<compile_context>
chip_gen: v5e
topology: v5e:2x2
jax: 0.10.0
libtpu: 0.0.40
codegen_flags: <defaults>
</compile_context>

<pallas_src>
import math

import jax
import jax.numpy as jnp
from jax import lax
from jax.experimental import pallas as pl
from jax.experimental.pallas import tpu as pltpu

SQRT2 = math.sqrt(2.0)
INV_SQRT2 = 1.0 / SQRT2
LRELU_SLOPE = 0.2
DEMOD_EPS = 1e-8


# ---------------------------------------------------------------------------
# parameters (same shapes / init as the PyTorch module)
# ---------------------------------------------------------------------------
def init_styled_resblock2_params(key, in_ch, out_ch, style_dim, ksize=3):
    k = jax.random.split(key, 5)
    return dict(
        w1=jax.random.normal(k[0], (out_ch, in_ch, ksize, ksize), jnp.float32),   # OIHW
        w2=jax.random.normal(k[1], (out_ch, out_ch, ksize, ksize), jnp.float32),  # OIHW
        w_skip=jax.random.normal(k[2], (out_ch, in_ch, 1, 1), jnp.float32),       # OIHW
        wm1=jax.random.normal(k[3], (in_ch, style_dim), jnp.float32),   # EqualLinear weights
        wm2=jax.random.normal(k[4], (out_ch, style_dim), jnp.float32),
        bm1=jnp.ones((in_ch,), jnp.float32),     # EqualLinear bias (bias_init=1)
        bm2=jnp.ones((out_ch,), jnp.float32),
        fb1=jnp.zeros((out_ch,), jnp.float32),   # FusedLeakyReLU biases (zero init)
        fb2=jnp.zeros((out_ch,), jnp.float32),
    )


def _blur_kernel_2d_flipped(blur_kernel):
    k = jnp.asarray(blur_kernel, jnp.float32)
    k2 = jnp.outer(k, k)
    k2 = k2 / jnp.sum(k2)
    # upfirdn2d correlates with the flipped FIR (symmetric for [1,3,3,1], kept for fidelity)
    return jnp.flip(k2, (0, 1))


def _prepare_kernel_params(params, blur_kernel, ksize=3):
    """Precompute TPU-friendly tensors: equal-lr-scaled HWIO weights in im2col layout (bf16),
    blur-folded effective downsample weights, and demod lookup tables (f32)."""
    out_ch, in_ch = params["w1"].shape[0], params["w1"].shape[1]
    style_dim = params["wm1"].shape[1]
    k2f = _blur_kernel_2d_flipped(blur_kernel)                     # (4, 4)

    sc1 = 1.0 / math.sqrt(in_ch * ksize * ksize)
    sc2 = 1.0 / math.sqrt(out_ch * ksize * ksize)
    scs = 1.0 / math.sqrt(in_ch)
    scm = 1.0 / math.sqrt(style_dim)

    w1h = jnp.transpose(params["w1"], (2, 3, 1, 0)) * sc1          # (3,3,in,out)  HWIO
    w2h = jnp.transpose(params["w2"], (2, 3, 1, 0)) * sc2          # (3,3,out,out) HWIO
    wsh = jnp.transpose(params["w_skip"], (2, 3, 1, 0))[0, 0] * scs  # (in,out)

    # demod(b,o) = rsqrt(sum_i style(b,i)^2 * A(i,o) + eps)
    a1 = jnp.sum(w1h * w1h, axis=(0, 1))                           # (in,  out)
    a2 = jnp.sum(w2h * w2h, axis=(0, 1))                           # (out, out)

    # Fold Blur(pad=(2,2)) followed by the 3x3 stride-2 conv into ONE 6x6 stride-2 conv.
    kb = k2f[:, :, None, None]
    w2eff = jnp.zeros((6, 6, out_ch, out_ch), jnp.float32)
    for a in range(3):
        for b in range(3):
            w2eff = w2eff.at[a:a + 4, b:b + 4, :, :].add(kb * w2h[a, b][None, None, :, :])

    # Fold Blur(pad=(1,1)) followed by the 1x1 stride-2 skip conv into ONE 4x4 stride-2 conv.
    wseff = kb * wsh[None, None, :, :]                             # (4,4,in,out)

    nine = ksize * ksize
    return dict(
        wm1=(params["wm1"] * scm).T,                               # (S, in)
        wm2=(params["wm2"] * scm).T,                               # (S, out)
        bm1=params["bm1"][None, :],                                # (1, in)
        bm2=params["bm2"][None, :],                                # (1, out)
        a1=a1,
        a2=a2,
        w1=w1h.reshape(nine * in_ch, out_ch).astype(jnp.bfloat16),
        w2e=w2eff.reshape(36 * out_ch, out_ch).astype(jnp.bfloat16),
        wsk=wseff.reshape(16 * in_ch, out_ch).astype(jnp.bfloat16),
        fb1=params["fb1"][None, :],
        fb2=params["fb2"][None, :],
    )


# ---------------------------------------------------------------------------
# the single fused Pallas kernel
# ---------------------------------------------------------------------------
def _build_fused_kernel(H, W, CIN, COUT, S):
    Ho, Wo = H // 2, W // 2

    def kernel(lat_ref, x_ref, wm1_ref, bm1_ref, a1_ref, w1_ref, fb1_ref,
               wm2_ref, bm2_ref, a2_ref, w2e_ref, fb2_ref, wsk_ref,
               o_ref, xpad_ref, hpad_ref, p1_ref, p2_ref, ps_ref):
        f32 = jnp.float32
        bf16 = jnp.bfloat16

        # --- per-sample style modulation (EqualLinear, bias init 1) + demodulation (f32) ---
        lat = lat_ref[...].reshape(1, S)
        s1 = jnp.dot(lat, wm1_ref[...], preferred_element_type=f32) + bm1_ref[...]  # (1,CIN)
        d1 = lax.rsqrt(jnp.dot(s1 * s1, a1_ref[...], preferred_element_type=f32) + DEMOD_EPS)
        s2 = jnp.dot(lat, wm2_ref[...], preferred_element_type=f32) + bm2_ref[...]  # (1,COUT)
        d2 = lax.rsqrt(jnp.dot(s2 * s2, a2_ref[...], preferred_element_type=f32) + DEMOD_EPS)

        # --- zero-padded x (halo = 1); shared by conv1 and the skip branch ---
        xpad_ref[...] = jnp.zeros(xpad_ref.shape, f32)
        xpad_ref[pl.ds(1, H), pl.ds(1, W), :] = x_ref[...].reshape(H, W, CIN)

        # --- conv1: modulated 3x3 / stride-1 as ONE im2col matmul (K = 9*CIN, bf16 -> f32) ---
        for kh in range(3):
            for kw in range(3):
                t = kh * 3 + kw
                slab = xpad_ref[pl.ds(kh, H), pl.ds(kw, W), :].reshape(H * W, CIN)
                p1_ref[:, pl.ds(t * CIN, CIN)] = (slab * s1).astype(bf16)  # style-modulated
        y1 = jnp.dot(p1_ref[...], w1_ref[...], preferred_element_type=f32)  # (H*W, COUT)
        y1 = y1 * d1 + fb1_ref[...]        # demodulate + FusedLeakyReLU bias (f32)
        # TODO(synk): NoiseInjection has a zero-initialized scale -> identity in this forward;
        # a trained nonzero scale would add pltpu.prng_* noise to y1/y2 right here.
        h1 = jnp.where(y1 >= 0.0, y1, LRELU_SLOPE * y1) * SQRT2             # FusedLeakyReLU

        # --- conv2 input: modulate by s2, zero-pad with halo = 2 (blur folded into w2e) ---
        hpad_ref[...] = jnp.zeros(hpad_ref.shape, f32)
        hpad_ref[pl.ds(2, H), pl.ds(2, W), :] = (h1 * s2).reshape(H, W, COUT)

        # --- conv2: Blur(2,2) + 3x3/stride-2 == ONE 6x6/stride-2 im2col matmul (K = 36*COUT) ---
        for p in range(6):
            for q in range(6):
                t = p * 6 + q
                slab = hpad_ref[pl.ds(p, Ho, stride=2), pl.ds(q, Wo, stride=2), :]
                p2_ref[:, pl.ds(t * COUT, COUT)] = slab.reshape(Ho * Wo, COUT).astype(bf16)
        y2 = jnp.dot(p2_ref[...], w2e_ref[...], preferred_element_type=f32)  # (Ho*Wo, COUT)
        y2 = y2 * d2 + fb2_ref[...]
        h2 = jnp.where(y2 >= 0.0, y2, LRELU_SLOPE * y2) * SQRT2

        # --- skip: Blur(1,1) + 1x1/stride-2 == ONE 4x4/stride-2 im2col matmul (K = 16*CIN) ---
        for p in range(4):
            for q in range(4):
                t = p * 4 + q
                slab = xpad_ref[pl.ds(p, Ho, stride=2), pl.ds(q, Wo, stride=2), :]
                ps_ref[:, pl.ds(t * CIN, CIN)] = slab.reshape(Ho * Wo, CIN).astype(bf16)
        sk = jnp.dot(ps_ref[...], wsk_ref[...], preferred_element_type=f32)

        # --- fused residual combine: (out + skip) / sqrt(2), single store ---
        o_ref[...] = ((h2 + sk) * INV_SQRT2).reshape(1, Ho, Wo, COUT)

    return kernel


def styled_resblock2_forward(x_nchw, latent, params, blur_kernel=(1, 3, 3, 1)):
    """Pallas forward of StyledResBlock2(in_ch, out_ch, 3, style_dim, downsample=True)."""
    N, CIN, H, W = x_nchw.shape
    COUT = params["w1"].shape[0]
    S = latent.shape[1]
    assert H % 2 == 0 and W % 2 == 0, "downsample path needs even spatial dims"
    Ho, Wo = H // 2, W // 2

    pp = _prepare_kernel_params(params, blur_kernel)
    x = jnp.transpose(x_nchw, (0, 2, 3, 1)).astype(jnp.float32)   # NHWC once, at the boundary
    lat = latent.astype(jnp.float32).reshape(N, 1, S)

    kernel = _build_fused_kernel(H, W, CIN, COUT, S)
    grid_spec = pltpu.PrefetchScalarGridSpec(
        num_scalar_prefetch=0,
        grid=(N,),
        in_specs=[
            pl.BlockSpec((1, 1, S), lambda n: (n, 0, 0)),            # latent
            pl.BlockSpec((1, H, W, CIN), lambda n: (n, 0, 0, 0)),    # x
            pl.BlockSpec((S, CIN), lambda n: (0, 0)),                # wm1 (style -> conv1 in)
            pl.BlockSpec((1, CIN), lambda n: (0, 0)),                # bm1
            pl.BlockSpec((CIN, COUT), lambda n: (0, 0)),             # a1  (demod table)
            pl.BlockSpec((9 * CIN, COUT), lambda n: (0, 0)),         # w1  (bf16 im2col)
            pl.BlockSpec((1, COUT), lambda n: (0, 0)),               # fb1 (FusedLeakyReLU bias)
            pl.BlockSpec((S, COUT), lambda n: (0, 0)),               # wm2
            pl.BlockSpec((1, COUT), lambda n: (0, 0)),               # bm2
            pl.BlockSpec((COUT, COUT), lambda n: (0, 0)),            # a2
            pl.BlockSpec((36 * COUT, COUT), lambda n: (0, 0)),       # w2e (bf16, blur-folded)
            pl.BlockSpec((1, COUT), lambda n: (0, 0)),               # fb2
            pl.BlockSpec((16 * CIN, COUT), lambda n: (0, 0)),        # wsk (bf16, blur-folded)
        ],
        out_specs=pl.BlockSpec((1, Ho, Wo, COUT), lambda n: (n, 0, 0, 0)),
        scratch_shapes=[
            pltpu.VMEM((H + 2, W + 2, CIN), jnp.float32),            # x halo buffer
            pltpu.VMEM((H + 4, W + 4, COUT), jnp.float32),           # conv1-act halo buffer
            pltpu.VMEM((H * W, 9 * CIN), jnp.bfloat16),              # im2col slab: conv1
            pltpu.VMEM((Ho * Wo, 36 * COUT), jnp.bfloat16),          # im2col slab: conv2
            pltpu.VMEM((Ho * Wo, 16 * CIN), jnp.bfloat16),           # im2col slab: skip
        ],
    )
    y = pl.pallas_call(
        kernel,
        out_shape=jax.ShapeDtypeStruct((N, Ho, Wo, COUT), jnp.float32),
        grid_spec=grid_spec,
        compiler_params=pltpu.CompilerParams(
            dimension_semantics=("parallel",),     # batch shards across v7x's 2 TensorCores
            vmem_limit_bytes=32 * 1024 * 1024,
        ),
    )(lat, x, pp["wm1"], pp["bm1"], pp["a1"], pp["w1"], pp["fb1"],
      pp["wm2"], pp["bm2"], pp["a2"], pp["w2e"], pp["fb2"], pp["wsk"])
    return jnp.transpose(y, (0, 3, 1, 2))                            # back to NCHW


# ---------------------------------------------------------------------------
# pure-JAX reference (direct translation of the PyTorch module) for validation
# ---------------------------------------------------------------------------
def _upfirdn2d_ref(x_nhwc, k2, pad):
    p0, p1 = pad
    xp = jnp.pad(x_nhwc, ((0, 0), (p0, p1), (p0, p1), (0, 0)))
    c = x_nhwc.shape[-1]
    w = jnp.flip(k2, (0, 1))[:, :, None, None] * jnp.ones((1, 1, 1, c), jnp.float32)
    return lax.conv_general_dilated(
        xp, w, (1, 1), "VALID",
        dimension_numbers=("NHWC", "HWIO", "NHWC"), feature_group_count=c)


def _fused_leaky_relu_ref(x, bias):
    x = x + bias
    return jnp.where(x >= 0.0, x, LRELU_SLOPE * x) * SQRT2


def _modulated_conv_ref(x, latent, w_oihw, wm, bm, k2, downsample):
    n = x.shape[0]
    in_ch, ksz = w_oihw.shape[1], w_oihw.shape[2]
    style_dim = wm.shape[1]
    scale = 1.0 / math.sqrt(in_ch * ksz * ksz)
    style = latent @ (wm * (1.0 / math.sqrt(style_dim))).T + bm[None, :]    # (N, in)
    w = scale * w_oihw[None] * style[:, None, :, None, None]               # (N,O,I,kh,kw)
    demod = lax.rsqrt(jnp.sum(w * w, axis=(2, 3, 4)) + DEMOD_EPS)           # (N, O)
    w = w * demod[:, :, None, None, None]
    outs = []
    for i in range(n):
        wn = jnp.transpose(w[i], (2, 3, 1, 0))                              # HWIO
        xi = x[i:i + 1]
        if downsample:
            xi = _upfirdn2d_ref(xi, k2, (2, 2))
            oi = lax.conv_general_dilated(
                xi, wn, (2, 2), "VALID", dimension_numbers=("NHWC", "HWIO", "NHWC"))
        else:
            oi = lax.conv_general_dilated(
                xi, wn, (1, 1), ((1, 1), (1, 1)),
                dimension_numbers=("NHWC", "HWIO", "NHWC"))
        outs.append(oi)
    return jnp.concatenate(outs, axis=0)


def styled_resblock2_reference(x_nchw, latent, params, blur_kernel=(1, 3, 3, 1)):
    k = jnp.asarray(blur_kernel, jnp.float32)
    k2 = jnp.outer(k, k)
    k2 = k2 / jnp.sum(k2)
    x = jnp.transpose(x_nchw, (0, 2, 3, 1)).astype(jnp.float32)
    in_ch = x.shape[-1]

    h = _modulated_conv_ref(x, latent, params["w1"], params["wm1"], params["bm1"],
                            k2, downsample=False)
    h = _fused_leaky_relu_ref(h, params["fb1"])          # NoiseInjection(0-weight) = identity
    h = _modulated_conv_ref(h, latent, params["w2"], params["wm2"], params["bm2"],
                            k2, downsample=True)
    h = _fused_leaky_relu_ref(h, params["fb2"])

    s = _upfirdn2d_ref(x, k2, (1, 1))
    wsk = jnp.transpose(params["w_skip"], (2, 3, 1, 0)) * (1.0 / math.sqrt(in_ch))
    s = lax.conv_general_dilated(
        s, wsk, (2, 2), "VALID", dimension_numbers=("NHWC", "HWIO", "NHWC"))

    y = (h + s) * INV_SQRT2
    return jnp.transpose(y, (0, 3, 1, 2))


if __name__ == "__main__":
    key = jax.random.PRNGKey(0)
    kx, kl, kp = jax.random.split(key, 3)

    N, CIN, COUT, H, W, STYLE = 2, 4, 8, 16, 16, 32
    x = jax.random.normal(kx, (N, CIN, H, W), jnp.float32)        # NCHW, PyTorch layout
    latent = jax.random.normal(kl, (N, STYLE), jnp.float32)
    params = init_styled_resblock2_params(kp, CIN, COUT, STYLE)

    fwd = jax.jit(styled_resblock2_forward)
    y = jax.block_until_ready(fwd(x, latent, params))
    assert y.shape == (N, COUT, H // 2, W // 2), y.shape
    assert bool(jnp.all(jnp.isfinite(y)))

    # pure-JAX reference check (kernel uses bf16 MXU operands -> loose tolerance)
    y_ref = jax.block_until_ready(styled_resblock2_reference(x, latent, params))
    rel = float(jnp.sqrt(jnp.sum((y - y_ref) ** 2)) /
                (jnp.sqrt(jnp.sum(y_ref ** 2)) + 1e-12))
    assert rel < 5e-2, f"kernel/reference mismatch: rel_l2={rel:.4f}"

    print("KERNEL_OK")
</pallas_src>

<mosaic_0001>
module attributes {stable_mosaic.version = 11 : i64} {
  func.func @kernel(%arg0: i32, %arg1: memref<1x1x32xf32, #tpu.memory_space<vmem>>, %arg2: memref<1x16x16x4xf32, #tpu.memory_space<vmem>>, %arg3: memref<32x4xf32, #tpu.memory_space<vmem>>, %arg4: memref<1x4xf32, #tpu.memory_space<vmem>>, %arg5: memref<4x8xf32, #tpu.memory_space<vmem>>, %arg6: memref<36x8xbf16, #tpu.memory_space<vmem>>, %arg7: memref<1x8xf32, #tpu.memory_space<vmem>>, %arg8: memref<32x8xf32, #tpu.memory_space<vmem>>, %arg9: memref<1x8xf32, #tpu.memory_space<vmem>>, %arg10: memref<8x8xf32, #tpu.memory_space<vmem>>, %arg11: memref<288x8xbf16, #tpu.memory_space<vmem>>, %arg12: memref<1x8xf32, #tpu.memory_space<vmem>>, %arg13: memref<64x8xbf16, #tpu.memory_space<vmem>>, %arg14: memref<1x8x8x8xf32, #tpu.memory_space<vmem>>, %arg15: memref<18x18x4xf32, #tpu.memory_space<vmem>>, %arg16: memref<20x20x8xf32, #tpu.memory_space<vmem>>, %arg17: memref<256x36xbf16, #tpu.memory_space<vmem>>, %arg18: memref<64x288xbf16, #tpu.memory_space<vmem>>, %arg19: memref<64x64xbf16, #tpu.memory_space<vmem>>) attributes {dimension_semantics = [#tpu.dimension_semantics<parallel>], iteration_bounds = array<i64: 2>, scalar_prefetch = 0 : i64, scratch_operands = 5 : i64, tpu.core_type = #tpu.core_type<tc>, window_params = [{transform_indices = @transform_0, window_bounds = array<i64: 1, 1, 32>}, {transform_indices = @transform_1, window_bounds = array<i64: 1, 16, 16, 4>}, {pipeline_mode = #tpu.pipeline_mode<synchronous>, transform_indices = @transform_2, window_bounds = array<i64: 32, 4>}, {pipeline_mode = #tpu.pipeline_mode<synchronous>, transform_indices = @transform_3, window_bounds = array<i64: 1, 4>}, {pipeline_mode = #tpu.pipeline_mode<synchronous>, transform_indices = @transform_4, window_bounds = array<i64: 4, 8>}, {pipeline_mode = #tpu.pipeline_mode<synchronous>, transform_indices = @transform_5, window_bounds = array<i64: 36, 8>}, {pipeline_mode = #tpu.pipeline_mode<synchronous>, transform_indices = @transform_6, window_bounds = array<i64: 1, 8>}, {pipeline_mode = #tpu.pipeline_mode<synchronous>, transform_indices = @transform_7, window_bounds = array<i64: 32, 8>}, {pipeline_mode = #tpu.pipeline_mode<synchronous>, transform_indices = @transform_8, window_bounds = array<i64: 1, 8>}, {pipeline_mode = #tpu.pipeline_mode<synchronous>, transform_indices = @transform_9, window_bounds = array<i64: 8, 8>}, {pipeline_mode = #tpu.pipeline_mode<synchronous>, transform_indices = @transform_10, window_bounds = array<i64: 288, 8>}, {pipeline_mode = #tpu.pipeline_mode<synchronous>, transform_indices = @transform_11, window_bounds = array<i64: 1, 8>}, {pipeline_mode = #tpu.pipeline_mode<synchronous>, transform_indices = @transform_12, window_bounds = array<i64: 64, 8>}, {transform_indices = @transform_13, window_bounds = array<i64: 1, 8, 8, 8>}]} {
    %c0 = arith.constant 0 : index
    %c0_0 = arith.constant 0 : index
    %c0_1 = arith.constant 0 : index
    %0 = vector.load %arg1[%c0, %c0_0, %c0_1] : memref<1x1x32xf32, #tpu.memory_space<vmem>>, vector<1x1x32xf32>
    %1 = vector.shape_cast %0 : vector<1x1x32xf32> to vector<1x32xf32>
    %c0_2 = arith.constant 0 : index
    %c0_3 = arith.constant 0 : index
    %2 = vector.load %arg3[%c0_2, %c0_3] : memref<32x4xf32, #tpu.memory_space<vmem>>, vector<32x4xf32>
    %cst = arith.constant dense<0.000000e+00> : vector<1x4xf32>
    %3 = tpu.matmul %1, %2, %cst {dimension_numbers = #tpu.dot_dimension_numbers<[1], [0], [0], [1], [0, 0, 1, 1], [], []>} : vector<1x32xf32>, vector<32x4xf32>, vector<1x4xf32> -> vector<1x4xf32>
    %c0_4 = arith.constant 0 : index
    %c0_5 = arith.constant 0 : index
    %4 = vector.load %arg4[%c0_4, %c0_5] : memref<1x4xf32, #tpu.memory_space<vmem>>, vector<1x4xf32>
    %5 = arith.addf %3, %4 : vector<1x4xf32>
    %6 = arith.mulf %5, %5 : vector<1x4xf32>
    %c0_6 = arith.constant 0 : index
    %c0_7 = arith.constant 0 : index
    %7 = vector.load %arg5[%c0_6, %c0_7] : memref<4x8xf32, #tpu.memory_space<vmem>>, vector<4x8xf32>
    %cst_8 = arith.constant dense<0.000000e+00> : vector<1x8xf32>
    %8 = tpu.matmul %6, %7, %cst_8 {dimension_numbers = #tpu.dot_dimension_numbers<[1], [0], [0], [1], [0, 0, 1, 1], [], []>} : vector<1x4xf32>, vector<4x8xf32>, vector<1x8xf32> -> vector<1x8xf32>
    %cst_9 = arith.constant 9.99999993E-9 : f32
    %9 = vector.broadcast %cst_9 : f32 to vector<1x8xf32>
    %10 = arith.addf %8, %9 : vector<1x8xf32>
    %11 = math.rsqrt %10 : vector<1x8xf32>
    %c0_10 = arith.constant 0 : index
    %c0_11 = arith.constant 0 : index
    %12 = vector.load %arg8[%c0_10, %c0_11] : memref<32x8xf32, #tpu.memory_space<vmem>>, vector<32x8xf32>
    %cst_12 = arith.constant dense<0.000000e+00> : vector<1x8xf32>
    %13 = tpu.matmul %1, %12, %cst_12 {dimension_numbers = #tpu.dot_dimension_numbers<[1], [0], [0], [1], [0, 0, 1, 1], [], []>} : vector<1x32xf32>, vector<32x8xf32>, vector<1x8xf32> -> vector<1x8xf32>
    %c0_13 = arith.constant 0 : index
    %c0_14 = arith.constant 0 : index
    %14 = vector.load %arg9[%c0_13, %c0_14] : memref<1x8xf32, #tpu.memory_space<vmem>>, vector<1x8xf32>
    %15 = arith.addf %13, %14 : vector<1x8xf32>
    %16 = arith.mulf %15, %15 : vector<1x8xf32>
    %c0_15 = arith.constant 0 : index
    %c0_16 = arith.constant 0 : index
    %17 = vector.load %arg10[%c0_15, %c0_16] : memref<8x8xf32, #tpu.memory_space<vmem>>, vector<8x8xf32>
    %cst_17 = arith.constant dense<0.000000e+00> : vector<1x8xf32>
    %18 = tpu.matmul %16, %17, %cst_17 {dimension_numbers = #tpu.dot_dimension_numbers<[1], [0], [0], [1], [0, 0, 1, 1], [], []>} : vector<1x8xf32>, vector<8x8xf32>, vector<1x8xf32> -> vector<1x8xf32>
    %cst_18 = arith.constant 9.99999993E-9 : f32
    %19 = vector.broadcast %cst_18 : f32 to vector<1x8xf32>
    %20 = arith.addf %18, %19 : vector<1x8xf32>
    %21 = math.rsqrt %20 : vector<1x8xf32>
    %cst_19 = arith.constant 0.000000e+00 : f32
    %22 = vector.broadcast %cst_19 : f32 to vector<18x18x4xf32>
    %c0_20 = arith.constant 0 : index
    %c0_21 = arith.constant 0 : index
    %c0_22 = arith.constant 0 : index
    %23 = vector.load %arg15[%c0_20, %c0_21, %c0_22] : memref<18x18x4xf32, #tpu.memory_space<vmem>>, vector<18x18x4xf32>
    tpu.vector_store %arg15[%c0_20, %c0_21, %c0_22], %22 {strides = array<i32>} : memref<18x18x4xf32, #tpu.memory_space<vmem>>, vector<18x18x4xf32>,
    %c0_23 = arith.constant 0 : index
    %c0_24 = arith.constant 0 : index
    %c0_25 = arith.constant 0 : index
    %c0_26 = arith.constant 0 : index
    %24 = vector.load %arg2[%c0_23, %c0_24, %c0_25, %c0_26] : memref<1x16x16x4xf32, #tpu.memory_space<vmem>>, vector<1x16x16x4xf32>
    %25 = vector.shape_cast %24 : vector<1x16x16x4xf32> to vector<16x16x4xf32>
    %c1 = arith.constant 1 : index
    %c1_27 = arith.constant 1 : index
    %c0_28 = arith.constant 0 : index
    %26 = vector.load %arg15[%c1, %c1_27, %c0_28] : memref<18x18x4xf32, #tpu.memory_space<vmem>>, vector<16x16x4xf32>
    tpu.vector_store %arg15[%c1, %c1_27, %c0_28], %25 {strides = array<i32>} : memref<18x18x4xf32, #tpu.memory_space<vmem>>, vector<16x16x4xf32>,
    %c0_29 = arith.constant 0 : index
    %c0_30 = arith.constant 0 : index
    %c0_31 = arith.constant 0 : index
    %27 = vector.load %arg15[%c0_29, %c0_30, %c0_31] : memref<18x18x4xf32, #tpu.memory_space<vmem>>, vector<16x16x4xf32>
    %28 = vector.shape_cast %27 : vector<16x16x4xf32> to vector<256x4xf32>
    %29 = vector.broadcast %5 : vector<1x4xf32> to vector<256x4xf32>
    %30 = arith.mulf %28, %29 : vector<256x4xf32>
    %31 = arith.truncf %30 : vector<256x4xf32> to vector<256x4xbf16>
    %c0_32 = arith.constant 0 : index
    %c0_33 = arith.constant 0 : index
    %32 = vector.load %arg17[%c0_32, %c0_33] : memref<256x36xbf16, #tpu.memory_space<vmem>>, vector<256x4xbf16>
    tpu.vector_store %arg17[%c0_32, %c0_33], %31 {strides = array<i32>} : memref<256x36xbf16, #tpu.memory_space<vmem>>, vector<256x4xbf16>,
    %c0_34 = arith.constant 0 : index
    %c1_35 = arith.constant 1 : index
    %c0_36 = arith.constant 0 : index
    %33 = vector.load %arg15[%c0_34, %c1_35, %c0_36] : memref<18x18x4xf32, #tpu.memory_space<vmem>>, vector<16x16x4xf32>
    %34 = vector.shape_cast %33 : vector<16x16x4xf32> to vector<256x4xf32>
    %35 = vector.broadcast %5 : vector<1x4xf32> to vector<256x4xf32>
    %36 = arith.mulf %34, %35 : vector<256x4xf32>
    %37 = arith.truncf %36 : vector<256x4xf32> to vector<256x4xbf16>
    %c0_37 = arith.constant 0 : index
    %c4 = arith.constant 4 : index
    %38 = vector.load %arg17[%c0_37, %c4] : memref<256x36xbf16, #tpu.memory_space<vmem>>, vector<256x4xbf16>
    tpu.vector_store %arg17[%c0_37, %c4], %37 {strides = array<i32>} : memref<256x36xbf16, #tpu.memory_space<vmem>>, vector<256x4xbf16>,
    %c0_38 = arith.constant 0 : index
    %c2 = arith.constant 2 : index
    %c0_39 = arith.constant 0 : index
    %39 = vector.load %arg15[%c0_38, %c2, %c0_39] : memref<18x18x4xf32, #tpu.memory_space<vmem>>, vector<16x16x4xf32>
    %40 = vector.shape_cast %39 : vector<16x16x4xf32> to vector<256x4xf32>
    %41 = vector.broadcast %5 : vector<1x4xf32> to vector<256x4xf32>
    %42 = arith.mulf %40, %41 : vector<256x4xf32>
    %43 = arith.truncf %42 : vector<256x4xf32> to vector<256x4xbf16>
    %c0_40 = arith.constant 0 : index
    %c8 = arith.constant 8 : index
    %44 = vector.load %arg17[%c0_40, %c8] : memref<256x36xbf16, #tpu.memory_space<vmem>>, vector<256x4xbf16>
    tpu.vector_store %arg17[%c0_40, %c8], %43 {strides = array<i32>} : memref<256x36xbf16, #tpu.memory_space<vmem>>, vector<256x4xbf16>,
    %c1_41 = arith.constant 1 : index
    %c0_42 = arith.constant 0 : index
    %c0_43 = arith.constant 0 : index
    %45 = vector.load %arg15[%c1_41, %c0_42, %c0_43] : memref<18x18x4xf32, #tpu.memory_space<vmem>>, vector<16x16x4xf32>
    %46 = vector.shape_cast %45 : vector<16x16x4xf32> to vector<256x4xf32>
    %47 = vector.broadcast %5 : vector<1x4xf32> to vector<256x4xf32>
    %48 = arith.mulf %46, %47 : vector<256x4xf32>
    %49 = arith.truncf %48 : vector<256x4xf32> to vector<256x4xbf16>
    %c0_44 = arith.constant 0 : index
    %c12 = arith.constant 12 : index
    %50 = vector.load %arg17[%c0_44, %c12] : memref<256x36xbf16, #tpu.memory_space<vmem>>, vector<256x4xbf16>
    tpu.vector_store %arg17[%c0_44, %c12], %49 {strides = array<i32>} : memref<256x36xbf16, #tpu.memory_space<vmem>>, vector<256x4xbf16>,
    %c1_45 = arith.constant 1 : index
    %c1_46 = arith.constant 1 : index
    %c0_47 = arith.constant 0 : index
    %51 = vector.load %arg15[%c1_45, %c1_46, %c0_47] : memref<18x18x4xf32, #tpu.memory_space<vmem>>, vector<16x16x4xf32>
    %52 = vector.shape_cast %51 : vector<16x16x4xf32> to vector<256x4xf32>
    %53 = vector.broadcast %5 : vector<1x4xf32> to vector<256x4xf32>
    %54 = arith.mulf %52, %53 : vector<256x4xf32>
    %55 = arith.truncf %54 : vector<256x4xf32> to vector<256x4xbf16>
    %c0_48 = arith.constant 0 : index
    %c16 = arith.constant 16 : index
    %56 = vector.load %arg17[%c0_48, %c16] : memref<256x36xbf16, #tpu.memory_space<vmem>>, vector<256x4xbf16>
    tpu.vector_store %arg17[%c0_48, %c16], %55 {strides = array<i32>} : memref<256x36xbf16, #tpu.memory_space<vmem>>, vector<256x4xbf16>,
    %c1_49 = arith.constant 1 : index
    %c2_50 = arith.constant 2 : index
    %c0_51 = arith.constant 0 : index
    %57 = vector.load %arg15[%c1_49, %c2_50, %c0_51] : memref<18x18x4xf32, #tpu.memory_space<vmem>>, vector<16x16x4xf32>
    %58 = vector.shape_cast %57 : vector<16x16x4xf32> to vector<256x4xf32>
    %59 = vector.broadcast %5 : vector<1x4xf32> to vector<256x4xf32>
    %60 = arith.mulf %58, %59 : vector<256x4xf32>
    %61 = arith.truncf %60 : vector<256x4xf32> to vector<256x4xbf16>
    %c0_52 = arith.constant 0 : index
    %c20 = arith.constant 20 : index
    %62 = vector.load %arg17[%c0_52, %c20] : memref<256x36xbf16, #tpu.memory_space<vmem>>, vector<256x4xbf16>
    tpu.vector_store %arg17[%c0_52, %c20], %61 {strides = array<i32>} : memref<256x36xbf16, #tpu.memory_space<vmem>>, vector<256x4xbf16>,
    %c2_53 = arith.constant 2 : index
    %c0_54 = arith.constant 0 : index
    %c0_55 = arith.constant 0 : index
    %63 = vector.load %arg15[%c2_53, %c0_54, %c0_55] : memref<18x18x4xf32, #tpu.memory_space<vmem>>, vector<16x16x4xf32>
    %64 = vector.shape_cast %63 : vector<16x16x4xf32> to vector<256x4xf32>
    %65 = vector.broadcast %5 : vector<1x4xf32> to vector<256x4xf32>
    %66 = arith.mulf %64, %65 : vector<256x4xf32>
    %67 = arith.truncf %66 : vector<256x4xf32> to vector<256x4xbf16>
    %c0_56 = arith.constant 0 : index
    %c24 = arith.constant 24 : index
    %68 = vector.load %arg17[%c0_56, %c24] : memref<256x36xbf16, #tpu.memory_space<vmem>>, vector<256x4xbf16>
    tpu.vector_store %arg17[%c0_56, %c24], %67 {strides = array<i32>} : memref<256x36xbf16, #tpu.memory_space<vmem>>, vector<256x4xbf16>,
    %c2_57 = arith.constant 2 : index
    %c1_58 = arith.constant 1 : index
    %c0_59 = arith.constant 0 : index
    %69 = vector.load %arg15[%c2_57, %c1_58, %c0_59] : memref<18x18x4xf32, #tpu.memory_space<vmem>>, vector<16x16x4xf32>
    %70 = vector.shape_cast %69 : vector<16x16x4xf32> to vector<256x4xf32>
    %71 = vector.broadcast %5 : vector<1x4xf32> to vector<256x4xf32>
    %72 = arith.mulf %70, %71 : vector<256x4xf32>
    %73 = arith.truncf %72 : vector<256x4xf32> to vector<256x4xbf16>
    %c0_60 = arith.constant 0 : index
    %c28 = arith.constant 28 : index
    %74 = vector.load %arg17[%c0_60, %c28] : memref<256x36xbf16, #tpu.memory_space<vmem>>, vector<256x4xbf16>
    tpu.vector_store %arg17[%c0_60, %c28], %73 {strides = array<i32>} : memref<256x36xbf16, #tpu.memory_space<vmem>>, vector<256x4xbf16>,
    %c2_61 = arith.constant 2 : index
    %c2_62 = arith.constant 2 : index
    %c0_63 = arith.constant 0 : index
    %75 = vector.load %arg15[%c2_61, %c2_62, %c0_63] : memref<18x18x4xf32, #tpu.memory_space<vmem>>, vector<16x16x4xf32>
    %76 = vector.shape_cast %75 : vector<16x16x4xf32> to vector<256x4xf32>
    %77 = vector.broadcast %5 : vector<1x4xf32> to vector<256x4xf32>
    %78 = arith.mulf %76, %77 : vector<256x4xf32>
    %79 = arith.truncf %78 : vector<256x4xf32> to vector<256x4xbf16>
    %c0_64 = arith.constant 0 : index
    %c32 = arith.constant 32 : index
    %80 = vector.load %arg17[%c0_64, %c32] : memref<256x36xbf16, #tpu.memory_space<vmem>>, vector<256x4xbf16>
    tpu.vector_store %arg17[%c0_64, %c32], %79 {strides = array<i32>} : memref<256x36xbf16, #tpu.memory_space<vmem>>, vector<256x4xbf16>,
    %c0_65 = arith.constant 0 : index
    %c0_66 = arith.constant 0 : index
    %81 = vector.load %arg17[%c0_65, %c0_66] : memref<256x36xbf16, #tpu.memory_space<vmem>>, vector<256x36xbf16>
    %c0_67 = arith.constant 0 : index
    %c0_68 = arith.constant 0 : index
    %82 = vector.load %arg6[%c0_67, %c0_68] : memref<36x8xbf16, #tpu.memory_space<vmem>>, vector<36x8xbf16>
    %cst_69 = arith.constant dense<0.000000e+00> : vector<256x8xf32>
    %83 = tpu.matmul %81, %82, %cst_69 {dimension_numbers = #tpu.dot_dimension_numbers<[1], [0], [0], [1], [0, 0, 1, 1], [], []>} : vector<256x36xbf16>, vector<36x8xbf16>, vector<256x8xf32> -> vector<256x8xf32>
    %84 = vector.broadcast %11 : vector<1x8xf32> to vector<256x8xf32>
    %85 = arith.mulf %83, %84 : vector<256x8xf32>
    %c0_70 = arith.constant 0 : index
    %c0_71 = arith.constant 0 : index
    %86 = vector.load %arg7[%c0_70, %c0_71] : memref<1x8xf32, #tpu.memory_space<vmem>>, vector<1x8xf32>
    %87 = vector.broadcast %86 : vector<1x8xf32> to vector<256x8xf32>
    %88 = arith.addf %85, %87 : vector<256x8xf32>
    %cst_72 = arith.constant 0.000000e+00 : f32
    %89 = vector.broadcast %cst_72 : f32 to vector<256x8xf32>
    %90 = arith.cmpf oge, %88, %89 : vector<256x8xf32>
    %cst_73 = arith.constant 2.000000e-01 : f32
    %91 = vector.broadcast %cst_73 : f32 to vector<256x8xf32>
    %92 = arith.mulf %91, %88 : vector<256x8xf32>
    %93 = arith.select %90, %88, %92 : vector<256x8xi1>, vector<256x8xf32>
    %cst_74 = arith.constant 1.41421354 : f32
    %94 = vector.broadcast %cst_74 : f32 to vector<256x8xf32>
    %95 = arith.mulf %93, %94 : vector<256x8xf32>
    %cst_75 = arith.constant 0.000000e+00 : f32
    %96 = vector.broadcast %cst_75 : f32 to vector<20x20x8xf32>
    %c0_76 = arith.constant 0 : index
    %c0_77 = arith.constant 0 : index
    %c0_78 = arith.constant 0 : index
    %97 = vector.load %arg16[%c0_76, %c0_77, %c0_78] : memref<20x20x8xf32, #tpu.memory_space<vmem>>, vector<20x20x8xf32>
    tpu.vector_store %arg16[%c0_76, %c0_77, %c0_78], %96 {strides = array<i32>} : memref<20x20x8xf32, #tpu.memory_space<vmem>>, vector<20x20x8xf32>,
    %98 = vector.broadcast %15 : vector<1x8xf32> to vector<256x8xf32>
    %99 = arith.mulf %95, %98 : vector<256x8xf32>
    %100 = vector.shape_cast %99 : vector<256x8xf32> to vector<16x16x8xf32>
    %c2_79 = arith.constant 2 : index
    %c2_80 = arith.constant 2 : index
    %c0_81 = arith.constant 0 : index
    %101 = vector.load %arg16[%c2_79, %c2_80, %c0_81] : memref<20x20x8xf32, #tpu.memory_space<vmem>>, vector<16x16x8xf32>
    tpu.vector_store %arg16[%c2_79, %c2_80, %c0_81], %100 {strides = array<i32>} : memref<20x20x8xf32, #tpu.memory_space<vmem>>, vector<16x16x8xf32>,
    %c0_82 = arith.constant 0 : index
    %c0_83 = arith.constant 0 : index
    %c0_84 = arith.constant 0 : index
    %102 = tpu.strided_load %arg16[%c0_82, %c0_83, %c0_84] {strides = array<i32: 2, 2, 1>} : memref<20x20x8xf32, #tpu.memory_space<vmem>>, vector<8x8x8xf32>
    %103 = vector.shape_cast %102 : vector<8x8x8xf32> to vector<64x8xf32>
    %104 = arith.truncf %103 : vector<64x8xf32> to vector<64x8xbf16>
    %c0_85 = arith.constant 0 : index
    %c0_86 = arith.constant 0 : index
    %105 = vector.load %arg18[%c0_85, %c0_86] : memref<64x288xbf16, #tpu.memory_space<vmem>>, vector<64x8xbf16>
    tpu.vector_store %arg18[%c0_85, %c0_86], %104 {strides = array<i32>} : memref<64x288xbf16, #tpu.memory_space<vmem>>, vector<64x8xbf16>,
    %c0_87 = arith.constant 0 : index
    %c1_88 = arith.constant 1 : index
    %c0_89 = arith.constant 0 : index
    %106 = tpu.strided_load %arg16[%c0_87, %c1_88, %c0_89] {strides = array<i32: 2, 2, 1>} : memref<20x20x8xf32, #tpu.memory_space<vmem>>, vector<8x8x8xf32>
    %107 = vector.shape_cast %106 : vector<8x8x8xf32> to vector<64x8xf32>
    %108 = arith.truncf %107 : vector<64x8xf32> to vector<64x8xbf16>
    %c0_90 = arith.constant 0 : index
    %c8_91 = arith.constant 8 : index
    %109 = vector.load %arg18[%c0_90, %c8_91] : memref<64x288xbf16, #tpu.memory_space<vmem>>, vector<64x8xbf16>
    tpu.vector_store %arg18[%c0_90, %c8_91], %108 {strides = array<i32>} : memref<64x288xbf16, #tpu.memory_space<vmem>>, vector<64x8xbf16>,
    %c0_92 = arith.constant 0 : index
    %c2_93 = arith.constant 2 : index
    %c0_94 = arith.constant 0 : index
    %110 = tpu.strided_load %arg16[%c0_92, %c2_93, %c0_94] {strides = array<i32: 2, 2, 1>} : memref<20x20x8xf32, #tpu.memory_space<vmem>>, vector<8x8x8xf32>
    %111 = vector.shape_cast %110 : vector<8x8x8xf32> to vector<64x8xf32>
    %112 = arith.truncf %111 : vector<64x8xf32> to vector<64x8xbf16>
    %c0_95 = arith.constant 0 : index
    %c16_96 = arith.constant 16 : index
    %113 = vector.load %arg18[%c0_95, %c16_96] : memref<64x288xbf16, #tpu.memory_space<vmem>>, vector<64x8xbf16>
    tpu.vector_store %arg18[%c0_95, %c16_96], %112 {strides = array<i32>} : memref<64x288xbf16, #tpu.memory_space<vmem>>, vector<64x8xbf16>,
    %c0_97 = arith.constant 0 : index
    %c3 = arith.constant 3 : index
    %c0_98 = arith.constant 0 : index
    %114 = tpu.strided_load %arg16[%c0_97, %c3, %c0_98] {strides = array<i32: 2, 2, 1>} : memref<20x20x8xf32, #tpu.memory_space<vmem>>, vector<8x8x8xf32>
    %115 = vector.shape_cast %114 : vector<8x8x8xf32> to vector<64x8xf32>
    %116 = arith.truncf %115 : vector<64x8xf32> to vector<64x8xbf16>
    %c0_99 = arith.constant 0 : index
    %c24_100 = arith.constant 24 : index
    %117 = vector.load %arg18[%c0_99, %c24_100] : memref<64x288xbf16, #tpu.memory_space<vmem>>, vector<64x8xbf16>
    tpu.vector_store %arg18[%c0_99, %c24_100], %116 {strides = array<i32>} : memref<64x288xbf16, #tpu.memory_space<vmem>>, vector<64x8xbf16>,
    %c0_101 = arith.constant 0 : index
    %c4_102 = arith.constant 4 : index
    %c0_103 = arith.constant 0 : index
    %118 = tpu.strided_load %arg16[%c0_101, %c4_102, %c0_103] {strides = array<i32: 2, 2, 1>} : memref<20x20x8xf32, #tpu.memory_space<vmem>>, vector<8x8x8xf32>
    %119 = vector.shape_cast %118 : vector<8x8x8xf32> to vector<64x8xf32>
    %120 = arith.truncf %119 : vector<64x8xf32> to vector<64x8xbf16>
    %c0_104 = arith.constant 0 : index
    %c32_105 = arith.constant 32 : index
    %121 = vector.load %arg18[%c0_104, %c32_105] : memref<64x288xbf16, #tpu.memory_space<vmem>>, vector<64x8xbf16>
    tpu.vector_store %arg18[%c0_104, %c32_105], %120 {strides = array<i32>} : memref<64x288xbf16, #tpu.memory_space<vmem>>, vector<64x8xbf16>,
    %c0_106 = arith.constant 0 : index
    %c5 = arith.constant 5 : index
    %c0_107 = arith.constant 0 : index
    %122 = tpu.strided_load %arg16[%c0_106, %c5, %c0_107] {strides = array<i32: 2, 2, 1>} : memref<20x20x8xf32, #tpu.memory_space<vmem>>, vector<8x8x8xf32>
    %123 = vector.shape_cast %122 : vector<8x8x8xf32> to vector<64x8xf32>
    %124 = arith.truncf %123 : vector<64x8xf32> to vector<64x8xbf16>
    %c0_108 = arith.constant 0 : index
    %c40 = arith.constant 40 : index
    %125 = vector.load %arg18[%c0_108, %c40] : memref<64x288xbf16, #tpu.memory_space<vmem>>, vector<64x8xbf16>
    tpu.vector_store %arg18[%c0_108, %c40], %124 {strides = array<i32>} : memref<64x288xbf16, #tpu.memory_space<vmem>>, vector<64x8xbf16>,
    %c1_109 = arith.constant 1 : index
    %c0_110 = arith.constant 0 : index
    %c0_111 = arith.constant 0 : index
    %126 = tpu.strided_load %arg16[%c1_109, %c0_110, %c0_111] {strides = array<i32: 2, 2, 1>} : memref<20x20x8xf32, #tpu.memory_space<vmem>>, vector<8x8x8xf32>
    %127 = vector.shape_cast %126 : vector<8x8x8xf32> to vector<64x8xf32>
    %128 = arith.truncf %127 : vector<64x8xf32> to vector<64x8xbf16>
    %c0_112 = arith.constant 0 : index
    %c48 = arith.constant 48 : index
    %129 = vector.load %arg18[%c0_112, %c48] : memref<64x288xbf16, #tpu.memory_space<vmem>>, vector<64x8xbf16>
    tpu.vector_store %arg18[%c0_112, %c48], %128 {strides = array<i32>} : memref<64x288xbf16, #tpu.memory_space<vmem>>, vector<64x8xbf16>,
    %c1_113 = arith.constant 1 : index
    %c1_114 = arith.constant 1 : index
    %c0_115 = arith.constant 0 : index
    %130 = tpu.strided_load %arg16[%c1_113, %c1_114, %c0_115] {strides = array<i32: 2, 2, 1>} : memref<20x20x8xf32, #tpu.memory_space<vmem>>, vector<8x8x8xf32>
    %131 = vector.shape_cast %130 : vector<8x8x8xf32> to vector<64x8xf32>
    %132 = arith.truncf %131 : vector<64x8xf32> to vector<64x8xbf16>
    %c0_116 = arith.constant 0 : index
    %c56 = arith.constant 56 : index
    %133 = vector.load %arg18[%c0_116, %c56] : memref<64x288xbf16, #tpu.memory_space<vmem>>, vector<64x8xbf16>
    tpu.vector_store %arg18[%c0_116, %c56], %132 {strides = array<i32>} : memref<64x288xbf16, #tpu.memory_space<vmem>>, vector<64x8xbf16>,
    %c1_117 = arith.constant 1 : index
    %c2_118 = arith.constant 2 : index
    %c0_119 = arith.constant 0 : index
    %134 = tpu.strided_load %arg16[%c1_117, %c2_118, %c0_119] {strides = array<i32: 2, 2, 1>} : memref<20x20x8xf32, #tpu.memory_space<vmem>>, vector<8x8x8xf32>
    %135 = vector.shape_cast %134 : vector<8x8x8xf32> to vector<64x8xf32>
    %136 = arith.truncf %135 : vector<64x8xf32> to vector<64x8xbf16>
    %c0_120 = arith.constant 0 : index
    %c64 = arith.constant 64 : index
    %137 = vector.load %arg18[%c0_120, %c64] : memref<64x288xbf16, #tpu.memory_space<vmem>>, vector<64x8xbf16>
    tpu.vector_store %arg18[%c0_120, %c64], %136 {strides = array<i32>} : memref<64x288xbf16, #tpu.memory_space<vmem>>, vector<64x8xbf16>,
    %c1_121 = arith.constant 1 : index
    %c3_122 = arith.constant 3 : index
    %c0_123 = arith.constant 0 : index
    %138 = tpu.strided_load %arg16[%c1_121, %c3_122, %c0_123] {strides = array<i32: 2, 2, 1>} : memref<20x20x8xf32, #tpu.memory_space<vmem>>, vector<8x8x8xf32>
    %139 = vector.shape_cast %138 : vector<8x8x8xf32> to vector<64x8xf32>
    %140 = arith.truncf %139 : vector<64x8xf32> to vector<64x8xbf16>
    %c0_124 = arith.constant 0 : index
    %c72 = arith.constant 72 : index
    %141 = vector.load %arg18[%c0_124, %c72] : memref<64x288xbf16, #tpu.memory_space<vmem>>, vector<64x8xbf16>
    tpu.vector_store %arg18[%c0_124, %c72], %140 {strides = array<i32>} : memref<64x288xbf16, #tpu.memory_space<vmem>>, vector<64x8xbf16>,
    %c1_125 = arith.constant 1 : index
    %c4_126 = arith.constant 4 : index
    %c0_127 = arith.constant 0 : index
    %142 = tpu.strided_load %arg16[%c1_125, %c4_126, %c0_127] {strides = array<i32: 2, 2, 1>} : memref<20x20x8xf32, #tpu.memory_space<vmem>>, vector<8x8x8xf32>
    %143 = vector.shape_cast %142 : vector<8x8x8xf32> to vector<64x8xf32>
    %144 = arith.truncf %143 : vector<64x8xf32> to vector<64x8xbf16>
    %c0_128 = arith.constant 0 : index
    %c80 = arith.constant 80 : index
    %145 = vector.load %arg18[%c0_128, %c80] : memref<64x288xbf16, #tpu.memory_space<vmem>>, vector<64x8xbf16>
    tpu.vector_store %arg18[%c0_128, %c80], %144 {strides = array<i32>} : memref<64x288xbf16, #tpu.memory_space<vmem>>, vector<64x8xbf16>,
    %c1_129 = arith.constant 1 : index
    %c5_130 = arith.constant 5 : index
    %c0_131 = arith.constant 0 : index
    %146 = tpu.strided_load %arg16[%c1_129, %c5_130, %c0_131] {strides = array<i32: 2, 2, 1>} : memref<20x20x8xf32, #tpu.memory_space<vmem>>, vector<8x8x8xf32>
    %147 = vector.shape_cast %146 : vector<8x8x8xf32> to vector<64x8xf32>
    %148 = arith.truncf %147 : vector<64x8xf32> to vector<64x8xbf16>
    %c0_132 = arith.constant 0 : index
    %c88 = arith.constant 88 : index
    %149 = vector.load %arg18[%c0_132, %c88] : memref<64x288xbf16, #tpu.memory_space<vmem>>, vector<64x8xbf16>
    tpu.vector_store %arg18[%c0_132, %c88], %148 {strides = array<i32>} : memref<64x288xbf16, #tpu.memory_space<vmem>>, vector<64x8xbf16>,
    %c2_133 = arith.constant 2 : index
    %c0_134 = arith.constant 0 : index
    %c0_135 = arith.constant 0 : index
    %150 = tpu.strided_load %arg16[%c2_133, %c0_134, %c0_135] {strides = array<i32: 2, 2, 1>} : memref<20x20x8xf32, #tpu.memory_space<vmem>>, vector<8x8x8xf32>
    %151 = vector.shape_cast %150 : vector<8x8x8xf32> to vector<64x8xf32>
    %152 = arith.truncf %151 : vector<64x8xf32> to vector<64x8xbf16>
    %c0_136 = arith.constant 0 : index
    %c96 = arith.constant 96 : index
    %153 = vector.load %arg18[%c0_136, %c96] : memref<64x288xbf16, #tpu.memory_space<vmem>>, vector<64x8xbf16>
    tpu.vector_store %arg18[%c0_136, %c96], %152 {strides = array<i32>} : memref<64x288xbf16, #tpu.memory_space<vmem>>, vector<64x8xbf16>,
    %c2_137 = arith.constant 2 : index
    %c1_138 = arith.constant 1 : index
    %c0_139 = arith.constant 0 : index
    %154 = tpu.strided_load %arg16[%c2_137, %c1_138, %c0_139] {strides = array<i32: 2, 2, 1>} : memref<20x20x8xf32, #tpu.memory_space<vmem>>, vector<8x8x8xf32>
    %155 = vector.shape_cast %154 : vector<8x8x8xf32> to vector<64x8xf32>
    %156 = arith.truncf %155 : vector<64x8xf32> to vector<64x8xbf16>
    %c0_140 = arith.constant 0 : index
    %c104 = arith.constant 104 : index
    %157 = vector.load %arg18[%c0_140, %c104] : memref<64x288xbf16, #tpu.memory_space<vmem>>, vector<64x8xbf16>
    tpu.vector_store %arg18[%c0_140, %c104], %156 {strides = array<i32>} : memref<64x288xbf16, #tpu.memory_space<vmem>>, vector<64x8xbf16>,
    %c2_141 = arith.constant 2 : index
    %c2_142 = arith.constant 2 : index
    %c0_143 = arith.constant 0 : index
    %158 = tpu.strided_load %arg16[%c2_141, %c2_142, %c0_143] {strides = array<i32: 2, 2, 1>} : memref<20x20x8xf32, #tpu.memory_space<vmem>>, vector<8x8x8xf32>
    %159 = vector.shape_cast %158 : vector<8x8x8xf32> to vector<64x8xf32>
    %160 = arith.truncf %159 : vector<64x8xf32> to vector<64x8xbf16>
    %c0_144 = arith.constant 0 : index
    %c112 = arith.constant 112 : index
    %161 = vector.load %arg18[%c0_144, %c112] : memref<64x288xbf16, #tpu.memory_space<vmem>>, vector<64x8xbf16>
    tpu.vector_store %arg18[%c0_144, %c112], %160 {strides = array<i32>} : memref<64x288xbf16, #tpu.memory_space<vmem>>, vector<64x8xbf16>,
    %c2_145 = arith.constant 2 : index
    %c3_146 = arith.constant 3 : index
    %c0_147 = arith.constant 0 : index
    %162 = tpu.strided_load %arg16[%c2_145, %c3_146, %c0_147] {strides = array<i32: 2, 2, 1>} : memref<20x20x8xf32, #tpu.memory_space<vmem>>, vector<8x8x8xf32>
    %163 = vector.shape_cast %162 : vector<8x8x8xf32> to vector<64x8xf32>
    %164 = arith.truncf %163 : vector<64x8xf32> to vector<64x8xbf16>
    %c0_148 = arith.constant 0 : index
    %c120 = arith.constant 120 : index
    %165 = vector.load %arg18[%c0_148, %c120] : memref<64x288xbf16, #tpu.memory_space<vmem>>, vector<64x8xbf16>
    tpu.vector_store %arg18[%c0_148, %c120], %164 {strides = array<i32>} : memref<64x288xbf16, #tpu.memory_space<vmem>>, vector<64x8xbf16>,
    %c2_149 = arith.constant 2 : index
    %c4_150 = arith.constant 4 : index
    %c0_151 = arith.constant 0 : index
    %166 = tpu.strided_load %arg16[%c2_149, %c4_150, %c0_151] {strides = array<i32: 2, 2, 1>} : memref<20x20x8xf32, #tpu.memory_space<vmem>>, vector<8x8x8xf32>
    %167 = vector.shape_cast %166 : vector<8x8x8xf32> to vector<64x8xf32>
    %168 = arith.truncf %167 : vector<64x8xf32> to vector<64x8xbf16>
    %c0_152 = arith.constant 0 : index
    %c128 = arith.constant 128 : index
    %169 = vector.load %arg18[%c0_152, %c128] : memref<64x288xbf16, #tpu.memory_space<vmem>>, vector<64x8xbf16>
    tpu.vector_store %arg18[%c0_152, %c128], %168 {strides = array<i32>} : memref<64x288xbf16, #tpu.memory_space<vmem>>, vector<64x8xbf16>,
    %c2_153 = arith.constant 2 : index
    %c5_154 = arith.constant 5 : index
    %c0_155 = arith.constant 0 : index
    %170 = tpu.strided_load %arg16[%c2_153, %c5_154, %c0_155] {strides = array<i32: 2, 2, 1>} : memref<20x20x8xf32, #tpu.memory_space<vmem>>, vector<8x8x8xf32>
    %171 = vector.shape_cast %170 : vector<8x8x8xf32> to vector<64x8xf32>
    %172 = arith.truncf %171 : vector<64x8xf32> to vector<64x8xbf16>
    %c0_156 = arith.constant 0 : index
    %c136 = arith.constant 136 : index
    %173 = vector.load %arg18[%c0_156, %c136] : memref<64x288xbf16, #tpu.memory_space<vmem>>, vector<64x8xbf16>
    tpu.vector_store %arg18[%c0_156, %c136], %172 {strides = array<i32>} : memref<64x288xbf16, #tpu.memory_space<vmem>>, vector<64x8xbf16>,
    %c3_157 = arith.constant 3 : index
    %c0_158 = arith.constant 0 : index
    %c0_159 = arith.constant 0 : index
    %174 = tpu.strided_load %arg16[%c3_157, %c0_158, %c0_159] {strides = array<i32: 2, 2, 1>} : memref<20x20x8xf32, #tpu.memory_space<vmem>>, vector<8x8x8xf32>
    %175 = vector.shape_cast %174 : vector<8x8x8xf32> to vector<64x8xf32>
    %176 = arith.truncf %175 : vector<64x8xf32> to vector<64x8xbf16>
    %c0_160 = arith.constant 0 : index
    %c144 = arith.constant 144 : index
    %177 = vector.load %arg18[%c0_160, %c144] : memref<64x288xbf16, #tpu.memory_space<vmem>>, vector<64x8xbf16>
    tpu.vector_store %arg18[%c0_160, %c144], %176 {strides = array<i32>} : memref<64x288xbf16, #tpu.memory_space<vmem>>, vector<64x8xbf16>,
    %c3_161 = arith.constant 3 : index
    %c1_162 = arith.constant 1 : index
    %c0_163 = arith.constant 0 : index
    %178 = tpu.strided_load %arg16[%c3_161, %c1_162, %c0_163] {strides = array<i32: 2, 2, 1>} : memref<20x20x8xf32, #tpu.memory_space<vmem>>, vector<8x8x8xf32>
    %179 = vector.shape_cast %178 : vector<8x8x8xf32> to vector<64x8xf32>
    %180 = arith.truncf %179 : vector<64x8xf32> to vector<64x8xbf16>
    %c0_164 = arith.constant 0 : index
    %c152 = arith.constant 152 : index
    %181 = vector.load %arg18[%c0_164, %c152] : memref<64x288xbf16, #tpu.memory_space<vmem>>, vector<64x8xbf16>
    tpu.vector_store %arg18[%c0_164, %c152], %180 {strides = array<i32>} : memref<64x288xbf16, #tpu.memory_space<vmem>>, vector<64x8xbf16>,
    %c3_165 = arith.constant 3 : index
    %c2_166 = arith.constant 2 : index
    %c0_167 = arith.constant 0 : index
    %182 = tpu.strided_load %arg16[%c3_165, %c2_166, %c0_167] {strides = array<i32: 2, 2, 1>} : memref<20x20x8xf32, #tpu.memory_space<vmem>>, vector<8x8x8xf32>
    %183 = vector.shape_cast %182 : vector<8x8x8xf32> to vector<64x8xf32>
    %184 = arith.truncf %183 : vector<64x8xf32> to vector<64x8xbf16>
    %c0_168 = arith.constant 0 : index
    %c160 = arith.constant 160 : index
    %185 = vector.load %arg18[%c0_168, %c160] : memref<64x288xbf16, #tpu.memory_space<vmem>>, vector<64x8xbf16>
    tpu.vector_store %arg18[%c0_168, %c160], %184 {strides = array<i32>} : memref<64x288xbf16, #tpu.memory_space<vmem>>, vector<64x8xbf16>,
    %c3_169 = arith.constant 3 : index
    %c3_170 = arith.constant 3 : index
    %c0_171 = arith.constant 0 : index
    %186 = tpu.strided_load %arg16[%c3_169, %c3_170, %c0_171] {strides = array<i32: 2, 2, 1>} : memref<20x20x8xf32, #tpu.memory_space<vmem>>, vector<8x8x8xf32>
    %187 = vector.shape_cast %186 : vector<8x8x8xf32> to vector<64x8xf32>
    %188 = arith.truncf %187 : vector<64x8xf32> to vector<64x8xbf16>
    %c0_172 = arith.constant 0 : index
    %c168 = arith.constant 168 : index
    %189 = vector.load %arg18[%c0_172, %c168] : memref<64x288xbf16, #tpu.memory_space<vmem>>, vector<64x8xbf16>
    tpu.vector_store %arg18[%c0_172, %c168], %188 {strides = array<i32>} : memref<64x288xbf16, #tpu.memory_space<vmem>>, vector<64x8xbf16>,
    %c3_173 = arith.constant 3 : index
    %c4_174 = arith.constant 4 : index
    %c0_175 = arith.constant 0 : index
    %190 = tpu.strided_load %arg16[%c3_173, %c4_174, %c0_175] {strides = array<i32: 2, 2, 1>} : memref<20x20x8xf32, #tpu.memory_space<vmem>>, vector<8x8x8xf32>
    %191 = vector.shape_cast %190 : vector<8x8x8xf32> to vector<64x8xf32>
    %192 = arith.truncf %191 : vector<64x8xf32> to vector<64x8xbf16>
    %c0_176 = arith.constant 0 : index
    %c176 = arith.constant 176 : index
    %193 = vector.load %arg18[%c0_176, %c176] : memref<64x288xbf16, #tpu.memory_space<vmem>>, vector<64x8xbf16>
    tpu.vector_store %arg18[%c0_176, %c176], %192 {strides = array<i32>} : memref<64x288xbf16, #tpu.memory_space<vmem>>, vector<64x8xbf16>,
    %c3_177 = arith.constant 3 : index
    %c5_178 = arith.constant 5 : index
    %c0_179 = arith.constant 0 : index
    %194 = tpu.strided_load %arg16[%c3_177, %c5_178, %c0_179] {strides = array<i32: 2, 2, 1>} : memref<20x20x8xf32, #tpu.memory_space<vmem>>, vector<8x8x8xf32>
    %195 = vector.shape_cast %194 : vector<8x8x8xf32> to vector<64x8xf32>
    %196 = arith.truncf %195 : vector<64x8xf32> to vector<64x8xbf16>
    %c0_180 = arith.constant 0 : index
    %c184 = arith.constant 184 : index
    %197 = vector.load %arg18[%c0_180, %c184] : memref<64x288xbf16, #tpu.memory_space<vmem>>, vector<64x8xbf16>
    tpu.vector_store %arg18[%c0_180, %c184], %196 {strides = array<i32>} : memref<64x288xbf16, #tpu.memory_space<vmem>>, vector<64x8xbf16>,
    %c4_181 = arith.constant 4 : index
    %c0_182 = arith.constant 0 : index
    %c0_183 = arith.constant 0 : index
    %198 = tpu.strided_load %arg16[%c4_181, %c0_182, %c0_183] {strides = array<i32: 2, 2, 1>} : memref<20x20x8xf32, #tpu.memory_space<vmem>>, vector<8x8x8xf32>
    %199 = vector.shape_cast %198 : vector<8x8x8xf32> to vector<64x8xf32>
    %200 = arith.truncf %199 : vector<64x8xf32> to vector<64x8xbf16>
    %c0_184 = arith.constant 0 : index
    %c192 = arith.constant 192 : index
    %201 = vector.load %arg18[%c0_184, %c192] : memref<64x288xbf16, #tpu.memory_space<vmem>>, vector<64x8xbf16>
    tpu.vector_store %arg18[%c0_184, %c192], %200 {strides = array<i32>} : memref<64x288xbf16, #tpu.memory_space<vmem>>, vector<64x8xbf16>,
    %c4_185 = arith.constant 4 : index
    %c1_186 = arith.constant 1 : index
    %c0_187 = arith.constant 0 : index
    %202 = tpu.strided_load %arg16[%c4_185, %c1_186, %c0_187] {strides = array<i32: 2, 2, 1>} : memref<20x20x8xf32, #tpu.memory_space<vmem>>, vector<8x8x8xf32>
    %203 = vector.shape_cast %202 : vector<8x8x8xf32> to vector<64x8xf32>
    %204 = arith.truncf %203 : vector<64x8xf32> to vector<64x8xbf16>
    %c0_188 = arith.constant 0 : index
    %c200 = arith.constant 200 : index
    %205 = vector.load %arg18[%c0_188, %c200] : memref<64x288xbf16, #tpu.memory_space<vmem>>, vector<64x8xbf16>
    tpu.vector_store %arg18[%c0_188, %c200], %204 {strides = array<i32>} : memref<64x288xbf16, #tpu.memory_space<vmem>>, vector<64x8xbf16>,
    %c4_189 = arith.constant 4 : index
    %c2_190 = arith.constant 2 : index
    %c0_191 = arith.constant 0 : index
    %206 = tpu.strided_load %arg16[%c4_189, %c2_190, %c0_191] {strides = array<i32: 2, 2, 1>} : memref<20x20x8xf32, #tpu.memory_space<vmem>>, vector<8x8x8xf32>
    %207 = vector.shape_cast %206 : vector<8x8x8xf32> to vector<64x8xf32>
    %208 = arith.truncf %207 : vector<64x8xf32> to vector<64x8xbf16>
    %c0_192 = arith.constant 0 : index
    %c208 = arith.constant 208 : index
    %209 = vector.load %arg18[%c0_192, %c208] : memref<64x288xbf16, #tpu.memory_space<vmem>>, vector<64x8xbf16>
    tpu.vector_store %arg18[%c0_192, %c208], %208 {strides = array<i32>} : memref<64x288xbf16, #tpu.memory_space<vmem>>, vector<64x8xbf16>,
    %c4_193 = arith.constant 4 : index
    %c3_194 = arith.constant 3 : index
    %c0_195 = arith.constant 0 : index
    %210 = tpu.strided_load %arg16[%c4_193, %c3_194, %c0_195] {strides = array<i32: 2, 2, 1>} : memref<20x20x8xf32, #tpu.memory_space<vmem>>, vector<8x8x8xf32>
    %211 = vector.shape_cast %210 : vector<8x8x8xf32> to vector<64x8xf32>
    %212 = arith.truncf %211 : vector<64x8xf32> to vector<64x8xbf16>
    %c0_196 = arith.constant 0 : index
    %c216 = arith.constant 216 : index
    %213 = vector.load %arg18[%c0_196, %c216] : memref<64x288xbf16, #tpu.memory_space<vmem>>, vector<64x8xbf16>
    tpu.vector_store %arg18[%c0_196, %c216], %212 {strides = array<i32>} : memref<64x288xbf16, #tpu.memory_space<vmem>>, vector<64x8xbf16>,
    %c4_197 = arith.constant 4 : index
    %c4_198 = arith.constant 4 : index
    %c0_199 = arith.constant 0 : index
    %214 = tpu.strided_load %arg16[%c4_197, %c4_198, %c0_199] {strides = array<i32: 2, 2, 1>} : memref<20x20x8xf32, #tpu.memory_space<vmem>>, vector<8x8x8xf32>
    %215 = vector.shape_cast %214 : vector<8x8x8xf32> to vector<64x8xf32>
    %216 = arith.truncf %215 : vector<64x8xf32> to vector<64x8xbf16>
    %c0_200 = arith.constant 0 : index
    %c224 = arith.constant 224 : index
    %217 = vector.load %arg18[%c0_200, %c224] : memref<64x288xbf16, #tpu.memory_space<vmem>>, vector<64x8xbf16>
    tpu.vector_store %arg18[%c0_200, %c224], %216 {strides = array<i32>} : memref<64x288xbf16, #tpu.memory_space<vmem>>, vector<64x8xbf16>,
    %c4_201 = arith.constant 4 : index
    %c5_202 = arith.constant 5 : index
    %c0_203 = arith.constant 0 : index
    %218 = tpu.strided_load %arg16[%c4_201, %c5_202, %c0_203] {strides = array<i32: 2, 2, 1>} : memref<20x20x8xf32, #tpu.memory_space<vmem>>, vector<8x8x8xf32>
    %219 = vector.shape_cast %218 : vector<8x8x8xf32> to vector<64x8xf32>
    %220 = arith.truncf %219 : vector<64x8xf32> to vector<64x8xbf16>
    %c0_204 = arith.constant 0 : index
    %c232 = arith.constant 232 : index
    %221 = vector.load %arg18[%c0_204, %c232] : memref<64x288xbf16, #tpu.memory_space<vmem>>, vector<64x8xbf16>
    tpu.vector_store %arg18[%c0_204, %c232], %220 {strides = array<i32>} : memref<64x288xbf16, #tpu.memory_space<vmem>>, vector<64x8xbf16>,
    %c5_205 = arith.constant 5 : index
    %c0_206 = arith.constant 0 : index
    %c0_207 = arith.constant 0 : index
    %222 = tpu.strided_load %arg16[%c5_205, %c0_206, %c0_207] {strides = array<i32: 2, 2, 1>} : memref<20x20x8xf32, #tpu.memory_space<vmem>>, vector<8x8x8xf32>
    %223 = vector.shape_cast %222 : vector<8x8x8xf32> to vector<64x8xf32>
    %224 = arith.truncf %223 : vector<64x8xf32> to vector<64x8xbf16>
    %c0_208 = arith.constant 0 : index
    %c240 = arith.constant 240 : index
    %225 = vector.load %arg18[%c0_208, %c240] : memref<64x288xbf16, #tpu.memory_space<vmem>>, vector<64x8xbf16>
    tpu.vector_store %arg18[%c0_208, %c240], %224 {strides = array<i32>} : memref<64x288xbf16, #tpu.memory_space<vmem>>, vector<64x8xbf16>,
    %c5_209 = arith.constant 5 : index
    %c1_210 = arith.constant 1 : index
    %c0_211 = arith.constant 0 : index
    %226 = tpu.strided_load %arg16[%c5_209, %c1_210, %c0_211] {strides = array<i32: 2, 2, 1>} : memref<20x20x8xf32, #tpu.memory_space<vmem>>, vector<8x8x8xf32>
    %227 = vector.shape_cast %226 : vector<8x8x8xf32> to vector<64x8xf32>
    %228 = arith.truncf %227 : vector<64x8xf32> to vector<64x8xbf16>
    %c0_212 = arith.constant 0 : index
    %c248 = arith.constant 248 : index
    %229 = vector.load %arg18[%c0_212, %c248] : memref<64x288xbf16, #tpu.memory_space<vmem>>, vector<64x8xbf16>
    tpu.vector_store %arg18[%c0_212, %c248], %228 {strides = array<i32>} : memref<64x288xbf16, #tpu.memory_space<vmem>>, vector<64x8xbf16>,
    %c5_213 = arith.constant 5 : index
    %c2_214 = arith.constant 2 : index
    %c0_215 = arith.constant 0 : index
    %230 = tpu.strided_load %arg16[%c5_213, %c2_214, %c0_215] {strides = array<i32: 2, 2, 1>} : memref<20x20x8xf32, #tpu.memory_space<vmem>>, vector<8x8x8xf32>
    %231 = vector.shape_cast %230 : vector<8x8x8xf32> to vector<64x8xf32>
    %232 = arith.truncf %231 : vector<64x8xf32> to vector<64x8xbf16>
    %c0_216 = arith.constant 0 : index
    %c256 = arith.constant 256 : index
    %233 = vector.load %arg18[%c0_216, %c256] : memref<64x288xbf16, #tpu.memory_space<vmem>>, vector<64x8xbf16>
    tpu.vector_store %arg18[%c0_216, %c256], %232 {strides = array<i32>} : memref<64x288xbf16, #tpu.memory_space<vmem>>, vector<64x8xbf16>,
    %c5_217 = arith.constant 5 : index
    %c3_218 = arith.constant 3 : index
    %c0_219 = arith.constant 0 : index
    %234 = tpu.strided_load %arg16[%c5_217, %c3_218, %c0_219] {strides = array<i32: 2, 2, 1>} : memref<20x20x8xf32, #tpu.memory_space<vmem>>, vector<8x8x8xf32>
    %235 = vector.shape_cast %234 : vector<8x8x8xf32> to vector<64x8xf32>
    %236 = arith.truncf %235 : vector<64x8xf32> to vector<64x8xbf16>
    %c0_220 = arith.constant 0 : index
    %c264 = arith.constant 264 : index
    %237 = vector.load %arg18[%c0_220, %c264] : memref<64x288xbf16, #tpu.memory_space<vmem>>, vector<64x8xbf16>
    tpu.vector_store %arg18[%c0_220, %c264], %236 {strides = array<i32>} : memref<64x288xbf16, #tpu.memory_space<vmem>>, vector<64x8xbf16>,
    %c5_221 = arith.constant 5 : index
    %c4_222 = arith.constant 4 : index
    %c0_223 = arith.constant 0 : index
    %238 = tpu.strided_load %arg16[%c5_221, %c4_222, %c0_223] {strides = array<i32: 2, 2, 1>} : memref<20x20x8xf32, #tpu.memory_space<vmem>>, vector<8x8x8xf32>
    %239 = vector.shape_cast %238 : vector<8x8x8xf32> to vector<64x8xf32>
    %240 = arith.truncf %239 : vector<64x8xf32> to vector<64x8xbf16>
    %c0_224 = arith.constant 0 : index
    %c272 = arith.constant 272 : index
    %241 = vector.load %arg18[%c0_224, %c272] : memref<64x288xbf16, #tpu.memory_space<vmem>>, vector<64x8xbf16>
    tpu.vector_store %arg18[%c0_224, %c272], %240 {strides = array<i32>} : memref<64x288xbf16, #tpu.memory_space<vmem>>, vector<64x8xbf16>,
    %c5_225 = arith.constant 5 : index
    %c5_226 = arith.constant 5 : index
    %c0_227 = arith.constant 0 : index
    %242 = tpu.strided_load %arg16[%c5_225, %c5_226, %c0_227] {strides = array<i32: 2, 2, 1>} : memref<20x20x8xf32, #tpu.memory_space<vmem>>, vector<8x8x8xf32>
    %243 = vector.shape_cast %242 : vector<8x8x8xf32> to vector<64x8xf32>
    %244 = arith.truncf %243 : vector<64x8xf32> to vector<64x8xbf16>
    %c0_228 = arith.constant 0 : index
    %c280 = arith.constant 280 : index
    %245 = vector.load %arg18[%c0_228, %c280] : memref<64x288xbf16, #tpu.memory_space<vmem>>, vector<64x8xbf16>
    tpu.vector_store %arg18[%c0_228, %c280], %244 {strides = array<i32>} : memref<64x288xbf16, #tpu.memory_space<vmem>>, vector<64x8xbf16>,
    %c0_229 = arith.constant 0 : index
    %c0_230 = arith.constant 0 : index
    %246 = vector.load %arg18[%c0_229, %c0_230] : memref<64x288xbf16, #tpu.memory_space<vmem>>, vector<64x288xbf16>
    %c0_231 = arith.constant 0 : index
    %c0_232 = arith.constant 0 : index
    %247 = vector.load %arg11[%c0_231, %c0_232] : memref<288x8xbf16, #tpu.memory_space<vmem>>, vector<288x8xbf16>
    %cst_233 = arith.constant dense<0.000000e+00> : vector<64x8xf32>
    %248 = tpu.matmul %246, %247, %cst_233 {dimension_numbers = #tpu.dot_dimension_numbers<[1], [0], [0], [1], [0, 0, 1, 1], [], []>} : vector<64x288xbf16>, vector<288x8xbf16>, vector<64x8xf32> -> vector<64x8xf32>
    %249 = vector.broadcast %21 : vector<1x8xf32> to vector<64x8xf32>
    %250 = arith.mulf %248, %249 : vector<64x8xf32>
    %c0_234 = arith.constant 0 : index
    %c0_235 = arith.constant 0 : index
    %251 = vector.load %arg12[%c0_234, %c0_235] : memref<1x8xf32, #tpu.memory_space<vmem>>, vector<1x8xf32>
    %252 = vector.broadcast %251 : vector<1x8xf32> to vector<64x8xf32>
    %253 = arith.addf %250, %252 : vector<64x8xf32>
    %cst_236 = arith.constant 0.000000e+00 : f32
    %254 = vector.broadcast %cst_236 : f32 to vector<64x8xf32>
    %255 = arith.cmpf oge, %253, %254 : vector<64x8xf32>
    %cst_237 = arith.constant 2.000000e-01 : f32
    %256 = vector.broadcast %cst_237 : f32 to vector<64x8xf32>
    %257 = arith.mulf %256, %253 : vector<64x8xf32>
    %258 = arith.select %255, %253, %257 : vector<64x8xi1>, vector<64x8xf32>
    %cst_238 = arith.constant 1.41421354 : f32
    %259 = vector.broadcast %cst_238 : f32 to vector<64x8xf32>
    %260 = arith.mulf %258, %259 : vector<64x8xf32>
    %c0_239 = arith.constant 0 : index
    %c0_240 = arith.constant 0 : index
    %c0_241 = arith.constant 0 : index
    %261 = tpu.strided_load %arg15[%c0_239, %c0_240, %c0_241] {strides = array<i32: 2, 2, 1>} : memref<18x18x4xf32, #tpu.memory_space<vmem>>, vector<8x8x4xf32>
    %262 = vector.shape_cast %261 : vector<8x8x4xf32> to vector<64x4xf32>
    %263 = arith.truncf %262 : vector<64x4xf32> to vector<64x4xbf16>
    %c0_242 = arith.constant 0 : index
    %c0_243 = arith.constant 0 : index
    %264 = vector.load %arg19[%c0_242, %c0_243] : memref<64x64xbf16, #tpu.memory_space<vmem>>, vector<64x4xbf16>
    tpu.vector_store %arg19[%c0_242, %c0_243], %263 {strides = array<i32>} : memref<64x64xbf16, #tpu.memory_space<vmem>>, vector<64x4xbf16>,
    %c0_244 = arith.constant 0 : index
    %c1_245 = arith.constant 1 : index
    %c0_246 = arith.constant 0 : index
    %265 = tpu.strided_load %arg15[%c0_244, %c1_245, %c0_246] {strides = array<i32: 2, 2, 1>} : memref<18x18x4xf32, #tpu.memory_space<vmem>>, vector<8x8x4xf32>
    %266 = vector.shape_cast %265 : vector<8x8x4xf32> to vector<64x4xf32>
    %267 = arith.truncf %266 : vector<64x4xf32> to vector<64x4xbf16>
    %c0_247 = arith.constant 0 : index
    %c4_248 = arith.constant 4 : index
    %268 = vector.load %arg19[%c0_247, %c4_248] : memref<64x64xbf16, #tpu.memory_space<vmem>>, vector<64x4xbf16>
    tpu.vector_store %arg19[%c0_247, %c4_248], %267 {strides = array<i32>} : memref<64x64xbf16, #tpu.memory_space<vmem>>, vector<64x4xbf16>,
    %c0_249 = arith.constant 0 : index
    %c2_250 = arith.constant 2 : index
    %c0_251 = arith.constant 0 : index
    %269 = tpu.strided_load %arg15[%c0_249, %c2_250, %c0_251] {strides = array<i32: 2, 2, 1>} : memref<18x18x4xf32, #tpu.memory_space<vmem>>, vector<8x8x4xf32>
    %270 = vector.shape_cast %269 : vector<8x8x4xf32> to vector<64x4xf32>
    %271 = arith.truncf %270 : vector<64x4xf32> to vector<64x4xbf16>
    %c0_252 = arith.constant 0 : index
    %c8_253 = arith.constant 8 : index
    %272 = vector.load %arg19[%c0_252, %c8_253] : memref<64x64xbf16, #tpu.memory_space<vmem>>, vector<64x4xbf16>
    tpu.vector_store %arg19[%c0_252, %c8_253], %271 {strides = array<i32>} : memref<64x64xbf16, #tpu.memory_space<vmem>>, vector<64x4xbf16>,
    %c0_254 = arith.constant 0 : index
    %c3_255 = arith.constant 3 : index
    %c0_256 = arith.constant 0 : index
    %273 = tpu.strided_load %arg15[%c0_254, %c3_255, %c0_256] {strides = array<i32: 2, 2, 1>} : memref<18x18x4xf32, #tpu.memory_space<vmem>>, vector<8x8x4xf32>
    %274 = vector.shape_cast %273 : vector<8x8x4xf32> to vector<64x4xf32>
    %275 = arith.truncf %274 : vector<64x4xf32> to vector<64x4xbf16>
    %c0_257 = arith.constant 0 : index
    %c12_258 = arith.constant 12 : index
    %276 = vector.load %arg19[%c0_257, %c12_258] : memref<64x64xbf16, #tpu.memory_space<vmem>>, vector<64x4xbf16>
    tpu.vector_store %arg19[%c0_257, %c12_258], %275 {strides = array<i32>} : memref<64x64xbf16, #tpu.memory_space<vmem>>, vector<64x4xbf16>,
    %c1_259 = arith.constant 1 : index
    %c0_260 = arith.constant 0 : index
    %c0_261 = arith.constant 0 : index
    %277 = tpu.strided_load %arg15[%c1_259, %c0_260, %c0_261] {strides = array<i32: 2, 2, 1>} : memref<18x18x4xf32, #tpu.memory_space<vmem>>, vector<8x8x4xf32>
    %278 = vector.shape_cast %277 : vector<8x8x4xf32> to vector<64x4xf32>
    %279 = arith.truncf %278 : vector<64x4xf32> to vector<64x4xbf16>
    %c0_262 = arith.constant 0 : index
    %c16_263 = arith.constant 16 : index
    %280 = vector.load %arg19[%c0_262, %c16_263] : memref<64x64xbf16, #tpu.memory_space<vmem>>, vector<64x4xbf16>
    tpu.vector_store %arg19[%c0_262, %c16_263], %279 {strides = array<i32>} : memref<64x64xbf16, #tpu.memory_space<vmem>>, vector<64x4xbf16>,
    %c1_264 = arith.constant 1 : index
    %c1_265 = arith.constant 1 : index
    %c0_266 = arith.constant 0 : index
    %281 = tpu.strided_load %arg15[%c1_264, %c1_265, %c0_266] {strides = array<i32: 2, 2, 1>} : memref<18x18x4xf32, #tpu.memory_space<vmem>>, vector<8x8x4xf32>
    %282 = vector.shape_cast %281 : vector<8x8x4xf32> to vector<64x4xf32>
    %283 = arith.truncf %282 : vector<64x4xf32> to vector<64x4xbf16>
    %c0_267 = arith.constant 0 : index
    %c20_268 = arith.constant 20 : index
    %284 = vector.load %arg19[%c0_267, %c20_268] : memref<64x64xbf16, #tpu.memory_space<vmem>>, vector<64x4xbf16>
    tpu.vector_store %arg19[%c0_267, %c20_268], %283 {strides = array<i32>} : memref<64x64xbf16, #tpu.memory_space<vmem>>, vector<64x4xbf16>,
    %c1_269 = arith.constant 1 : index
    %c2_270 = arith.constant 2 : index
    %c0_271 = arith.constant 0 : index
    %285 = tpu.strided_load %arg15[%c1_269, %c2_270, %c0_271] {strides = array<i32: 2, 2, 1>} : memref<18x18x4xf32, #tpu.memory_space<vmem>>, vector<8x8x4xf32>
    %286 = vector.shape_cast %285 : vector<8x8x4xf32> to vector<64x4xf32>
    %287 = arith.truncf %286 : vector<64x4xf32> to vector<64x4xbf16>
    %c0_272 = arith.constant 0 : index
    %c24_273 = arith.constant 24 : index
    %288 = vector.load %arg19[%c0_272, %c24_273] : memref<64x64xbf16, #tpu.memory_space<vmem>>, vector<64x4xbf16>
    tpu.vector_store %arg19[%c0_272, %c24_273], %287 {strides = array<i32>} : memref<64x64xbf16, #tpu.memory_space<vmem>>, vector<64x4xbf16>,
    %c1_274 = arith.constant 1 : index
    %c3_275 = arith.constant 3 : index
    %c0_276 = arith.constant 0 : index
    %289 = tpu.strided_load %arg15[%c1_274, %c3_275, %c0_276] {strides = array<i32: 2, 2, 1>} : memref<18x18x4xf32, #tpu.memory_space<vmem>>, vector<8x8x4xf32>
    %290 = vector.shape_cast %289 : vector<8x8x4xf32> to vector<64x4xf32>
    %291 = arith.truncf %290 : vector<64x4xf32> to vector<64x4xbf16>
    %c0_277 = arith.constant 0 : index
    %c28_278 = arith.constant 28 : index
    %292 = vector.load %arg19[%c0_277, %c28_278] : memref<64x64xbf16, #tpu.memory_space<vmem>>, vector<64x4xbf16>
    tpu.vector_store %arg19[%c0_277, %c28_278], %291 {strides = array<i32>} : memref<64x64xbf16, #tpu.memory_space<vmem>>, vector<64x4xbf16>,
    %c2_279 = arith.constant 2 : index
    %c0_280 = arith.constant 0 : index
    %c0_281 = arith.constant 0 : index
    %293 = tpu.strided_load %arg15[%c2_279, %c0_280, %c0_281] {strides = array<i32: 2, 2, 1>} : memref<18x18x4xf32, #tpu.memory_space<vmem>>, vector<8x8x4xf32>
    %294 = vector.shape_cast %293 : vector<8x8x4xf32> to vector<64x4xf32>
    %295 = arith.truncf %294 : vector<64x4xf32> to vector<64x4xbf16>
    %c0_282 = arith.constant 0 : index
    %c32_283 = arith.constant 32 : index
    %296 = vector.load %arg19[%c0_282, %c32_283] : memref<64x64xbf16, #tpu.memory_space<vmem>>, vector<64x4xbf16>
    tpu.vector_store %arg19[%c0_282, %c32_283], %295 {strides = array<i32>} : memref<64x64xbf16, #tpu.memory_space<vmem>>, vector<64x4xbf16>,
    %c2_284 = arith.constant 2 : index
    %c1_285 = arith.constant 1 : index
    %c0_286 = arith.constant 0 : index
    %297 = tpu.strided_load %arg15[%c2_284, %c1_285, %c0_286] {strides = array<i32: 2, 2, 1>} : memref<18x18x4xf32, #tpu.memory_space<vmem>>, vector<8x8x4xf32>
    %298 = vector.shape_cast %297 : vector<8x8x4xf32> to vector<64x4xf32>
    %299 = arith.truncf %298 : vector<64x4xf32> to vector<64x4xbf16>
    %c0_287 = arith.constant 0 : index
    %c36 = arith.constant 36 : index
    %300 = vector.load %arg19[%c0_287, %c36] : memref<64x64xbf16, #tpu.memory_space<vmem>>, vector<64x4xbf16>
    tpu.vector_store %arg19[%c0_287, %c36], %299 {strides = array<i32>} : memref<64x64xbf16, #tpu.memory_space<vmem>>, vector<64x4xbf16>,
    %c2_288 = arith.constant 2 : index
    %c2_289 = arith.constant 2 : index
    %c0_290 = arith.constant 0 : index
    %301 = tpu.strided_load %arg15[%c2_288, %c2_289, %c0_290] {strides = array<i32: 2, 2, 1>} : memref<18x18x4xf32, #tpu.memory_space<vmem>>, vector<8x8x4xf32>
    %302 = vector.shape_cast %301 : vector<8x8x4xf32> to vector<64x4xf32>
    %303 = arith.truncf %302 : vector<64x4xf32> to vector<64x4xbf16>
    %c0_291 = arith.constant 0 : index
    %c40_292 = arith.constant 40 : index
    %304 = vector.load %arg19[%c0_291, %c40_292] : memref<64x64xbf16, #tpu.memory_space<vmem>>, vector<64x4xbf16>
    tpu.vector_store %arg19[%c0_291, %c40_292], %303 {strides = array<i32>} : memref<64x64xbf16, #tpu.memory_space<vmem>>, vector<64x4xbf16>,
    %c2_293 = arith.constant 2 : index
    %c3_294 = arith.constant 3 : index
    %c0_295 = arith.constant 0 : index
    %305 = tpu.strided_load %arg15[%c2_293, %c3_294, %c0_295] {strides = array<i32: 2, 2, 1>} : memref<18x18x4xf32, #tpu.memory_space<vmem>>, vector<8x8x4xf32>
    %306 = vector.shape_cast %305 : vector<8x8x4xf32> to vector<64x4xf32>
    %307 = arith.truncf %306 : vector<64x4xf32> to vector<64x4xbf16>
    %c0_296 = arith.constant 0 : index
    %c44 = arith.constant 44 : index
    %308 = vector.load %arg19[%c0_296, %c44] : memref<64x64xbf16, #tpu.memory_space<vmem>>, vector<64x4xbf16>
    tpu.vector_store %arg19[%c0_296, %c44], %307 {strides = array<i32>} : memref<64x64xbf16, #tpu.memory_space<vmem>>, vector<64x4xbf16>,
    %c3_297 = arith.constant 3 : index
    %c0_298 = arith.constant 0 : index
    %c0_299 = arith.constant 0 : index
    %309 = tpu.strided_load %arg15[%c3_297, %c0_298, %c0_299] {strides = array<i32: 2, 2, 1>} : memref<18x18x4xf32, #tpu.memory_space<vmem>>, vector<8x8x4xf32>
    %310 = vector.shape_cast %309 : vector<8x8x4xf32> to vector<64x4xf32>
    %311 = arith.truncf %310 : vector<64x4xf32> to vector<64x4xbf16>
    %c0_300 = arith.constant 0 : index
    %c48_301 = arith.constant 48 : index
    %312 = vector.load %arg19[%c0_300, %c48_301] : memref<64x64xbf16, #tpu.memory_space<vmem>>, vector<64x4xbf16>
    tpu.vector_store %arg19[%c0_300, %c48_301], %311 {strides = array<i32>} : memref<64x64xbf16, #tpu.memory_space<vmem>>, vector<64x4xbf16>,
    %c3_302 = arith.constant 3 : index
    %c1_303 = arith.constant 1 : index
    %c0_304 = arith.constant 0 : index
    %313 = tpu.strided_load %arg15[%c3_302, %c1_303, %c0_304] {strides = array<i32: 2, 2, 1>} : memref<18x18x4xf32, #tpu.memory_space<vmem>>, vector<8x8x4xf32>
    %314 = vector.shape_cast %313 : vector<8x8x4xf32> to vector<64x4xf32>
    %315 = arith.truncf %314 : vector<64x4xf32> to vector<64x4xbf16>
    %c0_305 = arith.constant 0 : index
    %c52 = arith.constant 52 : index
    %316 = vector.load %arg19[%c0_305, %c52] : memref<64x64xbf16, #tpu.memory_space<vmem>>, vector<64x4xbf16>
    tpu.vector_store %arg19[%c0_305, %c52], %315 {strides = array<i32>} : memref<64x64xbf16, #tpu.memory_space<vmem>>, vector<64x4xbf16>,
    %c3_306 = arith.constant 3 : index
    %c2_307 = arith.constant 2 : index
    %c0_308 = arith.constant 0 : index
    %317 = tpu.strided_load %arg15[%c3_306, %c2_307, %c0_308] {strides = array<i32: 2, 2, 1>} : memref<18x18x4xf32, #tpu.memory_space<vmem>>, vector<8x8x4xf32>
    %318 = vector.shape_cast %317 : vector<8x8x4xf32> to vector<64x4xf32>
    %319 = arith.truncf %318 : vector<64x4xf32> to vector<64x4xbf16>
    %c0_309 = arith.constant 0 : index
    %c56_310 = arith.constant 56 : index
    %320 = vector.load %arg19[%c0_309, %c56_310] : memref<64x64xbf16, #tpu.memory_space<vmem>>, vector<64x4xbf16>
    tpu.vector_store %arg19[%c0_309, %c56_310], %319 {strides = array<i32>} : memref<64x64xbf16, #tpu.memory_space<vmem>>, vector<64x4xbf16>,
    %c3_311 = arith.constant 3 : index
    %c3_312 = arith.constant 3 : index
    %c0_313 = arith.constant 0 : index
    %321 = tpu.strided_load %arg15[%c3_311, %c3_312, %c0_313] {strides = array<i32: 2, 2, 1>} : memref<18x18x4xf32, #tpu.memory_space<vmem>>, vector<8x8x4xf32>
    %322 = vector.shape_cast %321 : vector<8x8x4xf32> to vector<64x4xf32>
    %323 = arith.truncf %322 : vector<64x4xf32> to vector<64x4xbf16>
    %c0_314 = arith.constant 0 : index
    %c60 = arith.constant 60 : index
    %324 = vector.load %arg19[%c0_314, %c60] : memref<64x64xbf16, #tpu.memory_space<vmem>>, vector<64x4xbf16>
    tpu.vector_store %arg19[%c0_314, %c60], %323 {strides = array<i32>} : memref<64x64xbf16, #tpu.memory_space<vmem>>, vector<64x4xbf16>,
    %c0_315 = arith.constant 0 : index
    %c0_316 = arith.constant 0 : index
    %325 = vector.load %arg19[%c0_315, %c0_316] : memref<64x64xbf16, #tpu.memory_space<vmem>>, vector<64x64xbf16>
    %c0_317 = arith.constant 0 : index
    %c0_318 = arith.constant 0 : index
    %326 = vector.load %arg13[%c0_317, %c0_318] : memref<64x8xbf16, #tpu.memory_space<vmem>>, vector<64x8xbf16>
    %cst_319 = arith.constant dense<0.000000e+00> : vector<64x8xf32>
    %327 = tpu.matmul %325, %326, %cst_319 {dimension_numbers = #tpu.dot_dimension_numbers<[1], [0], [0], [1], [0, 0, 1, 1], [], []>} : vector<64x64xbf16>, vector<64x8xbf16>, vector<64x8xf32> -> vector<64x8xf32>
    %328 = arith.addf %260, %327 : vector<64x8xf32>
    %cst_320 = arith.constant 0.707106769 : f32
    %329 = vector.broadcast %cst_320 : f32 to vector<64x8xf32>
    %330 = arith.mulf %328, %329 : vector<64x8xf32>
    %331 = vector.shape_cast %330 : vector<64x8xf32> to vector<1x8x8x8xf32>
    %c0_321 = arith.constant 0 : index
    %c0_322 = arith.constant 0 : index
    %c0_323 = arith.constant 0 : index
    %c0_324 = arith.constant 0 : index
    %332 = vector.load %arg14[%c0_321, %c0_322, %c0_323, %c0_324] : memref<1x8x8x8xf32, #tpu.memory_space<vmem>>, vector<1x8x8x8xf32>
    tpu.vector_store %arg14[%c0_321, %c0_322, %c0_323, %c0_324], %331 {strides = array<i32>} : memref<1x8x8x8xf32, #tpu.memory_space<vmem>>, vector<1x8x8x8xf32>,
    return
  }
  func.func @transform_0(%arg0: i32) -> (i32, i32, i32) {
    %c0_i32 = arith.constant 0 : i32
    %c0_i32_0 = arith.constant 0 : i32
    %c0_i32_1 = arith.constant 0 : i32
    return %arg0, %c0_i32, %c0_i32_0 : i32, i32, i32
  }
  func.func @transform_1(%arg0: i32) -> (i32, i32, i32, i32) {
    %c0_i32 = arith.constant 0 : i32
    %c0_i32_0 = arith.constant 0 : i32
    %c0_i32_1 = arith.constant 0 : i32
    %c0_i32_2 = arith.constant 0 : i32
    return %arg0, %c0_i32, %c0_i32_0, %c0_i32_1 : i32, i32, i32, i32
  }
  func.func @transform_2(%arg0: i32) -> (i32, i32) {
    %c0_i32 = arith.constant 0 : i32
    %c0_i32_0 = arith.constant 0 : i32
    %c0_i32_1 = arith.constant 0 : i32
    return %c0_i32, %c0_i32_0 : i32, i32
  }
  func.func @transform_3(%arg0: i32) -> (i32, i32) {
    %c0_i32 = arith.constant 0 : i32
    %c0_i32_0 = arith.constant 0 : i32
    %c0_i32_1 = arith.constant 0 : i32
    return %c0_i32, %c0_i32_0 : i32, i32
  }
  func.func @transform_4(%arg0: i32) -> (i32, i32) {
    %c0_i32 = arith.constant 0 : i32
    %c0_i32_0 = arith.constant 0 : i32
    %c0_i32_1 = arith.constant 0 : i32
    return %c0_i32, %c0_i32_0 : i32, i32
  }
  func.func @transform_5(%arg0: i32) -> (i32, i32) {
    %c0_i32 = arith.constant 0 : i32
    %c0_i32_0 = arith.constant 0 : i32
    %c0_i32_1 = arith.constant 0 : i32
    return %c0_i32, %c0_i32_0 : i32, i32
  }
  func.func @transform_6(%arg0: i32) -> (i32, i32) {
    %c0_i32 = arith.constant 0 : i32
    %c0_i32_0 = arith.constant 0 : i32
    %c0_i32_1 = arith.constant 0 : i32
    return %c0_i32, %c0_i32_0 : i32, i32
  }
  func.func @transform_7(%arg0: i32) -> (i32, i32) {
    %c0_i32 = arith.constant 0 : i32
    %c0_i32_0 = arith.constant 0 : i32
    %c0_i32_1 = arith.constant 0 : i32
    return %c0_i32, %c0_i32_0 : i32, i32
  }
  func.func @transform_8(%arg0: i32) -> (i32, i32) {
    %c0_i32 = arith.constant 0 : i32
    %c0_i32_0 = arith.constant 0 : i32
    %c0_i32_1 = arith.constant 0 : i32
    return %c0_i32, %c0_i32_0 : i32, i32
  }
  func.func @transform_9(%arg0: i32) -> (i32, i32) {
    %c0_i32 = arith.constant 0 : i32
    %c0_i32_0 = arith.constant 0 : i32
    %c0_i32_1 = arith.constant 0 : i32
    return %c0_i32, %c0_i32_0 : i32, i32
  }
  func.func @transform_10(%arg0: i32) -> (i32, i32) {
    %c0_i32 = arith.constant 0 : i32
    %c0_i32_0 = arith.constant 0 : i32
    %c0_i32_1 = arith.constant 0 : i32
    return %c0_i32, %c0_i32_0 : i32, i32
  }
  func.func @transform_11(%arg0: i32) -> (i32, i32) {
    %c0_i32 = arith.constant 0 : i32
    %c0_i32_0 = arith.constant 0 : i32
    %c0_i32_1 = arith.constant 0 : i32
    return %c0_i32, %c0_i32_0 : i32, i32
  }
  func.func @transform_12(%arg0: i32) -> (i32, i32) {
    %c0_i32 = arith.constant 0 : i32
    %c0_i32_0 = arith.constant 0 : i32
    %c0_i32_1 = arith.constant 0 : i32
    return %c0_i32, %c0_i32_0 : i32, i32
  }
  func.func @transform_13(%arg0: i32) -> (i32, i32, i32, i32) {
    %c0_i32 = arith.constant 0 : i32
    %c0_i32_0 = arith.constant 0 : i32
    %c0_i32_1 = arith.constant 0 : i32
    %c0_i32_2 = arith.constant 0 : i32
    return %arg0, %c0_i32, %c0_i32_0, %c0_i32_1 : i32, i32, i32, i32
  }
}

</mosaic_0001>

<llo_original>
// kernel: reverse
$region0: #{reverse}
  %s0 = inlined_call_operand.vmem [shape: f32[4,4], index: 0, kind: input, shape index: {}]
  %s1 = inlined_call_operand.vmem [shape: f32[4,4], index: 1, kind: output, shape index: {}]
  %v2 = vlaneseq
  %v3 = vsub.s32 3, %v2
  %4 = vset.pattern.permute.xlu0 %v3
  $region1: #{reverse} parent=0
    #allocation0 [shape = 'u8[8192]{0}', space=vmem, size = 0x2000, scoped, tag = 'operand span for operand 0']
    #allocation1 [shape = 'u8[4096]{0}', space=vmem, size = 0x1000, scoped, tag = 'packed  for operand 0']
    #allocation2 [shape = 'u8[4096]{0}', space=vmem, size = 0x1000, scoped, tag = 'operand span for operand 1']
    #allocation3 [shape = 'u8[2048]{0}', space=vmem, size = 0x800, scoped, tag = 'packed  for operand 1']
    %s5 = scalar_lea.vmem [#allocation1], 4
    // Predicated region
    $region2: #{reverse} parent=1 // pred_check
      _
    $region3: #{reverse} parent=1 // pred_check_branch
      %7 = sbr.rel (0) target = $region5
    $region4: #{reverse} parent=1 // pred_region
      // Predicated region
      $region6: #{reverse} parent=4 // pred_check
        _
      $region7: #{reverse} parent=4 // pred_check_branch
        %9 = sbr.rel target = $region9
      $region8: #{reverse} parent=4 // pred_region
        // Predicated region
        $region21: #{reverse} parent=8 // pred_check
          _
        $region22: #{reverse} parent=8 // pred_check_branch
          %25 = sbr.rel (0) target = $region24
        $region23: #{reverse} parent=8 // pred_region
          %s27 = ssub.s32 16, 1
          loop: start=0, step=1, limit=1
          $region25: #{reverse} parent=23 // loop_pre_header
            _
          $region26: #{reverse} parent=23 // loop_header
            %s29 = sphi 0, %s33
            %p30 = scmp.ge.s32.totalorder %s29, 1
            %s34 = sphi %s0, %s0
            %s35 = sphi %s5, %s5
          $region27: #{reverse} parent=23 // loop_header_branch
            %32 = sbr.rel (%p30) target = $region31
          $region28: #{reverse} parent=23 // loop_body
            %v36 = vld [vmem:[%s34] sm:%s27]
            %37 = vst [vmem:[%s35] sm:%s27] %v36
          $region29: #{reverse} parent=23 // loop_footer
            %s33 = sadd.s32 1, %s29
          $region30: #{reverse} parent=23 // loop_footer_branch
            %28 = sbr.rel target = $region26
          $region31: #{reverse} parent=23 // loop_exit
            _
        $region24: #{reverse} parent=8 // pred_fallthru
          _
      $region9: #{reverse} parent=4 // pred_fallthru
        _
      // Predicated region
      $region10: #{reverse} parent=4 // pred_check
        _
      $region11: #{reverse} parent=4 // pred_check_branch
        %11 = sbr.rel (0) target = $region13
      $region12: #{reverse} parent=4 // pred_region
        %s13 = ssub.s32 16, 1
        loop: start=0, step=1, limit=1
        $region14: #{reverse} parent=12 // loop_pre_header
          _
        $region15: #{reverse} parent=12 // loop_header
          %s15 = sphi 0, %s19
          %p16 = scmp.ge.s32.totalorder %s15, 1
          %s20 = sphi %s0, %s0
          %s21 = sphi %s5, %s5
        $region16: #{reverse} parent=12 // loop_header_branch
          %18 = sbr.rel (%p16) target = $region20
        $region17: #{reverse} parent=12 // loop_body
          %v22 = vld [vmem:[%s20] sm:%s13]
          %23 = vst [vmem:[%s21] sm:%s13] %v22
        $region18: #{reverse} parent=12 // loop_footer
          %s19 = sadd.s32 1, %s15
        $region19: #{reverse} parent=12 // loop_footer_branch
          %14 = sbr.rel target = $region15
        $region20: #{reverse} parent=12 // loop_exit
          _
      $region13: #{reverse} parent=4 // pred_fallthru
        _
    $region5: #{reverse} parent=1 // pred_fallthru
      _
    %38 = vnop
    %s40 = ssub.s32 16, 1
    %s41 = scalar_lea.vmem [#allocation1], 4
    %v42 = vld [vmem:[%s41] sm:%s40]
    %s43 = scalar_lea.vmem [#allocation0], 8
    %44 = vst [vmem:[%s43] sm:%s40] %v42
    %v45 = vld [vmem:[#allocation1] sm:%s40]
    %46 = vst [vmem:[#allocation0] sm:%s40] %v45
    %s47 = scalar_lea.vmem [#allocation0], 7
    %v48 = vld [vmem:[%s47] ss:$-1 sm:$0xff]
    %v49 = vrot.slane %v48, 4
    %50 = vperm.xlu0 %4, %v49
    %v51 = vpop.permute.xlu0 %50
    %52 = vst [vmem:[#allocation2] sm:$0xff] %v51
    %s53 = scalar_lea.vmem [#allocation0], 8
    %s54 = scalar_lea.vmem %s53, 7 [#allocation0]
    %v55 = vld [vmem:[%s54] ss:$-1 sm:$0xff]
    %v56 = vrot.slane %v55, 4
    %57 = vperm.xlu0 %4, %v56
    %v58 = vpop.permute.xlu0 %57
    %v59 = vlaneseq
    %v60 = vshrl.u32 %v59, 7
    %vm61 = vcmp.lt.s32.totalorder %v60, 4
    %62 = vst.msk [vmem:[#allocation2] sm:$0xff] %vm61, %v58
    %s64 = ssub.s32 16, 1
    %v65 = vld [vmem:[#allocation2] sm:%s64]
    %s67 = ssub.s32 16, 1
    %68 = vst [vmem:[#allocation3] sm:%s67] %v65
    // Predicated region
    $region32: #{reverse} parent=1 // pred_check
      _
    $region33: #{reverse} parent=1 // pred_check_branch
      %70 = sbr.rel (0) target = $region35
    $region34: #{reverse} parent=1 // pred_region
      // Predicated region
      $region36: #{reverse} parent=34 // pred_check
        _
      $region37: #{reverse} parent=34 // pred_check_branch
        %72 = sbr.rel target = $region39
      $region38: #{reverse} parent=34 // pred_region
        // Predicated region
        $region51: #{reverse} parent=38 // pred_check
          _
        $region52: #{reverse} parent=38 // pred_check_branch
          %88 = sbr.rel (0) target = $region54
        $region53: #{reverse} parent=38 // pred_region
          %s90 = ssub.s32 16, 1
          loop: start=0, step=1, limit=1
          $region55: #{reverse} parent=53 // loop_pre_header
            _
          $region56: #{reverse} parent=53 // loop_header
            %s92 = sphi 0, %s96
            %p93 = scmp.ge.s32.totalorder %s92, 1
            %s97 = sphi [#allocation3], [#allocation3]
            %s98 = sphi %s1, %s1
          $region57: #{reverse} parent=53 // loop_header_branch
            %95 = sbr.rel (%p93) target = $region61
          $region58: #{reverse} parent=53 // loop_body
            %v99 = vld [vmem:[%s97] sm:%s90]
            %100 = vst [vmem:[%s98] sm:%s90] %v99
          $region59: #{reverse} parent=53 // loop_footer
            %s96 = sadd.s32 1, %s92
          $region60: #{reverse} parent=53 // loop_footer_branch
            %91 = sbr.rel target = $region56
          $region61: #{reverse} parent=53 // loop_exit
            _
        $region54: #{reverse} parent=38 // pred_fallthru
          _
      $region39: #{reverse} parent=34 // pred_fallthru
        _
      // Predicated region
      $region40: #{reverse} parent=34 // pred_check
        _
      $region41: #{reverse} parent=34 // pred_check_branch
        %74 = sbr.rel (0) target = $region43
      $region42: #{reverse} parent=34 // pred_region
        %s76 = ssub.s32 16, 1
        loop: start=0, step=1, limit=1
        $region44: #{reverse} parent=42 // loop_pre_header
          _
        $region45: #{reverse} parent=42 // loop_header
          %s78 = sphi 0, %s82
          %p79 = scmp.ge.s32.totalorder %s78, 1
          %s83 = sphi [#allocation3], [#allocation3]
          %s84 = sphi %s1, %s1
        $region46: #{reverse} parent=42 // loop_header_branch
          %81 = sbr.rel (%p79) target = $region50
        $region47: #{reverse} parent=42 // loop_body
          %v85 = vld [vmem:[%s83] sm:%s76]
          %86 = vst [vmem:[%s84] sm:%s76] %v85
        $region48: #{reverse} parent=42 // loop_footer
          %s82 = sadd.s32 1, %s78
        $region49: #{reverse} parent=42 // loop_footer_branch
          %77 = sbr.rel target = $region45
        $region50: #{reverse} parent=42 // loop_exit
          _
      $region43: #{reverse} parent=34 // pred_fallthru
        _
    $region35: #{reverse} parent=1 // pred_fallthru
      _
    %101 = vnop

// kernel: styled_resblock2_forward.1
$region0: #{styled_resblock2_forward.1}
  #allocation0 [shape = 'u32[]', space=smem, size = 0x4, offset = 0x4, fixed_abs, tag = 'smem constant byte address 0x4 - core index']
  #allocation1 [shape = 'u32[72,128]{1,0:T(1,128)}', space=vmem, size = 0x9000, scoped, tag = 'internal scratch']
  #allocation2 [shape = 'f32[18,18,4]{2,1,0:T(8,128)}', space=vmem, size = 0x36000, scoped, tag = 'scratch operand']
  #allocation3 [shape = 'f32[20,20,8]{2,1,0:T(8,128)}', space=vmem, size = 0x3c000, scoped, tag = 'scratch operand']
  #allocation4 [shape = 'bf16[256,36]{1,0:T(8,128)(2,1)}', space=vmem, size = 0x10000, scoped, tag = 'scratch operand']
  #allocation5 [shape = 'bf16[64,288]{1,0:T(8,128)(2,1)}', space=vmem, size = 0xc000, scoped, tag = 'scratch operand']
  #allocation6 [shape = 'bf16[64,64]{1,0:T(8,128)(2,1)}', space=vmem, size = 0x4000, scoped, tag = 'scratch operand']
  %s0 = inlined_call_operand.vmem [shape: f32[2,1,32], index: 0, kind: input, shape index: {}]
  %s1 = inlined_call_operand.vmem [shape: f32[2,16,16,4], index: 1, kind: input, shape index: {}]
  %s2 = inlined_call_operand.vmem [shape: f32[32,4], index: 2, kind: input, shape index: {}]
  %s3 = inlined_call_operand.vmem [shape: f32[1,4], index: 3, kind: input, shape index: {}]
  %s4 = inlined_call_operand.vmem [shape: f32[4,8], index: 4, kind: input, shape index: {}]
  %s5 = inlined_call_operand.vmem [shape: bf16[36,8], index: 5, kind: input, shape index: {}]
  %s6 = inlined_call_operand.vmem [shape: f32[1,8], index: 6, kind: input, shape index: {}]
  %s7 = inlined_call_operand.vmem [shape: f32[32,8], index: 7, kind: input, shape index: {}]
  %s8 = inlined_call_operand.vmem [shape: f32[1,8], index: 8, kind: input, shape index: {}]
  %s9 = inlined_call_operand.vmem [shape: f32[8,8], index: 9, kind: input, shape index: {}]
  %s10 = inlined_call_operand.vmem [shape: bf16[288,8], index: 10, kind: input, shape index: {}]
  %s11 = inlined_call_operand.vmem [shape: f32[1,8], index: 11, kind: input, shape index: {}]
  %s12 = inlined_call_operand.vmem [shape: bf16[64,8], index: 12, kind: input, shape index: {}]
  %s13 = inlined_call_operand.vmem [shape: f32[2,8,8,8], index: 13, kind: output, shape index: {}]
  %s14 = sld [smem:[#allocation0]]
  $region85: #{styled_resblock2_forward.1} parent=0
    _
  %s16 = ssub.s32 1, %s14
  %s17 = scalar_select 0, %s16, %s14
  loop: start=0, step=1, limit=4
  $region2: #{styled_resblock2_forward.1} parent=0 // loop_pre_header
    _
  $region3: #{styled_resblock2_forward.1} parent=0 // loop_header
    %s19 = sphi 0, %s23
    %p20 = scmp.ge.s32.totalorder %s19, 4
    %s29 = sphi 0, %s31
    %s32 = sphi 0, %s29
    %s33 = sphi 0, %s32
    %s49 = sphi 0, %s33
    %s55 = sphi 0, %s57
    %s58 = sphi 0, %s55
    %s59 = sphi 0, %s58
    %s75 = sphi 0, %s59
    %s79 = sphi 0, %s79
    %s81 = sphi 0, %s79
    %s82 = sphi 0, %s81
    %s96 = sphi 0, %s82
    %s100 = sphi 0, %s100
    %s102 = sphi 0, %s100
    %s103 = sphi 0, %s102
    %s117 = sphi 0, %s103
    %s121 = sphi 0, %s121
    %s123 = sphi 0, %s121
    %s124 = sphi 0, %s123
    %s138 = sphi 0, %s124
    %s142 = sphi 0, %s142
    %s144 = sphi 0, %s142
    %s145 = sphi 0, %s144
    %s159 = sphi 0, %s145
    %s163 = sphi 0, %s163
    %s165 = sphi 0, %s163
    %s166 = sphi 0, %s165
    %s180 = sphi 0, %s166
    %s184 = sphi 0, %s184
    %s186 = sphi 0, %s184
    %s187 = sphi 0, %s186
    %s201 = sphi 0, %s187
    %s205 = sphi 0, %s205
    %s207 = sphi 0, %s205
    %s208 = sphi 0, %s207
    %s222 = sphi 0, %s208
    %s226 = sphi 0, %s226
    %s228 = sphi 0, %s226
    %s229 = sphi 0, %s228
    %s243 = sphi 0, %s229
    %s247 = sphi 0, %s247
    %s249 = sphi 0, %s247
    %s250 = sphi 0, %s249
    %s264 = sphi 0, %s250
    %s268 = sphi 0, %s268
    %s270 = sphi 0, %s268
    %s271 = sphi 0, %s270
    %s285 = sphi 0, %s271
    %s289 = sphi 0, %s289
    %s291 = sphi 0, %s289
    %s292 = sphi 0, %s291
    %s306 = sphi 0, %s292
    %s312 = sphi 0, %s314
    %s315 = sphi 0, %s312
    %s316 = sphi 0, %s315
    %s332 = sphi 0, %s316
  $region4: #{styled_resblock2_forward.1} parent=0 // loop_header_branch
    %22 = sbr.rel (%p20) target = $region8
  $region5: #{styled_resblock2_forward.1} parent=0 // loop_body
    %s24 = ssub.s32 %s19, 1
    %s25 = ssub.s32 %s19, 2
    %s26 = sadd.s32 %s19, 1
    %s27 = ssub.s32 %s19, %s26
    %p28 = scmp.eq.s32.totalorder %s27, 0
    %s30 = sadd.s32 %s29, 1
    %s31 = scalar_select %p28, %s29, %s30
    %p34 = pneg %p28
    %p35 = scmp.eq.s32.totalorder %s19, 1
    %p36 = por %p34, %p35
    %p37 = scmp.ne.s32.totalorder %s29, %s32
    %p38 = scmp.eq.s32.totalorder %s19, 0
    %p39 = por %p37, %p38
    %p40 = scmp.ne.s32.totalorder %s29, %s32
    %p41 = scmp.eq.s32.totalorder %s24, 1
    %p42 = por %p40, %p41
    %p43 = scmp.ne.s32.totalorder %s32, %s33
    %p44 = scmp.eq.s32.totalorder %s24, 0
    %p45 = por %p43, %p44
    %p46 = scmp.ne.s32.totalorder %s32, %s33
    %p47 = scmp.eq.s32.totalorder %s25, 1
    %p48 = por %p46, %p47
    %p50 = scmp.ne.s32.totalorder %s33, %s49
    %p51 = scmp.eq.s32.totalorder %s25, 0
    %p52 = por %p50, %p51
    %s53 = ssub.s32 %s19, %s26
    %p54 = scmp.eq.s32.totalorder %s53, 0
    %s56 = sadd.s32 %s55, 1
    %s57 = scalar_select %p54, %s55, %s56
    %p60 = pneg %p54
    %p61 = scmp.eq.s32.totalorder %s19, 1
    %p62 = por %p60, %p61
    %p63 = scmp.ne.s32.totalorder %s55, %s58
    %p64 = scmp.eq.s32.totalorder %s19, 0
    %p65 = por %p63, %p64
    %p66 = scmp.ne.s32.totalorder %s55, %s58
    %p67 = scmp.eq.s32.totalorder %s24, 1
    %p68 = por %p66, %p67
    %p69 = scmp.ne.s32.totalorder %s58, %s59
    %p70 = scmp.eq.s32.totalorder %s24, 0
    %p71 = por %p69, %p70
    %p72 = scmp.ne.s32.totalorder %s58, %s59
    %p73 = scmp.eq.s32.totalorder %s25, 1
    %p74 = por %p72, %p73
    %p76 = scmp.ne.s32.totalorder %s59, %s75
    %p77 = scmp.eq.s32.totalorder %s25, 0
    %p78 = por %p76, %p77
    %s80 = sadd.s32 %s79, 1
    %p83 = scmp.eq.s32.totalorder %s19, 1
    %p84 = scmp.ne.s32.totalorder %s79, %s81
    %p85 = scmp.eq.s32.totalorder %s19, 0
    %p86 = por %p84, %p85
    %p87 = scmp.ne.s32.totalorder %s79, %s81
    %p88 = scmp.eq.s32.totalorder %s24, 1
    %p89 = por %p87, %p88
    %p90 = scmp.ne.s32.totalorder %s81, %s82
    %p91 = scmp.eq.s32.totalorder %s24, 0
    %p92 = por %p90, %p91
    %p93 = scmp.ne.s32.totalorder %s81, %s82
    %p94 = scmp.eq.s32.totalorder %s25, 1
    %p95 = por %p93, %p94
    %p97 = scmp.ne.s32.totalorder %s82, %s96
    %p98 = scmp.eq.s32.totalorder %s25, 0
    %p99 = por %p97, %p98
    %s101 = sadd.s32 %s100, 1
    %p104 = scmp.eq.s32.totalorder %s19, 1
    %p105 = scmp.ne.s32.totalorder %s100, %s102
    %p106 = scmp.eq.s32.totalorder %s19, 0
    %p107 = por %p105, %p106
    %p108 = scmp.ne.s32.totalorder %s100, %s102
    %p109 = scmp.eq.s32.totalorder %s24, 1
    %p110 = por %p108, %p109
    %p111 = scmp.ne.s32.totalorder %s102, %s103
    %p112 = scmp.eq.s32.totalorder %s24, 0
    %p113 = por %p111, %p112
    %p114 = scmp.ne.s32.totalorder %s102, %s103
    %p115 = scmp.eq.s32.totalorder %s25, 1
    %p116 = por %p114, %p115
    %p118 = scmp.ne.s32.totalorder %s103, %s117
    %p119 = scmp.eq.s32.totalorder %s25, 0
    %p120 = por %p118, %p119
    %s122 = sadd.s32 %s121, 1
    %p125 = scmp.eq.s32.totalorder %s19, 1
    %p126 = scmp.ne.s32.totalorder %s121, %s123
    %p127 = scmp.eq.s32.totalorder %s19, 0
    %p128 = por %p126, %p127
    %p129 = scmp.ne.s32.totalorder %s121, %s123
    %p130 = scmp.eq.s32.totalorder %s24, 1
    %p131 = por %p129, %p130
    %p132 = scmp.ne.s32.totalorder %s123, %s124
    %p133 = scmp.eq.s32.totalorder %s24, 0
    %p134 = por %p132, %p133
    %p135 = scmp.ne.s32.totalorder %s123, %s124
    %p136 = scmp.eq.s32.totalorder %s25, 1
    %p137 = por %p135, %p136
    %p139 = scmp.ne.s32.totalorder %s124, %s138
    %p140 = scmp.eq.s32.totalorder %s25, 0
    %p141 = por %p139, %p140
    %s143 = sadd.s32 %s142, 1
    %p146 = scmp.eq.s32.totalorder %s19, 1
    %p147 = scmp.ne.s32.totalorder %s142, %s144
    %p148 = scmp.eq.s32.totalorder %s19, 0
    %p149 = por %p147, %p148
    %p150 = scmp.ne.s32.totalorder %s142, %s144
    %p151 = scmp.eq.s32.totalorder %s24, 1
    %p152 = por %p150, %p151
    %p153 = scmp.ne.s32.totalorder %s144, %s145
    %p154 = scmp.eq.s32.totalorder %s24, 0
    %p155 = por %p153, %p154
    %p156 = scmp.ne.s32.totalorder %s144, %s145
    %p157 = scmp.eq.s32.totalorder %s25, 1
    %p158 = por %p156, %p157
    %p160 = scmp.ne.s32.totalorder %s145, %s159
    %p161 = scmp.eq.s32.totalorder %s25, 0
    %p162 = por %p160, %p161
    %s164 = sadd.s32 %s163, 1
    %p167 = scmp.eq.s32.totalorder %s19, 1
    %p168 = scmp.ne.s32.totalorder %s163, %s165
    %p169 = scmp.eq.s32.totalorder %s19, 0
    %p170 = por %p168, %p169
    %p171 = scmp.ne.s32.totalorder %s163, %s165
    %p172 = scmp.eq.s32.totalorder %s24, 1
    %p173 = por %p171, %p172
    %p174 = scmp.ne.s32.totalorder %s165, %s166
    %p175 = scmp.eq.s32.totalorder %s24, 0
    %p176 = por %p174, %p175
    %p177 = scmp.ne.s32.totalorder %s165, %s166
    %p178 = scmp.eq.s32.totalorder %s25, 1
    %p179 = por %p177, %p178
    %p181 = scmp.ne.s32.totalorder %s166, %s180
    %p182 = scmp.eq.s32.totalorder %s25, 0
    %p183 = por %p181, %p182
    %s185 = sadd.s32 %s184, 1
    %p188 = scmp.eq.s32.totalorder %s19, 1
    %p189 = scmp.ne.s32.totalorder %s184, %s186
    %p190 = scmp.eq.s32.totalorder %s19, 0
    %p191 = por %p189, %p190
    %p192 = scmp.ne.s32.totalorder %s184, %s186
    %p193 = scmp.eq.s32.totalorder %s24, 1
    %p194 = por %p192, %p193
    %p195 = scmp.ne.s32.totalorder %s186, %s187
    %p196 = scmp.eq.s32.totalorder %s24, 0
    %p197 = por %p195, %p196
    %p198 = scmp.ne.s32.totalorder %s186, %s187
    %p199 = scmp.eq.s32.totalorder %s25, 1
    %p200 = por %p198, %p199
    %p202 = scmp.ne.s32.totalorder %s187, %s201
    %p203 = scmp.eq.s32.totalorder %s25, 0
    %p204 = por %p202, %p203
    %s206 = sadd.s32 %s205, 1
    %p209 = scmp.eq.s32.totalorder %s19, 1
    %p210 = scmp.ne.s32.totalorder %s205, %s207
    %p211 = scmp.eq.s32.totalorder %s19, 0
    %p212 = por %p210, %p211
    %p213 = scmp.ne.s32.totalorder %s205, %s207
    %p214 = scmp.eq.s32.totalorder %s24, 1
    %p215 = por %p213, %p214
    %p216 = scmp.ne.s32.totalorder %s207, %s208
    %p217 = scmp.eq.s32.totalorder %s24, 0
    %p218 = por %p216, %p217
    %p219 = scmp.ne.s32.totalorder %s207, %s208
    %p220 = scmp.eq.s32.totalorder %s25, 1
    %p221 = por %p219, %p220
    %p223 = scmp.ne.s32.totalorder %s208, %s222
    %p224 = scmp.eq.s32.totalorder %s25, 0
    %p225 = por %p223, %p224
    %s227 = sadd.s32 %s226, 1
    %p230 = scmp.eq.s32.totalorder %s19, 1
    %p231 = scmp.ne.s32.totalorder %s226, %s228
    %p232 = scmp.eq.s32.totalorder %s19, 0
    %p233 = por %p231, %p232
    %p234 = scmp.ne.s32.totalorder %s226, %s228
    %p235 = scmp.eq.s32.totalorder %s24, 1
    %p236 = por %p234, %p235
    %p237 = scmp.ne.s32.totalorder %s228, %s229
    %p238 = scmp.eq.s32.totalorder %s24, 0
    %p239 = por %p237, %p238
    %p240 = scmp.ne.s32.totalorder %s228, %s229
    %p241 = scmp.eq.s32.totalorder %s25, 1
    %p242 = por %p240, %p241
    %p244 = scmp.ne.s32.totalorder %s229, %s243
    %p245 = scmp.eq.s32.totalorder %s25, 0
    %p246 = por %p244, %p245
    %s248 = sadd.s32 %s247, 1
    %p251 = scmp.eq.s32.totalorder %s19, 1
    %p252 = scmp.ne.s32.totalorder %s247, %s249
    %p253 = scmp.eq.s32.totalorder %s19, 0
    %p254 = por %p252, %p253
    %p255 = scmp.ne.s32.totalorder %s247, %s249
    %p256 = scmp.eq.s32.totalorder %s24, 1
    %p257 = por %p255, %p256
    %p258 = scmp.ne.s32.totalorder %s249, %s250
    %p259 = scmp.eq.s32.totalorder %s24, 0
    %p260 = por %p258, %p259
    %p261 = scmp.ne.s32.totalorder %s249, %s250
    %p262 = scmp.eq.s32.totalorder %s25, 1
    %p263 = por %p261, %p262
    %p265 = scmp.ne.s32.totalorder %s250, %s264
    %p266 = scmp.eq.s32.totalorder %s25, 0
    %p267 = por %p265, %p266
    %s269 = sadd.s32 %s268, 1
    %p272 = scmp.eq.s32.totalorder %s19, 1
    %p273 = scmp.ne.s32.totalorder %s268, %s270
    %p274 = scmp.eq.s32.totalorder %s19, 0
    %p275 = por %p273, %p274
    %p276 = scmp.ne.s32.totalorder %s268, %s270
    %p277 = scmp.eq.s32.totalorder %s24, 1
    %p278 = por %p276, %p277
    %p279 = scmp.ne.s32.totalorder %s270, %s271
    %p280 = scmp.eq.s32.totalorder %s24, 0
    %p281 = por %p279, %p280
    %p282 = scmp.ne.s32.totalorder %s270, %s271
    %p283 = scmp.eq.s32.totalorder %s25, 1
    %p284 = por %p282, %p283
    %p286 = scmp.ne.s32.totalorder %s271, %s285
    %p287 = scmp.eq.s32.totalorder %s25, 0
    %p288 = por %p286, %p287
    %s290 = sadd.s32 %s289, 1
    %p293 = scmp.eq.s32.totalorder %s19, 1
    %p294 = scmp.ne.s32.totalorder %s289, %s291
    %p295 = scmp.eq.s32.totalorder %s19, 0
    %p296 = por %p294, %p295
    %p297 = scmp.ne.s32.totalorder %s289, %s291
    %p298 = scmp.eq.s32.totalorder %s24, 1
    %p299 = por %p297, %p298
    %p300 = scmp.ne.s32.totalorder %s291, %s292
    %p301 = scmp.eq.s32.totalorder %s24, 0
    %p302 = por %p300, %p301
    %p303 = scmp.ne.s32.totalorder %s291, %s292
    %p304 = scmp.eq.s32.totalorder %s25, 1
    %p305 = por %p303, %p304
    %p307 = scmp.ne.s32.totalorder %s292, %s306
    %p308 = scmp.eq.s32.totalorder %s25, 0
    %p309 = por %p307, %p308
    %s310 = ssub.s32 %s19, %s26
    %p311 = scmp.eq.s32.totalorder %s310, 0
    %s313 = sadd.s32 %s312, 1
    %s314 = scalar_select %p311, %s312, %s313
    %p317 = pneg %p311
    %p318 = scmp.eq.s32.totalorder %s19, 1
    %p319 = por %p317, %p318
    %p320 = scmp.ne.s32.totalorder %s312, %s315
    %p321 = scmp.eq.s32.totalorder %s19, 0
    %p322 = por %p320, %p321
    %p323 = scmp.ne.s32.totalorder %s312, %s315
    %p324 = scmp.eq.s32.totalorder %s24, 1
    %p325 = por %p323, %p324
    %p326 = scmp.ne.s32.totalorder %s315, %s316
    %p327 = scmp.eq.s32.totalorder %s24, 0
    %p328 = por %p326, %p327
    %p329 = scmp.ne.s32.totalorder %s315, %s316
    %p330 = scmp.eq.s32.totalorder %s25, 1
    %p331 = por %p329, %p330
    %p333 = scmp.ne.s32.totalorder %s316, %s332
    %p334 = scmp.eq.s32.totalorder %s25, 0
    %p335 = por %p333, %p334
    %p336 = scmp.le.s32.totalorder 1, %s19
    %p337 = scmp.lt.s32.totalorder %s19, 3
    %p338 = pnand %p336, %p337
    %p339 = pneg %p338
    // Predicated region
    $region9: #{styled_resblock2_forward.1} parent=5 // pred_check
      _
    $region10: #{styled_resblock2_forward.1} parent=5 // pred_check_branch
      %341 = sbr.rel (%p338) target = $region12
    $region11: #{styled_resblock2_forward.1} parent=5 // pred_region
      %s342 = ssub.s32 %s19, 1
      // Predicated region
      $region13: #{styled_resblock2_forward.1} parent=11 // pred_check
        %p343 = pneg %p92
      $region14: #{styled_resblock2_forward.1} parent=11 // pred_check_branch
        %345 = sbr.rel (%p343) target = $region16
      $region15: #{styled_resblock2_forward.1} parent=11 // pred_region
        _
      $region16: #{styled_resblock2_forward.1} parent=11 // pred_fallthru
        _
      // Predicated region
      $region17: #{styled_resblock2_forward.1} parent=11 // pred_check
        %p346 = pneg %p113
      $region18: #{styled_resblock2_forward.1} parent=11 // pred_check_branch
        %348 = sbr.rel (%p346) target = $region20
      $region19: #{styled_resblock2_forward.1} parent=11 // pred_region
        _
      $region20: #{styled_resblock2_forward.1} parent=11 // pred_fallthru
        _
      // Predicated region
      $region21: #{styled_resblock2_forward.1} parent=11 // pred_check
        %p349 = pneg %p134
      $region22: #{styled_resblock2_forward.1} parent=11 // pred_check_branch
        %351 = sbr.rel (%p349) target = $region24
      $region23: #{styled_resblock2_forward.1} parent=11 // pred_region
        _
      $region24: #{styled_resblock2_forward.1} parent=11 // pred_fallthru
        _
      // Predicated region
      $region25: #{styled_resblock2_forward.1} parent=11 // pred_check
        %p352 = pneg %p155
      $region26: #{styled_resblock2_forward.1} parent=11 // pred_check_branch
        %354 = sbr.rel (%p352) target = $region28
      $region27: #{styled_resblock2_forward.1} parent=11 // pred_region
        _
      $region28: #{styled_resblock2_forward.1} parent=11 // pred_fallthru
        _
      // Predicated region
      $region29: #{styled_resblock2_forward.1} parent=11 // pred_check
        %p355 = pneg %p176
      $region30: #{styled_resblock2_forward.1} parent=11 // pred_check_branch
        %357 = sbr.rel (%p355) target = $region32
      $region31: #{styled_resblock2_forward.1} parent=11 // pred_region
        _
      $region32: #{styled_resblock2_forward.1} parent=11 // pred_fallthru
        _
      // Predicated region
      $region33: #{styled_resblock2_forward.1} parent=11 // pred_check
        %p358 = pneg %p197
      $region34: #{styled_resblock2_forward.1} parent=11 // pred_check_branch
        %360 = sbr.rel (%p358) target = $region36
      $region35: #{styled_resblock2_forward.1} parent=11 // pred_region
        _
      $region36: #{styled_resblock2_forward.1} parent=11 // pred_fallthru
        _
      // Predicated region
      $region37: #{styled_resblock2_forward.1} parent=11 // pred_check
        %p361 = pneg %p218
      $region38: #{styled_resblock2_forward.1} parent=11 // pred_check_branch
        %363 = sbr.rel (%p361) target = $region40
      $region39: #{styled_resblock2_forward.1} parent=11 // pred_region
        _
      $region40: #{styled_resblock2_forward.1} parent=11 // pred_fallthru
        _
      // Predicated region
      $region41: #{styled_resblock2_forward.1} parent=11 // pred_check
        %p364 = pneg %p239
      $region42: #{styled_resblock2_forward.1} parent=11 // pred_check_branch
        %366 = sbr.rel (%p364) target = $region44
      $region43: #{styled_resblock2_forward.1} parent=11 // pred_region
        _
      $region44: #{styled_resblock2_forward.1} parent=11 // pred_fallthru
        _
      // Predicated region
      $region45: #{styled_resblock2_forward.1} parent=11 // pred_check
        %p367 = pneg %p260
      $region46: #{styled_resblock2_forward.1} parent=11 // pred_check_branch
        %369 = sbr.rel (%p367) target = $region48
      $region47: #{styled_resblock2_forward.1} parent=11 // pred_region
        _
      $region48: #{styled_resblock2_forward.1} parent=11 // pred_fallthru
        _
      // Predicated region
      $region49: #{styled_resblock2_forward.1} parent=11 // pred_check
        %p370 = pneg %p281
      $region50: #{styled_resblock2_forward.1} parent=11 // pred_check_branch
        %372 = sbr.rel (%p370) target = $region52
      $region51: #{styled_resblock2_forward.1} parent=11 // pred_region
        _
      $region52: #{styled_resblock2_forward.1} parent=11 // pred_fallthru
        _
      // Predicated region
      $region53: #{styled_resblock2_forward.1} parent=11 // pred_check
        %p373 = pneg %p302
      $region54: #{styled_resblock2_forward.1} parent=11 // pred_check_branch
        %375 = sbr.rel (%p373) target = $region56
      $region55: #{styled_resblock2_forward.1} parent=11 // pred_region
        _
      $region56: #{styled_resblock2_forward.1} parent=11 // pred_fallthru
        _
    $region12: #{styled_resblock2_forward.1} parent=5 // pred_fallthru
      _
    %p376 = scmp.lt.s32.totalorder %s19, 2
    // Predicated region
    $region57: #{styled_resblock2_forward.1} parent=5 // pred_check
      %p377 = pneg %p376
    $region58: #{styled_resblock2_forward.1} parent=5 // pred_check_branch
      %379 = sbr.rel (%p377) target = $region60
    $region59: #{styled_resblock2_forward.1} parent=5 // pred_region
      // Predicated region
      $region61: #{styled_resblock2_forward.1} parent=59 // pred_check
        %p380 = pneg %p39
      $region62: #{styled_resblock2_forward.1} parent=59 // pred_check_branch
        %382 = sbr.rel (%p380) target = $region64
      $region63: #{styled_resblock2_forward.1} parent=59 // pred_region
        %p383 = scmp.lt.s32.totalorder %s19, 1
        %s384 = scalar_select %p383, %s19, 1
        %s385 = scalar_lea.vmem %s0, %s384
      $region64: #{styled_resblock2_forward.1} parent=59 // pred_fallthru
        _
      // Predicated region
      $region65: #{styled_resblock2_forward.1} parent=59 // pred_check
        %p386 = pneg %p65
      $region66: #{styled_resblock2_forward.1} parent=59 // pred_check_branch
        %388 = sbr.rel (%p386) target = $region68
      $region67: #{styled_resblock2_forward.1} parent=59 // pred_region
        %p389 = scmp.lt.s32.totalorder %s19, 1
        %s390 = scalar_select %p389, %s19, 1
        %s391 = smul.addr %s390, 32
        %s392 = smul.addr %s391, 8
        %s393 = scalar_lea.vmem %s1, %s392
      $region68: #{styled_resblock2_forward.1} parent=59 // pred_fallthru
        _
    $region60: #{styled_resblock2_forward.1} parent=5 // pred_fallthru
      _
    %p394 = scmp.le.s32.totalorder 1, %s19
    %p395 = scmp.lt.s32.totalorder %s19, 3
    %p396 = pnand %p394, %p395
    %p397 = pneg %p396
    // Predicated region
    $region69: #{styled_resblock2_forward.1} parent=5 // pred_check
      _
    $region70: #{styled_resblock2_forward.1} parent=5 // pred_check_branch
      %399 = sbr.rel (%p396) target = $region72
    $region71: #{styled_resblock2_forward.1} parent=5 // pred_region
      %s400 = ssub.s32 %s19, 1
      %p401 = scmp.lt.s32.totalorder %s24, 1
      %s402 = scalar_select %p401, %s24, 1
      %s403 = scalar_lea.vmem %s0, %s402
      %p404 = pneg %p45
      %p405 = pneg %p42
      %p406 = scmp.lt.s32.totalorder %s24, 1
      %s407 = scalar_select %p406, %s24, 1
      %s408 = smul.addr %s407, 32
      %s409 = smul.addr %s408, 8
      %s410 = scalar_lea.vmem %s1, %s409
      %p411 = pneg %p71
      %p412 = pneg %p68
      %p413 = pneg %p92
      %p414 = pneg %p89
      %p415 = pneg %p113
      %p416 = pneg %p110
      %p417 = pneg %p134
      %p418 = pneg %p131
      %p419 = pneg %p155
      %p420 = pneg %p152
      %p421 = pneg %p176
      %p422 = pneg %p173
      %p423 = pneg %p197
      %p424 = pneg %p194
      %p425 = pneg %p218
      %p426 = pneg %p215
      %p427 = pneg %p239
      %p428 = pneg %p236
      %p429 = pneg %p260
      %p430 = pneg %p257
      %p431 = pneg %p281
      %p432 = pneg %p278
      %p433 = pneg %p302
      %p434 = pneg %p299
      %p435 = pneg %p328
      %p436 = pneg %p325
      %p437 = scmp.lt.s32.totalorder %s24, 1
      %s438 = scalar_select %p437, %s24, 1
      %s439 = smul.addr %s438, 8
      %s440 = smul.addr %s439, 8
      %s441 = scalar_lea.vmem %s13, %s440
      %p442 = scmp.lt.s32.totalorder %s24, 1
      %s443 = scalar_select %p442, %s24, 1
      %s444 = scalar_lea.vmem %s0, %s443
      %p445 = scmp.lt.s32.totalorder %s24, 1
      %s446 = scalar_select %p445, %s24, 1
      %s447 = smul.addr %s446, 32
      %s448 = smul.addr %s447, 8
      %s449 = scalar_lea.vmem %s1, %s448
      %p450 = scmp.lt.s32.totalorder %s24, 1
      %s451 = scalar_select %p450, %s24, 1
      %s452 = smul.addr %s451, 8
      %s453 = smul.addr %s452, 8
      %s454 = scalar_lea.vmem %s13, %s453
      %v456 = vld [vmem:[%s444] sm:$0x1]
      %v457 = vld [vmem:[%s2] sm:$0xff]
      %v458 = vld [vmem:[%s2 + $0x8] sm:$0xff]
      %v459 = vld [vmem:[%s2 + $0x10] sm:$0xff]
      %v460 = vld [vmem:[%s2 + $0x18] sm:$0xff]
      %v461 = vld [vmem:[%s3] sm:$0x1]
      %vm462 = vcmask 261120
      %v464 = vsel %vm462, %v456, 0
      %466 = vmatpush.msra.mxu0 0.0
      %467 = vmatpush.msra.mxu0 0.0
      %468 = vmatpush.msra.mxu0 0.0
      %469 = vmatpush.msra.mxu0 0.0
      %470 = vmatpush.msra.mxu0 0.0
      %471 = vmatpush.msra.mxu0 0.0
      %472 = vmatpush.msra.mxu0 0.0
      %473 = vmatpush.msra.mxu0 0.0
      %474 = vmatpush.msra.mxu0 0.0
      %475 = vmatpush.msra.mxu0 0.0
      %476 = vmatpush.msra.mxu0 0.0
      %477 = vmatpush.msra.mxu0 0.0
      %478 = vmatpush.msra.mxu0 %v460
      %479 = vmatpush.msra.mxu0 %v459
      %480 = vmatpush.msra.mxu0 %v458
      %481 = vmatpush.msra.mxu0 %v457
      %482 = vmatmul.f32.gmra.mxu0 %v464
      %v483 = vpop.f32.mrf.mxu0
      %v484 = vadd.f32 %v461, %v483
      %485 = vdwg.mxu0
      %v486 = vmul.f32 %v484, %v484
      %v487 = vld [vmem:[%s4] sm:$0xf]
      %vm488 = vcmask 31744
      %v490 = vsel %vm488, %v486, 0
      %vm492 = vcmask 1043456
      %v494 = vsel %vm492, %v487, 0
      %496 = vmatpush.msra.mxu0 0.0
      %497 = vmatpush.msra.mxu0 0.0
      %498 = vmatpush.msra.mxu0 0.0
      %499 = vmatpush.msra.mxu0 0.0
      %500 = vmatpush.msra.mxu0 0.0
      %501 = vmatpush.msra.mxu0 0.0
      %502 = vmatpush.msra.mxu0 0.0
      %503 = vmatpush.msra.mxu0 0.0
      %504 = vmatpush.msra.mxu0 0.0
      %505 = vmatpush.msra.mxu0 0.0
      %506 = vmatpush.msra.mxu0 0.0
      %507 = vmatpush.msra.mxu0 0.0
      %508 = vmatpush.msra.mxu0 0.0
      %509 = vmatpush.msra.mxu0 0.0
      %510 = vmatpush.msra.mxu0 0.0
      %511 = vmatpush.msra.mxu0 %v494
      %512 = vmatmul.f32.gmra.mxu0 %v490
      %v513 = vpop.f32.mrf.mxu0
      %v514 = vadd.f32 1e-08, %v513
      %515 = vdwg.mxu0
      %v516 = vrsqrt.pop %v514
      %v517 = vmul.f32 %v516, %v514
      %v518 = vmul.f32 %v517, %v516
      %v519 = vmul.f32 0.5, %v518
      %v520 = vsub.f32 1.5, %v519
      %v521 = vmul.f32 %v516, %v520
      %vm522 = vweird.f32 %v514
      %vm523 = vweird.f32 %v516
      %vm524 = vmor %vm522, %vm523
      %v525 = vsel %vm524, %v516, %v521
      %v526 = vld [vmem:[%s7] sm:$0xff]
      %v527 = vld [vmem:[%s7 + $0x8] sm:$0xff]
      %v528 = vld [vmem:[%s7 + $0x10] sm:$0xff]
      %v529 = vld [vmem:[%s7 + $0x18] sm:$0xff]
      %v530 = vld [vmem:[%s8] sm:$0x1]
      %531 = vmatpush.msra.mxu0 0.0
      %532 = vmatpush.msra.mxu0 0.0
      %533 = vmatpush.msra.mxu0 0.0
      %534 = vmatpush.msra.mxu0 0.0
      %535 = vmatpush.msra.mxu0 0.0
      %536 = vmatpush.msra.mxu0 0.0
      %537 = vmatpush.msra.mxu0 0.0
      %538 = vmatpush.msra.mxu0 0.0
      %539 = vmatpush.msra.mxu0 0.0
      %540 = vmatpush.msra.mxu0 0.0
      %541 = vmatpush.msra.mxu0 0.0
      %542 = vmatpush.msra.mxu0 0.0
      %543 = vmatpush.msra.mxu0 %v529
      %544 = vmatpush.msra.mxu0 %v528
      %545 = vmatpush.msra.mxu0 %v527
      %546 = vmatpush.msra.mxu0 %v526
      %547 = vmatmul.f32.gmra.mxu0 %v464
      %v548 = vpop.f32.mrf.mxu0
      %v549 = vadd.f32 %v530, %v548
      %550 = vdwg.mxu0
      %v551 = vmul.f32 %v549, %v549
      %v552 = vld [vmem:[%s9] sm:$0xff]
      %vm553 = vcmask 64512
      %v555 = vsel %vm553, %v551, 0
      %557 = vmatpush.msra.mxu0 0.0
      %558 = vmatpush.msra.mxu0 0.0
      %559 = vmatpush.msra.mxu0 0.0
      %560 = vmatpush.msra.mxu0 0.0
      %561 = vmatpush.msra.mxu0 0.0
      %562 = vmatpush.msra.mxu0 0.0
      %563 = vmatpush.msra.mxu0 0.0
      %564 = vmatpush.msra.mxu0 0.0
      %565 = vmatpush.msra.mxu0 0.0
      %566 = vmatpush.msra.mxu0 0.0
      %567 = vmatpush.msra.mxu0 0.0
      %568 = vmatpush.msra.mxu0 0.0
      %569 = vmatpush.msra.mxu0 0.0
      %570 = vmatpush.msra.mxu0 0.0
      %571 = vmatpush.msra.mxu0 0.0
      %572 = vmatpush.msra.mxu0 %v552
      %573 = vmatmul.f32.gmra.mxu0 %v555
      %v574 = vpop.f32.mrf.mxu0
      %v575 = vadd.f32 1e-08, %v574
      %576 = vdwg.mxu0
      %v577 = vrsqrt.pop %v575
      %v578 = vmul.f32 %v577, %v575
      %v579 = vmul.f32 %v578, %v577
      %v580 = vmul.f32 0.5, %v579
      %v581 = vsub.f32 1.5, %v580
      %v582 = vmul.f32 %v577, %v581
      %vm583 = vweird.f32 %v575
      %vm584 = vweird.f32 %v577
      %vm585 = vmor %vm583, %vm584
      %v586 = vsel %vm585, %v577, %v582
      %587 = vst.msk [vmem:[#allocation2] sm:$0xff] %vm488, 0.0
      %588 = vst.msk [vmem:[#allocation2 + $0x8] sm:$0xff] %vm488, 0.0
      %vm589 = vcmask 25600
      %590 = vst.msk [vmem:[#allocation2 + $0x10] sm:$0x3] %vm589, 0.0
      %591 = vst.msk [vmem:[#allocation2 + $0x18] sm:$0xff] %vm488, 0.0
      %592 = vst.msk [vmem:[#allocation2 + $0x20] sm:$0xff] %vm488, 0.0
      %593 = vst.msk [vmem:[#allocation2 + $0x28] sm:$0x3] %vm589, 0.0
      %594 = vst.msk [vmem:[#allocation2 + $0x30] sm:$0xff] %vm488, 0.0
      %595 = vst.msk [vmem:[#allocation2 + $0x38] sm:$0xff] %vm488, 0.0
      %596 = vst.msk [vmem:[#allocation2 + $0x40] sm:$0x3] %vm589, 0.0
      %597 = vst.msk [vmem:[#allocation2 + $0x48] sm:$0xff] %vm488, 0.0
      %598 = vst.msk [vmem:[#allocation2 + $0x50] sm:$0xff] %vm488, 0.0
      %599 = vst.msk [vmem:[#allocation2 + $0x58] sm:$0x3] %vm589, 0.0
      %600 = vst.msk [vmem:[#allocation2 + $0x60] sm:$0xff] %vm488, 0.0
      %601 = vst.msk [vmem:[#allocation2 + $0x68] sm:$0xff] %vm488, 0.0
      %602 = vst.msk [vmem:[#allocation2 + $0x70] sm:$0x3] %vm589, 0.0
      %603 = vst.msk [vmem:[#allocation2 + $0x78] sm:$0xff] %vm488, 0.0
      %604 = vst.msk [vmem:[#allocation2 + $0x80] sm:$0xff] %vm488, 0.0
      %605 = vst.msk [vmem:[#allocation2 + $0x88] sm:$0x3] %vm589, 0.0
      %606 = vst.msk [vmem:[#allocation2 + $0x90] sm:$0xff] %vm488, 0.0
      %607 = vst.msk [vmem:[#allocation2 + $0x98] sm:$0xff] %vm488, 0.0
      %608 = vst.msk [vmem:[#allocation2 + $0xa0] sm:$0x3] %vm589, 0.0
      %609 = vst.msk [vmem:[#allocation2 + $0xa8] sm:$0xff] %vm488, 0.0
      %610 = vst.msk [vmem:[#allocation2 + $0xb0] sm:$0xff] %vm488, 0.0
      %611 = vst.msk [vmem:[#allocation2 + $0xb8] sm:$0x3] %vm589, 0.0
      %612 = vst.msk [vmem:[#allocation2 + $0xc0] sm:$0xff] %vm488, 0.0
      %613 = vst.msk [vmem:[#allocation2 + $0xc8] sm:$0xff] %vm488, 0.0
      %614 = vst.msk [vmem:[#allocation2 + $0xd0] sm:$0x3] %vm589, 0.0
      %615 = vst.msk [vmem:[#allocation2 + $0xd8] sm:$0xff] %vm488, 0.0
      %616 = vst.msk [vmem:[#allocation2 + $0xe0] sm:$0xff] %vm488, 0.0
      %617 = vst.msk [vmem:[#allocation2 + $0xe8] sm:$0x3] %vm589, 0.0
      %618 = vst.msk [vmem:[#allocation2 + $0xf0] sm:$0xff] %vm488, 0.0
      %619 = vst.msk [vmem:[#allocation2 + $0xf8] sm:$0xff] %vm488, 0.0
      %620 = vst.msk [vmem:[#allocation2 + $0x100] sm:$0x3] %vm589, 0.0
      %621 = vst.msk [vmem:[#allocation2 + $0x108] sm:$0xff] %vm488, 0.0
      %622 = vst.msk [vmem:[#allocation2 + $0x110] sm:$0xff] %vm488, 0.0
      %623 = vst.msk [vmem:[#allocation2 + $0x118] sm:$0x3] %vm589, 0.0
      %624 = vst.msk [vmem:[#allocation2 + $0x120] sm:$0xff] %vm488, 0.0
      %625 = vst.msk [vmem:[#allocation2 + $0x128] sm:$0xff] %vm488, 0.0
      %626 = vst.msk [vmem:[#allocation2 + $0x130] sm:$0x3] %vm589, 0.0
      %627 = vst.msk [vmem:[#allocation2 + $0x138] sm:$0xff] %vm488, 0.0
      %628 = vst.msk [vmem:[#allocation2 + $0x140] sm:$0xff] %vm488, 0.0
      %629 = vst.msk [vmem:[#allocation2 + $0x148] sm:$0x3] %vm589, 0.0
      %630 = vst.msk [vmem:[#allocation2 + $0x150] sm:$0xff] %vm488, 0.0
      %631 = vst.msk [vmem:[#allocation2 + $0x158] sm:$0xff] %vm488, 0.0
      %632 = vst.msk [vmem:[#allocation2 + $0x160] sm:$0x3] %vm589, 0.0
      %633 = vst.msk [vmem:[#allocation2 + $0x168] sm:$0xff] %vm488, 0.0
      %634 = vst.msk [vmem:[#allocation2 + $0x170] sm:$0xff] %vm488, 0.0
      %635 = vst.msk [vmem:[#allocation2 + $0x178] sm:$0x3] %vm589, 0.0
      %636 = vst.msk [vmem:[#allocation2 + $0x180] sm:$0xff] %vm488, 0.0
      %637 = vst.msk [vmem:[#allocation2 + $0x188] sm:$0xff] %vm488, 0.0
      %638 = vst.msk [vmem:[#allocation2 + $0x190] sm:$0x3] %vm589, 0.0
      %639 = vst.msk [vmem:[#allocation2 + $0x198] sm:$0xff] %vm488, 0.0
      %640 = vst.msk [vmem:[#allocation2 + $0x1a0] sm:$0xff] %vm488, 0.0
      %641 = vst.msk [vmem:[#allocation2 + $0x1a8] sm:$0x3] %vm589, 0.0
      %v642 = vld [vmem:[%s449] sm:$0xff]
      %v643 = vld [vmem:[%s449 + $0x8] sm:$0xff]
      %v644 = vld [vmem:[%s449 + $0x10] sm:$0xff]
      %v645 = vld [vmem:[%s449 + $0x18] sm:$0xff]
      %v646 = vld [vmem:[%s449 + $0x20] sm:$0xff]
      %v647 = vld [vmem:[%s449 + $0x28] sm:$0xff]
      %v648 = vld [vmem:[%s449 + $0x30] sm:$0xff]
      %v649 = vld [vmem:[%s449 + $0x38] sm:$0xff]
      %v650 = vld [vmem:[%s449 + $0x40] sm:$0xff]
      %v651 = vld [vmem:[%s449 + $0x48] sm:$0xff]
      %v652 = vld [vmem:[%s449 + $0x50] sm:$0xff]
      %v653 = vld [vmem:[%s449 + $0x58] sm:$0xff]
      %v654 = vld [vmem:[%s449 + $0x60] sm:$0xff]
      %v655 = vld [vmem:[%s449 + $0x68] sm:$0xff]
      %v656 = vld [vmem:[%s449 + $0x70] sm:$0xff]
      %v657 = vld [vmem:[%s449 + $0x78] sm:$0xff]
      %v658 = vld [vmem:[%s449 + $0x80] sm:$0xff]
      %v659 = vld [vmem:[%s449 + $0x88] sm:$0xff]
      %v660 = vld [vmem:[%s449 + $0x90] sm:$0xff]
      %v661 = vld [vmem:[%s449 + $0x98] sm:$0xff]
      %v662 = vld [vmem:[%s449 + $0xa0] sm:$0xff]
      %v663 = vld [vmem:[%s449 + $0xa8] sm:$0xff]
      %v664 = vld [vmem:[%s449 + $0xb0] sm:$0xff]
      %v665 = vld [vmem:[%s449 + $0xb8] sm:$0xff]
      %v666 = vld [vmem:[%s449 + $0xc0] sm:$0xff]
      %v667 = vld [vmem:[%s449 + $0xc8] sm:$0xff]
      %v668 = vld [vmem:[%s449 + $0xd0] sm:$0xff]
      %v669 = vld [vmem:[%s449 + $0xd8] sm:$0xff]
      %v670 = vld [vmem:[%s449 + $0xe0] sm:$0xff]
      %v671 = vld [vmem:[%s449 + $0xe8] sm:$0xff]
      %v672 = vld [vmem:[%s449 + $0xf0] sm:$0xff]
      %v673 = vld [vmem:[%s449 + $0xf8] sm:$0xff]
      %s674 = scalar_lea.vmem [#allocation2], 24
      %675 = vst.msk [vmem:[%s674 + $0x1] sm:$0xff] %vm488, %v642
      %676 = vst.msk [vmem:[%s674 + $0x9] sm:$0xff] %vm488, %v643
      %677 = vst.msk [vmem:[%s674 + $0x19] sm:$0xff] %vm488, %v644
      %678 = vst.msk [vmem:[%s674 + $0x21] sm:$0xff] %vm488, %v645
      %679 = vst.msk [vmem:[%s674 + $0x31] sm:$0xff] %vm488, %v646
      %680 = vst.msk [vmem:[%s674 + $0x39] sm:$0xff] %vm488, %v647
      %681 = vst.msk [vmem:[%s674 + $0x49] sm:$0xff] %vm488, %v648
      %682 = vst.msk [vmem:[%s674 + $0x51] sm:$0xff] %vm488, %v649
      %683 = vst.msk [vmem:[%s674 + $0x61] sm:$0xff] %vm488, %v650
      %684 = vst.msk [vmem:[%s674 + $0x69] sm:$0xff] %vm488, %v651
      %685 = vst.msk [vmem:[%s674 + $0x79] sm:$0xff] %vm488, %v652
      %686 = vst.msk [vmem:[%s674 + $0x81] sm:$0xff] %vm488, %v653
      %687 = vst.msk [vmem:[%s674 + $0x91] sm:$0xff] %vm488, %v654
      %688 = vst.msk [vmem:[%s674 + $0x99] sm:$0xff] %vm488, %v655
      %689 = vst.msk [vmem:[%s674 + $0xa9] sm:$0xff] %vm488, %v656
      %690 = vst.msk [vmem:[%s674 + $0xb1] sm:$0xff] %vm488, %v657
      %691 = vst.msk [vmem:[%s674 + $0xc1] sm:$0xff] %vm488, %v658
      %692 = vst.msk [vmem:[%s674 + $0xc9] sm:$0xff] %vm488, %v659
      %693 = vst.msk [vmem:[%s674 + $0xd9] sm:$0xff] %vm488, %v660
      %694 = vst.msk [vmem:[%s674 + $0xe1] sm:$0xff] %vm488, %v661
      %695 = vst.msk [vmem:[%s674 + $0xf1] sm:$0xff] %vm488, %v662
      %696 = vst.msk [vmem:[%s674 + $0xf9] sm:$0xff] %vm488, %v663
      %697 = vst.msk [vmem:[%s674 + $0x109] sm:$0xff] %vm488, %v664
      %698 = vst.msk [vmem:[%s674 + $0x111] sm:$0xff] %vm488, %v665
      %699 = vst.msk [vmem:[%s674 + $0x121] sm:$0xff] %vm488, %v666
      %700 = vst.msk [vmem:[%s674 + $0x129] sm:$0xff] %vm488, %v667
      %701 = vst.msk [vmem:[%s674 + $0x139] sm:$0xff] %vm488, %v668
      %702 = vst.msk [vmem:[%s674 + $0x141] sm:$0xff] %vm488, %v669
      %703 = vst.msk [vmem:[%s674 + $0x151] sm:$0xff] %vm488, %v670
      %704 = vst.msk [vmem:[%s674 + $0x159] sm:$0xff] %vm488, %v671
      %705 = vst.msk [vmem:[%s674 + $0x169] sm:$0xff] %vm488, %v672
      %706 = vst.msk [vmem:[%s674 + $0x171] sm:$0xff] %vm488, %v673
      %v707 = vld [vmem:[#allocation2] sm:$0xff]
      %v708 = vld [vmem:[#allocation2 + $0x8] sm:$0xff]
      %v709 = vld [vmem:[#allocation2 + $0x18] sm:$0xff]
      %v710 = vld [vmem:[#allocation2 + $0x20] sm:$0xff]
      %v711 = vld [vmem:[#allocation2 + $0x30] sm:$0xff]
      %v712 = vld [vmem:[#allocation2 + $0x38] sm:$0xff]
      %v713 = vld [vmem:[#allocation2 + $0x48] sm:$0xff]
      %v714 = vld [vmem:[#allocation2 + $0x50] sm:$0xff]
      %v715 = vld [vmem:[#allocation2 + $0x60] sm:$0xff]
      %v716 = vld [vmem:[#allocation2 + $0x68] sm:$0xff]
      %v717 = vld [vmem:[#allocation2 + $0x78] sm:$0xff]
      %v718 = vld [vmem:[#allocation2 + $0x80] sm:$0xff]
      %v719 = vld [vmem:[#allocation2 + $0x90] sm:$0xff]
      %v720 = vld [vmem:[#allocation2 + $0x98] sm:$0xff]
      %v721 = vld [vmem:[#allocation2 + $0xa8] sm:$0xff]
      %v722 = vld [vmem:[#allocation2 + $0xb0] sm:$0xff]
      %v723 = vld [vmem:[#allocation2 + $0xc0] sm:$0xff]
      %v724 = vld [vmem:[#allocation2 + $0xc8] sm:$0xff]
      %v725 = vld [vmem:[#allocation2 + $0xd8] sm:$0xff]
      %v726 = vld [vmem:[#allocation2 + $0xe0] sm:$0xff]
      %v727 = vld [vmem:[#allocation2 + $0xf0] sm:$0xff]
      %v728 = vld [vmem:[#allocation2 + $0xf8] sm:$0xff]
      %v729 = vld [vmem:[#allocation2 + $0x108] sm:$0xff]
      %v730 = vld [vmem:[#allocation2 + $0x110] sm:$0xff]
      %v731 = vld [vmem:[#allocation2 + $0x120] sm:$0xff]
      %v732 = vld [vmem:[#allocation2 + $0x128] sm:$0xff]
      %v733 = vld [vmem:[#allocation2 + $0x138] sm:$0xff]
      %v734 = vld [vmem:[#allocation2 + $0x140] sm:$0xff]
      %v735 = vld [vmem:[#allocation2 + $0x150] sm:$0xff]
      %v736 = vld [vmem:[#allocation2 + $0x158] sm:$0xff]
      %v737 = vld [vmem:[#allocation2 + $0x168] sm:$0xff]
      %v738 = vld [vmem:[#allocation2 + $0x170] sm:$0xff]
      %v739 = vperm.slane %v484, 0
      %v740 = vmul.f32 %v707, %v739
      %v741 = vmul.f32 %v708, %v739
      %v742 = vmul.f32 %v709, %v739
      %v743 = vmul.f32 %v710, %v739
      %v744 = vmul.f32 %v711, %v739
      %v745 = vmul.f32 %v712, %v739
      %v746 = vmul.f32 %v713, %v739
      %v747 = vmul.f32 %v714, %v739
      %v748 = vmul.f32 %v715, %v739
      %v749 = vmul.f32 %v716, %v739
      %v750 = vmul.f32 %v717, %v739
      %v751 = vmul.f32 %v718, %v739
      %v752 = vmul.f32 %v719, %v739
      %v753 = vmul.f32 %v720, %v739
      %v754 = vmul.f32 %v721, %v739
      %v755 = vmul.f32 %v722, %v739
      %v756 = vmul.f32 %v723, %v739
      %v757 = vmul.f32 %v724, %v739
      %v758 = vmul.f32 %v725, %v739
      %v759 = vmul.f32 %v726, %v739
      %v760 = vmul.f32 %v727, %v739
      %v761 = vmul.f32 %v728, %v739
      %v762 = vmul.f32 %v729, %v739
      %v763 = vmul.f32 %v730, %v739
      %v764 = vmul.f32 %v731, %v739
      %v765 = vmul.f32 %v732, %v739
      %v766 = vmul.f32 %v733, %v739
      %v767 = vmul.f32 %v734, %v739
      %v768 = vmul.f32 %v735, %v739
      %v769 = vmul.f32 %v736, %v739
      %v770 = vmul.f32 %v737, %v739
      %v771 = vmul.f32 %v738, %v739
      %v772 = vpack.c.bf16 %v740, %v740
      %v773 = vpack.c.bf16 %v741, %v741
      %v774 = vpack.c.bf16 %v742, %v742
      %v775 = vpack.c.bf16 %v743, %v743
      %v776 = vpack.c.bf16 %v744, %v744
      %v777 = vpack.c.bf16 %v745, %v745
      %v778 = vpack.c.bf16 %v746, %v746
      %v779 = vpack.c.bf16 %v747, %v747
      %v780 = vpack.c.bf16 %v748, %v748
      %v781 = vpack.c.bf16 %v749, %v749
      %v782 = vpack.c.bf16 %v750, %v750
      %v783 = vpack.c.bf16 %v751, %v751
      %v784 = vpack.c.bf16 %v752, %v752
      %v785 = vpack.c.bf16 %v753, %v753
      %v786 = vpack.c.bf16 %v754, %v754
      %v787 = vpack.c.bf16 %v755, %v755
      %v788 = vpack.c.bf16 %v756, %v756
      %v789 = vpack.c.bf16 %v757, %v757
      %v790 = vpack.c.bf16 %v758, %v758
      %v791 = vpack.c.bf16 %v759, %v759
      %v792 = vpack.c.bf16 %v760, %v760
      %v793 = vpack.c.bf16 %v761, %v761
      %v794 = vpack.c.bf16 %v762, %v762
      %v795 = vpack.c.bf16 %v763, %v763
      %v796 = vpack.c.bf16 %v764, %v764
      %v797 = vpack.c.bf16 %v765, %v765
      %v798 = vpack.c.bf16 %v766, %v766
      %v799 = vpack.c.bf16 %v767, %v767
      %v800 = vpack.c.bf16 %v768, %v768
      %v801 = vpack.c.bf16 %v769, %v769
      %v802 = vpack.c.bf16 %v770, %v770
      %v803 = vpack.c.bf16 %v771, %v771
      %vm804 = vcmask 27648
      %805 = vst.msk [vmem:[#allocation4] sm:$0xf] %vm804, %v772
      %806 = vst.msk [vmem:[#allocation4 + $0x4] sm:$0xf] %vm804, %v773
      %807 = vst.msk [vmem:[#allocation4 + $0x8] sm:$0xf] %vm804, %v774
      %808 = vst.msk [vmem:[#allocation4 + $0xc] sm:$0xf] %vm804, %v775
      %809 = vst.msk [vmem:[#allocation4 + $0x10] sm:$0xf] %vm804, %v776
      %810 = vst.msk [vmem:[#allocation4 + $0x14] sm:$0xf] %vm804, %v777
      %811 = vst.msk [vmem:[#allocation4 + $0x18] sm:$0xf] %vm804, %v778
      %812 = vst.msk [vmem:[#allocation4 + $0x1c] sm:$0xf] %vm804, %v779
      %813 = vst.msk [vmem:[#allocation4 + $0x20] sm:$0xf] %vm804, %v780
      %814 = vst.msk [vmem:[#allocation4 + $0x24] sm:$0xf] %vm804, %v781
      %815 = vst.msk [vmem:[#allocation4 + $0x28] sm:$0xf] %vm804, %v782
      %816 = vst.msk [vmem:[#allocation4 + $0x2c] sm:$0xf] %vm804, %v783
      %817 = vst.msk [vmem:[#allocation4 + $0x30] sm:$0xf] %vm804, %v784
      %818 = vst.msk [vmem:[#allocation4 + $0x34] sm:$0xf] %vm804, %v785
      %819 = vst.msk [vmem:[#allocation4 + $0x38] sm:$0xf] %vm804, %v786
      %820 = vst.msk [vmem:[#allocation4 + $0x3c] sm:$0xf] %vm804, %v787
      %821 = vst.msk [vmem:[#allocation4 + $0x40] sm:$0xf] %vm804, %v788
      %822 = vst.msk [vmem:[#allocation4 + $0x44] sm:$0xf] %vm804, %v789
      %823 = vst.msk [vmem:[#allocation4 + $0x48] sm:$0xf] %vm804, %v790
      %824 = vst.msk [vmem:[#allocation4 + $0x4c] sm:$0xf] %vm804, %v791
      %825 = vst.msk [vmem:[#allocation4 + $0x50] sm:$0xf] %vm804, %v792
      %826 = vst.msk [vmem:[#allocation4 + $0x54] sm:$0xf] %vm804, %v793
      %827 = vst.msk [vmem:[#allocation4 + $0x58] sm:$0xf] %vm804, %v794
      %828 = vst.msk [vmem:[#allocation4 + $0x5c] sm:$0xf] %vm804, %v795
      %829 = vst.msk [vmem:[#allocation4 + $0x60] sm:$0xf] %vm804, %v796
      %830 = vst.msk [vmem:[#allocation4 + $0x64] sm:$0xf] %vm804, %v797
      %831 = vst.msk [vmem:[#allocation4 + $0x68] sm:$0xf] %vm804, %v798
      %832 = vst.msk [vmem:[#allocation4 + $0x6c] sm:$0xf] %vm804, %v799
      %833 = vst.msk [vmem:[#allocation4 + $0x70] sm:$0xf] %vm804, %v800
      %834 = vst.msk [vmem:[#allocation4 + $0x74] sm:$0xf] %vm804, %v801
      %835 = vst.msk [vmem:[#allocation4 + $0x78] sm:$0xf] %vm804, %v802
      %836 = vst.msk [vmem:[#allocation4 + $0x7c] sm:$0xf] %vm804, %v803
      %v837 = vld [vmem:[#allocation2 + $0x1] sm:$0xff]
      %v838 = vld [vmem:[#allocation2 + $0x9] sm:$0xff]
      %v839 = vld [vmem:[#allocation2 + $0x19] sm:$0xff]
      %v840 = vld [vmem:[#allocation2 + $0x21] sm:$0xff]
      %v841 = vld [vmem:[#allocation2 + $0x31] sm:$0xff]
      %v842 = vld [vmem:[#allocation2 + $0x39] sm:$0xff]
      %v843 = vld [vmem:[#allocation2 + $0x49] sm:$0xff]
      %v844 = vld [vmem:[#allocation2 + $0x51] sm:$0xff]
      %v845 = vld [vmem:[#allocation2 + $0x61] sm:$0xff]
      %v846 = vld [vmem:[#allocation2 + $0x69] sm:$0xff]
      %v847 = vld [vmem:[#allocation2 + $0x79] sm:$0xff]
      %v848 = vld [vmem:[#allocation2 + $0x81] sm:$0xff]
      %v849 = vld [vmem:[#allocation2 + $0x91] sm:$0xff]
      %v850 = vld [vmem:[#allocation2 + $0x99] sm:$0xff]
      %v851 = vld [vmem:[#allocation2 + $0xa9] sm:$0xff]
      %v852 = vld [vmem:[#allocation2 + $0xb1] sm:$0xff]
      %v853 = vld [vmem:[#allocation2 + $0xc1] sm:$0xff]
      %v854 = vld [vmem:[#allocation2 + $0xc9] sm:$0xff]
      %v855 = vld [vmem:[#allocation2 + $0xd9] sm:$0xff]
      %v856 = vld [vmem:[#allocation2 + $0xe1] sm:$0xff]
      %v857 = vld [vmem:[#allocation2 + $0xf1] sm:$0xff]
      %v858 = vld [vmem:[#allocation2 + $0xf9] sm:$0xff]
      %v859 = vld [vmem:[#allocation2 + $0x109] sm:$0xff]
      %v860 = vld [vmem:[#allocation2 + $0x111] sm:$0xff]
      %v861 = vld [vmem:[#allocation2 + $0x121] sm:$0xff]
      %v862 = vld [vmem:[#allocation2 + $0x129] sm:$0xff]
      %v863 = vld [vmem:[#allocation2 + $0x139] sm:$0xff]
      %v864 = vld [vmem:[#allocation2 + $0x141] sm:$0xff]
      %v865 = vld [vmem:[#allocation2 + $0x151] sm:$0xff]
      %v866 = vld [vmem:[#allocation2 + $0x159] sm:$0xff]
      %v867 = vld [vmem:[#allocation2 + $0x169] sm:$0xff]
      %v868 = vld [vmem:[#allocation2 + $0x171] sm:$0xff]
      %v869 = vmul.f32 %v837, %v739
      %v870 = vmul.f32 %v838, %v739
      %v871 = vmul.f32 %v839, %v739
      %v872 = vmul.f32 %v840, %v739
      %v873 = vmul.f32 %v841, %v739
      %v874 = vmul.f32 %v842, %v739
      %v875 = vmul.f32 %v843, %v739
      %v876 = vmul.f32 %v844, %v739
      %v877 = vmul.f32 %v845, %v739
      %v878 = vmul.f32 %v846, %v739
      %v879 = vmul.f32 %v847, %v739
      %v880 = vmul.f32 %v848, %v739
      %v881 = vmul.f32 %v849, %v739
      %v882 = vmul.f32 %v850, %v739
      %v883 = vmul.f32 %v851, %v739
      %v884 = vmul.f32 %v852, %v739
      %v885 = vmul.f32 %v853, %v739
      %v886 = vmul.f32 %v854, %v739
      %v887 = vmul.f32 %v855, %v739
      %v888 = vmul.f32 %v856, %v739
      %v889 = vmul.f32 %v857, %v739
      %v890 = vmul.f32 %v858, %v739
      %v891 = vmul.f32 %v859, %v739
      %v892 = vmul.f32 %v860, %v739
      %v893 = vmul.f32 %v861, %v739
      %v894 = vmul.f32 %v862, %v739
      %v895 = vmul.f32 %v863, %v739
      %v896 = vmul.f32 %v864, %v739
      %v897 = vmul.f32 %v865, %v739
      %v898 = vmul.f32 %v866, %v739
      %v899 = vmul.f32 %v867, %v739
      %v900 = vmul.f32 %v868, %v739
      %v901 = vpack.c.bf16 %v869, %v869
      %v902 = vpack.c.bf16 %v870, %v870
      %v903 = vpack.c.bf16 %v871, %v871
      %v904 = vpack.c.bf16 %v872, %v872
      %v905 = vpack.c.bf16 %v873, %v873
      %v906 = vpack.c.bf16 %v874, %v874
      %v907 = vpack.c.bf16 %v875, %v875
      %v908 = vpack.c.bf16 %v876, %v876
      %v909 = vpack.c.bf16 %v877, %v877
      %v910 = vpack.c.bf16 %v878, %v878
      %v911 = vpack.c.bf16 %v879, %v879
      %v912 = vpack.c.bf16 %v880, %v880
      %v913 = vpack.c.bf16 %v881, %v881
      %v914 = vpack.c.bf16 %v882, %v882
      %v915 = vpack.c.bf16 %v883, %v883
      %v916 = vpack.c.bf16 %v884, %v884
      %v917 = vpack.c.bf16 %v885, %v885
      %v918 = vpack.c.bf16 %v886, %v886
      %v919 = vpack.c.bf16 %v887, %v887
      %v920 = vpack.c.bf16 %v888, %v888
      %v921 = vpack.c.bf16 %v889, %v889
      %v922 = vpack.c.bf16 %v890, %v890
      %v923 = vpack.c.bf16 %v891, %v891
      %v924 = vpack.c.bf16 %v892, %v892
      %v925 = vpack.c.bf16 %v893, %v893
      %v926 = vpack.c.bf16 %v894, %v894
      %v927 = vpack.c.bf16 %v895, %v895
      %v928 = vpack.c.bf16 %v896, %v896
      %v929 = vpack.c.bf16 %v897, %v897
      %v930 = vpack.c.bf16 %v898, %v898
      %v931 = vpack.c.bf16 %v899, %v899
      %v932 = vpack.c.bf16 %v900, %v900
      %965 = vrot.lane.b32.xlu0 %v901, 4
      %v966 = vpop.permute.xlu0 %965
      %967 = vrot.lane.b32.xlu0 %v902, 4
      %v968 = vpop.permute.xlu0 %967
      %969 = vrot.lane.b32.xlu0 %v903, 4
      %v970 = vpop.permute.xlu0 %969
      %971 = vrot.lane.b32.xlu0 %v904, 4
      %v972 = vpop.permute.xlu0 %971
      %973 = vrot.lane.b32.xlu0 %v905, 4
      %v974 = vpop.permute.xlu0 %973
      %975 = vrot.lane.b32.xlu0 %v906, 4
      %v976 = vpop.permute.xlu0 %975
      %977 = vrot.lane.b32.xlu0 %v907, 4
      %v978 = vpop.permute.xlu0 %977
      %979 = vrot.lane.b32.xlu0 %v908, 4
      %v980 = vpop.permute.xlu0 %979
      %981 = vrot.lane.b32.xlu0 %v909, 4
      %v982 = vpop.permute.xlu0 %981
      %983 = vrot.lane.b32.xlu0 %v910, 4
      %v984 = vpop.permute.xlu0 %983
      %985 = vrot.lane.b32.xlu0 %v911, 4
      %v986 = vpop.permute.xlu0 %985
      %987 = vrot.lane.b32.xlu0 %v912, 4
      %v988 = vpop.permute.xlu0 %987
      %989 = vrot.lane.b32.xlu0 %v913, 4
      %v990 = vpop.permute.xlu0 %989
      %991 = vrot.lane.b32.xlu0 %v914, 4
      %v992 = vpop.permute.xlu0 %991
      %993 = vrot.lane.b32.xlu0 %v915, 4
      %v994 = vpop.permute.xlu0 %993
      %995 = vrot.lane.b32.xlu0 %v916, 4
      %v996 = vpop.permute.xlu0 %995
      %997 = vrot.lane.b32.xlu0 %v917, 4
      %v998 = vpop.permute.xlu0 %997
      %999 = vrot.lane.b32.xlu0 %v918, 4
      %v1000 = vpop.permute.xlu0 %999
      %1001 = vrot.lane.b32.xlu0 %v919, 4
      %v1002 = vpop.permute.xlu0 %1001
      %1003 = vrot.lane.b32.xlu0 %v920, 4
      %v1004 = vpop.permute.xlu0 %1003
      %1005 = vrot.lane.b32.xlu0 %v921, 4
      %v1006 = vpop.permute.xlu0 %1005
      %1007 = vrot.lane.b32.xlu0 %v922, 4
      %v1008 = vpop.permute.xlu0 %1007
      %1009 = vrot.lane.b32.xlu0 %v923, 4
      %v1010 = vpop.permute.xlu0 %1009
      %1011 = vrot.lane.b32.xlu0 %v924, 4
      %v1012 = vpop.permute.xlu0 %1011
      %1013 = vrot.lane.b32.xlu0 %v925, 4
      %v1014 = vpop.permute.xlu0 %1013
      %1015 = vrot.lane.b32.xlu0 %v926, 4
      %v1016 = vpop.permute.xlu0 %1015
      %1017 = vrot.lane.b32.xlu0 %v927, 4
      %v1018 = vpop.permute.xlu0 %1017
      %1019 = vrot.lane.b32.xlu0 %v928, 4
      %v1020 = vpop.permute.xlu0 %1019
      %1021 = vrot.lane.b32.xlu0 %v929, 4
      %v1022 = vpop.permute.xlu0 %1021
      %1023 = vrot.lane.b32.xlu0 %v930, 4
      %v1024 = vpop.permute.xlu0 %1023
      %1025 = vrot.lane.b32.xlu0 %v931, 4
      %v1026 = vpop.permute.xlu0 %1025
      %1027 = vrot.lane.b32.xlu0 %v932, 4
      %v1028 = vpop.permute.xlu0 %1027
      %vm1061 = vcmask 60448
      %1062 = vst.msk [vmem:[#allocation4] sm:$0xf] %vm1061, %v966
      %1063 = vst.msk [vmem:[#allocation4 + $0x4] sm:$0xf] %vm1061, %v968
      %1064 = vst.msk [vmem:[#allocation4 + $0x8] sm:$0xf] %vm1061, %v970
      %1065 = vst.msk [vmem:[#allocation4 + $0xc] sm:$0xf] %vm1061, %v972
      %1066 = vst.msk [vmem:[#allocation4 + $0x10] sm:$0xf] %vm1061, %v974
      %1067 = vst.msk [vmem:[#allocation4 + $0x14] sm:$0xf] %vm1061, %v976
      %1068 = vst.msk [vmem:[#allocation4 + $0x18] sm:$0xf] %vm1061, %v978
      %1069 = vst.msk [vmem:[#allocation4 + $0x1c] sm:$0xf] %vm1061, %v980
      %1070 = vst.msk [vmem:[#allocation4 + $0x20] sm:$0xf] %vm1061, %v982
      %1071 = vst.msk [vmem:[#allocation4 + $0x24] sm:$0xf] %vm1061, %v984
      %1072 = vst.msk [vmem:[#allocation4 + $0x28] sm:$0xf] %vm1061, %v986
      %1073 = vst.msk [vmem:[#allocation4 + $0x2c] sm:$0xf] %vm1061, %v988
      %1074 = vst.msk [vmem:[#allocation4 + $0x30] sm:$0xf] %vm1061, %v990
      %1075 = vst.msk [vmem:[#allocation4 + $0x34] sm:$0xf] %vm1061, %v992
      %1076 = vst.msk [vmem:[#allocation4 + $0x38] sm:$0xf] %vm1061, %v994
      %1077 = vst.msk [vmem:[#allocation4 + $0x3c] sm:$0xf] %vm1061, %v996
      %1078 = vst.msk [vmem:[#allocation4 + $0x40] sm:$0xf] %vm1061, %v998
      %1079 = vst.msk [vmem:[#allocation4 + $0x44] sm:$0xf] %vm1061, %v1000
      %1080 = vst.msk [vmem:[#allocation4 + $0x48] sm:$0xf] %vm1061, %v1002
      %1081 = vst.msk [vmem:[#allocation4 + $0x4c] sm:$0xf] %vm1061, %v1004
      %1082 = vst.msk [vmem:[#allocation4 + $0x50] sm:$0xf] %vm1061, %v1006
      %1083 = vst.msk [vmem:[#allocation4 + $0x54] sm:$0xf] %vm1061, %v1008
      %1084 = vst.msk [vmem:[#allocation4 + $0x58] sm:$0xf] %vm1061, %v1010
      %1085 = vst.msk [vmem:[#allocation4 + $0x5c] sm:$0xf] %vm1061, %v1012
      %1086 = vst.msk [vmem:[#allocation4 + $0x60] sm:$0xf] %vm1061, %v1014
      %1087 = vst.msk [vmem:[#allocation4 + $0x64] sm:$0xf] %vm1061, %v1016
      %1088 = vst.msk [vmem:[#allocation4 + $0x68] sm:$0xf] %vm1061, %v1018
      %1089 = vst.msk [vmem:[#allocation4 + $0x6c] sm:$0xf] %vm1061, %v1020
      %1090 = vst.msk [vmem:[#allocation4 + $0x70] sm:$0xf] %vm1061, %v1022
      %1091 = vst.msk [vmem:[#allocation4 + $0x74] sm:$0xf] %vm1061, %v1024
      %1092 = vst.msk [vmem:[#allocation4 + $0x78] sm:$0xf] %vm1061, %v1026
      %1093 = vst.msk [vmem:[#allocation4 + $0x7c] sm:$0xf] %vm1061, %v1028
      %v1094 = vld [vmem:[#allocation2 + $0x2] sm:$0xff]
      %v1095 = vld [vmem:[#allocation2 + $0xa] sm:$0xff]
      %v1096 = vld [vmem:[#allocation2 + $0x1a] sm:$0xff]
      %v1097 = vld [vmem:[#allocation2 + $0x22] sm:$0xff]
      %v1098 = vld [vmem:[#allocation2 + $0x32] sm:$0xff]
      %v1099 = vld [vmem:[#allocation2 + $0x3a] sm:$0xff]
      %v1100 = vld [vmem:[#allocation2 + $0x4a] sm:$0xff]
      %v1101 = vld [vmem:[#allocation2 + $0x52] sm:$0xff]
      %v1102 = vld [vmem:[#allocation2 + $0x62] sm:$0xff]
      %v1103 = vld [vmem:[#allocation2 + $0x6a] sm:$0xff]
      %v1104 = vld [vmem:[#allocation2 + $0x7a] sm:$0xff]
      %v1105 = vld [vmem:[#allocation2 + $0x82] sm:$0xff]
      %v1106 = vld [vmem:[#allocation2 + $0x92] sm:$0xff]
      %v1107 = vld [vmem:[#allocation2 + $0x9a] sm:$0xff]
      %v1108 = vld [vmem:[#allocation2 + $0xaa] sm:$0xff]
      %v1109 = vld [vmem:[#allocation2 + $0xb2] sm:$0xff]
      %v1110 = vld [vmem:[#allocation2 + $0xc2] sm:$0xff]
      %v1111 = vld [vmem:[#allocation2 + $0xca] sm:$0xff]
      %v1112 = vld [vmem:[#allocation2 + $0xda] sm:$0xff]
      %v1113 = vld [vmem:[#allocation2 + $0xe2] sm:$0xff]
      %v1114 = vld [vmem:[#allocation2 + $0xf2] sm:$0xff]
      %v1115 = vld [vmem:[#allocation2 + $0xfa] sm:$0xff]
      %v1116 = vld [vmem:[#allocation2 + $0x10a] sm:$0xff]
      %v1117 = vld [vmem:[#allocation2 + $0x112] sm:$0xff]
      %v1118 = vld [vmem:[#allocation2 + $0x122] sm:$0xff]
      %v1119 = vld [vmem:[#allocation2 + $0x12a] sm:$0xff]
      %v1120 = vld [vmem:[#allocation2 + $0x13a] sm:$0xff]
      %v1121 = vld [vmem:[#allocation2 + $0x142] sm:$0xff]
      %v1122 = vld [vmem:[#allocation2 + $0x152] sm:$0xff]
      %v1123 = vld [vmem:[#allocation2 + $0x15a] sm:$0xff]
      %v1124 = vld [vmem:[#allocation2 + $0x16a] sm:$0xff]
      %v1125 = vld [vmem:[#allocation2 + $0x172] sm:$0xff]
      %v1126 = vmul.f32 %v1094, %v739
      %v1127 = vmul.f32 %v1095, %v739
      %v1128 = vmul.f32 %v1096, %v739
      %v1129 = vmul.f32 %v1097, %v739
      %v1130 = vmul.f32 %v1098, %v739
      %v1131 = vmul.f32 %v1099, %v739
      %v1132 = vmul.f32 %v1100, %v739
      %v1133 = vmul.f32 %v1101, %v739
      %v1134 = vmul.f32 %v1102, %v739
      %v1135 = vmul.f32 %v1103, %v739
      %v1136 = vmul.f32 %v1104, %v739
      %v1137 = vmul.f32 %v1105, %v739
      %v1138 = vmul.f32 %v1106, %v739
      %v1139 = vmul.f32 %v1107, %v739
      %v1140 = vmul.f32 %v1108, %v739
      %v1141 = vmul.f32 %v1109, %v739
      %v1142 = vmul.f32 %v1110, %v739
      %v1143 = vmul.f32 %v1111, %v739
      %v1144 = vmul.f32 %v1112, %v739
      %v1145 = vmul.f32 %v1113, %v739
      %v1146 = vmul.f32 %v1114, %v739
      %v1147 = vmul.f32 %v1115, %v739
      %v1148 = vmul.f32 %v1116, %v739
      %v1149 = vmul.f32 %v1117, %v739
      %v1150 = vmul.f32 %v1118, %v739
      %v1151 = vmul.f32 %v1119, %v739
      %v1152 = vmul.f32 %v1120, %v739
      %v1153 = vmul.f32 %v1121, %v739
      %v1154 = vmul.f32 %v1122, %v739
      %v1155 = vmul.f32 %v1123, %v739
      %v1156 = vmul.f32 %v1124, %v739
      %v1157 = vmul.f32 %v1125, %v739
      %v1158 = vpack.c.bf16 %v1126, %v1126
      %v1159 = vpack.c.bf16 %v1127, %v1127
      %v1160 = vpack.c.bf16 %v1128, %v1128
      %v1161 = vpack.c.bf16 %v1129, %v1129
      %v1162 = vpack.c.bf16 %v1130, %v1130
      %v1163 = vpack.c.bf16 %v1131, %v1131
      %v1164 = vpack.c.bf16 %v1132, %v1132
      %v1165 = vpack.c.bf16 %v1133, %v1133
      %v1166 = vpack.c.bf16 %v1134, %v1134
      %v1167 = vpack.c.bf16 %v1135, %v1135
      %v1168 = vpack.c.bf16 %v1136, %v1136
      %v1169 = vpack.c.bf16 %v1137, %v1137
      %v1170 = vpack.c.bf16 %v1138, %v1138
      %v1171 = vpack.c.bf16 %v1139, %v1139
      %v1172 = vpack.c.bf16 %v1140, %v1140
      %v1173 = vpack.c.bf16 %v1141, %v1141
      %v1174 = vpack.c.bf16 %v1142, %v1142
      %v1175 = vpack.c.bf16 %v1143, %v1143
      %v1176 = vpack.c.bf16 %v1144, %v1144
      %v1177 = vpack.c.bf16 %v1145, %v1145
      %v1178 = vpack.c.bf16 %v1146, %v1146
      %v1179 = vpack.c.bf16 %v1147, %v1147
      %v1180 = vpack.c.bf16 %v1148, %v1148
      %v1181 = vpack.c.bf16 %v1149, %v1149
      %v1182 = vpack.c.bf16 %v1150, %v1150
      %v1183 = vpack.c.bf16 %v1151, %v1151
      %v1184 = vpack.c.bf16 %v1152, %v1152
      %v1185 = vpack.c.bf16 %v1153, %v1153
      %v1186 = vpack.c.bf16 %v1154, %v1154
      %v1187 = vpack.c.bf16 %v1155, %v1155
      %v1188 = vpack.c.bf16 %v1156, %v1156
      %v1189 = vpack.c.bf16 %v1157, %v1157
      %1222 = vrot.lane.b32.xlu0 %v1158, 8
      %v1223 = vpop.permute.xlu0 %1222
      %1224 = vrot.lane.b32.xlu0 %v1159, 8
      %v1225 = vpop.permute.xlu0 %1224
      %1226 = vrot.lane.b32.xlu0 %v1160, 8
      %v1227 = vpop.permute.xlu0 %1226
      %1228 = vrot.lane.b32.xlu0 %v1161, 8
      %v1229 = vpop.permute.xlu0 %1228
      %1230 = vrot.lane.b32.xlu0 %v1162, 8
      %v1231 = vpop.permute.xlu0 %1230
      %1232 = vrot.lane.b32.xlu0 %v1163, 8
      %v1233 = vpop.permute.xlu0 %1232
      %1234 = vrot.lane.b32.xlu0 %v1164, 8
      %v1235 = vpop.permute.xlu0 %1234
      %1236 = vrot.lane.b32.xlu0 %v1165, 8
      %v1237 = vpop.permute.xlu0 %1236
      %1238 = vrot.lane.b32.xlu0 %v1166, 8
      %v1239 = vpop.permute.xlu0 %1238
      %1240 = vrot.lane.b32.xlu0 %v1167, 8
      %v1241 = vpop.permute.xlu0 %1240
      %1242 = vrot.lane.b32.xlu0 %v1168, 8
      %v1243 = vpop.permute.xlu0 %1242
      %1244 = vrot.lane.b32.xlu0 %v1169, 8
      %v1245 = vpop.permute.xlu0 %1244
      %1246 = vrot.lane.b32.xlu0 %v1170, 8
      %v1247 = vpop.permute.xlu0 %1246
      %1248 = vrot.lane.b32.xlu0 %v1171, 8
      %v1249 = vpop.permute.xlu0 %1248
      %1250 = vrot.lane.b32.xlu0 %v1172, 8
      %v1251 = vpop.permute.xlu0 %1250
      %1252 = vrot.lane.b32.xlu0 %v1173, 8
      %v1253 = vpop.permute.xlu0 %1252
      %1254 = vrot.lane.b32.xlu0 %v1174, 8
      %v1255 = vpop.permute.xlu0 %1254
      %1256 = vrot.lane.b32.xlu0 %v1175, 8
      %v1257 = vpop.permute.xlu0 %1256
      %1258 = vrot.lane.b32.xlu0 %v1176, 8
      %v1259 = vpop.permute.xlu0 %1258
      %1260 = vrot.lane.b32.xlu0 %v1177, 8
      %v1261 = vpop.permute.xlu0 %1260
      %1262 = vrot.lane.b32.xlu0 %v1178, 8
      %v1263 = vpop.permute.xlu0 %1262
      %1264 = vrot.lane.b32.xlu0 %v1179, 8
      %v1265 = vpop.permute.xlu0 %1264
      %1266 = vrot.lane.b32.xlu0 %v1180, 8
      %v1267 = vpop.permute.xlu0 %1266
      %1268 = vrot.lane.b32.xlu0 %v1181, 8
      %v1269 = vpop.permute.xlu0 %1268
      %1270 = vrot.lane.b32.xlu0 %v1182, 8
      %v1271 = vpop.permute.xlu0 %1270
      %1272 = vrot.lane.b32.xlu0 %v1183, 8
      %v1273 = vpop.permute.xlu0 %1272
      %1274 = vrot.lane.b32.xlu0 %v1184, 8
      %v1275 = vpop.permute.xlu0 %1274
      %1276 = vrot.lane.b32.xlu0 %v1185, 8
      %v1277 = vpop.permute.xlu0 %1276
      %1278 = vrot.lane.b32.xlu0 %v1186, 8
      %v1279 = vpop.permute.xlu0 %1278
      %1280 = vrot.lane.b32.xlu0 %v1187, 8
      %v1281 = vpop.permute.xlu0 %1280
      %1282 = vrot.lane.b32.xlu0 %v1188, 8
      %v1283 = vpop.permute.xlu0 %1282
      %1284 = vrot.lane.b32.xlu0 %v1189, 8
      %v1285 = vpop.permute.xlu0 %1284
      %vm1318 = vcmask 93248
      %1319 = vst.msk [vmem:[#allocation4] sm:$0xf] %vm1318, %v1223
      %1320 = vst.msk [vmem:[#allocation4 + $0x4] sm:$0xf] %vm1318, %v1225
      %1321 = vst.msk [vmem:[#allocation4 + $0x8] sm:$0xf] %vm1318, %v1227
      %1322 = vst.msk [vmem:[#allocation4 + $0xc] sm:$0xf] %vm1318, %v1229
      %1323 = vst.msk [vmem:[#allocation4 + $0x10] sm:$0xf] %vm1318, %v1231
      %1324 = vst.msk [vmem:[#allocation4 + $0x14] sm:$0xf] %vm1318, %v1233
      %1325 = vst.msk [vmem:[#allocation4 + $0x18] sm:$0xf] %vm1318, %v1235
      %1326 = vst.msk [vmem:[#allocation4 + $0x1c] sm:$0xf] %vm1318, %v1237
      %1327 = vst.msk [vmem:[#allocation4 + $0x20] sm:$0xf] %vm1318, %v1239
      %1328 = vst.msk [vmem:[#allocation4 + $0x24] sm:$0xf] %vm1318, %v1241
      %1329 = vst.msk [vmem:[#allocation4 + $0x28] sm:$0xf] %vm1318, %v1243
      %1330 = vst.msk [vmem:[#allocation4 + $0x2c] sm:$0xf] %vm1318, %v1245
      %1331 = vst.msk [vmem:[#allocation4 + $0x30] sm:$0xf] %vm1318, %v1247
      %1332 = vst.msk [vmem:[#allocation4 + $0x34] sm:$0xf] %vm1318, %v1249
      %1333 = vst.msk [vmem:[#allocation4 + $0x38] sm:$0xf] %vm1318, %v1251
      %1334 = vst.msk [vmem:[#allocation4 + $0x3c] sm:$0xf] %vm1318, %v1253
      %1335 = vst.msk [vmem:[#allocation4 + $0x40] sm:$0xf] %vm1318, %v1255
      %1336 = vst.msk [vmem:[#allocation4 + $0x44] sm:$0xf] %vm1318, %v1257
      %1337 = vst.msk [vmem:[#allocation4 + $0x48] sm:$0xf] %vm1318, %v1259
      %1338 = vst.msk [vmem:[#allocation4 + $0x4c] sm:$0xf] %vm1318, %v1261
      %1339 = vst.msk [vmem:[#allocation4 + $0x50] sm:$0xf] %vm1318, %v1263
      %1340 = vst.msk [vmem:[#allocation4 + $0x54] sm:$0xf] %vm1318, %v1265
      %1341 = vst.msk [vmem:[#allocation4 + $0x58] sm:$0xf] %vm1318, %v1267
      %1342 = vst.msk [vmem:[#allocation4 + $0x5c] sm:$0xf] %vm1318, %v1269
      %1343 = vst.msk [vmem:[#allocation4 + $0x60] sm:$0xf] %vm1318, %v1271
      %1344 = vst.msk [vmem:[#allocation4 + $0x64] sm:$0xf] %vm1318, %v1273
      %1345 = vst.msk [vmem:[#allocation4 + $0x68] sm:$0xf] %vm1318, %v1275
      %1346 = vst.msk [vmem:[#allocation4 + $0x6c] sm:$0xf] %vm1318, %v1277
      %1347 = vst.msk [vmem:[#allocation4 + $0x70] sm:$0xf] %vm1318, %v1279
      %1348 = vst.msk [vmem:[#allocation4 + $0x74] sm:$0xf] %vm1318, %v1281
      %1349 = vst.msk [vmem:[#allocation4 + $0x78] sm:$0xf] %vm1318, %v1283
      %1350 = vst.msk [vmem:[#allocation4 + $0x7c] sm:$0xf] %vm1318, %v1285
      %v1351 = vld [vmem:[%s674] sm:$0xff]
      %v1352 = vld [vmem:[%s674 + $0x8] sm:$0xff]
      %v1353 = vld [vmem:[%s674 + $0x18] sm:$0xff]
      %v1354 = vld [vmem:[%s674 + $0x20] sm:$0xff]
      %v1355 = vld [vmem:[%s674 + $0x30] sm:$0xff]
      %v1356 = vld [vmem:[%s674 + $0x38] sm:$0xff]
      %v1357 = vld [vmem:[%s674 + $0x48] sm:$0xff]
      %v1358 = vld [vmem:[%s674 + $0x50] sm:$0xff]
      %v1359 = vld [vmem:[%s674 + $0x60] sm:$0xff]
      %v1360 = vld [vmem:[%s674 + $0x68] sm:$0xff]
      %v1361 = vld [vmem:[%s674 + $0x78] sm:$0xff]
      %v1362 = vld [vmem:[%s674 + $0x80] sm:$0xff]
      %v1363 = vld [vmem:[%s674 + $0x90] sm:$0xff]
      %v1364 = vld [vmem:[%s674 + $0x98] sm:$0xff]
      %v1365 = vld [vmem:[%s674 + $0xa8] sm:$0xff]
      %v1366 = vld [vmem:[%s674 + $0xb0] sm:$0xff]
      %v1367 = vld [vmem:[%s674 + $0xc0] sm:$0xff]
      %v1368 = vld [vmem:[%s674 + $0xc8] sm:$0xff]
      %v1369 = vld [vmem:[%s674 + $0xd8] sm:$0xff]
      %v1370 = vld [vmem:[%s674 + $0xe0] sm:$0xff]
      %v1371 = vld [vmem:[%s674 + $0xf0] sm:$0xff]
      %v1372 = vld [vmem:[%s674 + $0xf8] sm:$0xff]
      %v1373 = vld [vmem:[%s674 + $0x108] sm:$0xff]
      %v1374 = vld [vmem:[%s674 + $0x110] sm:$0xff]
      %v1375 = vld [vmem:[%s674 + $0x120] sm:$0xff]
      %v1376 = vld [vmem:[%s674 + $0x128] sm:$0xff]
      %v1377 = vld [vmem:[%s674 + $0x138] sm:$0xff]
      %v1378 = vld [vmem:[%s674 + $0x140] sm:$0xff]
      %v1379 = vld [vmem:[%s674 + $0x150] sm:$0xff]
      %v1380 = vld [vmem:[%s674 + $0x158] sm:$0xff]
      %v1381 = vld [vmem:[%s674 + $0x168] sm:$0xff]
      %v1382 = vld [vmem:[%s674 + $0x170] sm:$0xff]
      %v1383 = vmul.f32 %v1351, %v739
      %v1384 = vmul.f32 %v1352, %v739
      %v1385 = vmul.f32 %v1353, %v739
      %v1386 = vmul.f32 %v1354, %v739
      %v1387 = vmul.f32 %v1355, %v739
      %v1388 = vmul.f32 %v1356, %v739
      %v1389 = vmul.f32 %v1357, %v739
      %v1390 = vmul.f32 %v1358, %v739
      %v1391 = vmul.f32 %v1359, %v739
      %v1392 = vmul.f32 %v1360, %v739
      %v1393 = vmul.f32 %v1361, %v739
      %v1394 = vmul.f32 %v1362, %v739
      %v1395 = vmul.f32 %v1363, %v739
      %v1396 = vmul.f32 %v1364, %v739
      %v1397 = vmul.f32 %v1365, %v739
      %v1398 = vmul.f32 %v1366, %v739
      %v1399 = vmul.f32 %v1367, %v739
      %v1400 = vmul.f32 %v1368, %v739
      %v1401 = vmul.f32 %v1369, %v739
      %v1402 = vmul.f32 %v1370, %v739
      %v1403 = vmul.f32 %v1371, %v739
      %v1404 = vmul.f32 %v1372, %v739
      %v1405 = vmul.f32 %v1373, %v739
      %v1406 = vmul.f32 %v1374, %v739
      %v1407 = vmul.f32 %v1375, %v739
      %v1408 = vmul.f32 %v1376, %v739
      %v1409 = vmul.f32 %v1377, %v739
      %v1410 = vmul.f32 %v1378, %v739
      %v1411 = vmul.f32 %v1379, %v739
      %v1412 = vmul.f32 %v1380, %v739
      %v1413 = vmul.f32 %v1381, %v739
      %v1414 = vmul.f32 %v1382, %v739
      %v1415 = vpack.c.bf16 %v1383, %v1383
      %v1416 = vpack.c.bf16 %v1384, %v1384
      %v1417 = vpack.c.bf16 %v1385, %v1385
      %v1418 = vpack.c.bf16 %v1386, %v1386
      %v1419 = vpack.c.bf16 %v1387, %v1387
      %v1420 = vpack.c.bf16 %v1388, %v1388
      %v1421 = vpack.c.bf16 %v1389, %v1389
      %v1422 = vpack.c.bf16 %v1390, %v1390
      %v1423 = vpack.c.bf16 %v1391, %v1391
      %v1424 = vpack.c.bf16 %v1392, %v1392
      %v1425 = vpack.c.bf16 %v1393, %v1393
      %v1426 = vpack.c.bf16 %v1394, %v1394
      %v1427 = vpack.c.bf16 %v1395, %v1395
      %v1428 = vpack.c.bf16 %v1396, %v1396
      %v1429 = vpack.c.bf16 %v1397, %v1397
      %v1430 = vpack.c.bf16 %v1398, %v1398
      %v1431 = vpack.c.bf16 %v1399, %v1399
      %v1432 = vpack.c.bf16 %v1400, %v1400
      %v1433 = vpack.c.bf16 %v1401, %v1401
      %v1434 = vpack.c.bf16 %v1402, %v1402
      %v1435 = vpack.c.bf16 %v1403, %v1403
      %v1436 = vpack.c.bf16 %v1404, %v1404
      %v1437 = vpack.c.bf16 %v1405, %v1405
      %v1438 = vpack.c.bf16 %v1406, %v1406
      %v1439 = vpack.c.bf16 %v1407, %v1407
      %v1440 = vpack.c.bf16 %v1408, %v1408
      %v1441 = vpack.c.bf16 %v1409, %v1409
      %v1442 = vpack.c.bf16 %v1410, %v1410
      %v1443 = vpack.c.bf16 %v1411, %v1411
      %v1444 = vpack.c.bf16 %v1412, %v1412
      %v1445 = vpack.c.bf16 %v1413, %v1413
      %v1446 = vpack.c.bf16 %v1414, %v1414
      %1479 = vrot.lane.b32.xlu0 %v1415, 12
      %v1480 = vpop.permute.xlu0 %1479
      %1481 = vrot.lane.b32.xlu0 %v1416, 12
      %v1482 = vpop.permute.xlu0 %1481
      %1483 = vrot.lane.b32.xlu0 %v1417, 12
      %v1484 = vpop.permute.xlu0 %1483
      %1485 = vrot.lane.b32.xlu0 %v1418, 12
      %v1486 = vpop.permute.xlu0 %1485
      %1487 = vrot.lane.b32.xlu0 %v1419, 12
      %v1488 = vpop.permute.xlu0 %1487
      %1489 = vrot.lane.b32.xlu0 %v1420, 12
      %v1490 = vpop.permute.xlu0 %1489
      %1491 = vrot.lane.b32.xlu0 %v1421, 12
      %v1492 = vpop.permute.xlu0 %1491
      %1493 = vrot.lane.b32.xlu0 %v1422, 12
      %v1494 = vpop.permute.xlu0 %1493
      %1495 = vrot.lane.b32.xlu0 %v1423, 12
      %v1496 = vpop.permute.xlu0 %1495
      %1497 = vrot.lane.b32.xlu0 %v1424, 12
      %v1498 = vpop.permute.xlu0 %1497
      %1499 = vrot.lane.b32.xlu0 %v1425, 12
      %v1500 = vpop.permute.xlu0 %1499
      %1501 = vrot.lane.b32.xlu0 %v1426, 12
      %v1502 = vpop.permute.xlu0 %1501
      %1503 = vrot.lane.b32.xlu0 %v1427, 12
      %v1504 = vpop.permute.xlu0 %1503
      %1505 = vrot.lane.b32.xlu0 %v1428, 12
      %v1506 = vpop.permute.xlu0 %1505
      %1507 = vrot.lane.b32.xlu0 %v1429, 12
      %v1508 = vpop.permute.xlu0 %1507
      %1509 = vrot.lane.b32.xlu0 %v1430, 12
      %v1510 = vpop.permute.xlu0 %1509
      %1511 = vrot.lane.b32.xlu0 %v1431, 12
      %v1512 = vpop.permute.xlu0 %1511
      %1513 = vrot.lane.b32.xlu0 %v1432, 12
      %v1514 = vpop.permute.xlu0 %1513
      %1515 = vrot.lane.b32.xlu0 %v1433, 12
      %v1516 = vpop.permute.xlu0 %1515
      %1517 = vrot.lane.b32.xlu0 %v1434, 12
      %v1518 = vpop.permute.xlu0 %1517
      %1519 = vrot.lane.b32.xlu0 %v1435, 12
      %v1520 = vpop.permute.xlu0 %1519
      %1521 = vrot.lane.b32.xlu0 %v1436, 12
      %v1522 = vpop.permute.xlu0 %1521
      %1523 = vrot.lane.b32.xlu0 %v1437, 12
      %v1524 = vpop.permute.xlu0 %1523
      %1525 = vrot.lane.b32.xlu0 %v1438, 12
      %v1526 = vpop.permute.xlu0 %1525
      %1527 = vrot.lane.b32.xlu0 %v1439, 12
      %v1528 = vpop.permute.xlu0 %1527
      %1529 = vrot.lane.b32.xlu0 %v1440, 12
      %v1530 = vpop.permute.xlu0 %1529
      %1531 = vrot.lane.b32.xlu0 %v1441, 12
      %v1532 = vpop.permute.xlu0 %1531
      %1533 = vrot.lane.b32.xlu0 %v1442, 12
      %v1534 = vpop.permute.xlu0 %1533
      %1535 = vrot.lane.b32.xlu0 %v1443, 12
      %v1536 = vpop.permute.xlu0 %1535
      %1537 = vrot.lane.b32.xlu0 %v1444, 12
      %v1538 = vpop.permute.xlu0 %1537
      %1539 = vrot.lane.b32.xlu0 %v1445, 12
      %v1540 = vpop.permute.xlu0 %1539
      %1541 = vrot.lane.b32.xlu0 %v1446, 12
      %v1542 = vpop.permute.xlu0 %1541
      %vm1575 = vcmask 126048
      %1576 = vst.msk [vmem:[#allocation4] sm:$0xf] %vm1575, %v1480
      %1577 = vst.msk [vmem:[#allocation4 + $0x4] sm:$0xf] %vm1575, %v1482
      %1578 = vst.msk [vmem:[#allocation4 + $0x8] sm:$0xf] %vm1575, %v1484
      %1579 = vst.msk [vmem:[#allocation4 + $0xc] sm:$0xf] %vm1575, %v1486
      %1580 = vst.msk [vmem:[#allocation4 + $0x10] sm:$0xf] %vm1575, %v1488
      %1581 = vst.msk [vmem:[#allocation4 + $0x14] sm:$0xf] %vm1575, %v1490
      %1582 = vst.msk [vmem:[#allocation4 + $0x18] sm:$0xf] %vm1575, %v1492
      %1583 = vst.msk [vmem:[#allocation4 + $0x1c] sm:$0xf] %vm1575, %v1494
      %1584 = vst.msk [vmem:[#allocation4 + $0x20] sm:$0xf] %vm1575, %v1496
      %1585 = vst.msk [vmem:[#allocation4 + $0x24] sm:$0xf] %vm1575, %v1498
      %1586 = vst.msk [vmem:[#allocation4 + $0x28] sm:$0xf] %vm1575, %v1500
      %1587 = vst.msk [vmem:[#allocation4 + $0x2c] sm:$0xf] %vm1575, %v1502
      %1588 = vst.msk [vmem:[#allocation4 + $0x30] sm:$0xf] %vm1575, %v1504
      %1589 = vst.msk [vmem:[#allocation4 + $0x34] sm:$0xf] %vm1575, %v1506
      %1590 = vst.msk [vmem:[#allocation4 + $0x38] sm:$0xf] %vm1575, %v1508
      %1591 = vst.msk [vmem:[#allocation4 + $0x3c] sm:$0xf] %vm1575, %v1510
      %1592 = vst.msk [vmem:[#allocation4 + $0x40] sm:$0xf] %vm1575, %v1512
      %1593 = vst.msk [vmem:[#allocation4 + $0x44] sm:$0xf] %vm1575, %v1514
      %1594 = vst.msk [vmem:[#allocation4 + $0x48] sm:$0xf] %vm1575, %v1516
      %1595 = vst.msk [vmem:[#allocation4 + $0x4c] sm:$0xf] %vm1575, %v1518
      %1596 = vst.msk [vmem:[#allocation4 + $0x50] sm:$0xf] %vm1575, %v1520
      %1597 = vst.msk [vmem:[#allocation4 + $0x54] sm:$0xf] %vm1575, %v1522
      %1598 = vst.msk [vmem:[#allocation4 + $0x58] sm:$0xf] %vm1575, %v1524
      %1599 = vst.msk [vmem:[#allocation4 + $0x5c] sm:$0xf] %vm1575, %v1526
      %1600 = vst.msk [vmem:[#allocation4 + $0x60] sm:$0xf] %vm1575, %v1528
      %1601 = vst.msk [vmem:[#allocation4 + $0x64] sm:$0xf] %vm1575, %v1530
      %1602 = vst.msk [vmem:[#allocation4 + $0x68] sm:$0xf] %vm1575, %v1532
      %1603 = vst.msk [vmem:[#allocation4 + $0x6c] sm:$0xf] %vm1575, %v1534
      %1604 = vst.msk [vmem:[#allocation4 + $0x70] sm:$0xf] %vm1575, %v1536
      %1605 = vst.msk [vmem:[#allocation4 + $0x74] sm:$0xf] %vm1575, %v1538
      %1606 = vst.msk [vmem:[#allocation4 + $0x78] sm:$0xf] %vm1575, %v1540
      %1607 = vst.msk [vmem:[#allocation4 + $0x7c] sm:$0xf] %vm1575, %v1542
      %v1608 = vld [vmem:[%s674 + $0x1] sm:$0xff]
      %v1609 = vld [vmem:[%s674 + $0x9] sm:$0xff]
      %v1610 = vld [vmem:[%s674 + $0x19] sm:$0xff]
      %v1611 = vld [vmem:[%s674 + $0x21] sm:$0xff]
      %v1612 = vld [vmem:[%s674 + $0x31] sm:$0xff]
      %v1613 = vld [vmem:[%s674 + $0x39] sm:$0xff]
      %v1614 = vld [vmem:[%s674 + $0x49] sm:$0xff]
      %v1615 = vld [vmem:[%s674 + $0x51] sm:$0xff]
      %v1616 = vld [vmem:[%s674 + $0x61] sm:$0xff]
      %v1617 = vld [vmem:[%s674 + $0x69] sm:$0xff]
      %v1618 = vld [vmem:[%s674 + $0x79] sm:$0xff]
      %v1619 = vld [vmem:[%s674 + $0x81] sm:$0xff]
      %v1620 = vld [vmem:[%s674 + $0x91] sm:$0xff]
      %v1621 = vld [vmem:[%s674 + $0x99] sm:$0xff]
      %v1622 = vld [vmem:[%s674 + $0xa9] sm:$0xff]
      %v1623 = vld [vmem:[%s674 + $0xb1] sm:$0xff]
      %v1624 = vld [vmem:[%s674 + $0xc1] sm:$0xff]
      %v1625 = vld [vmem:[%s674 + $0xc9] sm:$0xff]
      %v1626 = vld [vmem:[%s674 + $0xd9] sm:$0xff]
      %v1627 = vld [vmem:[%s674 + $0xe1] sm:$0xff]
      %v1628 = vld [vmem:[%s674 + $0xf1] sm:$0xff]
      %v1629 = vld [vmem:[%s674 + $0xf9] sm:$0xff]
      %v1630 = vld [vmem:[%s674 + $0x109] sm:$0xff]
      %v1631 = vld [vmem:[%s674 + $0x111] sm:$0xff]
      %v1632 = vld [vmem:[%s674 + $0x121] sm:$0xff]
      %v1633 = vld [vmem:[%s674 + $0x129] sm:$0xff]
      %v1634 = vld [vmem:[%s674 + $0x139] sm:$0xff]
      %v1635 = vld [vmem:[%s674 + $0x141] sm:$0xff]
      %v1636 = vld [vmem:[%s674 + $0x151] sm:$0xff]
      %v1637 = vld [vmem:[%s674 + $0x159] sm:$0xff]
      %v1638 = vld [vmem:[%s674 + $0x169] sm:$0xff]
      %v1639 = vld [vmem:[%s674 + $0x171] sm:$0xff]
      %v1640 = vmul.f32 %v1608, %v739
      %v1641 = vmul.f32 %v1609, %v739
      %v1642 = vmul.f32 %v1610, %v739
      %v1643 = vmul.f32 %v1611, %v739
      %v1644 = vmul.f32 %v1612, %v739
      %v1645 = vmul.f32 %v1613, %v739
      %v1646 = vmul.f32 %v1614, %v739
      %v1647 = vmul.f32 %v1615, %v739
      %v1648 = vmul.f32 %v1616, %v739
      %v1649 = vmul.f32 %v1617, %v739
      %v1650 = vmul.f32 %v1618, %v739
      %v1651 = vmul.f32 %v1619, %v739
      %v1652 = vmul.f32 %v1620, %v739
      %v1653 = vmul.f32 %v1621, %v739
      %v1654 = vmul.f32 %v1622, %v739
      %v1655 = vmul.f32 %v1623, %v739
      %v1656 = vmul.f32 %v1624, %v739
      %v1657 = vmul.f32 %v1625, %v739
      %v1658 = vmul.f32 %v1626, %v739
      %v1659 = vmul.f32 %v1627, %v739
      %v1660 = vmul.f32 %v1628, %v739
      %v1661 = vmul.f32 %v1629, %v739
      %v1662 = vmul.f32 %v1630, %v739
      %v1663 = vmul.f32 %v1631, %v739
      %v1664 = vmul.f32 %v1632, %v739
      %v1665 = vmul.f32 %v1633, %v739
      %v1666 = vmul.f32 %v1634, %v739
      %v1667 = vmul.f32 %v1635, %v739
      %v1668 = vmul.f32 %v1636, %v739
      %v1669 = vmul.f32 %v1637, %v739
      %v1670 = vmul.f32 %v1638, %v739
      %v1671 = vmul.f32 %v1639, %v739
      %v1672 = vpack.c.bf16 %v1640, %v1640
      %v1673 = vpack.c.bf16 %v1641, %v1641
      %v1674 = vpack.c.bf16 %v1642, %v1642
      %v1675 = vpack.c.bf16 %v1643, %v1643
      %v1676 = vpack.c.bf16 %v1644, %v1644
      %v1677 = vpack.c.bf16 %v1645, %v1645
      %v1678 = vpack.c.bf16 %v1646, %v1646
      %v1679 = vpack.c.bf16 %v1647, %v1647
      %v1680 = vpack.c.bf16 %v1648, %v1648
      %v1681 = vpack.c.bf16 %v1649, %v1649
      %v1682 = vpack.c.bf16 %v1650, %v1650
      %v1683 = vpack.c.bf16 %v1651, %v1651
      %v1684 = vpack.c.bf16 %v1652, %v1652
      %v1685 = vpack.c.bf16 %v1653, %v1653
      %v1686 = vpack.c.bf16 %v1654, %v1654
      %v1687 = vpack.c.bf16 %v1655, %v1655
      %v1688 = vpack.c.bf16 %v1656, %v1656
      %v1689 = vpack.c.bf16 %v1657, %v1657
      %v1690 = vpack.c.bf16 %v1658, %v1658
      %v1691 = vpack.c.bf16 %v1659, %v1659
      %v1692 = vpack.c.bf16 %v1660, %v1660
      %v1693 = vpack.c.bf16 %v1661, %v1661
      %v1694 = vpack.c.bf16 %v1662, %v1662
      %v1695 = vpack.c.bf16 %v1663, %v1663
      %v1696 = vpack.c.bf16 %v1664, %v1664
      %v1697 = vpack.c.bf16 %v1665, %v1665
      %v1698 = vpack.c.bf16 %v1666, %v1666
      %v1699 = vpack.c.bf16 %v1667, %v1667
      %v1700 = vpack.c.bf16 %v1668, %v1668
      %v1701 = vpack.c.bf16 %v1669, %v1669
      %v1702 = vpack.c.bf16 %v1670, %v1670
      %v1703 = vpack.c.bf16 %v1671, %v1671
      %1736 = vrot.lane.b32.xlu0 %v1672, 16
      %v1737 = vpop.permute.xlu0 %1736
      %1738 = vrot.lane.b32.xlu0 %v1673, 16
      %v1739 = vpop.permute.xlu0 %1738
      %1740 = vrot.lane.b32.xlu0 %v1674, 16
      %v1741 = vpop.permute.xlu0 %1740
      %1742 = vrot.lane.b32.xlu0 %v1675, 16
      %v1743 = vpop.permute.xlu0 %1742
      %1744 = vrot.lane.b32.xlu0 %v1676, 16
      %v1745 = vpop.permute.xlu0 %1744
      %1746 = vrot.lane.b32.xlu0 %v1677, 16
      %v1747 = vpop.permute.xlu0 %1746
      %1748 = vrot.lane.b32.xlu0 %v1678, 16
      %v1749 = vpop.permute.xlu0 %1748
      %1750 = vrot.lane.b32.xlu0 %v1679, 16
      %v1751 = vpop.permute.xlu0 %1750
      %1752 = vrot.lane.b32.xlu0 %v1680, 16
      %v1753 = vpop.permute.xlu0 %1752
      %1754 = vrot.lane.b32.xlu0 %v1681, 16
      %v1755 = vpop.permute.xlu0 %1754
      %1756 = vrot.lane.b32.xlu0 %v1682, 16
      %v1757 = vpop.permute.xlu0 %1756
      %1758 = vrot.lane.b32.xlu0 %v1683, 16
      %v1759 = vpop.permute.xlu0 %1758
      %1760 = vrot.lane.b32.xlu0 %v1684, 16
      %v1761 = vpop.permute.xlu0 %1760
      %1762 = vrot.lane.b32.xlu0 %v1685, 16
      %v1763 = vpop.permute.xlu0 %1762
      %1764 = vrot.lane.b32.xlu0 %v1686, 16
      %v1765 = vpop.permute.xlu0 %1764
      %1766 = vrot.lane.b32.xlu0 %v1687, 16
      %v1767 = vpop.permute.xlu0 %1766
      %1768 = vrot.lane.b32.xlu0 %v1688, 16
      %v1769 = vpop.permute.xlu0 %1768
      %1770 = vrot.lane.b32.xlu0 %v1689, 16
      %v1771 = vpop.permute.xlu0 %1770
      %1772 = vrot.lane.b32.xlu0 %v1690, 16
      %v1773 = vpop.permute.xlu0 %1772
      %1774 = vrot.lane.b32.xlu0 %v1691, 16
      %v1775 = vpop.permute.xlu0 %1774
      %1776 = vrot.lane.b32.xlu0 %v1692, 16
      %v1777 = vpop.permute.xlu0 %1776
      %1778 = vrot.lane.b32.xlu0 %v1693, 16
      %v1779 = vpop.permute.xlu0 %1778
      %1780 = vrot.lane.b32.xlu0 %v1694, 16
      %v1781 = vpop.permute.xlu0 %1780
      %1782 = vrot.lane.b32.xlu0 %v1695, 16
      %v1783 = vpop.permute.xlu0 %1782
      %1784 = vrot.lane.b32.xlu0 %v1696, 16
      %v1785 = vpop.permute.xlu0 %1784
      %1786 = vrot.lane.b32.xlu0 %v1697, 16
      %v1787 = vpop.permute.xlu0 %1786
      %1788 = vrot.lane.b32.xlu0 %v1698, 16
      %v1789 = vpop.permute.xlu0 %1788
      %1790 = vrot.lane.b32.xlu0 %v1699, 16
      %v1791 = vpop.permute.xlu0 %1790
      %1792 = vrot.lane.b32.xlu0 %v1700, 16
      %v1793 = vpop.permute.xlu0 %1792
      %1794 = vrot.lane.b32.xlu0 %v1701, 16
      %v1795 = vpop.permute.xlu0 %1794
      %1796 = vrot.lane.b32.xlu0 %v1702, 16
      %v1797 = vpop.permute.xlu0 %1796
      %1798 = vrot.lane.b32.xlu0 %v1703, 16
      %v1799 = vpop.permute.xlu0 %1798
      %vm1832 = vcmask 158848
      %1833 = vst.msk [vmem:[#allocation4] sm:$0xf] %vm1832, %v1737
      %1834 = vst.msk [vmem:[#allocation4 + $0x4] sm:$0xf] %vm1832, %v1739
      %1835 = vst.msk [vmem:[#allocation4 + $0x8] sm:$0xf] %vm1832, %v1741
      %1836 = vst.msk [vmem:[#allocation4 + $0xc] sm:$0xf] %vm1832, %v1743
      %1837 = vst.msk [vmem:[#allocation4 + $0x10] sm:$0xf] %vm1832, %v1745
      %1838 = vst.msk [vmem:[#allocation4 + $0x14] sm:$0xf] %vm1832, %v1747
      %1839 = vst.msk [vmem:[#allocation4 + $0x18] sm:$0xf] %vm1832, %v1749
      %1840 = vst.msk [vmem:[#allocation4 + $0x1c] sm:$0xf] %vm1832, %v1751
      %1841 = vst.msk [vmem:[#allocation4 + $0x20] sm:$0xf] %vm1832, %v1753
      %1842 = vst.msk [vmem:[#allocation4 + $0x24] sm:$0xf] %vm1832, %v1755
      %1843 = vst.msk [vmem:[#allocation4 + $0x28] sm:$0xf] %vm1832, %v1757
      %1844 = vst.msk [vmem:[#allocation4 + $0x2c] sm:$0xf] %vm1832, %v1759
      %1845 = vst.msk [vmem:[#allocation4 + $0x30] sm:$0xf] %vm1832, %v1761
      %1846 = vst.msk [vmem:[#allocation4 + $0x34] sm:$0xf] %vm1832, %v1763
      %1847 = vst.msk [vmem:[#allocation4 + $0x38] sm:$0xf] %vm1832, %v1765
      %1848 = vst.msk [vmem:[#allocation4 + $0x3c] sm:$0xf] %vm1832, %v1767
      %1849 = vst.msk [vmem:[#allocation4 + $0x40] sm:$0xf] %vm1832, %v1769
      %1850 = vst.msk [vmem:[#allocation4 + $0x44] sm:$0xf] %vm1832, %v1771
      %1851 = vst.msk [vmem:[#allocation4 + $0x48] sm:$0xf] %vm1832, %v1773
      %1852 = vst.msk [vmem:[#allocation4 + $0x4c] sm:$0xf] %vm1832, %v1775
      %1853 = vst.msk [vmem:[#allocation4 + $0x50] sm:$0xf] %vm1832, %v1777
      %1854 = vst.msk [vmem:[#allocation4 + $0x54] sm:$0xf] %vm1832, %v1779
      %1855 = vst.msk [vmem:[#allocation4 + $0x58] sm:$0xf] %vm1832, %v1781
      %1856 = vst.msk [vmem:[#allocation4 + $0x5c] sm:$0xf] %vm1832, %v1783
      %1857 = vst.msk [vmem:[#allocation4 + $0x60] sm:$0xf] %vm1832, %v1785
      %1858 = vst.msk [vmem:[#allocation4 + $0x64] sm:$0xf] %vm1832, %v1787
      %1859 = vst.msk [vmem:[#allocation4 + $0x68] sm:$0xf] %vm1832, %v1789
      %1860 = vst.msk [vmem:[#allocation4 + $0x6c] sm:$0xf] %vm1832, %v1791
      %1861 = vst.msk [vmem:[#allocation4 + $0x70] sm:$0xf] %vm1832, %v1793
      %1862 = vst.msk [vmem:[#allocation4 + $0x74] sm:$0xf] %vm1832, %v1795
      %1863 = vst.msk [vmem:[#allocation4 + $0x78] sm:$0xf] %vm1832, %v1797
      %1864 = vst.msk [vmem:[#allocation4 + $0x7c] sm:$0xf] %vm1832, %v1799
      %v1865 = vld [vmem:[%s674 + $0x2] sm:$0xff]
      %v1866 = vld [vmem:[%s674 + $0xa] sm:$0xff]
      %v1867 = vld [vmem:[%s674 + $0x1a] sm:$0xff]
      %v1868 = vld [vmem:[%s674 + $0x22] sm:$0xff]
      %v1869 = vld [vmem:[%s674 + $0x32] sm:$0xff]
      %v1870 = vld [vmem:[%s674 + $0x3a] sm:$0xff]
      %v1871 = vld [vmem:[%s674 + $0x4a] sm:$0xff]
      %v1872 = vld [vmem:[%s674 + $0x52] sm:$0xff]
      %v1873 = vld [vmem:[%s674 + $0x62] sm:$0xff]
      %v1874 = vld [vmem:[%s674 + $0x6a] sm:$0xff]
      %v1875 = vld [vmem:[%s674 + $0x7a] sm:$0xff]
      %v1876 = vld [vmem:[%s674 + $0x82] sm:$0xff]
      %v1877 = vld [vmem:[%s674 + $0x92] sm:$0xff]
      %v1878 = vld [vmem:[%s674 + $0x9a] sm:$0xff]
      %v1879 = vld [vmem:[%s674 + $0xaa] sm:$0xff]
      %v1880 = vld [vmem:[%s674 + $0xb2] sm:$0xff]
      %v1881 = vld [vmem:[%s674 + $0xc2] sm:$0xff]
      %v1882 = vld [vmem:[%s674 + $0xca] sm:$0xff]
      %v1883 = vld [vmem:[%s674 + $0xda] sm:$0xff]
      %v1884 = vld [vmem:[%s674 + $0xe2] sm:$0xff]
      %v1885 = vld [vmem:[%s674 + $0xf2] sm:$0xff]
      %v1886 = vld [vmem:[%s674 + $0xfa] sm:$0xff]
      %v1887 = vld [vmem:[%s674 + $0x10a] sm:$0xff]
      %v1888 = vld [vmem:[%s674 + $0x112] sm:$0xff]
      %v1889 = vld [vmem:[%s674 + $0x122] sm:$0xff]
      %v1890 = vld [vmem:[%s674 + $0x12a] sm:$0xff]
      %v1891 = vld [vmem:[%s674 + $0x13a] sm:$0xff]
      %v1892 = vld [vmem:[%s674 + $0x142] sm:$0xff]
      %v1893 = vld [vmem:[%s674 + $0x152] sm:$0xff]
      %v1894 = vld [vmem:[%s674 + $0x15a] sm:$0xff]
      %v1895 = vld [vmem:[%s674 + $0x16a] sm:$0xff]
      %v1896 = vld [vmem:[%s674 + $0x172] sm:$0xff]
      %v1897 = vmul.f32 %v1865, %v739
      %v1898 = vmul.f32 %v1866, %v739
      %v1899 = vmul.f32 %v1867, %v739
      %v1900 = vmul.f32 %v1868, %v739
      %v1901 = vmul.f32 %v1869, %v739
      %v1902 = vmul.f32 %v1870, %v739
      %v1903 = vmul.f32 %v1871, %v739
      %v1904 = vmul.f32 %v1872, %v739
      %v1905 = vmul.f32 %v1873, %v739
      %v1906 = vmul.f32 %v1874, %v739
      %v1907 = vmul.f32 %v1875, %v739
      %v1908 = vmul.f32 %v1876, %v739
      %v1909 = vmul.f32 %v1877, %v739
      %v1910 = vmul.f32 %v1878, %v739
      %v1911 = vmul.f32 %v1879, %v739
      %v1912 = vmul.f32 %v1880, %v739
      %v1913 = vmul.f32 %v1881, %v739
      %v1914 = vmul.f32 %v1882, %v739
      %v1915 = vmul.f32 %v1883, %v739
      %v1916 = vmul.f32 %v1884, %v739
      %v1917 = vmul.f32 %v1885, %v739
      %v1918 = vmul.f32 %v1886, %v739
      %v1919 = vmul.f32 %v1887, %v739
      %v1920 = vmul.f32 %v1888, %v739
      %v1921 = vmul.f32 %v1889, %v739
      %v1922 = vmul.f32 %v1890, %v739
      %v1923 = vmul.f32 %v1891, %v739
      %v1924 = vmul.f32 %v1892, %v739
      %v1925 = vmul.f32 %v1893, %v739
      %v1926 = vmul.f32 %v1894, %v739
      %v1927 = vmul.f32 %v1895, %v739
      %v1928 = vmul.f32 %v1896, %v739
      %v1929 = vpack.c.bf16 %v1897, %v1897
      %v1930 = vpack.c.bf16 %v1898, %v1898
      %v1931 = vpack.c.bf16 %v1899, %v1899
      %v1932 = vpack.c.bf16 %v1900, %v1900
      %v1933 = vpack.c.bf16 %v1901, %v1901
      %v1934 = vpack.c.bf16 %v1902, %v1902
      %v1935 = vpack.c.bf16 %v1903, %v1903
      %v1936 = vpack.c.bf16 %v1904, %v1904
      %v1937 = vpack.c.bf16 %v1905, %v1905
      %v1938 = vpack.c.bf16 %v1906, %v1906
      %v1939 = vpack.c.bf16 %v1907, %v1907
      %v1940 = vpack.c.bf16 %v1908, %v1908
      %v1941 = vpack.c.bf16 %v1909, %v1909
      %v1942 = vpack.c.bf16 %v1910, %v1910
      %v1943 = vpack.c.bf16 %v1911, %v1911
      %v1944 = vpack.c.bf16 %v1912, %v1912
      %v1945 = vpack.c.bf16 %v1913, %v1913
      %v1946 = vpack.c.bf16 %v1914, %v1914
      %v1947 = vpack.c.bf16 %v1915, %v1915
      %v1948 = vpack.c.bf16 %v1916, %v1916
      %v1949 = vpack.c.bf16 %v1917, %v1917
      %v1950 = vpack.c.bf16 %v1918, %v1918
      %v1951 = vpack.c.bf16 %v1919, %v1919
      %v1952 = vpack.c.bf16 %v1920, %v1920
      %v1953 = vpack.c.bf16 %v1921, %v1921
      %v1954 = vpack.c.bf16 %v1922, %v1922
      %v1955 = vpack.c.bf16 %v1923, %v1923
      %v1956 = vpack.c.bf16 %v1924, %v1924
      %v1957 = vpack.c.bf16 %v1925, %v1925
      %v1958 = vpack.c.bf16 %v1926, %v1926
      %v1959 = vpack.c.bf16 %v1927, %v1927
      %v1960 = vpack.c.bf16 %v1928, %v1928
      %1993 = vrot.lane.b32.xlu0 %v1929, 20
      %v1994 = vpop.permute.xlu0 %1993
      %1995 = vrot.lane.b32.xlu0 %v1930, 20
      %v1996 = vpop.permute.xlu0 %1995
      %1997 = vrot.lane.b32.xlu0 %v1931, 20
      %v1998 = vpop.permute.xlu0 %1997
      %1999 = vrot.lane.b32.xlu0 %v1932, 20
      %v2000 = vpop.permute.xlu0 %1999
      %2001 = vrot.lane.b32.xlu0 %v1933, 20
      %v2002 = vpop.permute.xlu0 %2001
      %2003 = vrot.lane.b32.xlu0 %v1934, 20
      %v2004 = vpop.permute.xlu0 %2003
      %2005 = vrot.lane.b32.xlu0 %v1935, 20
      %v2006 = vpop.permute.xlu0 %2005
      %2007 = vrot.lane.b32.xlu0 %v1936, 20
      %v2008 = vpop.permute.xlu0 %2007
      %2009 = vrot.lane.b32.xlu0 %v1937, 20
      %v2010 = vpop.permute.xlu0 %2009
      %2011 = vrot.lane.b32.xlu0 %v1938, 20
      %v2012 = vpop.permute.xlu0 %2011
      %2013 = vrot.lane.b32.xlu0 %v1939, 20
      %v2014 = vpop.permute.xlu0 %2013
      %2015 = vrot.lane.b32.xlu0 %v1940, 20
      %v2016 = vpop.permute.xlu0 %2015
      %2017 = vrot.lane.b32.xlu0 %v1941, 20
      %v2018 = vpop.permute.xlu0 %2017
      %2019 = vrot.lane.b32.xlu0 %v1942, 20
      %v2020 = vpop.permute.xlu0 %2019
      %2021 = vrot.lane.b32.xlu0 %v1943, 20
      %v2022 = vpop.permute.xlu0 %2021
      %2023 = vrot.lane.b32.xlu0 %v1944, 20
      %v2024 = vpop.permute.xlu0 %2023
      %2025 = vrot.lane.b32.xlu0 %v1945, 20
      %v2026 = vpop.permute.xlu0 %2025
      %2027 = vrot.lane.b32.xlu0 %v1946, 20
      %v2028 = vpop.permute.xlu0 %2027
      %2029 = vrot.lane.b32.xlu0 %v1947, 20
      %v2030 = vpop.permute.xlu0 %2029
      %2031 = vrot.lane.b32.xlu0 %v1948, 20
      %v2032 = vpop.permute.xlu0 %2031
      %2033 = vrot.lane.b32.xlu0 %v1949, 20
      %v2034 = vpop.permute.xlu0 %2033
      %2035 = vrot.lane.b32.xlu0 %v1950, 20
      %v2036 = vpop.permute.xlu0 %2035
      %2037 = vrot.lane.b32.xlu0 %v1951, 20
      %v2038 = vpop.permute.xlu0 %2037
      %2039 = vrot.lane.b32.xlu0 %v1952, 20
      %v2040 = vpop.permute.xlu0 %2039
      %2041 = vrot.lane.b32.xlu0 %v1953, 20
      %v2042 = vpop.permute.xlu0 %2041
      %2043 = vrot.lane.b32.xlu0 %v1954, 20
      %v2044 = vpop.permute.xlu0 %2043
      %2045 = vrot.lane.b32.xlu0 %v1955, 20
      %v2046 = vpop.permute.xlu0 %2045
      %2047 = vrot.lane.b32.xlu0 %v1956, 20
      %v2048 = vpop.permute.xlu0 %2047
      %2049 = vrot.lane.b32.xlu0 %v1957, 20
      %v2050 = vpop.permute.xlu0 %2049
      %2051 = vrot.lane.b32.xlu0 %v1958, 20
      %v2052 = vpop.permute.xlu0 %2051
      %2053 = vrot.lane.b32.xlu0 %v1959, 20
      %v2054 = vpop.permute.xlu0 %2053
      %2055 = vrot.lane.b32.xlu0 %v1960, 20
      %v2056 = vpop.permute.xlu0 %2055
      %vm2089 = vcmask 191648
      %2090 = vst.msk [vmem:[#allocation4] sm:$0xf] %vm2089, %v1994
      %2091 = vst.msk [vmem:[#allocation4 + $0x4] sm:$0xf] %vm2089, %v1996
      %2092 = vst.msk [vmem:[#allocation4 + $0x8] sm:$0xf] %vm2089, %v1998
      %2093 = vst.msk [vmem:[#allocation4 + $0xc] sm:$0xf] %vm2089, %v2000
      %2094 = vst.msk [vmem:[#allocation4 + $0x10] sm:$0xf] %vm2089, %v2002
      %2095 = vst.msk [vmem:[#allocation4 + $0x14] sm:$0xf] %vm2089, %v2004
      %2096 = vst.msk [vmem:[#allocation4 + $0x18] sm:$0xf] %vm2089, %v2006
      %2097 = vst.msk [vmem:[#allocation4 + $0x1c] sm:$0xf] %vm2089, %v2008
      %2098 = vst.msk [vmem:[#allocation4 + $0x20] sm:$0xf] %vm2089, %v2010
      %2099 = vst.msk [vmem:[#allocation4 + $0x24] sm:$0xf] %vm2089, %v2012
      %2100 = vst.msk [vmem:[#allocation4 + $0x28] sm:$0xf] %vm2089, %v2014
      %2101 = vst.msk [vmem:[#allocation4 + $0x2c] sm:$0xf] %vm2089, %v2016
      %2102 = vst.msk [vmem:[#allocation4 + $0x30] sm:$0xf] %vm2089, %v2018
      %2103 = vst.msk [vmem:[#allocation4 + $0x34] sm:$0xf] %vm2089, %v2020
      %2104 = vst.msk [vmem:[#allocation4 + $0x38] sm:$0xf] %vm2089, %v2022
      %2105 = vst.msk [vmem:[#allocation4 + $0x3c] sm:$0xf] %vm2089, %v2024
      %2106 = vst.msk [vmem:[#allocation4 + $0x40] sm:$0xf] %vm2089, %v2026
      %2107 = vst.msk [vmem:[#allocation4 + $0x44] sm:$0xf] %vm2089, %v2028
      %2108 = vst.msk [vmem:[#allocation4 + $0x48] sm:$0xf] %vm2089, %v2030
      %2109 = vst.msk [vmem:[#allocation4 + $0x4c] sm:$0xf] %vm2089, %v2032
      %2110 = vst.msk [vmem:[#allocation4 + $0x50] sm:$0xf] %vm2089, %v2034
      %2111 = vst.msk [vmem:[#allocation4 + $0x54] sm:$0xf] %vm2089, %v2036
      %2112 = vst.msk [vmem:[#allocation4 + $0x58] sm:$0xf] %vm2089, %v2038
      %2113 = vst.msk [vmem:[#allocation4 + $0x5c] sm:$0xf] %vm2089, %v2040
      %2114 = vst.msk [vmem:[#allocation4 + $0x60] sm:$0xf] %vm2089, %v2042
      %2115 = vst.msk [vmem:[#allocation4 + $0x64] sm:$0xf] %vm2089, %v2044
      %2116 = vst.msk [vmem:[#allocation4 + $0x68] sm:$0xf] %vm2089, %v2046
      %2117 = vst.msk [vmem:[#allocation4 + $0x6c] sm:$0xf] %vm2089, %v2048
      %2118 = vst.msk [vmem:[#allocation4 + $0x70] sm:$0xf] %vm2089, %v2050
      %2119 = vst.msk [vmem:[#allocation4 + $0x74] sm:$0xf] %vm2089, %v2052
      %2120 = vst.msk [vmem:[#allocation4 + $0x78] sm:$0xf] %vm2089, %v2054
      %2121 = vst.msk [vmem:[#allocation4 + $0x7c] sm:$0xf] %vm2089, %v2056
      %s2122 = scalar_lea.vmem [#allocation2], 48
      %v2123 = vld [vmem:[%s2122] sm:$0xff]
      %v2124 = vld [vmem:[%s2122 + $0x8] sm:$0xff]
      %v2125 = vld [vmem:[%s2122 + $0x18] sm:$0xff]
      %v2126 = vld [vmem:[%s2122 + $0x20] sm:$0xff]
      %v2127 = vld [vmem:[%s2122 + $0x30] sm:$0xff]
      %v2128 = vld [vmem:[%s2122 + $0x38] sm:$0xff]
      %v2129 = vld [vmem:[%s2122 + $0x48] sm:$0xff]
      %v2130 = vld [vmem:[%s2122 + $0x50] sm:$0xff]
      %v2131 = vld [vmem:[%s2122 + $0x60] sm:$0xff]
      %v2132 = vld [vmem:[%s2122 + $0x68] sm:$0xff]
      %v2133 = vld [vmem:[%s2122 + $0x78] sm:$0xff]
      %v2134 = vld [vmem:[%s2122 + $0x80] sm:$0xff]
      %v2135 = vld [vmem:[%s2122 + $0x90] sm:$0xff]
      %v2136 = vld [vmem:[%s2122 + $0x98] sm:$0xff]
      %v2137 = vld [vmem:[%s2122 + $0xa8] sm:$0xff]
      %v2138 = vld [vmem:[%s2122 + $0xb0] sm:$0xff]
      %v2139 = vld [vmem:[%s2122 + $0xc0] sm:$0xff]
      %v2140 = vld [vmem:[%s2122 + $0xc8] sm:$0xff]
      %v2141 = vld [vmem:[%s2122 + $0xd8] sm:$0xff]
      %v2142 = vld [vmem:[%s2122 + $0xe0] sm:$0xff]
      %v2143 = vld [vmem:[%s2122 + $0xf0] sm:$0xff]
      %v2144 = vld [vmem:[%s2122 + $0xf8] sm:$0xff]
      %v2145 = vld [vmem:[%s2122 + $0x108] sm:$0xff]
      %v2146 = vld [vmem:[%s2122 + $0x110] sm:$0xff]
      %v2147 = vld [vmem:[%s2122 + $0x120] sm:$0xff]
      %v2148 = vld [vmem:[%s2122 + $0x128] sm:$0xff]
      %v2149 = vld [vmem:[%s2122 + $0x138] sm:$0xff]
      %v2150 = vld [vmem:[%s2122 + $0x140] sm:$0xff]
      %v2151 = vld [vmem:[%s2122 + $0x150] sm:$0xff]
      %v2152 = vld [vmem:[%s2122 + $0x158] sm:$0xff]
      %v2153 = vld [vmem:[%s2122 + $0x168] sm:$0xff]
      %v2154 = vld [vmem:[%s2122 + $0x170] sm:$0xff]
      %v2155 = vmul.f32 %v2123, %v739
      %v2156 = vmul.f32 %v2124, %v739
      %v2157 = vmul.f32 %v2125, %v739
      %v2158 = vmul.f32 %v2126, %v739
      %v2159 = vmul.f32 %v2127, %v739
      %v2160 = vmul.f32 %v2128, %v739
      %v2161 = vmul.f32 %v2129, %v739
      %v2162 = vmul.f32 %v2130, %v739
      %v2163 = vmul.f32 %v2131, %v739
      %v2164 = vmul.f32 %v2132, %v739
      %v2165 = vmul.f32 %v2133, %v739
      %v2166 = vmul.f32 %v2134, %v739
      %v2167 = vmul.f32 %v2135, %v739
      %v2168 = vmul.f32 %v2136, %v739
      %v2169 = vmul.f32 %v2137, %v739
      %v2170 = vmul.f32 %v2138, %v739
      %v2171 = vmul.f32 %v2139, %v739
      %v2172 = vmul.f32 %v2140, %v739
      %v2173 = vmul.f32 %v2141, %v739
      %v2174 = vmul.f32 %v2142, %v739
      %v2175 = vmul.f32 %v2143, %v739
      %v2176 = vmul.f32 %v2144, %v739
      %v2177 = vmul.f32 %v2145, %v739
      %v2178 = vmul.f32 %v2146, %v739
      %v2179 = vmul.f32 %v2147, %v739
      %v2180 = vmul.f32 %v2148, %v739
      %v2181 = vmul.f32 %v2149, %v739
      %v2182 = vmul.f32 %v2150, %v739
      %v2183 = vmul.f32 %v2151, %v739
      %v2184 = vmul.f32 %v2152, %v739
      %v2185 = vmul.f32 %v2153, %v739
      %v2186 = vmul.f32 %v2154, %v739
      %v2187 = vpack.c.bf16 %v2155, %v2155
      %v2188 = vpack.c.bf16 %v2156, %v2156
      %v2189 = vpack.c.bf16 %v2157, %v2157
      %v2190 = vpack.c.bf16 %v2158, %v2158
      %v2191 = vpack.c.bf16 %v2159, %v2159
      %v2192 = vpack.c.bf16 %v2160, %v2160
      %v2193 = vpack.c.bf16 %v2161, %v2161
      %v2194 = vpack.c.bf16 %v2162, %v2162
      %v2195 = vpack.c.bf16 %v2163, %v2163
      %v2196 = vpack.c.bf16 %v2164, %v2164
      %v2197 = vpack.c.bf16 %v2165, %v2165
      %v2198 = vpack.c.bf16 %v2166, %v2166
      %v2199 = vpack.c.bf16 %v2167, %v2167
      %v2200 = vpack.c.bf16 %v2168, %v2168
      %v2201 = vpack.c.bf16 %v2169, %v2169
      %v2202 = vpack.c.bf16 %v2170, %v2170
      %v2203 = vpack.c.bf16 %v2171, %v2171
      %v2204 = vpack.c.bf16 %v2172, %v2172
      %v2205 = vpack.c.bf16 %v2173, %v2173
      %v2206 = vpack.c.bf16 %v2174, %v2174
      %v2207 = vpack.c.bf16 %v2175, %v2175
      %v2208 = vpack.c.bf16 %v2176, %v2176
      %v2209 = vpack.c.bf16 %v2177, %v2177
      %v2210 = vpack.c.bf16 %v2178, %v2178
      %v2211 = vpack.c.bf16 %v2179, %v2179
      %v2212 = vpack.c.bf16 %v2180, %v2180
      %v2213 = vpack.c.bf16 %v2181, %v2181
      %v2214 = vpack.c.bf16 %v2182, %v2182
      %v2215 = vpack.c.bf16 %v2183, %v2183
      %v2216 = vpack.c.bf16 %v2184, %v2184
      %v2217 = vpack.c.bf16 %v2185, %v2185
      %v2218 = vpack.c.bf16 %v2186, %v2186
      %2251 = vrot.lane.b32.xlu0 %v2187, 24
      %v2252 = vpop.permute.xlu0 %2251
      %2253 = vrot.lane.b32.xlu0 %v2188, 24
      %v2254 = vpop.permute.xlu0 %2253
      %2255 = vrot.lane.b32.xlu0 %v2189, 24
      %v2256 = vpop.permute.xlu0 %2255
      %2257 = vrot.lane.b32.xlu0 %v2190, 24
      %v2258 = vpop.permute.xlu0 %2257
      %2259 = vrot.lane.b32.xlu0 %v2191, 24
      %v2260 = vpop.permute.xlu0 %2259
      %2261 = vrot.lane.b32.xlu0 %v2192, 24
      %v2262 = vpop.permute.xlu0 %2261
      %2263 = vrot.lane.b32.xlu0 %v2193, 24
      %v2264 = vpop.permute.xlu0 %2263
      %2265 = vrot.lane.b32.xlu0 %v2194, 24
      %v2266 = vpop.permute.xlu0 %2265
      %2267 = vrot.lane.b32.xlu0 %v2195, 24
      %v2268 = vpop.permute.xlu0 %2267
      %2269 = vrot.lane.b32.xlu0 %v2196, 24
      %v2270 = vpop.permute.xlu0 %2269
      %2271 = vrot.lane.b32.xlu0 %v2197, 24
      %v2272 = vpop.permute.xlu0 %2271
      %2273 = vrot.lane.b32.xlu0 %v2198, 24
      %v2274 = vpop.permute.xlu0 %2273
      %2275 = vrot.lane.b32.xlu0 %v2199, 24
      %v2276 = vpop.permute.xlu0 %2275
      %2277 = vrot.lane.b32.xlu0 %v2200, 24
      %v2278 = vpop.permute.xlu0 %2277
      %2279 = vrot.lane.b32.xlu0 %v2201, 24
      %v2280 = vpop.permute.xlu0 %2279
      %2281 = vrot.lane.b32.xlu0 %v2202, 24
      %v2282 = vpop.permute.xlu0 %2281
      %2283 = vrot.lane.b32.xlu0 %v2203, 24
      %v2284 = vpop.permute.xlu0 %2283
      %2285 = vrot.lane.b32.xlu0 %v2204, 24
      %v2286 = vpop.permute.xlu0 %2285
      %2287 = vrot.lane.b32.xlu0 %v2205, 24
      %v2288 = vpop.permute.xlu0 %2287
      %2289 = vrot.lane.b32.xlu0 %v2206, 24
      %v2290 = vpop.permute.xlu0 %2289
      %2291 = vrot.lane.b32.xlu0 %v2207, 24
      %v2292 = vpop.permute.xlu0 %2291
      %2293 = vrot.lane.b32.xlu0 %v2208, 24
      %v2294 = vpop.permute.xlu0 %2293
      %2295 = vrot.lane.b32.xlu0 %v2209, 24
      %v2296 = vpop.permute.xlu0 %2295
      %2297 = vrot.lane.b32.xlu0 %v2210, 24
      %v2298 = vpop.permute.xlu0 %2297
      %2299 = vrot.lane.b32.xlu0 %v2211, 24
      %v2300 = vpop.permute.xlu0 %2299
      %2301 = vrot.lane.b32.xlu0 %v2212, 24
      %v2302 = vpop.permute.xlu0 %2301
      %2303 = vrot.lane.b32.xlu0 %v2213, 24
      %v2304 = vpop.permute.xlu0 %2303
      %2305 = vrot.lane.b32.xlu0 %v2214, 24
      %v2306 = vpop.permute.xlu0 %2305
      %2307 = vrot.lane.b32.xlu0 %v2215, 24
      %v2308 = vpop.permute.xlu0 %2307
      %2309 = vrot.lane.b32.xlu0 %v2216, 24
      %v2310 = vpop.permute.xlu0 %2309
      %2311 = vrot.lane.b32.xlu0 %v2217, 24
      %v2312 = vpop.permute.xlu0 %2311
      %2313 = vrot.lane.b32.xlu0 %v2218, 24
      %v2314 = vpop.permute.xlu0 %2313
      %vm2347 = vcmask 224448
      %2348 = vst.msk [vmem:[#allocation4] sm:$0xf] %vm2347, %v2252
      %2349 = vst.msk [vmem:[#allocation4 + $0x4] sm:$0xf] %vm2347, %v2254
      %2350 = vst.msk [vmem:[#allocation4 + $0x8] sm:$0xf] %vm2347, %v2256
      %2351 = vst.msk [vmem:[#allocation4 + $0xc] sm:$0xf] %vm2347, %v2258
      %2352 = vst.msk [vmem:[#allocation4 + $0x10] sm:$0xf] %vm2347, %v2260
      %2353 = vst.msk [vmem:[#allocation4 + $0x14] sm:$0xf] %vm2347, %v2262
      %2354 = vst.msk [vmem:[#allocation4 + $0x18] sm:$0xf] %vm2347, %v2264
      %2355 = vst.msk [vmem:[#allocation4 + $0x1c] sm:$0xf] %vm2347, %v2266
      %2356 = vst.msk [vmem:[#allocation4 + $0x20] sm:$0xf] %vm2347, %v2268
      %2357 = vst.msk [vmem:[#allocation4 + $0x24] sm:$0xf] %vm2347, %v2270
      %2358 = vst.msk [vmem:[#allocation4 + $0x28] sm:$0xf] %vm2347, %v2272
      %2359 = vst.msk [vmem:[#allocation4 + $0x2c] sm:$0xf] %vm2347, %v2274
      %2360 = vst.msk [vmem:[#allocation4 + $0x30] sm:$0xf] %vm2347, %v2276
      %2361 = vst.msk [vmem:[#allocation4 + $0x34] sm:$0xf] %vm2347, %v2278
      %2362 = vst.msk [vmem:[#allocation4 + $0x38] sm:$0xf] %vm2347, %v2280
      %2363 = vst.msk [vmem:[#allocation4 + $0x3c] sm:$0xf] %vm2347, %v2282
      %2364 = vst.msk [vmem:[#allocation4 + $0x40] sm:$0xf] %vm2347, %v2284
      %2365 = vst.msk [vmem:[#allocation4 + $0x44] sm:$0xf] %vm2347, %v2286
      %2366 = vst.msk [vmem:[#allocation4 + $0x48] sm:$0xf] %vm2347, %v2288
      %2367 = vst.msk [vmem:[#allocation4 + $0x4c] sm:$0xf] %vm2347, %v2290
      %2368 = vst.msk [vmem:[#allocation4 + $0x50] sm:$0xf] %vm2347, %v2292
      %2369 = vst.msk [vmem:[#allocation4 + $0x54] sm:$0xf] %vm2347, %v2294
      %2370 = vst.msk [vmem:[#allocation4 + $0x58] sm:$0xf] %vm2347, %v2296
      %2371 = vst.msk [vmem:[#allocation4 + $0x5c] sm:$0xf] %vm2347, %v2298
      %2372 = vst.msk [vmem:[#allocation4 + $0x60] sm:$0xf] %vm2347, %v2300
      %2373 = vst.msk [vmem:[#allocation4 + $0x64] sm:$0xf] %vm2347, %v2302
      %2374 = vst.msk [vmem:[#allocation4 + $0x68] sm:$0xf] %vm2347, %v2304
      %2375 = vst.msk [vmem:[#allocation4 + $0x6c] sm:$0xf] %vm2347, %v2306
      %2376 = vst.msk [vmem:[#allocation4 + $0x70] sm:$0xf] %vm2347, %v2308
      %2377 = vst.msk [vmem:[#allocation4 + $0x74] sm:$0xf] %vm2347, %v2310
      %2378 = vst.msk [vmem:[#allocation4 + $0x78] sm:$0xf] %vm2347, %v2312
      %2379 = vst.msk [vmem:[#allocation4 + $0x7c] sm:$0xf] %vm2347, %v2314
      %v2380 = vld [vmem:[%s2122 + $0x1] sm:$0xff]
      %v2381 = vld [vmem:[%s2122 + $0x9] sm:$0xff]
      %v2382 = vld [vmem:[%s2122 + $0x19] sm:$0xff]
      %v2383 = vld [vmem:[%s2122 + $0x21] sm:$0xff]
      %v2384 = vld [vmem:[%s2122 + $0x31] sm:$0xff]
      %v2385 = vld [vmem:[%s2122 + $0x39] sm:$0xff]
      %v2386 = vld [vmem:[%s2122 + $0x49] sm:$0xff]
      %v2387 = vld [vmem:[%s2122 + $0x51] sm:$0xff]
      %v2388 = vld [vmem:[%s2122 + $0x61] sm:$0xff]
      %v2389 = vld [vmem:[%s2122 + $0x69] sm:$0xff]
      %v2390 = vld [vmem:[%s2122 + $0x79] sm:$0xff]
      %v2391 = vld [vmem:[%s2122 + $0x81] sm:$0xff]
      %v2392 = vld [vmem:[%s2122 + $0x91] sm:$0xff]
      %v2393 = vld [vmem:[%s2122 + $0x99] sm:$0xff]
      %v2394 = vld [vmem:[%s2122 + $0xa9] sm:$0xff]
      %v2395 = vld [vmem:[%s2122 + $0xb1] sm:$0xff]
      %v2396 = vld [vmem:[%s2122 + $0xc1] sm:$0xff]
      %v2397 = vld [vmem:[%s2122 + $0xc9] sm:$0xff]
      %v2398 = vld [vmem:[%s2122 + $0xd9] sm:$0xff]
      %v2399 = vld [vmem:[%s2122 + $0xe1] sm:$0xff]
      %v2400 = vld [vmem:[%s2122 + $0xf1] sm:$0xff]
      %v2401 = vld [vmem:[%s2122 + $0xf9] sm:$0xff]
      %v2402 = vld [vmem:[%s2122 + $0x109] sm:$0xff]
      %v2403 = vld [vmem:[%s2122 + $0x111] sm:$0xff]
      %v2404 = vld [vmem:[%s2122 + $0x121] sm:$0xff]
      %v2405 = vld [vmem:[%s2122 + $0x129] sm:$0xff]
      %v2406 = vld [vmem:[%s2122 + $0x139] sm:$0xff]
      %v2407 = vld [vmem:[%s2122 + $0x141] sm:$0xff]
      %v2408 = vld [vmem:[%s2122 + $0x151] sm:$0xff]
      %v2409 = vld [vmem:[%s2122 + $0x159] sm:$0xff]
      %v2410 = vld [vmem:[%s2122 + $0x169] sm:$0xff]
      %v2411 = vld [vmem:[%s2122 + $0x171] sm:$0xff]
      %v2412 = vmul.f32 %v2380, %v739
      %v2413 = vmul.f32 %v2381, %v739
      %v2414 = vmul.f32 %v2382, %v739
      %v2415 = vmul.f32 %v2383, %v739
      %v2416 = vmul.f32 %v2384, %v739
      %v2417 = vmul.f32 %v2385, %v739
      %v2418 = vmul.f32 %v2386, %v739
      %v2419 = vmul.f32 %v2387, %v739
      %v2420 = vmul.f32 %v2388, %v739
      %v2421 = vmul.f32 %v2389, %v739
      %v2422 = vmul.f32 %v2390, %v739
      %v2423 = vmul.f32 %v2391, %v739
      %v2424 = vmul.f32 %v2392, %v739
      %v2425 = vmul.f32 %v2393, %v739
      %v2426 = vmul.f32 %v2394, %v739
      %v2427 = vmul.f32 %v2395, %v739
      %v2428 = vmul.f32 %v2396, %v739
      %v2429 = vmul.f32 %v2397, %v739
      %v2430 = vmul.f32 %v2398, %v739
      %v2431 = vmul.f32 %v2399, %v739
      %v2432 = vmul.f32 %v2400, %v739
      %v2433 = vmul.f32 %v2401, %v739
      %v2434 = vmul.f32 %v2402, %v739
      %v2435 = vmul.f32 %v2403, %v739
      %v2436 = vmul.f32 %v2404, %v739
      %v2437 = vmul.f32 %v2405, %v739
      %v2438 = vmul.f32 %v2406, %v739
      %v2439 = vmul.f32 %v2407, %v739
      %v2440 = vmul.f32 %v2408, %v739
      %v2441 = vmul.f32 %v2409, %v739
      %v2442 = vmul.f32 %v2410, %v739
      %v2443 = vmul.f32 %v2411, %v739
      %v2444 = vpack.c.bf16 %v2412, %v2412
      %v2445 = vpack.c.bf16 %v2413, %v2413
      %v2446 = vpack.c.bf16 %v2414, %v2414
      %v2447 = vpack.c.bf16 %v2415, %v2415
      %v2448 = vpack.c.bf16 %v2416, %v2416
      %v2449 = vpack.c.bf16 %v2417, %v2417
      %v2450 = vpack.c.bf16 %v2418, %v2418
      %v2451 = vpack.c.bf16 %v2419, %v2419
      %v2452 = vpack.c.bf16 %v2420, %v2420
      %v2453 = vpack.c.bf16 %v2421, %v2421
      %v2454 = vpack.c.bf16 %v2422, %v2422
      %v2455 = vpack.c.bf16 %v2423, %v2423
      %v2456 = vpack.c.bf16 %v2424, %v2424
      %v2457 = vpack.c.bf16 %v2425, %v2425
      %v2458 = vpack.c.bf16 %v2426, %v2426
      %v2459 = vpack.c.bf16 %v2427, %v2427
      %v2460 = vpack.c.bf16 %v2428, %v2428
      %v2461 = vpack.c.bf16 %v2429, %v2429
      %v2462 = vpack.c.bf16 %v2430, %v2430
      %v2463 = vpack.c.bf16 %v2431, %v2431
      %v2464 = vpack.c.bf16 %v2432, %v2432
      %v2465 = vpack.c.bf16 %v2433, %v2433
      %v2466 = vpack.c.bf16 %v2434, %v2434
      %v2467 = vpack.c.bf16 %v2435, %v2435
      %v2468 = vpack.c.bf16 %v2436, %v2436
      %v2469 = vpack.c.bf16 %v2437, %v2437
      %v2470 = vpack.c.bf16 %v2438, %v2438
      %v2471 = vpack.c.bf16 %v2439, %v2439
      %v2472 = vpack.c.bf16 %v2440, %v2440
      %v2473 = vpack.c.bf16 %v2441, %v2441
      %v2474 = vpack.c.bf16 %v2442, %v2442
      %v2475 = vpack.c.bf16 %v2443, %v2443
      %2508 = vrot.lane.b32.xlu0 %v2444, 28
      %v2509 = vpop.permute.xlu0 %2508
      %2510 = vrot.lane.b32.xlu0 %v2445, 28
      %v2511 = vpop.permute.xlu0 %2510
      %2512 = vrot.lane.b32.xlu0 %v2446, 28
      %v2513 = vpop.permute.xlu0 %2512
      %2514 = vrot.lane.b32.xlu0 %v2447, 28
      %v2515 = vpop.permute.xlu0 %2514
      %2516 = vrot.lane.b32.xlu0 %v2448, 28
      %v2517 = vpop.permute.xlu0 %2516
      %2518 = vrot.lane.b32.xlu0 %v2449, 28
      %v2519 = vpop.permute.xlu0 %2518
      %2520 = vrot.lane.b32.xlu0 %v2450, 28
      %v2521 = vpop.permute.xlu0 %2520
      %2522 = vrot.lane.b32.xlu0 %v2451, 28
      %v2523 = vpop.permute.xlu0 %2522
      %2524 = vrot.lane.b32.xlu0 %v2452, 28
      %v2525 = vpop.permute.xlu0 %2524
      %2526 = vrot.lane.b32.xlu0 %v2453, 28
      %v2527 = vpop.permute.xlu0 %2526
      %2528 = vrot.lane.b32.xlu0 %v2454, 28
      %v2529 = vpop.permute.xlu0 %2528
      %2530 = vrot.lane.b32.xlu0 %v2455, 28
      %v2531 = vpop.permute.xlu0 %2530
      %2532 = vrot.lane.b32.xlu0 %v2456, 28
      %v2533 = vpop.permute.xlu0 %2532
      %2534 = vrot.lane.b32.xlu0 %v2457, 28
      %v2535 = vpop.permute.xlu0 %2534
      %2536 = vrot.lane.b32.xlu0 %v2458, 28
      %v2537 = vpop.permute.xlu0 %2536
      %2538 = vrot.lane.b32.xlu0 %v2459, 28
      %v2539 = vpop.permute.xlu0 %2538
      %2540 = vrot.lane.b32.xlu0 %v2460, 28
      %v2541 = vpop.permute.xlu0 %2540
      %2542 = vrot.lane.b32.xlu0 %v2461, 28
      %v2543 = vpop.permute.xlu0 %2542
      %2544 = vrot.lane.b32.xlu0 %v2462, 28
      %v2545 = vpop.permute.xlu0 %2544
      %2546 = vrot.lane.b32.xlu0 %v2463, 28
      %v2547 = vpop.permute.xlu0 %2546
      %2548 = vrot.lane.b32.xlu0 %v2464, 28
      %v2549 = vpop.permute.xlu0 %2548
      %2550 = vrot.lane.b32.xlu0 %v2465, 28
      %v2551 = vpop.permute.xlu0 %2550
      %2552 = vrot.lane.b32.xlu0 %v2466, 28
      %v2553 = vpop.permute.xlu0 %2552
      %2554 = vrot.lane.b32.xlu0 %v2467, 28
      %v2555 = vpop.permute.xlu0 %2554
      %2556 = vrot.lane.b32.xlu0 %v2468, 28
      %v2557 = vpop.permute.xlu0 %2556
      %2558 = vrot.lane.b32.xlu0 %v2469, 28
      %v2559 = vpop.permute.xlu0 %2558
      %2560 = vrot.lane.b32.xlu0 %v2470, 28
      %v2561 = vpop.permute.xlu0 %2560
      %2562 = vrot.lane.b32.xlu0 %v2471, 28
      %v2563 = vpop.permute.xlu0 %2562
      %2564 = vrot.lane.b32.xlu0 %v2472, 28
      %v2565 = vpop.permute.xlu0 %2564
      %2566 = vrot.lane.b32.xlu0 %v2473, 28
      %v2567 = vpop.permute.xlu0 %2566
      %2568 = vrot.lane.b32.xlu0 %v2474, 28
      %v2569 = vpop.permute.xlu0 %2568
      %2570 = vrot.lane.b32.xlu0 %v2475, 28
      %v2571 = vpop.permute.xlu0 %2570
      %vm2604 = vcmask 257248
      %2605 = vst.msk [vmem:[#allocation4] sm:$0xf] %vm2604, %v2509
      %2606 = vst.msk [vmem:[#allocation4 + $0x4] sm:$0xf] %vm2604, %v2511
      %2607 = vst.msk [vmem:[#allocation4 + $0x8] sm:$0xf] %vm2604, %v2513
      %2608 = vst.msk [vmem:[#allocation4 + $0xc] sm:$0xf] %vm2604, %v2515
      %2609 = vst.msk [vmem:[#allocation4 + $0x10] sm:$0xf] %vm2604, %v2517
      %2610 = vst.msk [vmem:[#allocation4 + $0x14] sm:$0xf] %vm2604, %v2519
      %2611 = vst.msk [vmem:[#allocation4 + $0x18] sm:$0xf] %vm2604, %v2521
      %2612 = vst.msk [vmem:[#allocation4 + $0x1c] sm:$0xf] %vm2604, %v2523
      %2613 = vst.msk [vmem:[#allocation4 + $0x20] sm:$0xf] %vm2604, %v2525
      %2614 = vst.msk [vmem:[#allocation4 + $0x24] sm:$0xf] %vm2604, %v2527
      %2615 = vst.msk [vmem:[#allocation4 + $0x28] sm:$0xf] %vm2604, %v2529
      %2616 = vst.msk [vmem:[#allocation4 + $0x2c] sm:$0xf] %vm2604, %v2531
      %2617 = vst.msk [vmem:[#allocation4 + $0x30] sm:$0xf] %vm2604, %v2533
      %2618 = vst.msk [vmem:[#allocation4 + $0x34] sm:$0xf] %vm2604, %v2535
      %2619 = vst.msk [vmem:[#allocation4 + $0x38] sm:$0xf] %vm2604, %v2537
      %2620 = vst.msk [vmem:[#allocation4 + $0x3c] sm:$0xf] %vm2604, %v2539
      %2621 = vst.msk [vmem:[#allocation4 + $0x40] sm:$0xf] %vm2604, %v2541
      %2622 = vst.msk [vmem:[#allocation4 + $0x44] sm:$0xf] %vm2604, %v2543
      %2623 = vst.msk [vmem:[#allocation4 + $0x48] sm:$0xf] %vm2604, %v2545
      %2624 = vst.msk [vmem:[#allocation4 + $0x4c] sm:$0xf] %vm2604, %v2547
      %2625 = vst.msk [vmem:[#allocation4 + $0x50] sm:$0xf] %vm2604, %v2549
      %2626 = vst.msk [vmem:[#allocation4 + $0x54] sm:$0xf] %vm2604, %v2551
      %2627 = vst.msk [vmem:[#allocation4 + $0x58] sm:$0xf] %vm2604, %v2553
      %2628 = vst.msk [vmem:[#allocation4 + $0x5c] sm:$0xf] %vm2604, %v2555
      %2629 = vst.msk [vmem:[#allocation4 + $0x60] sm:$0xf] %vm2604, %v2557
      %2630 = vst.msk [vmem:[#allocation4 + $0x64] sm:$0xf] %vm2604, %v2559
      %2631 = vst.msk [vmem:[#allocation4 + $0x68] sm:$0xf] %vm2604, %v2561
      %2632 = vst.msk [vmem:[#allocation4 + $0x6c] sm:$0xf] %vm2604, %v2563
      %2633 = vst.msk [vmem:[#allocation4 + $0x70] sm:$0xf] %vm2604, %v2565
      %2634 = vst.msk [vmem:[#allocation4 + $0x74] sm:$0xf] %vm2604, %v2567
      %2635 = vst.msk [vmem:[#allocation4 + $0x78] sm:$0xf] %vm2604, %v2569
      %2636 = vst.msk [vmem:[#allocation4 + $0x7c] sm:$0xf] %vm2604, %v2571
      %v2637 = vld [vmem:[%s2122 + $0x2] sm:$0xff]
      %v2638 = vld [vmem:[%s2122 + $0xa] sm:$0xff]
      %v2639 = vld [vmem:[%s2122 + $0x1a] sm:$0xff]
      %v2640 = vld [vmem:[%s2122 + $0x22] sm:$0xff]
      %v2641 = vld [vmem:[%s2122 + $0x32] sm:$0xff]
      %v2642 = vld [vmem:[%s2122 + $0x3a] sm:$0xff]
      %v2643 = vld [vmem:[%s2122 + $0x4a] sm:$0xff]
      %v2644 = vld [vmem:[%s2122 + $0x52] sm:$0xff]
      %v2645 = vld [vmem:[%s2122 + $0x62] sm:$0xff]
      %v2646 = vld [vmem:[%s2122 + $0x6a] sm:$0xff]
      %v2647 = vld [vmem:[%s2122 + $0x7a] sm:$0xff]
      %v2648 = vld [vmem:[%s2122 + $0x82] sm:$0xff]
      %v2649 = vld [vmem:[%s2122 + $0x92] sm:$0xff]
      %v2650 = vld [vmem:[%s2122 + $0x9a] sm:$0xff]
      %v2651 = vld [vmem:[%s2122 + $0xaa] sm:$0xff]
      %v2652 = vld [vmem:[%s2122 + $0xb2] sm:$0xff]
      %v2653 = vld [vmem:[%s2122 + $0xc2] sm:$0xff]
      %v2654 = vld [vmem:[%s2122 + $0xca] sm:$0xff]
      %v2655 = vld [vmem:[%s2122 + $0xda] sm:$0xff]
      %v2656 = vld [vmem:[%s2122 + $0xe2] sm:$0xff]
      %v2657 = vld [vmem:[%s2122 + $0xf2] sm:$0xff]
      %v2658 = vld [vmem:[%s2122 + $0xfa] sm:$0xff]
      %v2659 = vld [vmem:[%s2122 + $0x10a] sm:$0xff]
      %v2660 = vld [vmem:[%s2122 + $0x112] sm:$0xff]
      %v2661 = vld [vmem:[%s2122 + $0x122] sm:$0xff]
      %v2662 = vld [vmem:[%s2122 + $0x12a] sm:$0xff]
      %v2663 = vld [vmem:[%s2122 + $0x13a] sm:$0xff]
      %v2664 = vld [vmem:[%s2122 + $0x142] sm:$0xff]
      %v2665 = vld [vmem:[%s2122 + $0x152] sm:$0xff]
      %v2666 = vld [vmem:[%s2122 + $0x15a] sm:$0xff]
      %v2667 = vld [vmem:[%s2122 + $0x16a] sm:$0xff]
      %v2668 = vld [vmem:[%s2122 + $0x172] sm:$0xff]
      %v2669 = vmul.f32 %v2637, %v739
      %v2670 = vmul.f32 %v2638, %v739
      %v2671 = vmul.f32 %v2639, %v739
      %v2672 = vmul.f32 %v2640, %v739
      %v2673 = vmul.f32 %v2641, %v739
      %v2674 = vmul.f32 %v2642, %v739
      %v2675 = vmul.f32 %v2643, %v739
      %v2676 = vmul.f32 %v2644, %v739
      %v2677 = vmul.f32 %v2645, %v739
      %v2678 = vmul.f32 %v2646, %v739
      %v2679 = vmul.f32 %v2647, %v739
      %v2680 = vmul.f32 %v2648, %v739
      %v2681 = vmul.f32 %v2649, %v739
      %v2682 = vmul.f32 %v2650, %v739
      %v2683 = vmul.f32 %v2651, %v739
      %v2684 = vmul.f32 %v2652, %v739
      %v2685 = vmul.f32 %v2653, %v739
      %v2686 = vmul.f32 %v2654, %v739
      %v2687 = vmul.f32 %v2655, %v739
      %v2688 = vmul.f32 %v2656, %v739
      %v2689 = vmul.f32 %v2657, %v739
      %v2690 = vmul.f32 %v2658, %v739
      %v2691 = vmul.f32 %v2659, %v739
      %v2692 = vmul.f32 %v2660, %v739
      %v2693 = vmul.f32 %v2661, %v739
      %v2694 = vmul.f32 %v2662, %v739
      %v2695 = vmul.f32 %v2663, %v739
      %v2696 = vmul.f32 %v2664, %v739
      %v2697 = vmul.f32 %v2665, %v739
      %v2698 = vmul.f32 %v2666, %v739
      %v2699 = vmul.f32 %v2667, %v739
      %v2700 = vmul.f32 %v2668, %v739
      %v2701 = vpack.c.bf16 %v2669, %v2669
      %v2702 = vpack.c.bf16 %v2670, %v2670
      %v2703 = vpack.c.bf16 %v2671, %v2671
      %v2704 = vpack.c.bf16 %v2672, %v2672
      %v2705 = vpack.c.bf16 %v2673, %v2673
      %v2706 = vpack.c.bf16 %v2674, %v2674
      %v2707 = vpack.c.bf16 %v2675, %v2675
      %v2708 = vpack.c.bf16 %v2676, %v2676
      %v2709 = vpack.c.bf16 %v2677, %v2677
      %v2710 = vpack.c.bf16 %v2678, %v2678
      %v2711 = vpack.c.bf16 %v2679, %v2679
      %v2712 = vpack.c.bf16 %v2680, %v2680
      %v2713 = vpack.c.bf16 %v2681, %v2681
      %v2714 = vpack.c.bf16 %v2682, %v2682
      %v2715 = vpack.c.bf16 %v2683, %v2683
      %v2716 = vpack.c.bf16 %v2684, %v2684
      %v2717 = vpack.c.bf16 %v2685, %v2685
      %v2718 = vpack.c.bf16 %v2686, %v2686
      %v2719 = vpack.c.bf16 %v2687, %v2687
      %v2720 = vpack.c.bf16 %v2688, %v2688
      %v2721 = vpack.c.bf16 %v2689, %v2689
      %v2722 = vpack.c.bf16 %v2690, %v2690
      %v2723 = vpack.c.bf16 %v2691, %v2691
      %v2724 = vpack.c.bf16 %v2692, %v2692
      %v2725 = vpack.c.bf16 %v2693, %v2693
      %v2726 = vpack.c.bf16 %v2694, %v2694
      %v2727 = vpack.c.bf16 %v2695, %v2695
      %v2728 = vpack.c.bf16 %v2696, %v2696
      %v2729 = vpack.c.bf16 %v2697, %v2697
      %v2730 = vpack.c.bf16 %v2698, %v2698
      %v2731 = vpack.c.bf16 %v2699, %v2699
      %v2732 = vpack.c.bf16 %v2700, %v2700
      %2765 = vrot.lane.b32.xlu0 %v2701, 32
      %v2766 = vpop.permute.xlu0 %2765
      %2767 = vrot.lane.b32.xlu0 %v2702, 32
      %v2768 = vpop.permute.xlu0 %2767
      %2769 = vrot.lane.b32.xlu0 %v2703, 32
      %v2770 = vpop.permute.xlu0 %2769
      %2771 = vrot.lane.b32.xlu0 %v2704, 32
      %v2772 = vpop.permute.xlu0 %2771
      %2773 = vrot.lane.b32.xlu0 %v2705, 32
      %v2774 = vpop.permute.xlu0 %2773
      %2775 = vrot.lane.b32.xlu0 %v2706, 32
      %v2776 = vpop.permute.xlu0 %2775
      %2777 = vrot.lane.b32.xlu0 %v2707, 32
      %v2778 = vpop.permute.xlu0 %2777
      %2779 = vrot.lane.b32.xlu0 %v2708, 32
      %v2780 = vpop.permute.xlu0 %2779
      %2781 = vrot.lane.b32.xlu0 %v2709, 32
      %v2782 = vpop.permute.xlu0 %2781
      %2783 = vrot.lane.b32.xlu0 %v2710, 32
      %v2784 = vpop.permute.xlu0 %2783
      %2785 = vrot.lane.b32.xlu0 %v2711, 32
      %v2786 = vpop.permute.xlu0 %2785
      %2787 = vrot.lane.b32.xlu0 %v2712, 32
      %v2788 = vpop.permute.xlu0 %2787
      %2789 = vrot.lane.b32.xlu0 %v2713, 32
      %v2790 = vpop.permute.xlu0 %2789
      %2791 = vrot.lane.b32.xlu0 %v2714, 32
      %v2792 = vpop.permute.xlu0 %2791
      %2793 = vrot.lane.b32.xlu0 %v2715, 32
      %v2794 = vpop.permute.xlu0 %2793
      %2795 = vrot.lane.b32.xlu0 %v2716, 32
      %v2796 = vpop.permute.xlu0 %2795
      %2797 = vrot.lane.b32.xlu0 %v2717, 32
      %v2798 = vpop.permute.xlu0 %2797
      %2799 = vrot.lane.b32.xlu0 %v2718, 32
      %v2800 = vpop.permute.xlu0 %2799
      %2801 = vrot.lane.b32.xlu0 %v2719, 32
      %v2802 = vpop.permute.xlu0 %2801
      %2803 = vrot.lane.b32.xlu0 %v2720, 32
      %v2804 = vpop.permute.xlu0 %2803
      %2805 = vrot.lane.b32.xlu0 %v2721, 32
      %v2806 = vpop.permute.xlu0 %2805
      %2807 = vrot.lane.b32.xlu0 %v2722, 32
      %v2808 = vpop.permute.xlu0 %2807
      %2809 = vrot.lane.b32.xlu0 %v2723, 32
      %v2810 = vpop.permute.xlu0 %2809
      %2811 = vrot.lane.b32.xlu0 %v2724, 32
      %v2812 = vpop.permute.xlu0 %2811
      %2813 = vrot.lane.b32.xlu0 %v2725, 32
      %v2814 = vpop.permute.xlu0 %2813
      %2815 = vrot.lane.b32.xlu0 %v2726, 32
      %v2816 = vpop.permute.xlu0 %2815
      %2817 = vrot.lane.b32.xlu0 %v2727, 32
      %v2818 = vpop.permute.xlu0 %2817
      %2819 = vrot.lane.b32.xlu0 %v2728, 32
      %v2820 = vpop.permute.xlu0 %2819
      %2821 = vrot.lane.b32.xlu0 %v2729, 32
      %v2822 = vpop.permute.xlu0 %2821
      %2823 = vrot.lane.b32.xlu0 %v2730, 32
      %v2824 = vpop.permute.xlu0 %2823
      %2825 = vrot.lane.b32.xlu0 %v2731, 32
      %v2826 = vpop.permute.xlu0 %2825
      %2827 = vrot.lane.b32.xlu0 %v2732, 32
      %v2828 = vpop.permute.xlu0 %2827
      %vm2861 = vcmask 290048
      %2862 = vst.msk [vmem:[#allocation4] sm:$0xf] %vm2861, %v2766
      %2863 = vst.msk [vmem:[#allocation4 + $0x4] sm:$0xf] %vm2861, %v2768
      %2864 = vst.msk [vmem:[#allocation4 + $0x8] sm:$0xf] %vm2861, %v2770
      %2865 = vst.msk [vmem:[#allocation4 + $0xc] sm:$0xf] %vm2861, %v2772
      %2866 = vst.msk [vmem:[#allocation4 + $0x10] sm:$0xf] %vm2861, %v2774
      %2867 = vst.msk [vmem:[#allocation4 + $0x14] sm:$0xf] %vm2861, %v2776
      %2868 = vst.msk [vmem:[#allocation4 + $0x18] sm:$0xf] %vm2861, %v2778
      %2869 = vst.msk [vmem:[#allocation4 + $0x1c] sm:$0xf] %vm2861, %v2780
      %2870 = vst.msk [vmem:[#allocation4 + $0x20] sm:$0xf] %vm2861, %v2782
      %2871 = vst.msk [vmem:[#allocation4 + $0x24] sm:$0xf] %vm2861, %v2784
      %2872 = vst.msk [vmem:[#allocation4 + $0x28] sm:$0xf] %vm2861, %v2786
      %2873 = vst.msk [vmem:[#allocation4 + $0x2c] sm:$0xf] %vm2861, %v2788
      %2874 = vst.msk [vmem:[#allocation4 + $0x30] sm:$0xf] %vm2861, %v2790
      %2875 = vst.msk [vmem:[#allocation4 + $0x34] sm:$0xf] %vm2861, %v2792
      %2876 = vst.msk [vmem:[#allocation4 + $0x38] sm:$0xf] %vm2861, %v2794
      %2877 = vst.msk [vmem:[#allocation4 + $0x3c] sm:$0xf] %vm2861, %v2796
      %2878 = vst.msk [vmem:[#allocation4 + $0x40] sm:$0xf] %vm2861, %v2798
      %2879 = vst.msk [vmem:[#allocation4 + $0x44] sm:$0xf] %vm2861, %v2800
      %2880 = vst.msk [vmem:[#allocation4 + $0x48] sm:$0xf] %vm2861, %v2802
      %2881 = vst.msk [vmem:[#allocation4 + $0x4c] sm:$0xf] %vm2861, %v2804
      %2882 = vst.msk [vmem:[#allocation4 + $0x50] sm:$0xf] %vm2861, %v2806
      %2883 = vst.msk [vmem:[#allocation4 + $0x54] sm:$0xf] %vm2861, %v2808
      %2884 = vst.msk [vmem:[#allocation4 + $0x58] sm:$0xf] %vm2861, %v2810
      %2885 = vst.msk [vmem:[#allocation4 + $0x5c] sm:$0xf] %vm2861, %v2812
      %2886 = vst.msk [vmem:[#allocation4 + $0x60] sm:$0xf] %vm2861, %v2814
      %2887 = vst.msk [vmem:[#allocation4 + $0x64] sm:$0xf] %vm2861, %v2816
      %2888 = vst.msk [vmem:[#allocation4 + $0x68] sm:$0xf] %vm2861, %v2818
      %2889 = vst.msk [vmem:[#allocation4 + $0x6c] sm:$0xf] %vm2861, %v2820
      %2890 = vst.msk [vmem:[#allocation4 + $0x70] sm:$0xf] %vm2861, %v2822
      %2891 = vst.msk [vmem:[#allocation4 + $0x74] sm:$0xf] %vm2861, %v2824
      %2892 = vst.msk [vmem:[#allocation4 + $0x78] sm:$0xf] %vm2861, %v2826
      %2893 = vst.msk [vmem:[#allocation4 + $0x7c] sm:$0xf] %vm2861, %v2828
      %v2894 = vld [vmem:[#allocation4] sm:$0xf]
      %v2895 = vld [vmem:[#allocation4 + $0x4] sm:$0xf]
      %v2896 = vld [vmem:[#allocation4 + $0x8] sm:$0xf]
      %v2897 = vld [vmem:[#allocation4 + $0xc] sm:$0xf]
      %v2898 = vld [vmem:[#allocation4 + $0x10] sm:$0xf]
      %v2899 = vld [vmem:[#allocation4 + $0x14] sm:$0xf]
      %v2900 = vld [vmem:[#allocation4 + $0x18] sm:$0xf]
      %v2901 = vld [vmem:[#allocation4 + $0x1c] sm:$0xf]
      %v2902 = vld [vmem:[#allocation4 + $0x20] sm:$0xf]
      %v2903 = vld [vmem:[#allocation4 + $0x24] sm:$0xf]
      %v2904 = vld [vmem:[#allocation4 + $0x28] sm:$0xf]
      %v2905 = vld [vmem:[#allocation4 + $0x2c] sm:$0xf]
      %v2906 = vld [vmem:[#allocation4 + $0x30] sm:$0xf]
      %v2907 = vld [vmem:[#allocation4 + $0x34] sm:$0xf]
      %v2908 = vld [vmem:[#allocation4 + $0x38] sm:$0xf]
      %v2909 = vld [vmem:[#allocation4 + $0x3c] sm:$0xf]
      %v2910 = vld [vmem:[#allocation4 + $0x40] sm:$0xf]
      %v2911 = vld [vmem:[#allocation4 + $0x44] sm:$0xf]
      %v2912 = vld [vmem:[#allocation4 + $0x48] sm:$0xf]
      %v2913 = vld [vmem:[#allocation4 + $0x4c] sm:$0xf]
      %v2914 = vld [vmem:[#allocation4 + $0x50] sm:$0xf]
      %v2915 = vld [vmem:[#allocation4 + $0x54] sm:$0xf]
      %v2916 = vld [vmem:[#allocation4 + $0x58] sm:$0xf]
      %v2917 = vld [vmem:[#allocation4 + $0x5c] sm:$0xf]
      %v2918 = vld [vmem:[#allocation4 + $0x60] sm:$0xf]
      %v2919 = vld [vmem:[#allocation4 + $0x64] sm:$0xf]
      %v2920 = vld [vmem:[#allocation4 + $0x68] sm:$0xf]
      %v2921 = vld [vmem:[#allocation4 + $0x6c] sm:$0xf]
      %v2922 = vld [vmem:[#allocation4 + $0x70] sm:$0xf]
      %v2923 = vld [vmem:[#allocation4 + $0x74] sm:$0xf]
      %v2924 = vld [vmem:[#allocation4 + $0x78] sm:$0xf]
      %v2925 = vld [vmem:[#allocation4 + $0x7c] sm:$0xf]
      %v2926 = vld [vmem:[%s5] sm:$0xf]
      %v2927 = vld [vmem:[%s5 + $0x4] sm:$0xf]
      %v2928 = vld [vmem:[%s5 + $0x8] sm:$0xf]
      %v2929 = vld [vmem:[%s5 + $0xc] sm:$0xf]
      %v2930 = vld [vmem:[%s5 + $0x10] sm:$0x3]
      %v2963 = vunpack.c.l.b16 %v2894
      %v2964 = vunpack.c.l.b16 %v2895
      %v2965 = vunpack.c.l.b16 %v2896
      %v2966 = vunpack.c.l.b16 %v2897
      %v2967 = vunpack.c.l.b16 %v2898
      %v2968 = vunpack.c.l.b16 %v2899
      %v2969 = vunpack.c.l.b16 %v2900
      %v2970 = vunpack.c.l.b16 %v2901
      %v2971 = vunpack.c.l.b16 %v2902
      %v2972 = vunpack.c.l.b16 %v2903
      %v2973 = vunpack.c.l.b16 %v2904
      %v2974 = vunpack.c.l.b16 %v2905
      %v2975 = vunpack.c.l.b16 %v2906
      %v2976 = vunpack.c.l.b16 %v2907
      %v2977 = vunpack.c.l.b16 %v2908
      %v2978 = vunpack.c.l.b16 %v2909
      %v2979 = vunpack.c.l.b16 %v2910
      %v2980 = vunpack.c.l.b16 %v2911
      %v2981 = vunpack.c.l.b16 %v2912
      %v2982 = vunpack.c.l.b16 %v2913
      %v2983 = vunpack.c.l.b16 %v2914
      %v2984 = vunpack.c.l.b16 %v2915
      %v2985 = vunpack.c.l.b16 %v2916
      %v2986 = vunpack.c.l.b16 %v2917
      %v2987 = vunpack.c.l.b16 %v2918
      %v2988 = vunpack.c.l.b16 %v2919
      %v2989 = vunpack.c.l.b16 %v2920
      %v2990 = vunpack.c.l.b16 %v2921
      %v2991 = vunpack.c.l.b16 %v2922
      %v2992 = vunpack.c.l.b16 %v2923
      %v2993 = vunpack.c.l.b16 %v2924
      %v2994 = vunpack.c.l.b16 %v2925
      %v2995 = vpack.c.b16 %v2964, %v2963
      %v2996 = vpack.c.b16 %v2966, %v2965
      %v2997 = vpack.c.b16 %v2968, %v2967
      %v2998 = vpack.c.b16 %v2970, %v2969
      %v2999 = vpack.c.b16 %v2972, %v2971
      %v3000 = vpack.c.b16 %v2974, %v2973
      %v3001 = vpack.c.b16 %v2976, %v2975
      %v3002 = vpack.c.b16 %v2978, %v2977
      %v3003 = vpack.c.b16 %v2980, %v2979
      %v3004 = vpack.c.b16 %v2982, %v2981
      %v3005 = vpack.c.b16 %v2984, %v2983
      %v3006 = vpack.c.b16 %v2986, %v2985
      %v3007 = vpack.c.b16 %v2988, %v2987
      %v3008 = vpack.c.b16 %v2990, %v2989
      %v3009 = vpack.c.b16 %v2992, %v2991
      %v3010 = vpack.c.b16 %v2994, %v2993
      %v3016 = vunpack.c.l.b16 %v2926
      %v3017 = vunpack.c.l.b16 %v2927
      %v3018 = vunpack.c.l.b16 %v2928
      %v3019 = vunpack.c.l.b16 %v2929
      %v3020 = vunpack.c.l.b16 %v2930
      %v3021 = vpack.c.b16 %v3017, %v3016
      %v3022 = vpack.c.b16 %v3019, %v3018
      %v3023 = vpack.c.b16 %v3020, %v3020
      %vm3026 = vcmask 293888
      %v3028 = vsel %vm3026, %v2995, 0
      %v3031 = vsel %vm3026, %v2996, 0
      %v3034 = vsel %vm3026, %v2997, 0
      %v3037 = vsel %vm3026, %v2998, 0
      %v3040 = vsel %vm3026, %v2999, 0
      %v3043 = vsel %vm3026, %v3000, 0
      %v3046 = vsel %vm3026, %v3001, 0
      %v3049 = vsel %vm3026, %v3002, 0
      %v3052 = vsel %vm3026, %v3003, 0
      %v3055 = vsel %vm3026, %v3004, 0
      %v3058 = vsel %vm3026, %v3005, 0
      %v3061 = vsel %vm3026, %v3006, 0
      %v3064 = vsel %vm3026, %v3007, 0
      %v3067 = vsel %vm3026, %v3008, 0
      %v3070 = vsel %vm3026, %v3009, 0
      %v3073 = vsel %vm3026, %v3010, 0
      %vm3075 = vcmask 1041408
      %v3077 = vsel %vm3075, %v3023, 0
      %3079 = vmatpush.bf16.msra.mxu0 0
      %3080 = vmatpush.bf16.msra.mxu0 0
      %3081 = vmatpush.bf16.msra.mxu0 0
      %3082 = vmatpush.bf16.msra.mxu0 0
      %3083 = vmatpush.bf16.msra.mxu0 0
      %3084 = vmatpush.bf16.msra.mxu0 %v3077
      %3085 = vmatpush.bf16.msra.mxu0 %v3022
      %3086 = vmatpush.bf16.msra.mxu0 %v3021
      %3087 = vmatmul.bf16.gmra.mxu0 %v3028
      %v3088 = vpop.f32.mrf.mxu0
      %v3089 = vadd.f32 0.0, %v3088
      %v3090 = vpop.f32.mrf.mxu0
      %v3091 = vadd.f32 0.0, %v3090
      %3092 = vmatmul.bf16.gmra.mxu0 %v3031
      %v3093 = vpop.f32.mrf.mxu0
      %v3094 = vadd.f32 0.0, %v3093
      %v3095 = vpop.f32.mrf.mxu0
      %v3096 = vadd.f32 0.0, %v3095
      %3097 = vmatmul.bf16.gmra.mxu0 %v3034
      %v3098 = vpop.f32.mrf.mxu0
      %v3099 = vadd.f32 0.0, %v3098
      %v3100 = vpop.f32.mrf.mxu0
      %v3101 = vadd.f32 0.0, %v3100
      %3102 = vmatmul.bf16.gmra.mxu0 %v3037
      %v3103 = vpop.f32.mrf.mxu0
      %v3104 = vadd.f32 0.0, %v3103
      %v3105 = vpop.f32.mrf.mxu0
      %v3106 = vadd.f32 0.0, %v3105
      %3107 = vmatmul.bf16.gmra.mxu0 %v3040
      %v3108 = vpop.f32.mrf.mxu0
      %v3109 = vadd.f32 0.0, %v3108
      %v3110 = vpop.f32.mrf.mxu0
      %v3111 = vadd.f32 0.0, %v3110
      %3112 = vmatmul.bf16.gmra.mxu0 %v3043
      %v3113 = vpop.f32.mrf.mxu0
      %v3114 = vadd.f32 0.0, %v3113
      %v3115 = vpop.f32.mrf.mxu0
      %v3116 = vadd.f32 0.0, %v3115
      %3117 = vmatmul.bf16.gmra.mxu0 %v3046
      %v3118 = vpop.f32.mrf.mxu0
      %v3119 = vadd.f32 0.0, %v3118
      %v3120 = vpop.f32.mrf.mxu0
      %v3121 = vadd.f32 0.0, %v3120
      %3122 = vmatmul.bf16.gmra.mxu0 %v3049
      %v3123 = vpop.f32.mrf.mxu0
      %v3124 = vadd.f32 0.0, %v3123
      %v3125 = vpop.f32.mrf.mxu0
      %v3126 = vadd.f32 0.0, %v3125
      %3127 = vmatmul.bf16.gmra.mxu0 %v3052
      %v3128 = vpop.f32.mrf.mxu0
      %v3129 = vadd.f32 0.0, %v3128
      %v3130 = vpop.f32.mrf.mxu0
      %v3131 = vadd.f32 0.0, %v3130
      %3132 = vmatmul.bf16.gmra.mxu0 %v3055
      %v3133 = vpop.f32.mrf.mxu0
      %v3134 = vadd.f32 0.0, %v3133
      %v3135 = vpop.f32.mrf.mxu0
      %v3136 = vadd.f32 0.0, %v3135
      %3137 = vmatmul.bf16.gmra.mxu0 %v3058
      %v3138 = vpop.f32.mrf.mxu0
      %v3139 = vadd.f32 0.0, %v3138
      %v3140 = vpop.f32.mrf.mxu0
      %v3141 = vadd.f32 0.0, %v3140
      %3142 = vmatmul.bf16.gmra.mxu0 %v3061
      %v3143 = vpop.f32.mrf.mxu0
      %v3144 = vadd.f32 0.0, %v3143
      %v3145 = vpop.f32.mrf.mxu0
      %v3146 = vadd.f32 0.0, %v3145
      %3147 = vmatmul.bf16.gmra.mxu0 %v3064
      %v3148 = vpop.f32.mrf.mxu0
      %v3149 = vadd.f32 0.0, %v3148
      %v3150 = vpop.f32.mrf.mxu0
      %v3151 = vadd.f32 0.0, %v3150
      %3152 = vmatmul.bf16.gmra.mxu0 %v3067
      %v3153 = vpop.f32.mrf.mxu0
      %v3154 = vadd.f32 0.0, %v3153
      %v3155 = vpop.f32.mrf.mxu0
      %v3156 = vadd.f32 0.0, %v3155
      %3157 = vmatmul.bf16.gmra.mxu0 %v3070
      %v3158 = vpop.f32.mrf.mxu0
      %v3159 = vadd.f32 0.0, %v3158
      %v3160 = vpop.f32.mrf.mxu0
      %v3161 = vadd.f32 0.0, %v3160
      %3162 = vmatmul.bf16.gmra.mxu0 %v3073
      %v3163 = vpop.f32.mrf.mxu0
      %v3164 = vadd.f32 0.0, %v3163
      %v3165 = vpop.f32.mrf.mxu0
      %v3166 = vadd.f32 0.0, %v3165
      %3167 = vdwg.mxu0
      %v3168 = vperm.slane %v525, 0
      %v3169 = vmul.f32 %v3089, %v3168
      %v3170 = vmul.f32 %v3091, %v3168
      %v3171 = vmul.f32 %v3094, %v3168
      %v3172 = vmul.f32 %v3096, %v3168
      %v3173 = vmul.f32 %v3099, %v3168
      %v3174 = vmul.f32 %v3101, %v3168
      %v3175 = vmul.f32 %v3104, %v3168
      %v3176 = vmul.f32 %v3106, %v3168
      %v3177 = vmul.f32 %v3109, %v3168
      %v3178 = vmul.f32 %v3111, %v3168
      %v3179 = vmul.f32 %v3114, %v3168
      %v3180 = vmul.f32 %v3116, %v3168
      %v3181 = vmul.f32 %v3119, %v3168
      %v3182 = vmul.f32 %v3121, %v3168
      %v3183 = vmul.f32 %v3124, %v3168
      %v3184 = vmul.f32 %v3126, %v3168
      %v3185 = vmul.f32 %v3129, %v3168
      %v3186 = vmul.f32 %v3131, %v3168
      %v3187 = vmul.f32 %v3134, %v3168
      %v3188 = vmul.f32 %v3136, %v3168
      %v3189 = vmul.f32 %v3139, %v3168
      %v3190 = vmul.f32 %v3141, %v3168
      %v3191 = vmul.f32 %v3144, %v3168
      %v3192 = vmul.f32 %v3146, %v3168
      %v3193 = vmul.f32 %v3149, %v3168
      %v3194 = vmul.f32 %v3151, %v3168
      %v3195 = vmul.f32 %v3154, %v3168
      %v3196 = vmul.f32 %v3156, %v3168
      %v3197 = vmul.f32 %v3159, %v3168
      %v3198 = vmul.f32 %v3161, %v3168
      %v3199 = vmul.f32 %v3164, %v3168
      %v3200 = vmul.f32 %v3166, %v3168
      %v3201 = vld [vmem:[%s6] sm:$0x1]
      %v3203 = vperm.slane %v3201, 0
      %v3205 = vadd.f32 %v3169, %v3203
      %v3206 = vadd.f32 %v3170, %v3203
      %v3207 = vadd.f32 %v3171, %v3203
      %v3208 = vadd.f32 %v3172, %v3203
      %v3209 = vadd.f32 %v3173, %v3203
      %v3210 = vadd.f32 %v3174, %v3203
      %v3211 = vadd.f32 %v3175, %v3203
      %v3212 = vadd.f32 %v3176, %v3203
      %v3213 = vadd.f32 %v3177, %v3203
      %v3214 = vadd.f32 %v3178, %v3203
      %v3215 = vadd.f32 %v3179, %v3203
      %v3216 = vadd.f32 %v3180, %v3203
      %v3217 = vadd.f32 %v3181, %v3203
      %v3218 = vadd.f32 %v3182, %v3203
      %v3219 = vadd.f32 %v3183, %v3203
      %v3220 = vadd.f32 %v3184, %v3203
      %v3221 = vadd.f32 %v3185, %v3203
      %v3222 = vadd.f32 %v3186, %v3203
      %v3223 = vadd.f32 %v3187, %v3203
      %v3224 = vadd.f32 %v3188, %v3203
      %v3225 = vadd.f32 %v3189, %v3203
      %v3226 = vadd.f32 %v3190, %v3203
      %v3227 = vadd.f32 %v3191, %v3203
      %v3228 = vadd.f32 %v3192, %v3203
      %v3229 = vadd.f32 %v3193, %v3203
      %v3230 = vadd.f32 %v3194, %v3203
      %v3231 = vadd.f32 %v3195, %v3203
      %v3232 = vadd.f32 %v3196, %v3203
      %v3233 = vadd.f32 %v3197, %v3203
      %v3234 = vadd.f32 %v3198, %v3203
      %v3235 = vadd.f32 %v3199, %v3203
      %v3236 = vadd.f32 %v3200, %v3203
      %vm3237 = vcmp.ge.f32.partialorder %v3205, 0.0
      %vm3238 = vcmp.ge.f32.partialorder %v3206, 0.0
      %vm3239 = vcmp.ge.f32.partialorder %v3207, 0.0
      %vm3240 = vcmp.ge.f32.partialorder %v3208, 0.0
      %vm3241 = vcmp.ge.f32.partialorder %v3209, 0.0
      %vm3242 = vcmp.ge.f32.partialorder %v3210, 0.0
      %vm3243 = vcmp.ge.f32.partialorder %v3211, 0.0
      %vm3244 = vcmp.ge.f32.partialorder %v3212, 0.0
      %vm3245 = vcmp.ge.f32.partialorder %v3213, 0.0
      %vm3246 = vcmp.ge.f32.partialorder %v3214, 0.0
      %vm3247 = vcmp.ge.f32.partialorder %v3215, 0.0
      %vm3248 = vcmp.ge.f32.partialorder %v3216, 0.0
      %vm3249 = vcmp.ge.f32.partialorder %v3217, 0.0
      %vm3250 = vcmp.ge.f32.partialorder %v3218, 0.0
      %vm3251 = vcmp.ge.f32.partialorder %v3219, 0.0
      %vm3252 = vcmp.ge.f32.partialorder %v3220, 0.0
      %vm3253 = vcmp.ge.f32.partialorder %v3221, 0.0
      %vm3254 = vcmp.ge.f32.partialorder %v3222, 0.0
      %vm3255 = vcmp.ge.f32.partialorder %v3223, 0.0
      %vm3256 = vcmp.ge.f32.partialorder %v3224, 0.0
      %vm3257 = vcmp.ge.f32.partialorder %v3225, 0.0
      %vm3258 = vcmp.ge.f32.partialorder %v3226, 0.0
      %vm3259 = vcmp.ge.f32.partialorder %v3227, 0.0
      %vm3260 = vcmp.ge.f32.partialorder %v3228, 0.0
      %vm3261 = vcmp.ge.f32.partialorder %v3229, 0.0
      %vm3262 = vcmp.ge.f32.partialorder %v3230, 0.0
      %vm3263 = vcmp.ge.f32.partialorder %v3231, 0.0
      %vm3264 = vcmp.ge.f32.partialorder %v3232, 0.0
      %vm3265 = vcmp.ge.f32.partialorder %v3233, 0.0
      %vm3266 = vcmp.ge.f32.partialorder %v3234, 0.0
      %vm3267 = vcmp.ge.f32.partialorder %v3235, 0.0
      %vm3268 = vcmp.ge.f32.partialorder %v3236, 0.0
      %v3269 = vmul.f32 %v3205, 0.2
      %v3270 = vmul.f32 %v3206, 0.2
      %v3271 = vmul.f32 %v3207, 0.2
      %v3272 = vmul.f32 %v3208, 0.2
      %v3273 = vmul.f32 %v3209, 0.2
      %v3274 = vmul.f32 %v3210, 0.2
      %v3275 = vmul.f32 %v3211, 0.2
      %v3276 = vmul.f32 %v3212, 0.2
      %v3277 = vmul.f32 %v3213, 0.2
      %v3278 = vmul.f32 %v3214, 0.2
      %v3279 = vmul.f32 %v3215, 0.2
      %v3280 = vmul.f32 %v3216, 0.2
      %v3281 = vmul.f32 %v3217, 0.2
      %v3282 = vmul.f32 %v3218, 0.2
      %v3283 = vmul.f32 %v3219, 0.2
      %v3284 = vmul.f32 %v3220, 0.2
      %v3285 = vmul.f32 %v3221, 0.2
      %v3286 = vmul.f32 %v3222, 0.2
      %v3287 = vmul.f32 %v3223, 0.2
      %v3288 = vmul.f32 %v3224, 0.2
      %v3289 = vmul.f32 %v3225, 0.2
      %v3290 = vmul.f32 %v3226, 0.2
      %v3291 = vmul.f32 %v3227, 0.2
      %v3292 = vmul.f32 %v3228, 0.2
      %v3293 = vmul.f32 %v3229, 0.2
      %v3294 = vmul.f32 %v3230, 0.2
      %v3295 = vmul.f32 %v3231, 0.2
      %v3296 = vmul.f32 %v3232, 0.2
      %v3297 = vmul.f32 %v3233, 0.2
      %v3298 = vmul.f32 %v3234, 0.2
      %v3299 = vmul.f32 %v3235, 0.2
      %v3300 = vmul.f32 %v3236, 0.2
      %v3301 = vsel %vm3237, %v3205, %v3269
      %v3302 = vsel %vm3238, %v3206, %v3270
      %v3303 = vsel %vm3239, %v3207, %v3271
      %v3304 = vsel %vm3240, %v3208, %v3272
      %v3305 = vsel %vm3241, %v3209, %v3273
      %v3306 = vsel %vm3242, %v3210, %v3274
      %v3307 = vsel %vm3243, %v3211, %v3275
      %v3308 = vsel %vm3244, %v3212, %v3276
      %v3309 = vsel %vm3245, %v3213, %v3277
      %v3310 = vsel %vm3246, %v3214, %v3278
      %v3311 = vsel %vm3247, %v3215, %v3279
      %v3312 = vsel %vm3248, %v3216, %v3280
      %v3313 = vsel %vm3249, %v3217, %v3281
      %v3314 = vsel %vm3250, %v3218, %v3282
      %v3315 = vsel %vm3251, %v3219, %v3283
      %v3316 = vsel %vm3252, %v3220, %v3284
      %v3317 = vsel %vm3253, %v3221, %v3285
      %v3318 = vsel %vm3254, %v3222, %v3286
      %v3319 = vsel %vm3255, %v3223, %v3287
      %v3320 = vsel %vm3256, %v3224, %v3288
      %v3321 = vsel %vm3257, %v3225, %v3289
      %v3322 = vsel %vm3258, %v3226, %v3290
      %v3323 = vsel %vm3259, %v3227, %v3291
      %v3324 = vsel %vm3260, %v3228, %v3292
      %v3325 = vsel %vm3261, %v3229, %v3293
      %v3326 = vsel %vm3262, %v3230, %v3294
      %v3327 = vsel %vm3263, %v3231, %v3295
      %v3328 = vsel %vm3264, %v3232, %v3296
      %v3329 = vsel %vm3265, %v3233, %v3297
      %v3330 = vsel %vm3266, %v3234, %v3298
      %v3331 = vsel %vm3267, %v3235, %v3299
      %v3332 = vsel %vm3268, %v3236, %v3300
      %v3333 = vmul.f32 %v3301, 1.4142135
      %v3334 = vmul.f32 %v3302, 1.4142135
      %v3335 = vmul.f32 %v3303, 1.4142135
      %v3336 = vmul.f32 %v3304, 1.4142135
      %v3337 = vmul.f32 %v3305, 1.4142135
      %v3338 = vmul.f32 %v3306, 1.4142135
      %v3339 = vmul.f32 %v3307, 1.4142135
      %v3340 = vmul.f32 %v3308, 1.4142135
      %v3341 = vmul.f32 %v3309, 1.4142135
      %v3342 = vmul.f32 %v3310, 1.4142135
      %v3343 = vmul.f32 %v3311, 1.4142135
      %v3344 = vmul.f32 %v3312, 1.4142135
      %v3345 = vmul.f32 %v3313, 1.4142135
      %v3346 = vmul.f32 %v3314, 1.4142135
      %v3347 = vmul.f32 %v3315, 1.4142135
      %v3348 = vmul.f32 %v3316, 1.4142135
      %v3349 = vmul.f32 %v3317, 1.4142135
      %v3350 = vmul.f32 %v3318, 1.4142135
      %v3351 = vmul.f32 %v3319, 1.4142135
      %v3352 = vmul.f32 %v3320, 1.4142135
      %v3353 = vmul.f32 %v3321, 1.4142135
      %v3354 = vmul.f32 %v3322, 1.4142135
      %v3355 = vmul.f32 %v3323, 1.4142135
      %v3356 = vmul.f32 %v3324, 1.4142135
      %v3357 = vmul.f32 %v3325, 1.4142135
      %v3358 = vmul.f32 %v3326, 1.4142135
      %v3359 = vmul.f32 %v3327, 1.4142135
      %v3360 = vmul.f32 %v3328, 1.4142135
      %v3361 = vmul.f32 %v3329, 1.4142135
      %v3362 = vmul.f32 %v3330, 1.4142135
      %v3363 = vmul.f32 %v3331, 1.4142135
      %v3364 = vmul.f32 %v3332, 1.4142135
      %3365 = vst.msk [vmem:[#allocation3] sm:$0xff] %vm553, 0.0
      %3366 = vst.msk [vmem:[#allocation3 + $0x8] sm:$0xff] %vm553, 0.0
      %vm3367 = vcmask 60416
      %3368 = vst.msk [vmem:[#allocation3 + $0x10] sm:$0xf] %vm3367, 0.0
      %3369 = vst.msk [vmem:[#allocation3 + $0x18] sm:$0xff] %vm553, 0.0
      %3370 = vst.msk [vmem:[#allocation3 + $0x20] sm:$0xff] %vm553, 0.0
      %3371 = vst.msk [vmem:[#allocation3 + $0x28] sm:$0xf] %vm3367, 0.0
      %3372 = vst.msk [vmem:[#allocation3 + $0x30] sm:$0xff] %vm553, 0.0
      %3373 = vst.msk [vmem:[#allocation3 + $0x38] sm:$0xff] %vm553, 0.0
      %3374 = vst.msk [vmem:[#allocation3 + $0x40] sm:$0xf] %vm3367, 0.0
      %3375 = vst.msk [vmem:[#allocation3 + $0x48] sm:$0xff] %vm553, 0.0
      %3376 = vst.msk [vmem:[#allocation3 + $0x50] sm:$0xff] %vm553, 0.0
      %3377 = vst.msk [vmem:[#allocation3 + $0x58] sm:$0xf] %vm3367, 0.0
      %3378 = vst.msk [vmem:[#allocation3 + $0x60] sm:$0xff] %vm553, 0.0
      %3379 = vst.msk [vmem:[#allocation3 + $0x68] sm:$0xff] %vm553, 0.0
      %3380 = vst.msk [vmem:[#allocation3 + $0x70] sm:$0xf] %vm3367, 0.0
      %3381 = vst.msk [vmem:[#allocation3 + $0x78] sm:$0xff] %vm553, 0.0
      %3382 = vst.msk [vmem:[#allocation3 + $0x80] sm:$0xff] %vm553, 0.0
      %3383 = vst.msk [vmem:[#allocation3 + $0x88] sm:$0xf] %vm3367, 0.0
      %3384 = vst.msk [vmem:[#allocation3 + $0x90] sm:$0xff] %vm553, 0.0
      %3385 = vst.msk [vmem:[#allocation3 + $0x98] sm:$0xff] %vm553, 0.0
      %3386 = vst.msk [vmem:[#allocation3 + $0xa0] sm:$0xf] %vm3367, 0.0
      %3387 = vst.msk [vmem:[#allocation3 + $0xa8] sm:$0xff] %vm553, 0.0
      %3388 = vst.msk [vmem:[#allocation3 + $0xb0] sm:$0xff] %vm553, 0.0
      %3389 = vst.msk [vmem:[#allocation3 + $0xb8] sm:$0xf] %vm3367, 0.0
      %3390 = vst.msk [vmem:[#allocation3 + $0xc0] sm:$0xff] %vm553, 0.0
      %3391 = vst.msk [vmem:[#allocation3 + $0xc8] sm:$0xff] %vm553, 0.0
      %3392 = vst.msk [vmem:[#allocation3 + $0xd0] sm:$0xf] %vm3367, 0.0
      %3393 = vst.msk [vmem:[#allocation3 + $0xd8] sm:$0xff] %vm553, 0.0
      %3394 = vst.msk [vmem:[#allocation3 + $0xe0] sm:$0xff] %vm553, 0.0
      %3395 = vst.msk [vmem:[#allocation3 + $0xe8] sm:$0xf] %vm3367, 0.0
      %3396 = vst.msk [vmem:[#allocation3 + $0xf0] sm:$0xff] %vm553, 0.0
      %3397 = vst.msk [vmem:[#allocation3 + $0xf8] sm:$0xff] %vm553, 0.0
      %3398 = vst.msk [vmem:[#allocation3 + $0x100] sm:$0xf] %vm3367, 0.0
      %3399 = vst.msk [vmem:[#allocation3 + $0x108] sm:$0xff] %vm553, 0.0
      %3400 = vst.msk [vmem:[#allocation3 + $0x110] sm:$0xff] %vm553, 0.0
      %3401 = vst.msk [vmem:[#allocation3 + $0x118] sm:$0xf] %vm3367, 0.0
      %3402 = vst.msk [vmem:[#allocation3 + $0x120] sm:$0xff] %vm553, 0.0
      %3403 = vst.msk [vmem:[#allocation3 + $0x128] sm:$0xff] %vm553, 0.0
      %3404 = vst.msk [vmem:[#allocation3 + $0x130] sm:$0xf] %vm3367, 0.0
      %3405 = vst.msk [vmem:[#allocation3 + $0x138] sm:$0xff] %vm553, 0.0
      %3406 = vst.msk [vmem:[#allocation3 + $0x140] sm:$0xff] %vm553, 0.0
      %3407 = vst.msk [vmem:[#allocation3 + $0x148] sm:$0xf] %vm3367, 0.0
      %3408 = vst.msk [vmem:[#allocation3 + $0x150] sm:$0xff] %vm553, 0.0
      %3409 = vst.msk [vmem:[#allocation3 + $0x158] sm:$0xff] %vm553, 0.0
      %3410 = vst.msk [vmem:[#allocation3 + $0x160] sm:$0xf] %vm3367, 0.0
      %3411 = vst.msk [vmem:[#allocation3 + $0x168] sm:$0xff] %vm553, 0.0
      %3412 = vst.msk [vmem:[#allocation3 + $0x170] sm:$0xff] %vm553, 0.0
      %3413 = vst.msk [vmem:[#allocation3 + $0x178] sm:$0xf] %vm3367, 0.0
      %3414 = vst.msk [vmem:[#allocation3 + $0x180] sm:$0xff] %vm553, 0.0
      %3415 = vst.msk [vmem:[#allocation3 + $0x188] sm:$0xff] %vm553, 0.0
      %3416 = vst.msk [vmem:[#allocation3 + $0x190] sm:$0xf] %vm3367, 0.0
      %3417 = vst.msk [vmem:[#allocation3 + $0x198] sm:$0xff] %vm553, 0.0
      %3418 = vst.msk [vmem:[#allocation3 + $0x1a0] sm:$0xff] %vm553, 0.0
      %3419 = vst.msk [vmem:[#allocation3 + $0x1a8] sm:$0xf] %vm3367, 0.0
      %3420 = vst.msk [vmem:[#allocation3 + $0x1b0] sm:$0xff] %vm553, 0.0
      %3421 = vst.msk [vmem:[#allocation3 + $0x1b8] sm:$0xff] %vm553, 0.0
      %3422 = vst.msk [vmem:[#allocation3 + $0x1c0] sm:$0xf] %vm3367, 0.0
      %3423 = vst.msk [vmem:[#allocation3 + $0x1c8] sm:$0xff] %vm553, 0.0
      %3424 = vst.msk [vmem:[#allocation3 + $0x1d0] sm:$0xff] %vm553, 0.0
      %3425 = vst.msk [vmem:[#allocation3 + $0x1d8] sm:$0xf] %vm3367, 0.0
      %v3426 = vperm.slane %v549, 0
      %v3427 = vmul.f32 %v3333, %v3426
      %v3428 = vmul.f32 %v3334, %v3426
      %v3429 = vmul.f32 %v3335, %v3426
      %v3430 = vmul.f32 %v3336, %v3426
      %v3431 = vmul.f32 %v3337, %v3426
      %v3432 = vmul.f32 %v3338, %v3426
      %v3433 = vmul.f32 %v3339, %v3426
      %v3434 = vmul.f32 %v3340, %v3426
      %v3435 = vmul.f32 %v3341, %v3426
      %v3436 = vmul.f32 %v3342, %v3426
      %v3437 = vmul.f32 %v3343, %v3426
      %v3438 = vmul.f32 %v3344, %v3426
      %v3439 = vmul.f32 %v3345, %v3426
      %v3440 = vmul.f32 %v3346, %v3426
      %v3441 = vmul.f32 %v3347, %v3426
      %v3442 = vmul.f32 %v3348, %v3426
      %v3443 = vmul.f32 %v3349, %v3426
      %v3444 = vmul.f32 %v3350, %v3426
      %v3445 = vmul.f32 %v3351, %v3426
      %v3446 = vmul.f32 %v3352, %v3426
      %v3447 = vmul.f32 %v3353, %v3426
      %v3448 = vmul.f32 %v3354, %v3426
      %v3449 = vmul.f32 %v3355, %v3426
      %v3450 = vmul.f32 %v3356, %v3426
      %v3451 = vmul.f32 %v3357, %v3426
      %v3452 = vmul.f32 %v3358, %v3426
      %v3453 = vmul.f32 %v3359, %v3426
      %v3454 = vmul.f32 %v3360, %v3426
      %v3455 = vmul.f32 %v3361, %v3426
      %v3456 = vmul.f32 %v3362, %v3426
      %v3457 = vmul.f32 %v3363, %v3426
      %v3458 = vmul.f32 %v3364, %v3426
      %s3459 = scalar_lea.vmem [#allocation3], 48
      %3460 = vst.msk [vmem:[%s3459 + $0x2] sm:$0xff] %vm553, %v3427
      %3461 = vst.msk [vmem:[%s3459 + $0xa] sm:$0xff] %vm553, %v3428
      %3462 = vst.msk [vmem:[%s3459 + $0x1a] sm:$0xff] %vm553, %v3429
      %3463 = vst.msk [vmem:[%s3459 + $0x22] sm:$0xff] %vm553, %v3430
      %3464 = vst.msk [vmem:[%s3459 + $0x32] sm:$0xff] %vm553, %v3431
      %3465 = vst.msk [vmem:[%s3459 + $0x3a] sm:$0xff] %vm553, %v3432
      %3466 = vst.msk [vmem:[%s3459 + $0x4a] sm:$0xff] %vm553, %v3433
      %3467 = vst.msk [vmem:[%s3459 + $0x52] sm:$0xff] %vm553, %v3434
      %3468 = vst.msk [vmem:[%s3459 + $0x62] sm:$0xff] %vm553, %v3435
      %3469 = vst.msk [vmem:[%s3459 + $0x6a] sm:$0xff] %vm553, %v3436
      %3470 = vst.msk [vmem:[%s3459 + $0x7a] sm:$0xff] %vm553, %v3437
      %3471 = vst.msk [vmem:[%s3459 + $0x82] sm:$0xff] %vm553, %v3438
      %3472 = vst.msk [vmem:[%s3459 + $0x92] sm:$0xff] %vm553, %v3439
      %3473 = vst.msk [vmem:[%s3459 + $0x9a] sm:$0xff] %vm553, %v3440
      %3474 = vst.msk [vmem:[%s3459 + $0xaa] sm:$0xff] %vm553, %v3441
      %3475 = vst.msk [vmem:[%s3459 + $0xb2] sm:$0xff] %vm553, %v3442
      %3476 = vst.msk [vmem:[%s3459 + $0xc2] sm:$0xff] %vm553, %v3443
      %3477 = vst.msk [vmem:[%s3459 + $0xca] sm:$0xff] %vm553, %v3444
      %3478 = vst.msk [vmem:[%s3459 + $0xda] sm:$0xff] %vm553, %v3445
      %3479 = vst.msk [vmem:[%s3459 + $0xe2] sm:$0xff] %vm553, %v3446
      %3480 = vst.msk [vmem:[%s3459 + $0xf2] sm:$0xff] %vm553, %v3447
      %3481 = vst.msk [vmem:[%s3459 + $0xfa] sm:$0xff] %vm553, %v3448
      %3482 = vst.msk [vmem:[%s3459 + $0x10a] sm:$0xff] %vm553, %v3449
      %3483 = vst.msk [vmem:[%s3459 + $0x112] sm:$0xff] %vm553, %v3450
      %3484 = vst.msk [vmem:[%s3459 + $0x122] sm:$0xff] %vm553, %v3451
      %3485 = vst.msk [vmem:[%s3459 + $0x12a] sm:$0xff] %vm553, %v3452
      %3486 = vst.msk [vmem:[%s3459 + $0x13a] sm:$0xff] %vm553, %v3453
      %3487 = vst.msk [vmem:[%s3459 + $0x142] sm:$0xff] %vm553, %v3454
      %3488 = vst.msk [vmem:[%s3459 + $0x152] sm:$0xff] %vm553, %v3455
      %3489 = vst.msk [vmem:[%s3459 + $0x15a] sm:$0xff] %vm553, %v3456
      %3490 = vst.msk [vmem:[%s3459 + $0x16a] sm:$0xff] %vm553, %v3457
      %3491 = vst.msk [vmem:[%s3459 + $0x172] sm:$0xff] %vm553, %v3458
      %v3492 = vld [vmem:[#allocation3] ss:$2 sm:$0xff]
      %s3493 = scalar_lea.vmem [#allocation3], 48
      %v3494 = vld [vmem:[%s3493] ss:$2 sm:$0xff]
      %s3495 = scalar_lea.vmem [#allocation3], 96
      %v3496 = vld [vmem:[%s3495] ss:$2 sm:$0xff]
      %s3497 = scalar_lea.vmem [#allocation3], 144
      %v3498 = vld [vmem:[%s3497] ss:$2 sm:$0xff]
      %s3499 = scalar_lea.vmem [#allocation3], 192
      %v3500 = vld [vmem:[%s3499] ss:$2 sm:$0xff]
      %s3501 = scalar_lea.vmem [#allocation3], 240
      %v3502 = vld [vmem:[%s3501] ss:$2 sm:$0xff]
      %s3503 = scalar_lea.vmem [#allocation3], 288
      %v3504 = vld [vmem:[%s3503] ss:$2 sm:$0xff]
      %s3505 = scalar_lea.vmem [#allocation3], 336
      %v3506 = vld [vmem:[%s3505] ss:$2 sm:$0xff]
      %v3507 = vpack.c.bf16 %v3492, %v3492
      %v3508 = vpack.c.bf16 %v3494, %v3494
      %v3509 = vpack.c.bf16 %v3496, %v3496
      %v3510 = vpack.c.bf16 %v3498, %v3498
      %v3511 = vpack.c.bf16 %v3500, %v3500
      %v3512 = vpack.c.bf16 %v3502, %v3502
      %v3513 = vpack.c.bf16 %v3504, %v3504
      %v3514 = vpack.c.bf16 %v3506, %v3506
      %3515 = vst.msk [vmem:[#allocation5] sm:$0xf] %vm3367, %v3507
      %3516 = vst.msk [vmem:[#allocation5 + $0xc] sm:$0xf] %vm3367, %v3508
      %3517 = vst.msk [vmem:[#allocation5 + $0x18] sm:$0xf] %vm3367, %v3509
      %3518 = vst.msk [vmem:[#allocation5 + $0x24] sm:$0xf] %vm3367, %v3510
      %3519 = vst.msk [vmem:[#allocation5 + $0x30] sm:$0xf] %vm3367, %v3511
      %3520 = vst.msk [vmem:[#allocation5 + $0x3c] sm:$0xf] %vm3367, %v3512
      %3521 = vst.msk [vmem:[#allocation5 + $0x48] sm:$0xf] %vm3367, %v3513
      %3522 = vst.msk [vmem:[#allocation5 + $0x54] sm:$0xf] %vm3367, %v3514
      %s3523 = scalar_lea.vmem [#allocation3], 1
      %v3524 = vld [vmem:[%s3523] ss:$2 sm:$0xff]
      %s3525 = scalar_lea.vmem [#allocation3], 49
      %v3526 = vld [vmem:[%s3525] ss:$2 sm:$0xff]
      %s3527 = scalar_lea.vmem [#allocation3], 97
      %v3528 = vld [vmem:[%s3527] ss:$2 sm:$0xff]
      %s3529 = scalar_lea.vmem [#allocation3], 145
      %v3530 = vld [vmem:[%s3529] ss:$2 sm:$0xff]
      %s3531 = scalar_lea.vmem [#allocation3], 193
      %v3532 = vld [vmem:[%s3531] ss:$2 sm:$0xff]
      %s3533 = scalar_lea.vmem [#allocation3], 241
      %v3534 = vld [vmem:[%s3533] ss:$2 sm:$0xff]
      %s3535 = scalar_lea.vmem [#allocation3], 289
      %v3536 = vld [vmem:[%s3535] ss:$2 sm:$0xff]
      %s3537 = scalar_lea.vmem [#allocation3], 337
      %v3538 = vld [vmem:[%s3537] ss:$2 sm:$0xff]
      %v3539 = vpack.c.bf16 %v3524, %v3524
      %v3540 = vpack.c.bf16 %v3526, %v3526
      %v3541 = vpack.c.bf16 %v3528, %v3528
      %v3542 = vpack.c.bf16 %v3530, %v3530
      %v3543 = vpack.c.bf16 %v3532, %v3532
      %v3544 = vpack.c.bf16 %v3534, %v3534
      %v3545 = vpack.c.bf16 %v3536, %v3536
      %v3546 = vpack.c.bf16 %v3538, %v3538
      %3555 = vrot.lane.b32.xlu0 %v3539, 8
      %v3556 = vpop.permute.xlu0 %3555
      %3557 = vrot.lane.b32.xlu0 %v3540, 8
      %v3558 = vpop.permute.xlu0 %3557
      %3559 = vrot.lane.b32.xlu0 %v3541, 8
      %v3560 = vpop.permute.xlu0 %3559
      %3561 = vrot.lane.b32.xlu0 %v3542, 8
      %v3562 = vpop.permute.xlu0 %3561
      %3563 = vrot.lane.b32.xlu0 %v3543, 8
      %v3564 = vpop.permute.xlu0 %3563
      %3565 = vrot.lane.b32.xlu0 %v3544, 8
      %v3566 = vpop.permute.xlu0 %3565
      %3567 = vrot.lane.b32.xlu0 %v3545, 8
      %v3568 = vpop.permute.xlu0 %3567
      %3569 = vrot.lane.b32.xlu0 %v3546, 8
      %v3570 = vpop.permute.xlu0 %3569
      %vm3579 = vcmask 126016
      %3580 = vst.msk [vmem:[#allocation5] sm:$0xf] %vm3579, %v3556
      %3581 = vst.msk [vmem:[#allocation5 + $0xc] sm:$0xf] %vm3579, %v3558
      %3582 = vst.msk [vmem:[#allocation5 + $0x18] sm:$0xf] %vm3579, %v3560
      %3583 = vst.msk [vmem:[#allocation5 + $0x24] sm:$0xf] %vm3579, %v3562
      %3584 = vst.msk [vmem:[#allocation5 + $0x30] sm:$0xf] %vm3579, %v3564
      %3585 = vst.msk [vmem:[#allocation5 + $0x3c] sm:$0xf] %vm3579, %v3566
      %3586 = vst.msk [vmem:[#allocation5 + $0x48] sm:$0xf] %vm3579, %v3568
      %3587 = vst.msk [vmem:[#allocation5 + $0x54] sm:$0xf] %vm3579, %v3570
      %s3588 = scalar_lea.vmem [#allocation3], 2
      %v3589 = vld [vmem:[%s3588] ss:$2 sm:$0xff]
      %s3590 = scalar_lea.vmem [#allocation3], 50
      %v3591 = vld [vmem:[%s3590] ss:$2 sm:$0xff]
      %s3592 = scalar_lea.vmem [#allocation3], 98
      %v3593 = vld [vmem:[%s3592] ss:$2 sm:$0xff]
      %s3594 = scalar_lea.vmem [#allocation3], 146
      %v3595 = vld [vmem:[%s3594] ss:$2 sm:$0xff]
      %s3596 = scalar_lea.vmem [#allocation3], 194
      %v3597 = vld [vmem:[%s3596] ss:$2 sm:$0xff]
      %s3598 = scalar_lea.vmem [#allocation3], 242
      %v3599 = vld [vmem:[%s3598] ss:$2 sm:$0xff]
      %s3600 = scalar_lea.vmem [#allocation3], 290
      %v3601 = vld [vmem:[%s3600] ss:$2 sm:$0xff]
      %s3602 = scalar_lea.vmem [#allocation3], 338
      %v3603 = vld [vmem:[%s3602] ss:$2 sm:$0xff]
      %v3604 = vpack.c.bf16 %v3589, %v3589
      %v3605 = vpack.c.bf16 %v3591, %v3591
      %v3606 = vpack.c.bf16 %v3593, %v3593
      %v3607 = vpack.c.bf16 %v3595, %v3595
      %v3608 = vpack.c.bf16 %v3597, %v3597
      %v3609 = vpack.c.bf16 %v3599, %v3599
      %v3610 = vpack.c.bf16 %v3601, %v3601
      %v3611 = vpack.c.bf16 %v3603, %v3603
      %3620 = vrot.lane.b32.xlu0 %v3604, 16
      %v3621 = vpop.permute.xlu0 %3620
      %3622 = vrot.lane.b32.xlu0 %v3605, 16
      %v3623 = vpop.permute.xlu0 %3622
      %3624 = vrot.lane.b32.xlu0 %v3606, 16
      %v3625 = vpop.permute.xlu0 %3624
      %3626 = vrot.lane.b32.xlu0 %v3607, 16
      %v3627 = vpop.permute.xlu0 %3626
      %3628 = vrot.lane.b32.xlu0 %v3608, 16
      %v3629 = vpop.permute.xlu0 %3628
      %3630 = vrot.lane.b32.xlu0 %v3609, 16
      %v3631 = vpop.permute.xlu0 %3630
      %3632 = vrot.lane.b32.xlu0 %v3610, 16
      %v3633 = vpop.permute.xlu0 %3632
      %3634 = vrot.lane.b32.xlu0 %v3611, 16
      %v3635 = vpop.permute.xlu0 %3634
      %vm3644 = vcmask 191616
      %3645 = vst.msk [vmem:[#allocation5] sm:$0xf] %vm3644, %v3621
      %3646 = vst.msk [vmem:[#allocation5 + $0xc] sm:$0xf] %vm3644, %v3623
      %3647 = vst.msk [vmem:[#allocation5 + $0x18] sm:$0xf] %vm3644, %v3625
      %3648 = vst.msk [vmem:[#allocation5 + $0x24] sm:$0xf] %vm3644, %v3627
      %3649 = vst.msk [vmem:[#allocation5 + $0x30] sm:$0xf] %vm3644, %v3629
      %3650 = vst.msk [vmem:[#allocation5 + $0x3c] sm:$0xf] %vm3644, %v3631
      %3651 = vst.msk [vmem:[#allocation5 + $0x48] sm:$0xf] %vm3644, %v3633
      %3652 = vst.msk [vmem:[#allocation5 + $0x54] sm:$0xf] %vm3644, %v3635
      %s3653 = scalar_lea.vmem [#allocation3], 3
      %v3654 = vld [vmem:[%s3653] ss:$2 sm:$0xff]
      %s3655 = scalar_lea.vmem [#allocation3], 51
      %v3656 = vld [vmem:[%s3655] ss:$2 sm:$0xff]
      %s3657 = scalar_lea.vmem [#allocation3], 99
      %v3658 = vld [vmem:[%s3657] ss:$2 sm:$0xff]
      %s3659 = scalar_lea.vmem [#allocation3], 147
      %v3660 = vld [vmem:[%s3659] ss:$2 sm:$0xff]
      %s3661 = scalar_lea.vmem [#allocation3], 195
      %v3662 = vld [vmem:[%s3661] ss:$2 sm:$0xff]
      %s3663 = scalar_lea.vmem [#allocation3], 243
      %v3664 = vld [vmem:[%s3663] ss:$2 sm:$0xff]
      %s3665 = scalar_lea.vmem [#allocation3], 291
      %v3666 = vld [vmem:[%s3665] ss:$2 sm:$0xff]
      %s3667 = scalar_lea.vmem [#allocation3], 339
      %v3668 = vld [vmem:[%s3667] ss:$2 sm:$0xff]
      %v3669 = vpack.c.bf16 %v3654, %v3654
      %v3670 = vpack.c.bf16 %v3656, %v3656
      %v3671 = vpack.c.bf16 %v3658, %v3658
      %v3672 = vpack.c.bf16 %v3660, %v3660
      %v3673 = vpack.c.bf16 %v3662, %v3662
      %v3674 = vpack.c.bf16 %v3664, %v3664
      %v3675 = vpack.c.bf16 %v3666, %v3666
      %v3676 = vpack.c.bf16 %v3668, %v3668
      %3685 = vrot.lane.b32.xlu0 %v3669, 24
      %v3686 = vpop.permute.xlu0 %3685
      %3687 = vrot.lane.b32.xlu0 %v3670, 24
      %v3688 = vpop.permute.xlu0 %3687
      %3689 = vrot.lane.b32.xlu0 %v3671, 24
      %v3690 = vpop.permute.xlu0 %3689
      %3691 = vrot.lane.b32.xlu0 %v3672, 24
      %v3692 = vpop.permute.xlu0 %3691
      %3693 = vrot.lane.b32.xlu0 %v3673, 24
      %v3694 = vpop.permute.xlu0 %3693
      %3695 = vrot.lane.b32.xlu0 %v3674, 24
      %v3696 = vpop.permute.xlu0 %3695
      %3697 = vrot.lane.b32.xlu0 %v3675, 24
      %v3698 = vpop.permute.xlu0 %3697
      %3699 = vrot.lane.b32.xlu0 %v3676, 24
      %v3700 = vpop.permute.xlu0 %3699
      %vm3709 = vcmask 257216
      %3710 = vst.msk [vmem:[#allocation5] sm:$0xf] %vm3709, %v3686
      %3711 = vst.msk [vmem:[#allocation5 + $0xc] sm:$0xf] %vm3709, %v3688
      %3712 = vst.msk [vmem:[#allocation5 + $0x18] sm:$0xf] %vm3709, %v3690
      %3713 = vst.msk [vmem:[#allocation5 + $0x24] sm:$0xf] %vm3709, %v3692
      %3714 = vst.msk [vmem:[#allocation5 + $0x30] sm:$0xf] %vm3709, %v3694
      %3715 = vst.msk [vmem:[#allocation5 + $0x3c] sm:$0xf] %vm3709, %v3696
      %3716 = vst.msk [vmem:[#allocation5 + $0x48] sm:$0xf] %vm3709, %v3698
      %3717 = vst.msk [vmem:[#allocation5 + $0x54] sm:$0xf] %vm3709, %v3700
      %s3718 = scalar_lea.vmem [#allocation3], 4
      %v3719 = vld [vmem:[%s3718] ss:$2 sm:$0xff]
      %s3720 = scalar_lea.vmem [#allocation3], 52
      %v3721 = vld [vmem:[%s3720] ss:$2 sm:$0xff]
      %s3722 = scalar_lea.vmem [#allocation3], 100
      %v3723 = vld [vmem:[%s3722] ss:$2 sm:$0xff]
      %s3724 = scalar_lea.vmem [#allocation3], 148
      %v3725 = vld [vmem:[%s3724] ss:$2 sm:$0xff]
      %s3726 = scalar_lea.vmem [#allocation3], 196
      %v3727 = vld [vmem:[%s3726] ss:$2 sm:$0xff]
      %s3728 = scalar_lea.vmem [#allocation3], 244
      %v3729 = vld [vmem:[%s3728] ss:$2 sm:$0xff]
      %s3730 = scalar_lea.vmem [#allocation3], 292
      %v3731 = vld [vmem:[%s3730] ss:$2 sm:$0xff]
      %s3732 = scalar_lea.vmem [#allocation3], 340
      %v3733 = vld [vmem:[%s3732] ss:$2 sm:$0xff]
      %v3734 = vpack.c.bf16 %v3719, %v3719
      %v3735 = vpack.c.bf16 %v3721, %v3721
      %v3736 = vpack.c.bf16 %v3723, %v3723
      %v3737 = vpack.c.bf16 %v3725, %v3725
      %v3738 = vpack.c.bf16 %v3727, %v3727
      %v3739 = vpack.c.bf16 %v3729, %v3729
      %v3740 = vpack.c.bf16 %v3731, %v3731
      %v3741 = vpack.c.bf16 %v3733, %v3733
      %3750 = vrot.lane.b32.xlu0 %v3734, 32
      %v3751 = vpop.permute.xlu0 %3750
      %3752 = vrot.lane.b32.xlu0 %v3735, 32
      %v3753 = vpop.permute.xlu0 %3752
      %3754 = vrot.lane.b32.xlu0 %v3736, 32
      %v3755 = vpop.permute.xlu0 %3754
      %3756 = vrot.lane.b32.xlu0 %v3737, 32
      %v3757 = vpop.permute.xlu0 %3756
      %3758 = vrot.lane.b32.xlu0 %v3738, 32
      %v3759 = vpop.permute.xlu0 %3758
      %3760 = vrot.lane.b32.xlu0 %v3739, 32
      %v3761 = vpop.permute.xlu0 %3760
      %3762 = vrot.lane.b32.xlu0 %v3740, 32
      %v3763 = vpop.permute.xlu0 %3762
      %3764 = vrot.lane.b32.xlu0 %v3741, 32
      %v3765 = vpop.permute.xlu0 %3764
      %vm3774 = vcmask 322816
      %3775 = vst.msk [vmem:[#allocation5] sm:$0xf] %vm3774, %v3751
      %3776 = vst.msk [vmem:[#allocation5 + $0xc] sm:$0xf] %vm3774, %v3753
      %3777 = vst.msk [vmem:[#allocation5 + $0x18] sm:$0xf] %vm3774, %v3755
      %3778 = vst.msk [vmem:[#allocation5 + $0x24] sm:$0xf] %vm3774, %v3757
      %3779 = vst.msk [vmem:[#allocation5 + $0x30] sm:$0xf] %vm3774, %v3759
      %3780 = vst.msk [vmem:[#allocation5 + $0x3c] sm:$0xf] %vm3774, %v3761
      %3781 = vst.msk [vmem:[#allocation5 + $0x48] sm:$0xf] %vm3774, %v3763
      %3782 = vst.msk [vmem:[#allocation5 + $0x54] sm:$0xf] %vm3774, %v3765
      %s3783 = scalar_lea.vmem [#allocation3], 5
      %v3784 = vld [vmem:[%s3783] ss:$2 sm:$0xff]
      %s3785 = scalar_lea.vmem [#allocation3], 53
      %v3786 = vld [vmem:[%s3785] ss:$2 sm:$0xff]
      %s3787 = scalar_lea.vmem [#allocation3], 101
      %v3788 = vld [vmem:[%s3787] ss:$2 sm:$0xff]
      %s3789 = scalar_lea.vmem [#allocation3], 149
      %v3790 = vld [vmem:[%s3789] ss:$2 sm:$0xff]
      %s3791 = scalar_lea.vmem [#allocation3], 197
      %v3792 = vld [vmem:[%s3791] ss:$2 sm:$0xff]
      %s3793 = scalar_lea.vmem [#allocation3], 245
      %v3794 = vld [vmem:[%s3793] ss:$2 sm:$0xff]
      %s3795 = scalar_lea.vmem [#allocation3], 293
      %v3796 = vld [vmem:[%s3795] ss:$2 sm:$0xff]
      %s3797 = scalar_lea.vmem [#allocation3], 341
      %v3798 = vld [vmem:[%s3797] ss:$2 sm:$0xff]
      %v3799 = vpack.c.bf16 %v3784, %v3784
      %v3800 = vpack.c.bf16 %v3786, %v3786
      %v3801 = vpack.c.bf16 %v3788, %v3788
      %v3802 = vpack.c.bf16 %v3790, %v3790
      %v3803 = vpack.c.bf16 %v3792, %v3792
      %v3804 = vpack.c.bf16 %v3794, %v3794
      %v3805 = vpack.c.bf16 %v3796, %v3796
      %v3806 = vpack.c.bf16 %v3798, %v3798
      %3815 = vrot.lane.b32.xlu0 %v3799, 40
      %v3816 = vpop.permute.xlu0 %3815
      %3817 = vrot.lane.b32.xlu0 %v3800, 40
      %v3818 = vpop.permute.xlu0 %3817
      %3819 = vrot.lane.b32.xlu0 %v3801, 40
      %v3820 = vpop.permute.xlu0 %3819
      %3821 = vrot.lane.b32.xlu0 %v3802, 40
      %v3822 = vpop.permute.xlu0 %3821
      %3823 = vrot.lane.b32.xlu0 %v3803, 40
      %v3824 = vpop.permute.xlu0 %3823
      %3825 = vrot.lane.b32.xlu0 %v3804, 40
      %v3826 = vpop.permute.xlu0 %3825
      %3827 = vrot.lane.b32.xlu0 %v3805, 40
      %v3828 = vpop.permute.xlu0 %3827
      %3829 = vrot.lane.b32.xlu0 %v3806, 40
      %v3830 = vpop.permute.xlu0 %3829
      %vm3839 = vcmask 388416
      %3840 = vst.msk [vmem:[#allocation5] sm:$0xf] %vm3839, %v3816
      %3841 = vst.msk [vmem:[#allocation5 + $0xc] sm:$0xf] %vm3839, %v3818
      %3842 = vst.msk [vmem:[#allocation5 + $0x18] sm:$0xf] %vm3839, %v3820
      %3843 = vst.msk [vmem:[#allocation5 + $0x24] sm:$0xf] %vm3839, %v3822
      %3844 = vst.msk [vmem:[#allocation5 + $0x30] sm:$0xf] %vm3839, %v3824
      %3845 = vst.msk [vmem:[#allocation5 + $0x3c] sm:$0xf] %vm3839, %v3826
      %3846 = vst.msk [vmem:[#allocation5 + $0x48] sm:$0xf] %vm3839, %v3828
      %3847 = vst.msk [vmem:[#allocation5 + $0x54] sm:$0xf] %vm3839, %v3830
      %s3848 = scalar_lea.vmem [#allocation3], 24
      %v3849 = vld [vmem:[%s3848] ss:$2 sm:$0xff]
      %s3850 = scalar_lea.vmem %s3848, 48 [#allocation3]
      %v3851 = vld [vmem:[%s3850] ss:$2 sm:$0xff]
      %s3852 = scalar_lea.vmem %s3848, 96 [#allocation3]
      %v3853 = vld [vmem:[%s3852] ss:$2 sm:$0xff]
      %s3854 = scalar_lea.vmem %s3848, 144 [#allocation3]
      %v3855 = vld [vmem:[%s3854] ss:$2 sm:$0xff]
      %s3856 = scalar_lea.vmem %s3848, 192 [#allocation3]
      %v3857 = vld [vmem:[%s3856] ss:$2 sm:$0xff]
      %s3858 = scalar_lea.vmem %s3848, 240 [#allocation3]
      %v3859 = vld [vmem:[%s3858] ss:$2 sm:$0xff]
      %s3860 = scalar_lea.vmem %s3848, 288 [#allocation3]
      %v3861 = vld [vmem:[%s3860] ss:$2 sm:$0xff]
      %s3862 = scalar_lea.vmem %s3848, 336 [#allocation3]
      %v3863 = vld [vmem:[%s3862] ss:$2 sm:$0xff]
      %v3864 = vpack.c.bf16 %v3849, %v3849
      %v3865 = vpack.c.bf16 %v3851, %v3851
      %v3866 = vpack.c.bf16 %v3853, %v3853
      %v3867 = vpack.c.bf16 %v3855, %v3855
      %v3868 = vpack.c.bf16 %v3857, %v3857
      %v3869 = vpack.c.bf16 %v3859, %v3859
      %v3870 = vpack.c.bf16 %v3861, %v3861
      %v3871 = vpack.c.bf16 %v3863, %v3863
      %3880 = vrot.lane.b32.xlu0 %v3864, 48
      %v3881 = vpop.permute.xlu0 %3880
      %3882 = vrot.lane.b32.xlu0 %v3865, 48
      %v3883 = vpop.permute.xlu0 %3882
      %3884 = vrot.lane.b32.xlu0 %v3866, 48
      %v3885 = vpop.permute.xlu0 %3884
      %3886 = vrot.lane.b32.xlu0 %v3867, 48
      %v3887 = vpop.permute.xlu0 %3886
      %3888 = vrot.lane.b32.xlu0 %v3868, 48
      %v3889 = vpop.permute.xlu0 %3888
      %3890 = vrot.lane.b32.xlu0 %v3869, 48
      %v3891 = vpop.permute.xlu0 %3890
      %3892 = vrot.lane.b32.xlu0 %v3870, 48
      %v3893 = vpop.permute.xlu0 %3892
      %3894 = vrot.lane.b32.xlu0 %v3871, 48
      %v3895 = vpop.permute.xlu0 %3894
      %vm3904 = vcmask 454016
      %3905 = vst.msk [vmem:[#allocation5] sm:$0xf] %vm3904, %v3881
      %3906 = vst.msk [vmem:[#allocation5 + $0xc] sm:$0xf] %vm3904, %v3883
      %3907 = vst.msk [vmem:[#allocation5 + $0x18] sm:$0xf] %vm3904, %v3885
      %3908 = vst.msk [vmem:[#allocation5 + $0x24] sm:$0xf] %vm3904, %v3887
      %3909 = vst.msk [vmem:[#allocation5 + $0x30] sm:$0xf] %vm3904, %v3889
      %3910 = vst.msk [vmem:[#allocation5 + $0x3c] sm:$0xf] %vm3904, %v3891
      %3911 = vst.msk [vmem:[#allocation5 + $0x48] sm:$0xf] %vm3904, %v3893
      %3912 = vst.msk [vmem:[#allocation5 + $0x54] sm:$0xf] %vm3904, %v3895
      %s3913 = scalar_lea.vmem %s3848, 1 [#allocation3]
      %v3914 = vld [vmem:[%s3913] ss:$2 sm:$0xff]
      %s3915 = scalar_lea.vmem %s3848, 49 [#allocation3]
      %v3916 = vld [vmem:[%s3915] ss:$2 sm:$0xff]
      %s3917 = scalar_lea.vmem %s3848, 97 [#allocation3]
      %v3918 = vld [vmem:[%s3917] ss:$2 sm:$0xff]
      %s3919 = scalar_lea.vmem %s3848, 145 [#allocation3]
      %v3920 = vld [vmem:[%s3919] ss:$2 sm:$0xff]
      %s3921 = scalar_lea.vmem %s3848, 193 [#allocation3]
      %v3922 = vld [vmem:[%s3921] ss:$2 sm:$0xff]
      %s3923 = scalar_lea.vmem %s3848, 241 [#allocation3]
      %v3924 = vld [vmem:[%s3923] ss:$2 sm:$0xff]
      %s3925 = scalar_lea.vmem %s3848, 289 [#allocation3]
      %v3926 = vld [vmem:[%s3925] ss:$2 sm:$0xff]
      %s3927 = scalar_lea.vmem %s3848, 337 [#allocation3]
      %v3928 = vld [vmem:[%s3927] ss:$2 sm:$0xff]
      %v3929 = vpack.c.bf16 %v3914, %v3914
      %v3930 = vpack.c.bf16 %v3916, %v3916
      %v3931 = vpack.c.bf16 %v3918, %v3918
      %v3932 = vpack.c.bf16 %v3920, %v3920
      %v3933 = vpack.c.bf16 %v3922, %v3922
      %v3934 = vpack.c.bf16 %v3924, %v3924
      %v3935 = vpack.c.bf16 %v3926, %v3926
      %v3936 = vpack.c.bf16 %v3928, %v3928
      %3945 = vrot.lane.b32.xlu0 %v3929, 56
      %v3946 = vpop.permute.xlu0 %3945
      %3947 = vrot.lane.b32.xlu0 %v3930, 56
      %v3948 = vpop.permute.xlu0 %3947
      %3949 = vrot.lane.b32.xlu0 %v3931, 56
      %v3950 = vpop.permute.xlu0 %3949
      %3951 = vrot.lane.b32.xlu0 %v3932, 56
      %v3952 = vpop.permute.xlu0 %3951
      %3953 = vrot.lane.b32.xlu0 %v3933, 56
      %v3954 = vpop.permute.xlu0 %3953
      %3955 = vrot.lane.b32.xlu0 %v3934, 56
      %v3956 = vpop.permute.xlu0 %3955
      %3957 = vrot.lane.b32.xlu0 %v3935, 56
      %v3958 = vpop.permute.xlu0 %3957
      %3959 = vrot.lane.b32.xlu0 %v3936, 56
      %v3960 = vpop.permute.xlu0 %3959
      %vm3969 = vcmask 519616
      %3970 = vst.msk [vmem:[#allocation5] sm:$0xf] %vm3969, %v3946
      %3971 = vst.msk [vmem:[#allocation5 + $0xc] sm:$0xf] %vm3969, %v3948
      %3972 = vst.msk [vmem:[#allocation5 + $0x18] sm:$0xf] %vm3969, %v3950
      %3973 = vst.msk [vmem:[#allocation5 + $0x24] sm:$0xf] %vm3969, %v3952
      %3974 = vst.msk [vmem:[#allocation5 + $0x30] sm:$0xf] %vm3969, %v3954
      %3975 = vst.msk [vmem:[#allocation5 + $0x3c] sm:$0xf] %vm3969, %v3956
      %3976 = vst.msk [vmem:[#allocation5 + $0x48] sm:$0xf] %vm3969, %v3958
      %3977 = vst.msk [vmem:[#allocation5 + $0x54] sm:$0xf] %vm3969, %v3960
      %s3978 = scalar_lea.vmem %s3848, 2 [#allocation3]
      %v3979 = vld [vmem:[%s3978] ss:$2 sm:$0xff]
      %s3980 = scalar_lea.vmem %s3848, 50 [#allocation3]
      %v3981 = vld [vmem:[%s3980] ss:$2 sm:$0xff]
      %s3982 = scalar_lea.vmem %s3848, 98 [#allocation3]
      %v3983 = vld [vmem:[%s3982] ss:$2 sm:$0xff]
      %s3984 = scalar_lea.vmem %s3848, 146 [#allocation3]
      %v3985 = vld [vmem:[%s3984] ss:$2 sm:$0xff]
      %s3986 = scalar_lea.vmem %s3848, 194 [#allocation3]
      %v3987 = vld [vmem:[%s3986] ss:$2 sm:$0xff]
      %s3988 = scalar_lea.vmem %s3848, 242 [#allocation3]
      %v3989 = vld [vmem:[%s3988] ss:$2 sm:$0xff]
      %s3990 = scalar_lea.vmem %s3848, 290 [#allocation3]
      %v3991 = vld [vmem:[%s3990] ss:$2 sm:$0xff]
      %s3992 = scalar_lea.vmem %s3848, 338 [#allocation3]
      %v3993 = vld [vmem:[%s3992] ss:$2 sm:$0xff]
      %v3994 = vpack.c.bf16 %v3979, %v3979
      %v3995 = vpack.c.bf16 %v3981, %v3981
      %v3996 = vpack.c.bf16 %v3983, %v3983
      %v3997 = vpack.c.bf16 %v3985, %v3985
      %v3998 = vpack.c.bf16 %v3987, %v3987
      %v3999 = vpack.c.bf16 %v3989, %v3989
      %v4000 = vpack.c.bf16 %v3991, %v3991
      %v4001 = vpack.c.bf16 %v3993, %v3993
      %4010 = vrot.lane.b32.xlu0 %v3994, 64
      %v4011 = vpop.permute.xlu0 %4010
      %4012 = vrot.lane.b32.xlu0 %v3995, 64
      %v4013 = vpop.permute.xlu0 %4012
      %4014 = vrot.lane.b32.xlu0 %v3996, 64
      %v4015 = vpop.permute.xlu0 %4014
      %4016 = vrot.lane.b32.xlu0 %v3997, 64
      %v4017 = vpop.permute.xlu0 %4016
      %4018 = vrot.lane.b32.xlu0 %v3998, 64
      %v4019 = vpop.permute.xlu0 %4018
      %4020 = vrot.lane.b32.xlu0 %v3999, 64
      %v4021 = vpop.permute.xlu0 %4020
      %4022 = vrot.lane.b32.xlu0 %v4000, 64
      %v4023 = vpop.permute.xlu0 %4022
      %4024 = vrot.lane.b32.xlu0 %v4001, 64
      %v4025 = vpop.permute.xlu0 %4024
      %vm4034 = vcmask 585216
      %4035 = vst.msk [vmem:[#allocation5] sm:$0xf] %vm4034, %v4011
      %4036 = vst.msk [vmem:[#allocation5 + $0xc] sm:$0xf] %vm4034, %v4013
      %4037 = vst.msk [vmem:[#allocation5 + $0x18] sm:$0xf] %vm4034, %v4015
      %4038 = vst.msk [vmem:[#allocation5 + $0x24] sm:$0xf] %vm4034, %v4017
      %4039 = vst.msk [vmem:[#allocation5 + $0x30] sm:$0xf] %vm4034, %v4019
      %4040 = vst.msk [vmem:[#allocation5 + $0x3c] sm:$0xf] %vm4034, %v4021
      %4041 = vst.msk [vmem:[#allocation5 + $0x48] sm:$0xf] %vm4034, %v4023
      %4042 = vst.msk [vmem:[#allocation5 + $0x54] sm:$0xf] %vm4034, %v4025
      %s4043 = scalar_lea.vmem %s3848, 3 [#allocation3]
      %v4044 = vld [vmem:[%s4043] ss:$2 sm:$0xff]
      %s4045 = scalar_lea.vmem %s3848, 51 [#allocation3]
      %v4046 = vld [vmem:[%s4045] ss:$2 sm:$0xff]
      %s4047 = scalar_lea.vmem %s3848, 99 [#allocation3]
      %v4048 = vld [vmem:[%s4047] ss:$2 sm:$0xff]
      %s4049 = scalar_lea.vmem %s3848, 147 [#allocation3]
      %v4050 = vld [vmem:[%s4049] ss:$2 sm:$0xff]
      %s4051 = scalar_lea.vmem %s3848, 195 [#allocation3]
      %v4052 = vld [vmem:[%s4051] ss:$2 sm:$0xff]
      %s4053 = scalar_lea.vmem %s3848, 243 [#allocation3]
      %v4054 = vld [vmem:[%s4053] ss:$2 sm:$0xff]
      %s4055 = scalar_lea.vmem %s3848, 291 [#allocation3]
      %v4056 = vld [vmem:[%s4055] ss:$2 sm:$0xff]
      %s4057 = scalar_lea.vmem %s3848, 339 [#allocation3]
      %v4058 = vld [vmem:[%s4057] ss:$2 sm:$0xff]
      %v4059 = vpack.c.bf16 %v4044, %v4044
      %v4060 = vpack.c.bf16 %v4046, %v4046
      %v4061 = vpack.c.bf16 %v4048, %v4048
      %v4062 = vpack.c.bf16 %v4050, %v4050
      %v4063 = vpack.c.bf16 %v4052, %v4052
      %v4064 = vpack.c.bf16 %v4054, %v4054
      %v4065 = vpack.c.bf16 %v4056, %v4056
      %v4066 = vpack.c.bf16 %v4058, %v4058
      %4075 = vrot.lane.b32.xlu0 %v4059, 72
      %v4076 = vpop.permute.xlu0 %4075
      %4077 = vrot.lane.b32.xlu0 %v4060, 72
      %v4078 = vpop.permute.xlu0 %4077
      %4079 = vrot.lane.b32.xlu0 %v4061, 72
      %v4080 = vpop.permute.xlu0 %4079
      %4081 = vrot.lane.b32.xlu0 %v4062, 72
      %v4082 = vpop.permute.xlu0 %4081
      %4083 = vrot.lane.b32.xlu0 %v4063, 72
      %v4084 = vpop.permute.xlu0 %4083
      %4085 = vrot.lane.b32.xlu0 %v4064, 72
      %v4086 = vpop.permute.xlu0 %4085
      %4087 = vrot.lane.b32.xlu0 %v4065, 72
      %v4088 = vpop.permute.xlu0 %4087
      %4089 = vrot.lane.b32.xlu0 %v4066, 72
      %v4090 = vpop.permute.xlu0 %4089
      %vm4099 = vcmask 650816
      %4100 = vst.msk [vmem:[#allocation5] sm:$0xf] %vm4099, %v4076
      %4101 = vst.msk [vmem:[#allocation5 + $0xc] sm:$0xf] %vm4099, %v4078
      %4102 = vst.msk [vmem:[#allocation5 + $0x18] sm:$0xf] %vm4099, %v4080
      %4103 = vst.msk [vmem:[#allocation5 + $0x24] sm:$0xf] %vm4099, %v4082
      %4104 = vst.msk [vmem:[#allocation5 + $0x30] sm:$0xf] %vm4099, %v4084
      %4105 = vst.msk [vmem:[#allocation5 + $0x3c] sm:$0xf] %vm4099, %v4086
      %4106 = vst.msk [vmem:[#allocation5 + $0x48] sm:$0xf] %vm4099, %v4088
      %4107 = vst.msk [vmem:[#allocation5 + $0x54] sm:$0xf] %vm4099, %v4090
      %s4108 = scalar_lea.vmem %s3848, 4 [#allocation3]
      %v4109 = vld [vmem:[%s4108] ss:$2 sm:$0xff]
      %s4110 = scalar_lea.vmem %s3848, 52 [#allocation3]
      %v4111 = vld [vmem:[%s4110] ss:$2 sm:$0xff]
      %s4112 = scalar_lea.vmem %s3848, 100 [#allocation3]
      %v4113 = vld [vmem:[%s4112] ss:$2 sm:$0xff]
      %s4114 = scalar_lea.vmem %s3848, 148 [#allocation3]
      %v4115 = vld [vmem:[%s4114] ss:$2 sm:$0xff]
      %s4116 = scalar_lea.vmem %s3848, 196 [#allocation3]
      %v4117 = vld [vmem:[%s4116] ss:$2 sm:$0xff]
      %s4118 = scalar_lea.vmem %s3848, 244 [#allocation3]
      %v4119 = vld [vmem:[%s4118] ss:$2 sm:$0xff]
      %s4120 = scalar_lea.vmem %s3848, 292 [#allocation3]
      %v4121 = vld [vmem:[%s4120] ss:$2 sm:$0xff]
      %s4122 = scalar_lea.vmem %s3848, 340 [#allocation3]
      %v4123 = vld [vmem:[%s4122] ss:$2 sm:$0xff]
      %v4124 = vpack.c.bf16 %v4109, %v4109
      %v4125 = vpack.c.bf16 %v4111, %v4111
      %v4126 = vpack.c.bf16 %v4113, %v4113
      %v4127 = vpack.c.bf16 %v4115, %v4115
      %v4128 = vpack.c.bf16 %v4117, %v4117
      %v4129 = vpack.c.bf16 %v4119, %v4119
      %v4130 = vpack.c.bf16 %v4121, %v4121
      %v4131 = vpack.c.bf16 %v4123, %v4123
      %4140 = vrot.lane.b32.xlu0 %v4124, 80
      %v4141 = vpop.permute.xlu0 %4140
      %4142 = vrot.lane.b32.xlu0 %v4125, 80
      %v4143 = vpop.permute.xlu0 %4142
      %4144 = vrot.lane.b32.xlu0 %v4126, 80
      %v4145 = vpop.permute.xlu0 %4144
      %4146 = vrot.lane.b32.xlu0 %v4127, 80
      %v4147 = vpop.permute.xlu0 %4146
      %4148 = vrot.lane.b32.xlu0 %v4128, 80
      %v4149 = vpop.permute.xlu0 %4148
      %4150 = vrot.lane.b32.xlu0 %v4129, 80
      %v4151 = vpop.permute.xlu0 %4150
      %4152 = vrot.lane.b32.xlu0 %v4130, 80
      %v4153 = vpop.permute.xlu0 %4152
      %4154 = vrot.lane.b32.xlu0 %v4131, 80
      %v4155 = vpop.permute.xlu0 %4154
      %vm4164 = vcmask 716416
      %4165 = vst.msk [vmem:[#allocation5] sm:$0xf] %vm4164, %v4141
      %4166 = vst.msk [vmem:[#allocation5 + $0xc] sm:$0xf] %vm4164, %v4143
      %4167 = vst.msk [vmem:[#allocation5 + $0x18] sm:$0xf] %vm4164, %v4145
      %4168 = vst.msk [vmem:[#allocation5 + $0x24] sm:$0xf] %vm4164, %v4147
      %4169 = vst.msk [vmem:[#allocation5 + $0x30] sm:$0xf] %vm4164, %v4149
      %4170 = vst.msk [vmem:[#allocation5 + $0x3c] sm:$0xf] %vm4164, %v4151
      %4171 = vst.msk [vmem:[#allocation5 + $0x48] sm:$0xf] %vm4164, %v4153
      %4172 = vst.msk [vmem:[#allocation5 + $0x54] sm:$0xf] %vm4164, %v4155
      %s4173 = scalar_lea.vmem %s3848, 5 [#allocation3]
      %v4174 = vld [vmem:[%s4173] ss:$2 sm:$0xff]
      %s4175 = scalar_lea.vmem %s3848, 53 [#allocation3]
      %v4176 = vld [vmem:[%s4175] ss:$2 sm:$0xff]
      %s4177 = scalar_lea.vmem %s3848, 101 [#allocation3]
      %v4178 = vld [vmem:[%s4177] ss:$2 sm:$0xff]
      %s4179 = scalar_lea.vmem %s3848, 149 [#allocation3]
      %v4180 = vld [vmem:[%s4179] ss:$2 sm:$0xff]
      %s4181 = scalar_lea.vmem %s3848, 197 [#allocation3]
      %v4182 = vld [vmem:[%s4181] ss:$2 sm:$0xff]
      %s4183 = scalar_lea.vmem %s3848, 245 [#allocation3]
      %v4184 = vld [vmem:[%s4183] ss:$2 sm:$0xff]
      %s4185 = scalar_lea.vmem %s3848, 293 [#allocation3]
      %v4186 = vld [vmem:[%s4185] ss:$2 sm:$0xff]
      %s4187 = scalar_lea.vmem %s3848, 341 [#allocation3]
      %v4188 = vld [vmem:[%s4187] ss:$2 sm:$0xff]
      %v4189 = vpack.c.bf16 %v4174, %v4174
      %v4190 = vpack.c.bf16 %v4176, %v4176
      %v4191 = vpack.c.bf16 %v4178, %v4178
      %v4192 = vpack.c.bf16 %v4180, %v4180
      %v4193 = vpack.c.bf16 %v4182, %v4182
      %v4194 = vpack.c.bf16 %v4184, %v4184
      %v4195 = vpack.c.bf16 %v4186, %v4186
      %v4196 = vpack.c.bf16 %v4188, %v4188
      %4205 = vrot.lane.b32.xlu0 %v4189, 88
      %v4206 = vpop.permute.xlu0 %4205
      %4207 = vrot.lane.b32.xlu0 %v4190, 88
      %v4208 = vpop.permute.xlu0 %4207
      %4209 = vrot.lane.b32.xlu0 %v4191, 88
      %v4210 = vpop.permute.xlu0 %4209
      %4211 = vrot.lane.b32.xlu0 %v4192, 88
      %v4212 = vpop.permute.xlu0 %4211
      %4213 = vrot.lane.b32.xlu0 %v4193, 88
      %v4214 = vpop.permute.xlu0 %4213
      %4215 = vrot.lane.b32.xlu0 %v4194, 88
      %v4216 = vpop.permute.xlu0 %4215
      %4217 = vrot.lane.b32.xlu0 %v4195, 88
      %v4218 = vpop.permute.xlu0 %4217
      %4219 = vrot.lane.b32.xlu0 %v4196, 88
      %v4220 = vpop.permute.xlu0 %4219
      %vm4229 = vcmask 782016
      %4230 = vst.msk [vmem:[#allocation5] sm:$0xf] %vm4229, %v4206
      %4231 = vst.msk [vmem:[#allocation5 + $0xc] sm:$0xf] %vm4229, %v4208
      %4232 = vst.msk [vmem:[#allocation5 + $0x18] sm:$0xf] %vm4229, %v4210
      %4233 = vst.msk [vmem:[#allocation5 + $0x24] sm:$0xf] %vm4229, %v4212
      %4234 = vst.msk [vmem:[#allocation5 + $0x30] sm:$0xf] %vm4229, %v4214
      %4235 = vst.msk [vmem:[#allocation5 + $0x3c] sm:$0xf] %vm4229, %v4216
      %4236 = vst.msk [vmem:[#allocation5 + $0x48] sm:$0xf] %vm4229, %v4218
      %4237 = vst.msk [vmem:[#allocation5 + $0x54] sm:$0xf] %vm4229, %v4220
      %v4238 = vld [vmem:[%s3459] ss:$2 sm:$0xff]
      %s4239 = scalar_lea.vmem %s3459, 48 [#allocation3]
      %v4240 = vld [vmem:[%s4239] ss:$2 sm:$0xff]
      %s4241 = scalar_lea.vmem %s3459, 96 [#allocation3]
      %v4242 = vld [vmem:[%s4241] ss:$2 sm:$0xff]
      %s4243 = scalar_lea.vmem %s3459, 144 [#allocation3]
      %v4244 = vld [vmem:[%s4243] ss:$2 sm:$0xff]
      %s4245 = scalar_lea.vmem %s3459, 192 [#allocation3]
      %v4246 = vld [vmem:[%s4245] ss:$2 sm:$0xff]
      %s4247 = scalar_lea.vmem %s3459, 240 [#allocation3]
      %v4248 = vld [vmem:[%s4247] ss:$2 sm:$0xff]
      %s4249 = scalar_lea.vmem %s3459, 288 [#allocation3]
      %v4250 = vld [vmem:[%s4249] ss:$2 sm:$0xff]
      %s4251 = scalar_lea.vmem %s3459, 336 [#allocation3]
      %v4252 = vld [vmem:[%s4251] ss:$2 sm:$0xff]
      %v4253 = vpack.c.bf16 %v4238, %v4238
      %v4254 = vpack.c.bf16 %v4240, %v4240
      %v4255 = vpack.c.bf16 %v4242, %v4242
      %v4256 = vpack.c.bf16 %v4244, %v4244
      %v4257 = vpack.c.bf16 %v4246, %v4246
      %v4258 = vpack.c.bf16 %v4248, %v4248
      %v4259 = vpack.c.bf16 %v4250, %v4250
      %v4260 = vpack.c.bf16 %v4252, %v4252
      %4269 = vrot.lane.b32.xlu0 %v4253, 96
      %v4270 = vpop.permute.xlu0 %4269
      %4271 = vrot.lane.b32.xlu0 %v4254, 96
      %v4272 = vpop.permute.xlu0 %4271
      %4273 = vrot.lane.b32.xlu0 %v4255, 96
      %v4274 = vpop.permute.xlu0 %4273
      %4275 = vrot.lane.b32.xlu0 %v4256, 96
      %v4276 = vpop.permute.xlu0 %4275
      %4277 = vrot.lane.b32.xlu0 %v4257, 96
      %v4278 = vpop.permute.xlu0 %4277
      %4279 = vrot.lane.b32.xlu0 %v4258, 96
      %v4280 = vpop.permute.xlu0 %4279
      %4281 = vrot.lane.b32.xlu0 %v4259, 96
      %v4282 = vpop.permute.xlu0 %4281
      %4283 = vrot.lane.b32.xlu0 %v4260, 96
      %v4284 = vpop.permute.xlu0 %4283
      %vm4293 = vcmask 847616
      %4294 = vst.msk [vmem:[#allocation5] sm:$0xf] %vm4293, %v4270
      %4295 = vst.msk [vmem:[#allocation5 + $0xc] sm:$0xf] %vm4293, %v4272
      %4296 = vst.msk [vmem:[#allocation5 + $0x18] sm:$0xf] %vm4293, %v4274
      %4297 = vst.msk [vmem:[#allocation5 + $0x24] sm:$0xf] %vm4293, %v4276
      %4298 = vst.msk [vmem:[#allocation5 + $0x30] sm:$0xf] %vm4293, %v4278
      %4299 = vst.msk [vmem:[#allocation5 + $0x3c] sm:$0xf] %vm4293, %v4280
      %4300 = vst.msk [vmem:[#allocation5 + $0x48] sm:$0xf] %vm4293, %v4282
      %4301 = vst.msk [vmem:[#allocation5 + $0x54] sm:$0xf] %vm4293, %v4284
      %s4302 = scalar_lea.vmem %s3459, 1 [#allocation3]
      %v4303 = vld [vmem:[%s4302] ss:$2 sm:$0xff]
      %s4304 = scalar_lea.vmem %s3459, 49 [#allocation3]
      %v4305 = vld [vmem:[%s4304] ss:$2 sm:$0xff]
      %s4306 = scalar_lea.vmem %s3459, 97 [#allocation3]
      %v4307 = vld [vmem:[%s4306] ss:$2 sm:$0xff]
      %s4308 = scalar_lea.vmem %s3459, 145 [#allocation3]
      %v4309 = vld [vmem:[%s4308] ss:$2 sm:$0xff]
      %s4310 = scalar_lea.vmem %s3459, 193 [#allocation3]
      %v4311 = vld [vmem:[%s4310] ss:$2 sm:$0xff]
      %s4312 = scalar_lea.vmem %s3459, 241 [#allocation3]
      %v4313 = vld [vmem:[%s4312] ss:$2 sm:$0xff]
      %s4314 = scalar_lea.vmem %s3459, 289 [#allocation3]
      %v4315 = vld [vmem:[%s4314] ss:$2 sm:$0xff]
      %s4316 = scalar_lea.vmem %s3459, 337 [#allocation3]
      %v4317 = vld [vmem:[%s4316] ss:$2 sm:$0xff]
      %v4318 = vpack.c.bf16 %v4303, %v4303
      %v4319 = vpack.c.bf16 %v4305, %v4305
      %v4320 = vpack.c.bf16 %v4307, %v4307
      %v4321 = vpack.c.bf16 %v4309, %v4309
      %v4322 = vpack.c.bf16 %v4311, %v4311
      %v4323 = vpack.c.bf16 %v4313, %v4313
      %v4324 = vpack.c.bf16 %v4315, %v4315
      %v4325 = vpack.c.bf16 %v4317, %v4317
      %4334 = vrot.lane.b32.xlu0 %v4318, 104
      %v4335 = vpop.permute.xlu0 %4334
      %4336 = vrot.lane.b32.xlu0 %v4319, 104
      %v4337 = vpop.permute.xlu0 %4336
      %4338 = vrot.lane.b32.xlu0 %v4320, 104
      %v4339 = vpop.permute.xlu0 %4338
      %4340 = vrot.lane.b32.xlu0 %v4321, 104
      %v4341 = vpop.permute.xlu0 %4340
      %4342 = vrot.lane.b32.xlu0 %v4322, 104
      %v4343 = vpop.permute.xlu0 %4342
      %4344 = vrot.lane.b32.xlu0 %v4323, 104
      %v4345 = vpop.permute.xlu0 %4344
      %4346 = vrot.lane.b32.xlu0 %v4324, 104
      %v4347 = vpop.permute.xlu0 %4346
      %4348 = vrot.lane.b32.xlu0 %v4325, 104
      %v4349 = vpop.permute.xlu0 %4348
      %vm4358 = vcmask 913216
      %4359 = vst.msk [vmem:[#allocation5] sm:$0xf] %vm4358, %v4335
      %4360 = vst.msk [vmem:[#allocation5 + $0xc] sm:$0xf] %vm4358, %v4337
      %4361 = vst.msk [vmem:[#allocation5 + $0x18] sm:$0xf] %vm4358, %v4339
      %4362 = vst.msk [vmem:[#allocation5 + $0x24] sm:$0xf] %vm4358, %v4341
      %4363 = vst.msk [vmem:[#allocation5 + $0x30] sm:$0xf] %vm4358, %v4343
      %4364 = vst.msk [vmem:[#allocation5 + $0x3c] sm:$0xf] %vm4358, %v4345
      %4365 = vst.msk [vmem:[#allocation5 + $0x48] sm:$0xf] %vm4358, %v4347
      %4366 = vst.msk [vmem:[#allocation5 + $0x54] sm:$0xf] %vm4358, %v4349
      %s4367 = scalar_lea.vmem %s3459, 2 [#allocation3]
      %v4368 = vld [vmem:[%s4367] ss:$2 sm:$0xff]
      %s4369 = scalar_lea.vmem %s3459, 50 [#allocation3]
      %v4370 = vld [vmem:[%s4369] ss:$2 sm:$0xff]
      %s4371 = scalar_lea.vmem %s3459, 98 [#allocation3]
      %v4372 = vld [vmem:[%s4371] ss:$2 sm:$0xff]
      %s4373 = scalar_lea.vmem %s3459, 146 [#allocation3]
      %v4374 = vld [vmem:[%s4373] ss:$2 sm:$0xff]
      %s4375 = scalar_lea.vmem %s3459, 194 [#allocation3]
      %v4376 = vld [vmem:[%s4375] ss:$2 sm:$0xff]
      %s4377 = scalar_lea.vmem %s3459, 242 [#allocation3]
      %v4378 = vld [vmem:[%s4377] ss:$2 sm:$0xff]
      %s4379 = scalar_lea.vmem %s3459, 290 [#allocation3]
      %v4380 = vld [vmem:[%s4379] ss:$2 sm:$0xff]
      %s4381 = scalar_lea.vmem %s3459, 338 [#allocation3]
      %v4382 = vld [vmem:[%s4381] ss:$2 sm:$0xff]
      %v4383 = vpack.c.bf16 %v4368, %v4368
      %v4384 = vpack.c.bf16 %v4370, %v4370
      %v4385 = vpack.c.bf16 %v4372, %v4372
      %v4386 = vpack.c.bf16 %v4374, %v4374
      %v4387 = vpack.c.bf16 %v4376, %v4376
      %v4388 = vpack.c.bf16 %v4378, %v4378
      %v4389 = vpack.c.bf16 %v4380, %v4380
      %v4390 = vpack.c.bf16 %v4382, %v4382
      %4399 = vrot.lane.b32.xlu0 %v4383, 112
      %v4400 = vpop.permute.xlu0 %4399
      %4401 = vrot.lane.b32.xlu0 %v4384, 112
      %v4402 = vpop.permute.xlu0 %4401
      %4403 = vrot.lane.b32.xlu0 %v4385, 112
      %v4404 = vpop.permute.xlu0 %4403
      %4405 = vrot.lane.b32.xlu0 %v4386, 112
      %v4406 = vpop.permute.xlu0 %4405
      %4407 = vrot.lane.b32.xlu0 %v4387, 112
      %v4408 = vpop.permute.xlu0 %4407
      %4409 = vrot.lane.b32.xlu0 %v4388, 112
      %v4410 = vpop.permute.xlu0 %4409
      %4411 = vrot.lane.b32.xlu0 %v4389, 112
      %v4412 = vpop.permute.xlu0 %4411
      %4413 = vrot.lane.b32.xlu0 %v4390, 112
      %v4414 = vpop.permute.xlu0 %4413
      %vm4423 = vcmask 978816
      %4424 = vst.msk [vmem:[#allocation5] sm:$0xf] %vm4423, %v4400
      %4425 = vst.msk [vmem:[#allocation5 + $0xc] sm:$0xf] %vm4423, %v4402
      %4426 = vst.msk [vmem:[#allocation5 + $0x18] sm:$0xf] %vm4423, %v4404
      %4427 = vst.msk [vmem:[#allocation5 + $0x24] sm:$0xf] %vm4423, %v4406
      %4428 = vst.msk [vmem:[#allocation5 + $0x30] sm:$0xf] %vm4423, %v4408
      %4429 = vst.msk [vmem:[#allocation5 + $0x3c] sm:$0xf] %vm4423, %v4410
      %4430 = vst.msk [vmem:[#allocation5 + $0x48] sm:$0xf] %vm4423, %v4412
      %4431 = vst.msk [vmem:[#allocation5 + $0x54] sm:$0xf] %vm4423, %v4414
      %s4432 = scalar_lea.vmem %s3459, 3 [#allocation3]
      %v4433 = vld [vmem:[%s4432] ss:$2 sm:$0xff]
      %s4434 = scalar_lea.vmem %s3459, 51 [#allocation3]
      %v4435 = vld [vmem:[%s4434] ss:$2 sm:$0xff]
      %s4436 = scalar_lea.vmem %s3459, 99 [#allocation3]
      %v4437 = vld [vmem:[%s4436] ss:$2 sm:$0xff]
      %s4438 = scalar_lea.vmem %s3459, 147 [#allocation3]
      %v4439 = vld [vmem:[%s4438] ss:$2 sm:$0xff]
      %s4440 = scalar_lea.vmem %s3459, 195 [#allocation3]
      %v4441 = vld [vmem:[%s4440] ss:$2 sm:$0xff]
      %s4442 = scalar_lea.vmem %s3459, 243 [#allocation3]
      %v4443 = vld [vmem:[%s4442] ss:$2 sm:$0xff]
      %s4444 = scalar_lea.vmem %s3459, 291 [#allocation3]
      %v4445 = vld [vmem:[%s4444] ss:$2 sm:$0xff]
      %s4446 = scalar_lea.vmem %s3459, 339 [#allocation3]
      %v4447 = vld [vmem:[%s4446] ss:$2 sm:$0xff]
      %v4448 = vpack.c.bf16 %v4433, %v4433
      %v4449 = vpack.c.bf16 %v4435, %v4435
      %v4450 = vpack.c.bf16 %v4437, %v4437
      %v4451 = vpack.c.bf16 %v4439, %v4439
      %v4452 = vpack.c.bf16 %v4441, %v4441
      %v4453 = vpack.c.bf16 %v4443, %v4443
      %v4454 = vpack.c.bf16 %v4445, %v4445
      %v4455 = vpack.c.bf16 %v4447, %v4447
      %4464 = vrot.lane.b32.xlu0 %v4448, 120
      %v4465 = vpop.permute.xlu0 %4464
      %4466 = vrot.lane.b32.xlu0 %v4449, 120
      %v4467 = vpop.permute.xlu0 %4466
      %4468 = vrot.lane.b32.xlu0 %v4450, 120
      %v4469 = vpop.permute.xlu0 %4468
      %4470 = vrot.lane.b32.xlu0 %v4451, 120
      %v4471 = vpop.permute.xlu0 %4470
      %4472 = vrot.lane.b32.xlu0 %v4452, 120
      %v4473 = vpop.permute.xlu0 %4472
      %4474 = vrot.lane.b32.xlu0 %v4453, 120
      %v4475 = vpop.permute.xlu0 %4474
      %4476 = vrot.lane.b32.xlu0 %v4454, 120
      %v4477 = vpop.permute.xlu0 %4476
      %4478 = vrot.lane.b32.xlu0 %v4455, 120
      %v4479 = vpop.permute.xlu0 %4478
      %vm4488 = vcmask 1044416
      %4489 = vst.msk [vmem:[#allocation5] sm:$0xf] %vm4488, %v4465
      %4490 = vst.msk [vmem:[#allocation5 + $0xc] sm:$0xf] %vm4488, %v4467
      %4491 = vst.msk [vmem:[#allocation5 + $0x18] sm:$0xf] %vm4488, %v4469
      %4492 = vst.msk [vmem:[#allocation5 + $0x24] sm:$0xf] %vm4488, %v4471
      %4493 = vst.msk [vmem:[#allocation5 + $0x30] sm:$0xf] %vm4488, %v4473
      %4494 = vst.msk [vmem:[#allocation5 + $0x3c] sm:$0xf] %vm4488, %v4475
      %4495 = vst.msk [vmem:[#allocation5 + $0x48] sm:$0xf] %vm4488, %v4477
      %4496 = vst.msk [vmem:[#allocation5 + $0x54] sm:$0xf] %vm4488, %v4479
      %s4497 = scalar_lea.vmem %s3459, 4 [#allocation3]
      %v4498 = vld [vmem:[%s4497] ss:$2 sm:$0xff]
      %s4499 = scalar_lea.vmem %s3459, 52 [#allocation3]
      %v4500 = vld [vmem:[%s4499] ss:$2 sm:$0xff]
      %s4501 = scalar_lea.vmem %s3459, 100 [#allocation3]
      %v4502 = vld [vmem:[%s4501] ss:$2 sm:$0xff]
      %s4503 = scalar_lea.vmem %s3459, 148 [#allocation3]
      %v4504 = vld [vmem:[%s4503] ss:$2 sm:$0xff]
      %s4505 = scalar_lea.vmem %s3459, 196 [#allocation3]
      %v4506 = vld [vmem:[%s4505] ss:$2 sm:$0xff]
      %s4507 = scalar_lea.vmem %s3459, 244 [#allocation3]
      %v4508 = vld [vmem:[%s4507] ss:$2 sm:$0xff]
      %s4509 = scalar_lea.vmem %s3459, 292 [#allocation3]
      %v4510 = vld [vmem:[%s4509] ss:$2 sm:$0xff]
      %s4511 = scalar_lea.vmem %s3459, 340 [#allocation3]
      %v4512 = vld [vmem:[%s4511] ss:$2 sm:$0xff]
      %v4513 = vpack.c.bf16 %v4498, %v4498
      %v4514 = vpack.c.bf16 %v4500, %v4500
      %v4515 = vpack.c.bf16 %v4502, %v4502
      %v4516 = vpack.c.bf16 %v4504, %v4504
      %v4517 = vpack.c.bf16 %v4506, %v4506
      %v4518 = vpack.c.bf16 %v4508, %v4508
      %v4519 = vpack.c.bf16 %v4510, %v4510
      %v4520 = vpack.c.bf16 %v4512, %v4512
      %4521 = vst.msk [vmem:[#allocation5 + $0x4] sm:$0xf] %vm3367, %v4513
      %4522 = vst.msk [vmem:[#allocation5 + $0x10] sm:$0xf] %vm3367, %v4514
      %4523 = vst.msk [vmem:[#allocation5 + $0x1c] sm:$0xf] %vm3367, %v4515
      %4524 = vst.msk [vmem:[#allocation5 + $0x28] sm:$0xf] %vm3367, %v4516
      %4525 = vst.msk [vmem:[#allocation5 + $0x34] sm:$0xf] %vm3367, %v4517
      %4526 = vst.msk [vmem:[#allocation5 + $0x40] sm:$0xf] %vm3367, %v4518
      %4527 = vst.msk [vmem:[#allocation5 + $0x4c] sm:$0xf] %vm3367, %v4519
      %4528 = vst.msk [vmem:[#allocation5 + $0x58] sm:$0xf] %vm3367, %v4520
      %s4529 = scalar_lea.vmem %s3459, 5 [#allocation3]
      %v4530 = vld [vmem:[%s4529] ss:$2 sm:$0xff]
      %s4531 = scalar_lea.vmem %s3459, 53 [#allocation3]
      %v4532 = vld [vmem:[%s4531] ss:$2 sm:$0xff]
      %s4533 = scalar_lea.vmem %s3459, 101 [#allocation3]
      %v4534 = vld [vmem:[%s4533] ss:$2 sm:$0xff]
      %s4535 = scalar_lea.vmem %s3459, 149 [#allocation3]
      %v4536 = vld [vmem:[%s4535] ss:$2 sm:$0xff]
      %s4537 = scalar_lea.vmem %s3459, 197 [#allocation3]
      %v4538 = vld [vmem:[%s4537] ss:$2 sm:$0xff]
      %s4539 = scalar_lea.vmem %s3459, 245 [#allocation3]
      %v4540 = vld [vmem:[%s4539] ss:$2 sm:$0xff]
      %s4541 = scalar_lea.vmem %s3459, 293 [#allocation3]
      %v4542 = vld [vmem:[%s4541] ss:$2 sm:$0xff]
      %s4543 = scalar_lea.vmem %s3459, 341 [#allocation3]
      %v4544 = vld [vmem:[%s4543] ss:$2 sm:$0xff]
      %v4545 = vpack.c.bf16 %v4530, %v4530
      %v4546 = vpack.c.bf16 %v4532, %v4532
      %v4547 = vpack.c.bf16 %v4534, %v4534
      %v4548 = vpack.c.bf16 %v4536, %v4536
      %v4549 = vpack.c.bf16 %v4538, %v4538
      %v4550 = vpack.c.bf16 %v4540, %v4540
      %v4551 = vpack.c.bf16 %v4542, %v4542
      %v4552 = vpack.c.bf16 %v4544, %v4544
      %4561 = vrot.lane.b32.xlu0 %v4545, 8
      %v4562 = vpop.permute.xlu0 %4561
      %4563 = vrot.lane.b32.xlu0 %v4546, 8
      %v4564 = vpop.permute.xlu0 %4563
      %4565 = vrot.lane.b32.xlu0 %v4547, 8
      %v4566 = vpop.permute.xlu0 %4565
      %4567 = vrot.lane.b32.xlu0 %v4548, 8
      %v4568 = vpop.permute.xlu0 %4567
      %4569 = vrot.lane.b32.xlu0 %v4549, 8
      %v4570 = vpop.permute.xlu0 %4569
      %4571 = vrot.lane.b32.xlu0 %v4550, 8
      %v4572 = vpop.permute.xlu0 %4571
      %4573 = vrot.lane.b32.xlu0 %v4551, 8
      %v4574 = vpop.permute.xlu0 %4573
      %4575 = vrot.lane.b32.xlu0 %v4552, 8
      %v4576 = vpop.permute.xlu0 %4575
      %4585 = vst.msk [vmem:[#allocation5 + $0x4] sm:$0xf] %vm3579, %v4562
      %4586 = vst.msk [vmem:[#allocation5 + $0x10] sm:$0xf] %vm3579, %v4564
      %4587 = vst.msk [vmem:[#allocation5 + $0x1c] sm:$0xf] %vm3579, %v4566
      %4588 = vst.msk [vmem:[#allocation5 + $0x28] sm:$0xf] %vm3579, %v4568
      %4589 = vst.msk [vmem:[#allocation5 + $0x34] sm:$0xf] %vm3579, %v4570
      %4590 = vst.msk [vmem:[#allocation5 + $0x40] sm:$0xf] %vm3579, %v4572
      %4591 = vst.msk [vmem:[#allocation5 + $0x4c] sm:$0xf] %vm3579, %v4574
      %4592 = vst.msk [vmem:[#allocation5 + $0x58] sm:$0xf] %vm3579, %v4576
      %s4593 = scalar_lea.vmem [#allocation3], 72
      %v4594 = vld [vmem:[%s4593] ss:$2 sm:$0xff]
      %s4595 = scalar_lea.vmem %s4593, 48 [#allocation3]
      %v4596 = vld [vmem:[%s4595] ss:$2 sm:$0xff]
      %s4597 = scalar_lea.vmem %s4593, 96 [#allocation3]
      %v4598 = vld [vmem:[%s4597] ss:$2 sm:$0xff]
      %s4599 = scalar_lea.vmem %s4593, 144 [#allocation3]
      %v4600 = vld [vmem:[%s4599] ss:$2 sm:$0xff]
      %s4601 = scalar_lea.vmem %s4593, 192 [#allocation3]
      %v4602 = vld [vmem:[%s4601] ss:$2 sm:$0xff]
      %s4603 = scalar_lea.vmem %s4593, 240 [#allocation3]
      %v4604 = vld [vmem:[%s4603] ss:$2 sm:$0xff]
      %s4605 = scalar_lea.vmem %s4593, 288 [#allocation3]
      %v4606 = vld [vmem:[%s4605] ss:$2 sm:$0xff]
      %s4607 = scalar_lea.vmem %s4593, 336 [#allocation3]
      %v4608 = vld [vmem:[%s4607] ss:$2 sm:$0xff]
      %v4609 = vpack.c.bf16 %v4594, %v4594
      %v4610 = vpack.c.bf16 %v4596, %v4596
      %v4611 = vpack.c.bf16 %v4598, %v4598
      %v4612 = vpack.c.bf16 %v4600, %v4600
      %v4613 = vpack.c.bf16 %v4602, %v4602
      %v4614 = vpack.c.bf16 %v4604, %v4604
      %v4615 = vpack.c.bf16 %v4606, %v4606
      %v4616 = vpack.c.bf16 %v4608, %v4608
      %4625 = vrot.lane.b32.xlu0 %v4609, 16
      %v4626 = vpop.permute.xlu0 %4625
      %4627 = vrot.lane.b32.xlu0 %v4610, 16
      %v4628 = vpop.permute.xlu0 %4627
      %4629 = vrot.lane.b32.xlu0 %v4611, 16
      %v4630 = vpop.permute.xlu0 %4629
      %4631 = vrot.lane.b32.xlu0 %v4612, 16
      %v4632 = vpop.permute.xlu0 %4631
      %4633 = vrot.lane.b32.xlu0 %v4613, 16
      %v4634 = vpop.permute.xlu0 %4633
      %4635 = vrot.lane.b32.xlu0 %v4614, 16
      %v4636 = vpop.permute.xlu0 %4635
      %4637 = vrot.lane.b32.xlu0 %v4615, 16
      %v4638 = vpop.permute.xlu0 %4637
      %4639 = vrot.lane.b32.xlu0 %v4616, 16
      %v4640 = vpop.permute.xlu0 %4639
      %4649 = vst.msk [vmem:[#allocation5 + $0x4] sm:$0xf] %vm3644, %v4626
      %4650 = vst.msk [vmem:[#allocation5 + $0x10] sm:$0xf] %vm3644, %v4628
      %4651 = vst.msk [vmem:[#allocation5 + $0x1c] sm:$0xf] %vm3644, %v4630
      %4652 = vst.msk [vmem:[#allocation5 + $0x28] sm:$0xf] %vm3644, %v4632
      %4653 = vst.msk [vmem:[#allocation5 + $0x34] sm:$0xf] %vm3644, %v4634
      %4654 = vst.msk [vmem:[#allocation5 + $0x40] sm:$0xf] %vm3644, %v4636
      %4655 = vst.msk [vmem:[#allocation5 + $0x4c] sm:$0xf] %vm3644, %v4638
      %4656 = vst.msk [vmem:[#allocation5 + $0x58] sm:$0xf] %vm3644, %v4640
      %s4657 = scalar_lea.vmem %s4593, 1 [#allocation3]
      %v4658 = vld [vmem:[%s4657] ss:$2 sm:$0xff]
      %s4659 = scalar_lea.vmem %s4593, 49 [#allocation3]
      %v4660 = vld [vmem:[%s4659] ss:$2 sm:$0xff]
      %s4661 = scalar_lea.vmem %s4593, 97 [#allocation3]
      %v4662 = vld [vmem:[%s4661] ss:$2 sm:$0xff]
      %s4663 = scalar_lea.vmem %s4593, 145 [#allocation3]
      %v4664 = vld [vmem:[%s4663] ss:$2 sm:$0xff]
      %s4665 = scalar_lea.vmem %s4593, 193 [#allocation3]
      %v4666 = vld [vmem:[%s4665] ss:$2 sm:$0xff]
      %s4667 = scalar_lea.vmem %s4593, 241 [#allocation3]
      %v4668 = vld [vmem:[%s4667] ss:$2 sm:$0xff]
      %s4669 = scalar_lea.vmem %s4593, 289 [#allocation3]
      %v4670 = vld [vmem:[%s4669] ss:$2 sm:$0xff]
      %s4671 = scalar_lea.vmem %s4593, 337 [#allocation3]
      %v4672 = vld [vmem:[%s4671] ss:$2 sm:$0xff]
      %v4673 = vpack.c.bf16 %v4658, %v4658
      %v4674 = vpack.c.bf16 %v4660, %v4660
      %v4675 = vpack.c.bf16 %v4662, %v4662
      %v4676 = vpack.c.bf16 %v4664, %v4664
      %v4677 = vpack.c.bf16 %v4666, %v4666
      %v4678 = vpack.c.bf16 %v4668, %v4668
      %v4679 = vpack.c.bf16 %v4670, %v4670
      %v4680 = vpack.c.bf16 %v4672, %v4672
      %4689 = vrot.lane.b32.xlu0 %v4673, 24
      %v4690 = vpop.permute.xlu0 %4689
      %4691 = vrot.lane.b32.xlu0 %v4674, 24
      %v4692 = vpop.permute.xlu0 %4691
      %4693 = vrot.lane.b32.xlu0 %v4675, 24
      %v4694 = vpop.permute.xlu0 %4693
      %4695 = vrot.lane.b32.xlu0 %v4676, 24
      %v4696 = vpop.permute.xlu0 %4695
      %4697 = vrot.lane.b32.xlu0 %v4677, 24
      %v4698 = vpop.permute.xlu0 %4697
      %4699 = vrot.lane.b32.xlu0 %v4678, 24
      %v4700 = vpop.permute.xlu0 %4699
      %4701 = vrot.lane.b32.xlu0 %v4679, 24
      %v4702 = vpop.permute.xlu0 %4701
      %4703 = vrot.lane.b32.xlu0 %v4680, 24
      %v4704 = vpop.permute.xlu0 %4703
      %4713 = vst.msk [vmem:[#allocation5 + $0x4] sm:$0xf] %vm3709, %v4690
      %4714 = vst.msk [vmem:[#allocation5 + $0x10] sm:$0xf] %vm3709, %v4692
      %4715 = vst.msk [vmem:[#allocation5 + $0x1c] sm:$0xf] %vm3709, %v4694
      %4716 = vst.msk [vmem:[#allocation5 + $0x28] sm:$0xf] %vm3709, %v4696
      %4717 = vst.msk [vmem:[#allocation5 + $0x34] sm:$0xf] %vm3709, %v4698
      %4718 = vst.msk [vmem:[#allocation5 + $0x40] sm:$0xf] %vm3709, %v4700
      %4719 = vst.msk [vmem:[#allocation5 + $0x4c] sm:$0xf] %vm3709, %v4702
      %4720 = vst.msk [vmem:[#allocation5 + $0x58] sm:$0xf] %vm3709, %v4704
      %s4721 = scalar_lea.vmem %s4593, 2 [#allocation3]
      %v4722 = vld [vmem:[%s4721] ss:$2 sm:$0xff]
      %s4723 = scalar_lea.vmem %s4593, 50 [#allocation3]
      %v4724 = vld [vmem:[%s4723] ss:$2 sm:$0xff]
      %s4725 = scalar_lea.vmem %s4593, 98 [#allocation3]
      %v4726 = vld [vmem:[%s4725] ss:$2 sm:$0xff]
      %s4727 = scalar_lea.vmem %s4593, 146 [#allocation3]
      %v4728 = vld [vmem:[%s4727] ss:$2 sm:$0xff]
      %s4729 = scalar_lea.vmem %s4593, 194 [#allocation3]
      %v4730 = vld [vmem:[%s4729] ss:$2 sm:$0xff]
      %s4731 = scalar_lea.vmem %s4593, 242 [#allocation3]
      %v4732 = vld [vmem:[%s4731] ss:$2 sm:$0xff]
      %s4733 = scalar_lea.vmem %s4593, 290 [#allocation3]
      %v4734 = vld [vmem:[%s4733] ss:$2 sm:$0xff]
      %s4735 = scalar_lea.vmem %s4593, 338 [#allocation3]
      %v4736 = vld [vmem:[%s4735] ss:$2 sm:$0xff]
      %v4737 = vpack.c.bf16 %v4722, %v4722
      %v4738 = vpack.c.bf16 %v4724, %v4724
      %v4739 = vpack.c.bf16 %v4726, %v4726
      %v4740 = vpack.c.bf16 %v4728, %v4728
      %v4741 = vpack.c.bf16 %v4730, %v4730
      %v4742 = vpack.c.bf16 %v4732, %v4732
      %v4743 = vpack.c.bf16 %v4734, %v4734
      %v4744 = vpack.c.bf16 %v4736, %v4736
      %4753 = vrot.lane.b32.xlu0 %v4737, 32
      %v4754 = vpop.permute.xlu0 %4753
      %4755 = vrot.lane.b32.xlu0 %v4738, 32
      %v4756 = vpop.permute.xlu0 %4755
      %4757 = vrot.lane.b32.xlu0 %v4739, 32
      %v4758 = vpop.permute.xlu0 %4757
      %4759 = vrot.lane.b32.xlu0 %v4740, 32
      %v4760 = vpop.permute.xlu0 %4759
      %4761 = vrot.lane.b32.xlu0 %v4741, 32
      %v4762 = vpop.permute.xlu0 %4761
      %4763 = vrot.lane.b32.xlu0 %v4742, 32
      %v4764 = vpop.permute.xlu0 %4763
      %4765 = vrot.lane.b32.xlu0 %v4743, 32
      %v4766 = vpop.permute.xlu0 %4765
      %4767 = vrot.lane.b32.xlu0 %v4744, 32
      %v4768 = vpop.permute.xlu0 %4767
      %4777 = vst.msk [vmem:[#allocation5 + $0x4] sm:$0xf] %vm3774, %v4754
      %4778 = vst.msk [vmem:[#allocation5 + $0x10] sm:$0xf] %vm3774, %v4756
      %4779 = vst.msk [vmem:[#allocation5 + $0x1c] sm:$0xf] %vm3774, %v4758
      %4780 = vst.msk [vmem:[#allocation5 + $0x28] sm:$0xf] %vm3774, %v4760
      %4781 = vst.msk [vmem:[#allocation5 + $0x34] sm:$0xf] %vm3774, %v4762
      %4782 = vst.msk [vmem:[#allocation5 + $0x40] sm:$0xf] %vm3774, %v4764
      %4783 = vst.msk [vmem:[#allocation5 + $0x4c] sm:$0xf] %vm3774, %v4766
      %4784 = vst.msk [vmem:[#allocation5 + $0x58] sm:$0xf] %vm3774, %v4768
      %s4785 = scalar_lea.vmem %s4593, 3 [#allocation3]
      %v4786 = vld [vmem:[%s4785] ss:$2 sm:$0xff]
      %s4787 = scalar_lea.vmem %s4593, 51 [#allocation3]
      %v4788 = vld [vmem:[%s4787] ss:$2 sm:$0xff]
      %s4789 = scalar_lea.vmem %s4593, 99 [#allocation3]
      %v4790 = vld [vmem:[%s4789] ss:$2 sm:$0xff]
      %s4791 = scalar_lea.vmem %s4593, 147 [#allocation3]
      %v4792 = vld [vmem:[%s4791] ss:$2 sm:$0xff]
      %s4793 = scalar_lea.vmem %s4593, 195 [#allocation3]
      %v4794 = vld [vmem:[%s4793] ss:$2 sm:$0xff]
      %s4795 = scalar_lea.vmem %s4593, 243 [#allocation3]
      %v4796 = vld [vmem:[%s4795] ss:$2 sm:$0xff]
      %s4797 = scalar_lea.vmem %s4593, 291 [#allocation3]
      %v4798 = vld [vmem:[%s4797] ss:$2 sm:$0xff]
      %s4799 = scalar_lea.vmem %s4593, 339 [#allocation3]
      %v4800 = vld [vmem:[%s4799] ss:$2 sm:$0xff]
      %v4801 = vpack.c.bf16 %v4786, %v4786
      %v4802 = vpack.c.bf16 %v4788, %v4788
      %v4803 = vpack.c.bf16 %v4790, %v4790
      %v4804 = vpack.c.bf16 %v4792, %v4792
      %v4805 = vpack.c.bf16 %v4794, %v4794
      %v4806 = vpack.c.bf16 %v4796, %v4796
      %v4807 = vpack.c.bf16 %v4798, %v4798
      %v4808 = vpack.c.bf16 %v4800, %v4800
      %4817 = vrot.lane.b32.xlu0 %v4801, 40
      %v4818 = vpop.permute.xlu0 %4817
      %4819 = vrot.lane.b32.xlu0 %v4802, 40
      %v4820 = vpop.permute.xlu0 %4819
      %4821 = vrot.lane.b32.xlu0 %v4803, 40
      %v4822 = vpop.permute.xlu0 %4821
      %4823 = vrot.lane.b32.xlu0 %v4804, 40
      %v4824 = vpop.permute.xlu0 %4823
      %4825 = vrot.lane.b32.xlu0 %v4805, 40
      %v4826 = vpop.permute.xlu0 %4825
      %4827 = vrot.lane.b32.xlu0 %v4806, 40
      %v4828 = vpop.permute.xlu0 %4827
      %4829 = vrot.lane.b32.xlu0 %v4807, 40
      %v4830 = vpop.permute.xlu0 %4829
      %4831 = vrot.lane.b32.xlu0 %v4808, 40
      %v4832 = vpop.permute.xlu0 %4831
      %4841 = vst.msk [vmem:[#allocation5 + $0x4] sm:$0xf] %vm3839, %v4818
      %4842 = vst.msk [vmem:[#allocation5 + $0x10] sm:$0xf] %vm3839, %v4820
      %4843 = vst.msk [vmem:[#allocation5 + $0x1c] sm:$0xf] %vm3839, %v4822
      %4844 = vst.msk [vmem:[#allocation5 + $0x28] sm:$0xf] %vm3839, %v4824
      %4845 = vst.msk [vmem:[#allocation5 + $0x34] sm:$0xf] %vm3839, %v4826
      %4846 = vst.msk [vmem:[#allocation5 + $0x40] sm:$0xf] %vm3839, %v4828
      %4847 = vst.msk [vmem:[#allocation5 + $0x4c] sm:$0xf] %vm3839, %v4830
      %4848 = vst.msk [vmem:[#allocation5 + $0x58] sm:$0xf] %vm3839, %v4832
      %s4849 = scalar_lea.vmem %s4593, 4 [#allocation3]
      %v4850 = vld [vmem:[%s4849] ss:$2 sm:$0xff]
      %s4851 = scalar_lea.vmem %s4593, 52 [#allocation3]
      %v4852 = vld [vmem:[%s4851] ss:$2 sm:$0xff]
      %s4853 = scalar_lea.vmem %s4593, 100 [#allocation3]
      %v4854 = vld [vmem:[%s4853] ss:$2 sm:$0xff]
      %s4855 = scalar_lea.vmem %s4593, 148 [#allocation3]
      %v4856 = vld [vmem:[%s4855] ss:$2 sm:$0xff]
      %s4857 = scalar_lea.vmem %s4593, 196 [#allocation3]
      %v4858 = vld [vmem:[%s4857] ss:$2 sm:$0xff]
      %s4859 = scalar_lea.vmem %s4593, 244 [#allocation3]
      %v4860 = vld [vmem:[%s4859] ss:$2 sm:$0xff]
      %s4861 = scalar_lea.vmem %s4593, 292 [#allocation3]
      %v4862 = vld [vmem:[%s4861] ss:$2 sm:$0xff]
      %s4863 = scalar_lea.vmem %s4593, 340 [#allocation3]
      %v4864 = vld [vmem:[%s4863] ss:$2 sm:$0xff]
      %v4865 = vpack.c.bf16 %v4850, %v4850
      %v4866 = vpack.c.bf16 %v4852, %v4852
      %v4867 = vpack.c.bf16 %v4854, %v4854
      %v4868 = vpack.c.bf16 %v4856, %v4856
      %v4869 = vpack.c.bf16 %v4858, %v4858
      %v4870 = vpack.c.bf16 %v4860, %v4860
      %v4871 = vpack.c.bf16 %v4862, %v4862
      %v4872 = vpack.c.bf16 %v4864, %v4864
      %4881 = vrot.lane.b32.xlu0 %v4865, 48
      %v4882 = vpop.permute.xlu0 %4881
      %4883 = vrot.lane.b32.xlu0 %v4866, 48
      %v4884 = vpop.permute.xlu0 %4883
      %4885 = vrot.lane.b32.xlu0 %v4867, 48
      %v4886 = vpop.permute.xlu0 %4885
      %4887 = vrot.lane.b32.xlu0 %v4868, 48
      %v4888 = vpop.permute.xlu0 %4887
      %4889 = vrot.lane.b32.xlu0 %v4869, 48
      %v4890 = vpop.permute.xlu0 %4889
      %4891 = vrot.lane.b32.xlu0 %v4870, 48
      %v4892 = vpop.permute.xlu0 %4891
      %4893 = vrot.lane.b32.xlu0 %v4871, 48
      %v4894 = vpop.permute.xlu0 %4893
      %4895 = vrot.lane.b32.xlu0 %v4872, 48
      %v4896 = vpop.permute.xlu0 %4895
      %4905 = vst.msk [vmem:[#allocation5 + $0x4] sm:$0xf] %vm3904, %v4882
      %4906 = vst.msk [vmem:[#allocation5 + $0x10] sm:$0xf] %vm3904, %v4884
      %4907 = vst.msk [vmem:[#allocation5 + $0x1c] sm:$0xf] %vm3904, %v4886
      %4908 = vst.msk [vmem:[#allocation5 + $0x28] sm:$0xf] %vm3904, %v4888
      %4909 = vst.msk [vmem:[#allocation5 + $0x34] sm:$0xf] %vm3904, %v4890
      %4910 = vst.msk [vmem:[#allocation5 + $0x40] sm:$0xf] %vm3904, %v4892
      %4911 = vst.msk [vmem:[#allocation5 + $0x4c] sm:$0xf] %vm3904, %v4894
      %4912 = vst.msk [vmem:[#allocation5 + $0x58] sm:$0xf] %vm3904, %v4896
      %s4913 = scalar_lea.vmem %s4593, 5 [#allocation3]
      %v4914 = vld [vmem:[%s4913] ss:$2 sm:$0xff]
      %s4915 = scalar_lea.vmem %s4593, 53 [#allocation3]
      %v4916 = vld [vmem:[%s4915] ss:$2 sm:$0xff]
      %s4917 = scalar_lea.vmem %s4593, 101 [#allocation3]
      %v4918 = vld [vmem:[%s4917] ss:$2 sm:$0xff]
      %s4919 = scalar_lea.vmem %s4593, 149 [#allocation3]
      %v4920 = vld [vmem:[%s4919] ss:$2 sm:$0xff]
      %s4921 = scalar_lea.vmem %s4593, 197 [#allocation3]
      %v4922 = vld [vmem:[%s4921] ss:$2 sm:$0xff]
      %s4923 = scalar_lea.vmem %s4593, 245 [#allocation3]
      %v4924 = vld [vmem:[%s4923] ss:$2 sm:$0xff]
      %s4925 = scalar_lea.vmem %s4593, 293 [#allocation3]
      %v4926 = vld [vmem:[%s4925] ss:$2 sm:$0xff]
      %s4927 = scalar_lea.vmem %s4593, 341 [#allocation3]
      %v4928 = vld [vmem:[%s4927] ss:$2 sm:$0xff]
      %v4929 = vpack.c.bf16 %v4914, %v4914
      %v4930 = vpack.c.bf16 %v4916, %v4916
      %v4931 = vpack.c.bf16 %v4918, %v4918
      %v4932 = vpack.c.bf16 %v4920, %v4920
      %v4933 = vpack.c.bf16 %v4922, %v4922
      %v4934 = vpack.c.bf16 %v4924, %v4924
      %v4935 = vpack.c.bf16 %v4926, %v4926
      %v4936 = vpack.c.bf16 %v4928, %v4928
      %4945 = vrot.lane.b32.xlu0 %v4929, 56
      %v4946 = vpop.permute.xlu0 %4945
      %4947 = vrot.lane.b32.xlu0 %v4930, 56
      %v4948 = vpop.permute.xlu0 %4947
      %4949 = vrot.lane.b32.xlu0 %v4931, 56
      %v4950 = vpop.permute.xlu0 %4949
      %4951 = vrot.lane.b32.xlu0 %v4932, 56
      %v4952 = vpop.permute.xlu0 %4951
      %4953 = vrot.lane.b32.xlu0 %v4933, 56
      %v4954 = vpop.permute.xlu0 %4953
      %4955 = vrot.lane.b32.xlu0 %v4934, 56
      %v4956 = vpop.permute.xlu0 %4955
      %4957 = vrot.lane.b32.xlu0 %v4935, 56
      %v4958 = vpop.permute.xlu0 %4957
      %4959 = vrot.lane.b32.xlu0 %v4936, 56
      %v4960 = vpop.permute.xlu0 %4959
      %4969 = vst.msk [vmem:[#allocation5 + $0x4] sm:$0xf] %vm3969, %v4946
      %4970 = vst.msk [vmem:[#allocation5 + $0x10] sm:$0xf] %vm3969, %v4948
      %4971 = vst.msk [vmem:[#allocation5 + $0x1c] sm:$0xf] %vm3969, %v4950
      %4972 = vst.msk [vmem:[#allocation5 + $0x28] sm:$0xf] %vm3969, %v4952
      %4973 = vst.msk [vmem:[#allocation5 + $0x34] sm:$0xf] %vm3969, %v4954
      %4974 = vst.msk [vmem:[#allocation5 + $0x40] sm:$0xf] %vm3969, %v4956
      %4975 = vst.msk [vmem:[#allocation5 + $0x4c] sm:$0xf] %vm3969, %v4958
      %4976 = vst.msk [vmem:[#allocation5 + $0x58] sm:$0xf] %vm3969, %v4960
      %s4977 = scalar_lea.vmem [#allocation3], 96
      %v4978 = vld [vmem:[%s4977] ss:$2 sm:$0xff]
      %s4979 = scalar_lea.vmem %s4977, 48 [#allocation3]
      %v4980 = vld [vmem:[%s4979] ss:$2 sm:$0xff]
      %s4981 = scalar_lea.vmem %s4977, 96 [#allocation3]
      %v4982 = vld [vmem:[%s4981] ss:$2 sm:$0xff]
      %s4983 = scalar_lea.vmem %s4977, 144 [#allocation3]
      %v4984 = vld [vmem:[%s4983] ss:$2 sm:$0xff]
      %s4985 = scalar_lea.vmem %s4977, 192 [#allocation3]
      %v4986 = vld [vmem:[%s4985] ss:$2 sm:$0xff]
      %s4987 = scalar_lea.vmem %s4977, 240 [#allocation3]
      %v4988 = vld [vmem:[%s4987] ss:$2 sm:$0xff]
      %s4989 = scalar_lea.vmem %s4977, 288 [#allocation3]
      %v4990 = vld [vmem:[%s4989] ss:$2 sm:$0xff]
      %s4991 = scalar_lea.vmem %s4977, 336 [#allocation3]
      %v4992 = vld [vmem:[%s4991] ss:$2 sm:$0xff]
      %v4993 = vpack.c.bf16 %v4978, %v4978
      %v4994 = vpack.c.bf16 %v4980, %v4980
      %v4995 = vpack.c.bf16 %v4982, %v4982
      %v4996 = vpack.c.bf16 %v4984, %v4984
      %v4997 = vpack.c.bf16 %v4986, %v4986
      %v4998 = vpack.c.bf16 %v4988, %v4988
      %v4999 = vpack.c.bf16 %v4990, %v4990
      %v5000 = vpack.c.bf16 %v4992, %v4992
      %5009 = vrot.lane.b32.xlu0 %v4993, 64
      %v5010 = vpop.permute.xlu0 %5009
      %5011 = vrot.lane.b32.xlu0 %v4994, 64
      %v5012 = vpop.permute.xlu0 %5011
      %5013 = vrot.lane.b32.xlu0 %v4995, 64
      %v5014 = vpop.permute.xlu0 %5013
      %5015 = vrot.lane.b32.xlu0 %v4996, 64
      %v5016 = vpop.permute.xlu0 %5015
      %5017 = vrot.lane.b32.xlu0 %v4997, 64
      %v5018 = vpop.permute.xlu0 %5017
      %5019 = vrot.lane.b32.xlu0 %v4998, 64
      %v5020 = vpop.permute.xlu0 %5019
      %5021 = vrot.lane.b32.xlu0 %v4999, 64
      %v5022 = vpop.permute.xlu0 %5021
      %5023 = vrot.lane.b32.xlu0 %v5000, 64
      %v5024 = vpop.permute.xlu0 %5023
      %5033 = vst.msk [vmem:[#allocation5 + $0x4] sm:$0xf] %vm4034, %v5010
      %5034 = vst.msk [vmem:[#allocation5 + $0x10] sm:$0xf] %vm4034, %v5012
      %5035 = vst.msk [vmem:[#allocation5 + $0x1c] sm:$0xf] %vm4034, %v5014
      %5036 = vst.msk [vmem:[#allocation5 + $0x28] sm:$0xf] %vm4034, %v5016
      %5037 = vst.msk [vmem:[#allocation5 + $0x34] sm:$0xf] %vm4034, %v5018
      %5038 = vst.msk [vmem:[#allocation5 + $0x40] sm:$0xf] %vm4034, %v5020
      %5039 = vst.msk [vmem:[#allocation5 + $0x4c] sm:$0xf] %vm4034, %v5022
      %5040 = vst.msk [vmem:[#allocation5 + $0x58] sm:$0xf] %vm4034, %v5024
      %s5041 = scalar_lea.vmem %s4977, 1 [#allocation3]
      %v5042 = vld [vmem:[%s5041] ss:$2 sm:$0xff]
      %s5043 = scalar_lea.vmem %s4977, 49 [#allocation3]
      %v5044 = vld [vmem:[%s5043] ss:$2 sm:$0xff]
      %s5045 = scalar_lea.vmem %s4977, 97 [#allocation3]
      %v5046 = vld [vmem:[%s5045] ss:$2 sm:$0xff]
      %s5047 = scalar_lea.vmem %s4977, 145 [#allocation3]
      %v5048 = vld [vmem:[%s5047] ss:$2 sm:$0xff]
      %s5049 = scalar_lea.vmem %s4977, 193 [#allocation3]
      %v5050 = vld [vmem:[%s5049] ss:$2 sm:$0xff]
      %s5051 = scalar_lea.vmem %s4977, 241 [#allocation3]
      %v5052 = vld [vmem:[%s5051] ss:$2 sm:$0xff]
      %s5053 = scalar_lea.vmem %s4977, 289 [#allocation3]
      %v5054 = vld [vmem:[%s5053] ss:$2 sm:$0xff]
      %s5055 = scalar_lea.vmem %s4977, 337 [#allocation3]
      %v5056 = vld [vmem:[%s5055] ss:$2 sm:$0xff]
      %v5057 = vpack.c.bf16 %v5042, %v5042
      %v5058 = vpack.c.bf16 %v5044, %v5044
      %v5059 = vpack.c.bf16 %v5046, %v5046
      %v5060 = vpack.c.bf16 %v5048, %v5048
      %v5061 = vpack.c.bf16 %v5050, %v5050
      %v5062 = vpack.c.bf16 %v5052, %v5052
      %v5063 = vpack.c.bf16 %v5054, %v5054
      %v5064 = vpack.c.bf16 %v5056, %v5056
      %5073 = vrot.lane.b32.xlu0 %v5057, 72
      %v5074 = vpop.permute.xlu0 %5073
      %5075 = vrot.lane.b32.xlu0 %v5058, 72
      %v5076 = vpop.permute.xlu0 %5075
      %5077 = vrot.lane.b32.xlu0 %v5059, 72
      %v5078 = vpop.permute.xlu0 %5077
      %5079 = vrot.lane.b32.xlu0 %v5060, 72
      %v5080 = vpop.permute.xlu0 %5079
      %5081 = vrot.lane.b32.xlu0 %v5061, 72
      %v5082 = vpop.permute.xlu0 %5081
      %5083 = vrot.lane.b32.xlu0 %v5062, 72
      %v5084 = vpop.permute.xlu0 %5083
      %5085 = vrot.lane.b32.xlu0 %v5063, 72
      %v5086 = vpop.permute.xlu0 %5085
      %5087 = vrot.lane.b32.xlu0 %v5064, 72
      %v5088 = vpop.permute.xlu0 %5087
      %5097 = vst.msk [vmem:[#allocation5 + $0x4] sm:$0xf] %vm4099, %v5074
      %5098 = vst.msk [vmem:[#allocation5 + $0x10] sm:$0xf] %vm4099, %v5076
      %5099 = vst.msk [vmem:[#allocation5 + $0x1c] sm:$0xf] %vm4099, %v5078
      %5100 = vst.msk [vmem:[#allocation5 + $0x28] sm:$0xf] %vm4099, %v5080
      %5101 = vst.msk [vmem:[#allocation5 + $0x34] sm:$0xf] %vm4099, %v5082
      %5102 = vst.msk [vmem:[#allocation5 + $0x40] sm:$0xf] %vm4099, %v5084
      %5103 = vst.msk [vmem:[#allocation5 + $0x4c] sm:$0xf] %vm4099, %v5086
      %5104 = vst.msk [vmem:[#allocation5 + $0x58] sm:$0xf] %vm4099, %v5088
      %s5105 = scalar_lea.vmem %s4977, 2 [#allocation3]
      %v5106 = vld [vmem:[%s5105] ss:$2 sm:$0xff]
      %s5107 = scalar_lea.vmem %s4977, 50 [#allocation3]
      %v5108 = vld [vmem:[%s5107] ss:$2 sm:$0xff]
      %s5109 = scalar_lea.vmem %s4977, 98 [#allocation3]
      %v5110 = vld [vmem:[%s5109] ss:$2 sm:$0xff]
      %s5111 = scalar_lea.vmem %s4977, 146 [#allocation3]
      %v5112 = vld [vmem:[%s5111] ss:$2 sm:$0xff]
      %s5113 = scalar_lea.vmem %s4977, 194 [#allocation3]
      %v5114 = vld [vmem:[%s5113] ss:$2 sm:$0xff]
      %s5115 = scalar_lea.vmem %s4977, 242 [#allocation3]
      %v5116 = vld [vmem:[%s5115] ss:$2 sm:$0xff]
      %s5117 = scalar_lea.vmem %s4977, 290 [#allocation3]
      %v5118 = vld [vmem:[%s5117] ss:$2 sm:$0xff]
      %s5119 = scalar_lea.vmem %s4977, 338 [#allocation3]
      %v5120 = vld [vmem:[%s5119] ss:$2 sm:$0xff]
      %v5121 = vpack.c.bf16 %v5106, %v5106
      %v5122 = vpack.c.bf16 %v5108, %v5108
      %v5123 = vpack.c.bf16 %v5110, %v5110
      %v5124 = vpack.c.bf16 %v5112, %v5112
      %v5125 = vpack.c.bf16 %v5114, %v5114
      %v5126 = vpack.c.bf16 %v5116, %v5116
      %v5127 = vpack.c.bf16 %v5118, %v5118
      %v5128 = vpack.c.bf16 %v5120, %v5120
      %5137 = vrot.lane.b32.xlu0 %v5121, 80
      %v5138 = vpop.permute.xlu0 %5137
      %5139 = vrot.lane.b32.xlu0 %v5122, 80
      %v5140 = vpop.permute.xlu0 %5139
      %5141 = vrot.lane.b32.xlu0 %v5123, 80
      %v5142 = vpop.permute.xlu0 %5141
      %5143 = vrot.lane.b32.xlu0 %v5124, 80
      %v5144 = vpop.permute.xlu0 %5143
      %5145 = vrot.lane.b32.xlu0 %v5125, 80
      %v5146 = vpop.permute.xlu0 %5145
      %5147 = vrot.lane.b32.xlu0 %v5126, 80
      %v5148 = vpop.permute.xlu0 %5147
      %5149 = vrot.lane.b32.xlu0 %v5127, 80
      %v5150 = vpop.permute.xlu0 %5149
      %5151 = vrot.lane.b32.xlu0 %v5128, 80
      %v5152 = vpop.permute.xlu0 %5151
      %5161 = vst.msk [vmem:[#allocation5 + $0x4] sm:$0xf] %vm4164, %v5138
      %5162 = vst.msk [vmem:[#allocation5 + $0x10] sm:$0xf] %vm4164, %v5140
      %5163 = vst.msk [vmem:[#allocation5 + $0x1c] sm:$0xf] %vm4164, %v5142
      %5164 = vst.msk [vmem:[#allocation5 + $0x28] sm:$0xf] %vm4164, %v5144
      %5165 = vst.msk [vmem:[#allocation5 + $0x34] sm:$0xf] %vm4164, %v5146
      %5166 = vst.msk [vmem:[#allocation5 + $0x40] sm:$0xf] %vm4164, %v5148
      %5167 = vst.msk [vmem:[#allocation5 + $0x4c] sm:$0xf] %vm4164, %v5150
      %5168 = vst.msk [vmem:[#allocation5 + $0x58] sm:$0xf] %vm4164, %v5152
      %s5169 = scalar_lea.vmem %s4977, 3 [#allocation3]
      %v5170 = vld [vmem:[%s5169] ss:$2 sm:$0xff]
      %s5171 = scalar_lea.vmem %s4977, 51 [#allocation3]
      %v5172 = vld [vmem:[%s5171] ss:$2 sm:$0xff]
      %s5173 = scalar_lea.vmem %s4977, 99 [#allocation3]
      %v5174 = vld [vmem:[%s5173] ss:$2 sm:$0xff]
      %s5175 = scalar_lea.vmem %s4977, 147 [#allocation3]
      %v5176 = vld [vmem:[%s5175] ss:$2 sm:$0xff]
      %s5177 = scalar_lea.vmem %s4977, 195 [#allocation3]
      %v5178 = vld [vmem:[%s5177] ss:$2 sm:$0xff]
      %s5179 = scalar_lea.vmem %s4977, 243 [#allocation3]
      %v5180 = vld [vmem:[%s5179] ss:$2 sm:$0xff]
      %s5181 = scalar_lea.vmem %s4977, 291 [#allocation3]
      %v5182 = vld [vmem:[%s5181] ss:$2 sm:$0xff]
      %s5183 = scalar_lea.vmem %s4977, 339 [#allocation3]
      %v5184 = vld [vmem:[%s5183] ss:$2 sm:$0xff]
      %v5185 = vpack.c.bf16 %v5170, %v5170
      %v5186 = vpack.c.bf16 %v5172, %v5172
      %v5187 = vpack.c.bf16 %v5174, %v5174
      %v5188 = vpack.c.bf16 %v5176, %v5176
      %v5189 = vpack.c.bf16 %v5178, %v5178
      %v5190 = vpack.c.bf16 %v5180, %v5180
      %v5191 = vpack.c.bf16 %v5182, %v5182
      %v5192 = vpack.c.bf16 %v5184, %v5184
      %5201 = vrot.lane.b32.xlu0 %v5185, 88
      %v5202 = vpop.permute.xlu0 %5201
      %5203 = vrot.lane.b32.xlu0 %v5186, 88
      %v5204 = vpop.permute.xlu0 %5203
      %5205 = vrot.lane.b32.xlu0 %v5187, 88
      %v5206 = vpop.permute.xlu0 %5205
      %5207 = vrot.lane.b32.xlu0 %v5188, 88
      %v5208 = vpop.permute.xlu0 %5207
      %5209 = vrot.lane.b32.xlu0 %v5189, 88
      %v5210 = vpop.permute.xlu0 %5209
      %5211 = vrot.lane.b32.xlu0 %v5190, 88
      %v5212 = vpop.permute.xlu0 %5211
      %5213 = vrot.lane.b32.xlu0 %v5191, 88
      %v5214 = vpop.permute.xlu0 %5213
      %5215 = vrot.lane.b32.xlu0 %v5192, 88
      %v5216 = vpop.permute.xlu0 %5215
      %5225 = vst.msk [vmem:[#allocation5 + $0x4] sm:$0xf] %vm4229, %v5202
      %5226 = vst.msk [vmem:[#allocation5 + $0x10] sm:$0xf] %vm4229, %v5204
      %5227 = vst.msk [vmem:[#allocation5 + $0x1c] sm:$0xf] %vm4229, %v5206
      %5228 = vst.msk [vmem:[#allocation5 + $0x28] sm:$0xf] %vm4229, %v5208
      %5229 = vst.msk [vmem:[#allocation5 + $0x34] sm:$0xf] %vm4229, %v5210
      %5230 = vst.msk [vmem:[#allocation5 + $0x40] sm:$0xf] %vm4229, %v5212
      %5231 = vst.msk [vmem:[#allocation5 + $0x4c] sm:$0xf] %vm4229, %v5214
      %5232 = vst.msk [vmem:[#allocation5 + $0x58] sm:$0xf] %vm4229, %v5216
      %s5233 = scalar_lea.vmem %s4977, 4 [#allocation3]
      %v5234 = vld [vmem:[%s5233] ss:$2 sm:$0xff]
      %s5235 = scalar_lea.vmem %s4977, 52 [#allocation3]
      %v5236 = vld [vmem:[%s5235] ss:$2 sm:$0xff]
      %s5237 = scalar_lea.vmem %s4977, 100 [#allocation3]
      %v5238 = vld [vmem:[%s5237] ss:$2 sm:$0xff]
      %s5239 = scalar_lea.vmem %s4977, 148 [#allocation3]
      %v5240 = vld [vmem:[%s5239] ss:$2 sm:$0xff]
      %s5241 = scalar_lea.vmem %s4977, 196 [#allocation3]
      %v5242 = vld [vmem:[%s5241] ss:$2 sm:$0xff]
      %s5243 = scalar_lea.vmem %s4977, 244 [#allocation3]
      %v5244 = vld [vmem:[%s5243] ss:$2 sm:$0xff]
      %s5245 = scalar_lea.vmem %s4977, 292 [#allocation3]
      %v5246 = vld [vmem:[%s5245] ss:$2 sm:$0xff]
      %s5247 = scalar_lea.vmem %s4977, 340 [#allocation3]
      %v5248 = vld [vmem:[%s5247] ss:$2 sm:$0xff]
      %v5249 = vpack.c.bf16 %v5234, %v5234
      %v5250 = vpack.c.bf16 %v5236, %v5236
      %v5251 = vpack.c.bf16 %v5238, %v5238
      %v5252 = vpack.c.bf16 %v5240, %v5240
      %v5253 = vpack.c.bf16 %v5242, %v5242
      %v5254 = vpack.c.bf16 %v5244, %v5244
      %v5255 = vpack.c.bf16 %v5246, %v5246
      %v5256 = vpack.c.bf16 %v5248, %v5248
      %5265 = vrot.lane.b32.xlu0 %v5249, 96
      %v5266 = vpop.permute.xlu0 %5265
      %5267 = vrot.lane.b32.xlu0 %v5250, 96
      %v5268 = vpop.permute.xlu0 %5267
      %5269 = vrot.lane.b32.xlu0 %v5251, 96
      %v5270 = vpop.permute.xlu0 %5269
      %5271 = vrot.lane.b32.xlu0 %v5252, 96
      %v5272 = vpop.permute.xlu0 %5271
      %5273 = vrot.lane.b32.xlu0 %v5253, 96
      %v5274 = vpop.permute.xlu0 %5273
      %5275 = vrot.lane.b32.xlu0 %v5254, 96
      %v5276 = vpop.permute.xlu0 %5275
      %5277 = vrot.lane.b32.xlu0 %v5255, 96
      %v5278 = vpop.permute.xlu0 %5277
      %5279 = vrot.lane.b32.xlu0 %v5256, 96
      %v5280 = vpop.permute.xlu0 %5279
      %5289 = vst.msk [vmem:[#allocation5 + $0x4] sm:$0xf] %vm4293, %v5266
      %5290 = vst.msk [vmem:[#allocation5 + $0x10] sm:$0xf] %vm4293, %v5268
      %5291 = vst.msk [vmem:[#allocation5 + $0x1c] sm:$0xf] %vm4293, %v5270
      %5292 = vst.msk [vmem:[#allocation5 + $0x28] sm:$0xf] %vm4293, %v5272
      %5293 = vst.msk [vmem:[#allocation5 + $0x34] sm:$0xf] %vm4293, %v5274
      %5294 = vst.msk [vmem:[#allocation5 + $0x40] sm:$0xf] %vm4293, %v5276
      %5295 = vst.msk [vmem:[#allocation5 + $0x4c] sm:$0xf] %vm4293, %v5278
      %5296 = vst.msk [vmem:[#allocation5 + $0x58] sm:$0xf] %vm4293, %v5280
      %s5297 = scalar_lea.vmem %s4977, 5 [#allocation3]
      %v5298 = vld [vmem:[%s5297] ss:$2 sm:$0xff]
      %s5299 = scalar_lea.vmem %s4977, 53 [#allocation3]
      %v5300 = vld [vmem:[%s5299] ss:$2 sm:$0xff]
      %s5301 = scalar_lea.vmem %s4977, 101 [#allocation3]
      %v5302 = vld [vmem:[%s5301] ss:$2 sm:$0xff]
      %s5303 = scalar_lea.vmem %s4977, 149 [#allocation3]
      %v5304 = vld [vmem:[%s5303] ss:$2 sm:$0xff]
      %s5305 = scalar_lea.vmem %s4977, 197 [#allocation3]
      %v5306 = vld [vmem:[%s5305] ss:$2 sm:$0xff]
      %s5307 = scalar_lea.vmem %s4977, 245 [#allocation3]
      %v5308 = vld [vmem:[%s5307] ss:$2 sm:$0xff]
      %s5309 = scalar_lea.vmem %s4977, 293 [#allocation3]
      %v5310 = vld [vmem:[%s5309] ss:$2 sm:$0xff]
      %s5311 = scalar_lea.vmem %s4977, 341 [#allocation3]
      %v5312 = vld [vmem:[%s5311] ss:$2 sm:$0xff]
      %v5313 = vpack.c.bf16 %v5298, %v5298
      %v5314 = vpack.c.bf16 %v5300, %v5300
      %v5315 = vpack.c.bf16 %v5302, %v5302
      %v5316 = vpack.c.bf16 %v5304, %v5304
      %v5317 = vpack.c.bf16 %v5306, %v5306
      %v5318 = vpack.c.bf16 %v5308, %v5308
      %v5319 = vpack.c.bf16 %v5310, %v5310
      %v5320 = vpack.c.bf16 %v5312, %v5312
      %5329 = vrot.lane.b32.xlu0 %v5313, 104
      %v5330 = vpop.permute.xlu0 %5329
      %5331 = vrot.lane.b32.xlu0 %v5314, 104
      %v5332 = vpop.permute.xlu0 %5331
      %5333 = vrot.lane.b32.xlu0 %v5315, 104
      %v5334 = vpop.permute.xlu0 %5333
      %5335 = vrot.lane.b32.xlu0 %v5316, 104
      %v5336 = vpop.permute.xlu0 %5335
      %5337 = vrot.lane.b32.xlu0 %v5317, 104
      %v5338 = vpop.permute.xlu0 %5337
      %5339 = vrot.lane.b32.xlu0 %v5318, 104
      %v5340 = vpop.permute.xlu0 %5339
      %5341 = vrot.lane.b32.xlu0 %v5319, 104
      %v5342 = vpop.permute.xlu0 %5341
      %5343 = vrot.lane.b32.xlu0 %v5320, 104
      %v5344 = vpop.permute.xlu0 %5343
      %5353 = vst.msk [vmem:[#allocation5 + $0x4] sm:$0xf] %vm4358, %v5330
      %5354 = vst.msk [vmem:[#allocation5 + $0x10] sm:$0xf] %vm4358, %v5332
      %5355 = vst.msk [vmem:[#allocation5 + $0x1c] sm:$0xf] %vm4358, %v5334
      %5356 = vst.msk [vmem:[#allocation5 + $0x28] sm:$0xf] %vm4358, %v5336
      %5357 = vst.msk [vmem:[#allocation5 + $0x34] sm:$0xf] %vm4358, %v5338
      %5358 = vst.msk [vmem:[#allocation5 + $0x40] sm:$0xf] %vm4358, %v5340
      %5359 = vst.msk [vmem:[#allocation5 + $0x4c] sm:$0xf] %vm4358, %v5342
      %5360 = vst.msk [vmem:[#allocation5 + $0x58] sm:$0xf] %vm4358, %v5344
      %s5361 = scalar_lea.vmem [#allocation3], 120
      %v5362 = vld [vmem:[%s5361] ss:$2 sm:$0xff]
      %s5363 = scalar_lea.vmem %s5361, 48 [#allocation3]
      %v5364 = vld [vmem:[%s5363] ss:$2 sm:$0xff]
      %s5365 = scalar_lea.vmem %s5361, 96 [#allocation3]
      %v5366 = vld [vmem:[%s5365] ss:$2 sm:$0xff]
      %s5367 = scalar_lea.vmem %s5361, 144 [#allocation3]
      %v5368 = vld [vmem:[%s5367] ss:$2 sm:$0xff]
      %s5369 = scalar_lea.vmem %s5361, 192 [#allocation3]
      %v5370 = vld [vmem:[%s5369] ss:$2 sm:$0xff]
      %s5371 = scalar_lea.vmem %s5361, 240 [#allocation3]
      %v5372 = vld [vmem:[%s5371] ss:$2 sm:$0xff]
      %s5373 = scalar_lea.vmem %s5361, 288 [#allocation3]
      %v5374 = vld [vmem:[%s5373] ss:$2 sm:$0xff]
      %s5375 = scalar_lea.vmem %s5361, 336 [#allocation3]
      %v5376 = vld [vmem:[%s5375] ss:$2 sm:$0xff]
      %v5377 = vpack.c.bf16 %v5362, %v5362
      %v5378 = vpack.c.bf16 %v5364, %v5364
      %v5379 = vpack.c.bf16 %v5366, %v5366
      %v5380 = vpack.c.bf16 %v5368, %v5368
      %v5381 = vpack.c.bf16 %v5370, %v5370
      %v5382 = vpack.c.bf16 %v5372, %v5372
      %v5383 = vpack.c.bf16 %v5374, %v5374
      %v5384 = vpack.c.bf16 %v5376, %v5376
      %5393 = vrot.lane.b32.xlu0 %v5377, 112
      %v5394 = vpop.permute.xlu0 %5393
      %5395 = vrot.lane.b32.xlu0 %v5378, 112
      %v5396 = vpop.permute.xlu0 %5395
      %5397 = vrot.lane.b32.xlu0 %v5379, 112
      %v5398 = vpop.permute.xlu0 %5397
      %5399 = vrot.lane.b32.xlu0 %v5380, 112
      %v5400 = vpop.permute.xlu0 %5399
      %5401 = vrot.lane.b32.xlu0 %v5381, 112
      %v5402 = vpop.permute.xlu0 %5401
      %5403 = vrot.lane.b32.xlu0 %v5382, 112
      %v5404 = vpop.permute.xlu0 %5403
      %5405 = vrot.lane.b32.xlu0 %v5383, 112
      %v5406 = vpop.permute.xlu0 %5405
      %5407 = vrot.lane.b32.xlu0 %v5384, 112
      %v5408 = vpop.permute.xlu0 %5407
      %5417 = vst.msk [vmem:[#allocation5 + $0x4] sm:$0xf] %vm4423, %v5394
      %5418 = vst.msk [vmem:[#allocation5 + $0x10] sm:$0xf] %vm4423, %v5396
      %5419 = vst.msk [vmem:[#allocation5 + $0x1c] sm:$0xf] %vm4423, %v5398
      %5420 = vst.msk [vmem:[#allocation5 + $0x28] sm:$0xf] %vm4423, %v5400
      %5421 = vst.msk [vmem:[#allocation5 + $0x34] sm:$0xf] %vm4423, %v5402
      %5422 = vst.msk [vmem:[#allocation5 + $0x40] sm:$0xf] %vm4423, %v5404
      %5423 = vst.msk [vmem:[#allocation5 + $0x4c] sm:$0xf] %vm4423, %v5406
      %5424 = vst.msk [vmem:[#allocation5 + $0x58] sm:$0xf] %vm4423, %v5408
      %s5425 = scalar_lea.vmem %s5361, 1 [#allocation3]
      %v5426 = vld [vmem:[%s5425] ss:$2 sm:$0xff]
      %s5427 = scalar_lea.vmem %s5361, 49 [#allocation3]
      %v5428 = vld [vmem:[%s5427] ss:$2 sm:$0xff]
      %s5429 = scalar_lea.vmem %s5361, 97 [#allocation3]
      %v5430 = vld [vmem:[%s5429] ss:$2 sm:$0xff]
      %s5431 = scalar_lea.vmem %s5361, 145 [#allocation3]
      %v5432 = vld [vmem:[%s5431] ss:$2 sm:$0xff]
      %s5433 = scalar_lea.vmem %s5361, 193 [#allocation3]
      %v5434 = vld [vmem:[%s5433] ss:$2 sm:$0xff]
      %s5435 = scalar_lea.vmem %s5361, 241 [#allocation3]
      %v5436 = vld [vmem:[%s5435] ss:$2 sm:$0xff]
      %s5437 = scalar_lea.vmem %s5361, 289 [#allocation3]
      %v5438 = vld [vmem:[%s5437] ss:$2 sm:$0xff]
      %s5439 = scalar_lea.vmem %s5361, 337 [#allocation3]
      %v5440 = vld [vmem:[%s5439] ss:$2 sm:$0xff]
      %v5441 = vpack.c.bf16 %v5426, %v5426
      %v5442 = vpack.c.bf16 %v5428, %v5428
      %v5443 = vpack.c.bf16 %v5430, %v5430
      %v5444 = vpack.c.bf16 %v5432, %v5432
      %v5445 = vpack.c.bf16 %v5434, %v5434
      %v5446 = vpack.c.bf16 %v5436, %v5436
      %v5447 = vpack.c.bf16 %v5438, %v5438
      %v5448 = vpack.c.bf16 %v5440, %v5440
      %5457 = vrot.lane.b32.xlu0 %v5441, 120
      %v5458 = vpop.permute.xlu0 %5457
      %5459 = vrot.lane.b32.xlu0 %v5442, 120
      %v5460 = vpop.permute.xlu0 %5459
      %5461 = vrot.lane.b32.xlu0 %v5443, 120
      %v5462 = vpop.permute.xlu0 %5461
      %5463 = vrot.lane.b32.xlu0 %v5444, 120
      %v5464 = vpop.permute.xlu0 %5463
      %5465 = vrot.lane.b32.xlu0 %v5445, 120
      %v5466 = vpop.permute.xlu0 %5465
      %5467 = vrot.lane.b32.xlu0 %v5446, 120
      %v5468 = vpop.permute.xlu0 %5467
      %5469 = vrot.lane.b32.xlu0 %v5447, 120
      %v5470 = vpop.permute.xlu0 %5469
      %5471 = vrot.lane.b32.xlu0 %v5448, 120
      %v5472 = vpop.permute.xlu0 %5471
      %5481 = vst.msk [vmem:[#allocation5 + $0x4] sm:$0xf] %vm4488, %v5458
      %5482 = vst.msk [vmem:[#allocation5 + $0x10] sm:$0xf] %vm4488, %v5460
      %5483 = vst.msk [vmem:[#allocation5 + $0x1c] sm:$0xf] %vm4488, %v5462
      %5484 = vst.msk [vmem:[#allocation5 + $0x28] sm:$0xf] %vm4488, %v5464
      %5485 = vst.msk [vmem:[#allocation5 + $0x34] sm:$0xf] %vm4488, %v5466
      %5486 = vst.msk [vmem:[#allocation5 + $0x40] sm:$0xf] %vm4488, %v5468
      %5487 = vst.msk [vmem:[#allocation5 + $0x4c] sm:$0xf] %vm4488, %v5470
      %5488 = vst.msk [vmem:[#allocation5 + $0x58] sm:$0xf] %vm4488, %v5472
      %s5489 = scalar_lea.vmem %s5361, 2 [#allocation3]
      %v5490 = vld [vmem:[%s5489] ss:$2 sm:$0xff]
      %s5491 = scalar_lea.vmem %s5361, 50 [#allocation3]
      %v5492 = vld [vmem:[%s5491] ss:$2 sm:$0xff]
      %s5493 = scalar_lea.vmem %s5361, 98 [#allocation3]
      %v5494 = vld [vmem:[%s5493] ss:$2 sm:$0xff]
      %s5495 = scalar_lea.vmem %s5361, 146 [#allocation3]
      %v5496 = vld [vmem:[%s5495] ss:$2 sm:$0xff]
      %s5497 = scalar_lea.vmem %s5361, 194 [#allocation3]
      %v5498 = vld [vmem:[%s5497] ss:$2 sm:$0xff]
      %s5499 = scalar_lea.vmem %s5361, 242 [#allocation3]
      %v5500 = vld [vmem:[%s5499] ss:$2 sm:$0xff]
      %s5501 = scalar_lea.vmem %s5361, 290 [#allocation3]
      %v5502 = vld [vmem:[%s5501] ss:$2 sm:$0xff]
      %s5503 = scalar_lea.vmem %s5361, 338 [#allocation3]
      %v5504 = vld [vmem:[%s5503] ss:$2 sm:$0xff]
      %v5505 = vpack.c.bf16 %v5490, %v5490
      %v5506 = vpack.c.bf16 %v5492, %v5492
      %v5507 = vpack.c.bf16 %v5494, %v5494
      %v5508 = vpack.c.bf16 %v5496, %v5496
      %v5509 = vpack.c.bf16 %v5498, %v5498
      %v5510 = vpack.c.bf16 %v5500, %v5500
      %v5511 = vpack.c.bf16 %v5502, %v5502
      %v5512 = vpack.c.bf16 %v5504, %v5504
      %5513 = vst.msk [vmem:[#allocation5 + $0x8] sm:$0xf] %vm3367, %v5505
      %5514 = vst.msk [vmem:[#allocation5 + $0x14] sm:$0xf] %vm3367, %v5506
      %5515 = vst.msk [vmem:[#allocation5 + $0x20] sm:$0xf] %vm3367, %v5507
      %5516 = vst.msk [vmem:[#allocation5 + $0x2c] sm:$0xf] %vm3367, %v5508
      %5517 = vst.msk [vmem:[#allocation5 + $0x38] sm:$0xf] %vm3367, %v5509
      %5518 = vst.msk [vmem:[#allocation5 + $0x44] sm:$0xf] %vm3367, %v5510
      %5519 = vst.msk [vmem:[#allocation5 + $0x50] sm:$0xf] %vm3367, %v5511
      %5520 = vst.msk [vmem:[#allocation5 + $0x5c] sm:$0xf] %vm3367, %v5512
      %s5521 = scalar_lea.vmem %s5361, 3 [#allocation3]
      %v5522 = vld [vmem:[%s5521] ss:$2 sm:$0xff]
      %s5523 = scalar_lea.vmem %s5361, 51 [#allocation3]
      %v5524 = vld [vmem:[%s5523] ss:$2 sm:$0xff]
      %s5525 = scalar_lea.vmem %s5361, 99 [#allocation3]
      %v5526 = vld [vmem:[%s5525] ss:$2 sm:$0xff]
      %s5527 = scalar_lea.vmem %s5361, 147 [#allocation3]
      %v5528 = vld [vmem:[%s5527] ss:$2 sm:$0xff]
      %s5529 = scalar_lea.vmem %s5361, 195 [#allocation3]
      %v5530 = vld [vmem:[%s5529] ss:$2 sm:$0xff]
      %s5531 = scalar_lea.vmem %s5361, 243 [#allocation3]
      %v5532 = vld [vmem:[%s5531] ss:$2 sm:$0xff]
      %s5533 = scalar_lea.vmem %s5361, 291 [#allocation3]
      %v5534 = vld [vmem:[%s5533] ss:$2 sm:$0xff]
      %s5535 = scalar_lea.vmem %s5361, 339 [#allocation3]
      %v5536 = vld [vmem:[%s5535] ss:$2 sm:$0xff]
      %v5537 = vpack.c.bf16 %v5522, %v5522
      %v5538 = vpack.c.bf16 %v5524, %v5524
      %v5539 = vpack.c.bf16 %v5526, %v5526
      %v5540 = vpack.c.bf16 %v5528, %v5528
      %v5541 = vpack.c.bf16 %v5530, %v5530
      %v5542 = vpack.c.bf16 %v5532, %v5532
      %v5543 = vpack.c.bf16 %v5534, %v5534
      %v5544 = vpack.c.bf16 %v5536, %v5536
      %5553 = vrot.lane.b32.xlu0 %v5537, 8
      %v5554 = vpop.permute.xlu0 %5553
      %5555 = vrot.lane.b32.xlu0 %v5538, 8
      %v5556 = vpop.permute.xlu0 %5555
      %5557 = vrot.lane.b32.xlu0 %v5539, 8
      %v5558 = vpop.permute.xlu0 %5557
      %5559 = vrot.lane.b32.xlu0 %v5540, 8
      %v5560 = vpop.permute.xlu0 %5559
      %5561 = vrot.lane.b32.xlu0 %v5541, 8
      %v5562 = vpop.permute.xlu0 %5561
      %5563 = vrot.lane.b32.xlu0 %v5542, 8
      %v5564 = vpop.permute.xlu0 %5563
      %5565 = vrot.lane.b32.xlu0 %v5543, 8
      %v5566 = vpop.permute.xlu0 %5565
      %5567 = vrot.lane.b32.xlu0 %v5544, 8
      %v5568 = vpop.permute.xlu0 %5567
      %5577 = vst.msk [vmem:[#allocation5 + $0x8] sm:$0xf] %vm3579, %v5554
      %5578 = vst.msk [vmem:[#allocation5 + $0x14] sm:$0xf] %vm3579, %v5556
      %5579 = vst.msk [vmem:[#allocation5 + $0x20] sm:$0xf] %vm3579, %v5558
      %5580 = vst.msk [vmem:[#allocation5 + $0x2c] sm:$0xf] %vm3579, %v5560
      %5581 = vst.msk [vmem:[#allocation5 + $0x38] sm:$0xf] %vm3579, %v5562
      %5582 = vst.msk [vmem:[#allocation5 + $0x44] sm:$0xf] %vm3579, %v5564
      %5583 = vst.msk [vmem:[#allocation5 + $0x50] sm:$0xf] %vm3579, %v5566
      %5584 = vst.msk [vmem:[#allocation5 + $0x5c] sm:$0xf] %vm3579, %v5568
      %s5585 = scalar_lea.vmem %s5361, 4 [#allocation3]
      %v5586 = vld [vmem:[%s5585] ss:$2 sm:$0xff]
      %s5587 = scalar_lea.vmem %s5361, 52 [#allocation3]
      %v5588 = vld [vmem:[%s5587] ss:$2 sm:$0xff]
      %s5589 = scalar_lea.vmem %s5361, 100 [#allocation3]
      %v5590 = vld [vmem:[%s5589] ss:$2 sm:$0xff]
      %s5591 = scalar_lea.vmem %s5361, 148 [#allocation3]
      %v5592 = vld [vmem:[%s5591] ss:$2 sm:$0xff]
      %s5593 = scalar_lea.vmem %s5361, 196 [#allocation3]
      %v5594 = vld [vmem:[%s5593] ss:$2 sm:$0xff]
      %s5595 = scalar_lea.vmem %s5361, 244 [#allocation3]
      %v5596 = vld [vmem:[%s5595] ss:$2 sm:$0xff]
      %s5597 = scalar_lea.vmem %s5361, 292 [#allocation3]
      %v5598 = vld [vmem:[%s5597] ss:$2 sm:$0xff]
      %s5599 = scalar_lea.vmem %s5361, 340 [#allocation3]
      %v5600 = vld [vmem:[%s5599] ss:$2 sm:$0xff]
      %v5601 = vpack.c.bf16 %v5586, %v5586
      %v5602 = vpack.c.bf16 %v5588, %v5588
      %v5603 = vpack.c.bf16 %v5590, %v5590
      %v5604 = vpack.c.bf16 %v5592, %v5592
      %v5605 = vpack.c.bf16 %v5594, %v5594
      %v5606 = vpack.c.bf16 %v5596, %v5596
      %v5607 = vpack.c.bf16 %v5598, %v5598
      %v5608 = vpack.c.bf16 %v5600, %v5600
      %5617 = vrot.lane.b32.xlu0 %v5601, 16
      %v5618 = vpop.permute.xlu0 %5617
      %5619 = vrot.lane.b32.xlu0 %v5602, 16
      %v5620 = vpop.permute.xlu0 %5619
      %5621 = vrot.lane.b32.xlu0 %v5603, 16
      %v5622 = vpop.permute.xlu0 %5621
      %5623 = vrot.lane.b32.xlu0 %v5604, 16
      %v5624 = vpop.permute.xlu0 %5623
      %5625 = vrot.lane.b32.xlu0 %v5605, 16
      %v5626 = vpop.permute.xlu0 %5625
      %5627 = vrot.lane.b32.xlu0 %v5606, 16
      %v5628 = vpop.permute.xlu0 %5627
      %5629 = vrot.lane.b32.xlu0 %v5607, 16
      %v5630 = vpop.permute.xlu0 %5629
      %5631 = vrot.lane.b32.xlu0 %v5608, 16
      %v5632 = vpop.permute.xlu0 %5631
      %5641 = vst.msk [vmem:[#allocation5 + $0x8] sm:$0xf] %vm3644, %v5618
      %5642 = vst.msk [vmem:[#allocation5 + $0x14] sm:$0xf] %vm3644, %v5620
      %5643 = vst.msk [vmem:[#allocation5 + $0x20] sm:$0xf] %vm3644, %v5622
      %5644 = vst.msk [vmem:[#allocation5 + $0x2c] sm:$0xf] %vm3644, %v5624
      %5645 = vst.msk [vmem:[#allocation5 + $0x38] sm:$0xf] %vm3644, %v5626
      %5646 = vst.msk [vmem:[#allocation5 + $0x44] sm:$0xf] %vm3644, %v5628
      %5647 = vst.msk [vmem:[#allocation5 + $0x50] sm:$0xf] %vm3644, %v5630
      %5648 = vst.msk [vmem:[#allocation5 + $0x5c] sm:$0xf] %vm3644, %v5632
      %s5649 = scalar_lea.vmem %s5361, 5 [#allocation3]
      %v5650 = vld [vmem:[%s5649] ss:$2 sm:$0xff]
      %s5651 = scalar_lea.vmem %s5361, 53 [#allocation3]
      %v5652 = vld [vmem:[%s5651] ss:$2 sm:$0xff]
      %s5653 = scalar_lea.vmem %s5361, 101 [#allocation3]
      %v5654 = vld [vmem:[%s5653] ss:$2 sm:$0xff]
      %s5655 = scalar_lea.vmem %s5361, 149 [#allocation3]
      %v5656 = vld [vmem:[%s5655] ss:$2 sm:$0xff]
      %s5657 = scalar_lea.vmem %s5361, 197 [#allocation3]
      %v5658 = vld [vmem:[%s5657] ss:$2 sm:$0xff]
      %s5659 = scalar_lea.vmem %s5361, 245 [#allocation3]
      %v5660 = vld [vmem:[%s5659] ss:$2 sm:$0xff]
      %s5661 = scalar_lea.vmem %s5361, 293 [#allocation3]
      %v5662 = vld [vmem:[%s5661] ss:$2 sm:$0xff]
      %s5663 = scalar_lea.vmem %s5361, 341 [#allocation3]
      %v5664 = vld [vmem:[%s5663] ss:$2 sm:$0xff]
      %v5665 = vpack.c.bf16 %v5650, %v5650
      %v5666 = vpack.c.bf16 %v5652, %v5652
      %v5667 = vpack.c.bf16 %v5654, %v5654
      %v5668 = vpack.c.bf16 %v5656, %v5656
      %v5669 = vpack.c.bf16 %v5658, %v5658
      %v5670 = vpack.c.bf16 %v5660, %v5660
      %v5671 = vpack.c.bf16 %v5662, %v5662
      %v5672 = vpack.c.bf16 %v5664, %v5664
      %5681 = vrot.lane.b32.xlu0 %v5665, 24
      %v5682 = vpop.permute.xlu0 %5681
      %5683 = vrot.lane.b32.xlu0 %v5666, 24
      %v5684 = vpop.permute.xlu0 %5683
      %5685 = vrot.lane.b32.xlu0 %v5667, 24
      %v5686 = vpop.permute.xlu0 %5685
      %5687 = vrot.lane.b32.xlu0 %v5668, 24
      %v5688 = vpop.permute.xlu0 %5687
      %5689 = vrot.lane.b32.xlu0 %v5669, 24
      %v5690 = vpop.permute.xlu0 %5689
      %5691 = vrot.lane.b32.xlu0 %v5670, 24
      %v5692 = vpop.permute.xlu0 %5691
      %5693 = vrot.lane.b32.xlu0 %v5671, 24
      %v5694 = vpop.permute.xlu0 %5693
      %5695 = vrot.lane.b32.xlu0 %v5672, 24
      %v5696 = vpop.permute.xlu0 %5695
      %5705 = vst.msk [vmem:[#allocation5 + $0x8] sm:$0xf] %vm3709, %v5682
      %5706 = vst.msk [vmem:[#allocation5 + $0x14] sm:$0xf] %vm3709, %v5684
      %5707 = vst.msk [vmem:[#allocation5 + $0x20] sm:$0xf] %vm3709, %v5686
      %5708 = vst.msk [vmem:[#allocation5 + $0x2c] sm:$0xf] %vm3709, %v5688
      %5709 = vst.msk [vmem:[#allocation5 + $0x38] sm:$0xf] %vm3709, %v5690
      %5710 = vst.msk [vmem:[#allocation5 + $0x44] sm:$0xf] %vm3709, %v5692
      %5711 = vst.msk [vmem:[#allocation5 + $0x50] sm:$0xf] %vm3709, %v5694
      %5712 = vst.msk [vmem:[#allocation5 + $0x5c] sm:$0xf] %vm3709, %v5696
      %v5713 = vld [vmem:[#allocation5] sm:$0xff]
      %v5714 = vld [vmem:[#allocation5 + $0x8] sm:$0xf]
      %v5715 = vld [vmem:[#allocation5 + $0xc] sm:$0xff]
      %v5716 = vld [vmem:[#allocation5 + $0x14] sm:$0xf]
      %v5717 = vld [vmem:[#allocation5 + $0x18] sm:$0xff]
      %v5718 = vld [vmem:[#allocation5 + $0x20] sm:$0xf]
      %v5719 = vld [vmem:[#allocation5 + $0x24] sm:$0xff]
      %v5720 = vld [vmem:[#allocation5 + $0x2c] sm:$0xf]
      %v5721 = vld [vmem:[#allocation5 + $0x30] sm:$0xff]
      %v5722 = vld [vmem:[#allocation5 + $0x38] sm:$0xf]
      %v5723 = vld [vmem:[#allocation5 + $0x3c] sm:$0xff]
      %v5724 = vld [vmem:[#allocation5 + $0x44] sm:$0xf]
      %v5725 = vld [vmem:[#allocation5 + $0x48] sm:$0xff]
      %v5726 = vld [vmem:[#allocation5 + $0x50] sm:$0xf]
      %v5727 = vld [vmem:[#allocation5 + $0x54] sm:$0xff]
      %v5728 = vld [vmem:[#allocation5 + $0x5c] sm:$0xf]
      %v5729 = vld [vmem:[%s10] sm:$0xf]
      %v5730 = vld [vmem:[%s10 + $0x4] sm:$0xf]
      %v5731 = vld [vmem:[%s10 + $0x8] sm:$0xf]
      %v5732 = vld [vmem:[%s10 + $0xc] sm:$0xf]
      %v5733 = vld [vmem:[%s10 + $0x10] sm:$0xf]
      %v5734 = vld [vmem:[%s10 + $0x14] sm:$0xf]
      %v5735 = vld [vmem:[%s10 + $0x18] sm:$0xf]
      %v5736 = vld [vmem:[%s10 + $0x1c] sm:$0xf]
      %v5737 = vld [vmem:[%s10 + $0x20] sm:$0xf]
      %v5738 = vld [vmem:[%s10 + $0x24] sm:$0xf]
      %v5739 = vld [vmem:[%s10 + $0x28] sm:$0xf]
      %v5740 = vld [vmem:[%s10 + $0x2c] sm:$0xf]
      %v5741 = vld [vmem:[%s10 + $0x30] sm:$0xf]
      %v5742 = vld [vmem:[%s10 + $0x34] sm:$0xf]
      %v5743 = vld [vmem:[%s10 + $0x38] sm:$0xf]
      %v5744 = vld [vmem:[%s10 + $0x3c] sm:$0xf]
      %v5745 = vld [vmem:[%s10 + $0x40] sm:$0xf]
      %v5746 = vld [vmem:[%s10 + $0x44] sm:$0xf]
      %v5747 = vld [vmem:[%s10 + $0x48] sm:$0xf]
      %v5748 = vld [vmem:[%s10 + $0x4c] sm:$0xf]
      %v5749 = vld [vmem:[%s10 + $0x50] sm:$0xf]
      %v5750 = vld [vmem:[%s10 + $0x54] sm:$0xf]
      %v5751 = vld [vmem:[%s10 + $0x58] sm:$0xf]
      %v5752 = vld [vmem:[%s10 + $0x5c] sm:$0xf]
      %v5753 = vld [vmem:[%s10 + $0x60] sm:$0xf]
      %v5754 = vld [vmem:[%s10 + $0x64] sm:$0xf]
      %v5755 = vld [vmem:[%s10 + $0x68] sm:$0xf]
      %v5756 = vld [vmem:[%s10 + $0x6c] sm:$0xf]
      %v5757 = vld [vmem:[%s10 + $0x70] sm:$0xf]
      %v5758 = vld [vmem:[%s10 + $0x74] sm:$0xf]
      %v5759 = vld [vmem:[%s10 + $0x78] sm:$0xf]
      %v5760 = vld [vmem:[%s10 + $0x7c] sm:$0xf]
      %v5761 = vld [vmem:[%s10 + $0x80] sm:$0xf]
      %v5762 = vld [vmem:[%s10 + $0x84] sm:$0xf]
      %v5763 = vld [vmem:[%s10 + $0x88] sm:$0xf]
      %v5764 = vld [vmem:[%s10 + $0x8c] sm:$0xf]
      %v5781 = vunpack.c.l.b16 %v5713
      %v5782 = vunpack.c.h.b16 %v5713
      %v5783 = vunpack.c.l.b16 %v5714
      %v5784 = vunpack.c.l.b16 %v5715
      %v5785 = vunpack.c.h.b16 %v5715
      %v5786 = vunpack.c.l.b16 %v5716
      %v5787 = vunpack.c.l.b16 %v5717
      %v5788 = vunpack.c.h.b16 %v5717
      %v5789 = vunpack.c.l.b16 %v5718
      %v5790 = vunpack.c.l.b16 %v5719
      %v5791 = vunpack.c.h.b16 %v5719
      %v5792 = vunpack.c.l.b16 %v5720
      %v5793 = vunpack.c.l.b16 %v5721
      %v5794 = vunpack.c.h.b16 %v5721
      %v5795 = vunpack.c.l.b16 %v5722
      %v5796 = vunpack.c.l.b16 %v5723
      %v5797 = vunpack.c.h.b16 %v5723
      %v5798 = vunpack.c.l.b16 %v5724
      %v5799 = vunpack.c.l.b16 %v5725
      %v5800 = vunpack.c.h.b16 %v5725
      %v5801 = vunpack.c.l.b16 %v5726
      %v5802 = vunpack.c.l.b16 %v5727
      %v5803 = vunpack.c.h.b16 %v5727
      %v5804 = vunpack.c.l.b16 %v5728
      %v5805 = vpack.c.b16 %v5784, %v5781
      %v5806 = vpack.c.b16 %v5785, %v5782
      %v5807 = vpack.c.b16 %v5786, %v5783
      %v5808 = vpack.c.b16 %v5790, %v5787
      %v5809 = vpack.c.b16 %v5791, %v5788
      %v5810 = vpack.c.b16 %v5792, %v5789
      %v5811 = vpack.c.b16 %v5796, %v5793
      %v5812 = vpack.c.b16 %v5797, %v5794
      %v5813 = vpack.c.b16 %v5798, %v5795
      %v5814 = vpack.c.b16 %v5802, %v5799
      %v5815 = vpack.c.b16 %v5803, %v5800
      %v5816 = vpack.c.b16 %v5804, %v5801
      %v5861 = vunpack.c.l.b16 %v5729
      %v5862 = vunpack.c.l.b16 %v5730
      %v5863 = vunpack.c.l.b16 %v5731
      %v5864 = vunpack.c.l.b16 %v5732
      %v5865 = vunpack.c.l.b16 %v5733
      %v5866 = vunpack.c.l.b16 %v5734
      %v5867 = vunpack.c.l.b16 %v5735
      %v5868 = vunpack.c.l.b16 %v5736
      %v5869 = vunpack.c.l.b16 %v5737
      %v5870 = vunpack.c.l.b16 %v5738
      %v5871 = vunpack.c.l.b16 %v5739
      %v5872 = vunpack.c.l.b16 %v5740
      %v5873 = vunpack.c.l.b16 %v5741
      %v5874 = vunpack.c.l.b16 %v5742
      %v5875 = vunpack.c.l.b16 %v5743
      %v5876 = vunpack.c.l.b16 %v5744
      %v5877 = vunpack.c.l.b16 %v5745
      %v5878 = vunpack.c.l.b16 %v5746
      %v5879 = vunpack.c.l.b16 %v5747
      %v5880 = vunpack.c.l.b16 %v5748
      %v5881 = vunpack.c.l.b16 %v5749
      %v5882 = vunpack.c.l.b16 %v5750
      %v5883 = vunpack.c.l.b16 %v5751
      %v5884 = vunpack.c.l.b16 %v5752
      %v5885 = vunpack.c.l.b16 %v5753
      %v5886 = vunpack.c.l.b16 %v5754
      %v5887 = vunpack.c.l.b16 %v5755
      %v5888 = vunpack.c.l.b16 %v5756
      %v5889 = vunpack.c.l.b16 %v5757
      %v5890 = vunpack.c.l.b16 %v5758
      %v5891 = vunpack.c.l.b16 %v5759
      %v5892 = vunpack.c.l.b16 %v5760
      %v5893 = vunpack.c.l.b16 %v5761
      %v5894 = vunpack.c.l.b16 %v5762
      %v5895 = vunpack.c.l.b16 %v5763
      %v5896 = vunpack.c.l.b16 %v5764
      %v5897 = vpack.c.b16 %v5862, %v5861
      %v5898 = vpack.c.b16 %v5864, %v5863
      %v5899 = vpack.c.b16 %v5866, %v5865
      %v5900 = vpack.c.b16 %v5868, %v5867
      %v5901 = vpack.c.b16 %v5870, %v5869
      %v5902 = vpack.c.b16 %v5872, %v5871
      %v5903 = vpack.c.b16 %v5874, %v5873
      %v5904 = vpack.c.b16 %v5876, %v5875
      %v5905 = vpack.c.b16 %v5878, %v5877
      %v5906 = vpack.c.b16 %v5880, %v5879
      %v5907 = vpack.c.b16 %v5882, %v5881
      %v5908 = vpack.c.b16 %v5884, %v5883
      %v5909 = vpack.c.b16 %v5886, %v5885
      %v5910 = vpack.c.b16 %v5888, %v5887
      %v5911 = vpack.c.b16 %v5890, %v5889
      %v5912 = vpack.c.b16 %v5892, %v5891
      %v5913 = vpack.c.b16 %v5894, %v5893
      %v5914 = vpack.c.b16 %v5896, %v5895
      %v5934 = vsel %vm462, %v5807, 0
      %v5937 = vsel %vm462, %v5810, 0
      %v5940 = vsel %vm462, %v5813, 0
      %v5943 = vsel %vm462, %v5816, 0
      %5945 = vmatpush.bf16.msra.mxu0 %v5904
      %5946 = vmatpush.bf16.msra.mxu0 %v5903
      %5947 = vmatpush.bf16.msra.mxu0 %v5902
      %5948 = vmatpush.bf16.msra.mxu0 %v5901
      %5949 = vmatpush.bf16.msra.mxu0 %v5900
      %5950 = vmatpush.bf16.msra.mxu0 %v5899
      %5951 = vmatpush.bf16.msra.mxu0 %v5898
      %5952 = vmatpush.bf16.msra.mxu0 %v5897
      %5953 = vmatmul.bf16.gmra.mxu0 %v5805
      %v5954 = vpop.f32.mrf.mxu0
      %v5955 = vadd.f32 0.0, %v5954
      %v5956 = vpop.f32.mrf.mxu0
      %v5957 = vadd.f32 0.0, %v5956
      %5958 = vmatmul.bf16.gmra.mxu0 %v5808
      %v5959 = vpop.f32.mrf.mxu0
      %v5960 = vadd.f32 0.0, %v5959
      %v5961 = vpop.f32.mrf.mxu0
      %v5962 = vadd.f32 0.0, %v5961
      %5963 = vmatmul.bf16.gmra.mxu0 %v5811
      %v5964 = vpop.f32.mrf.mxu0
      %v5965 = vadd.f32 0.0, %v5964
      %v5966 = vpop.f32.mrf.mxu0
      %v5967 = vadd.f32 0.0, %v5966
      %5968 = vmatmul.bf16.gmra.mxu0 %v5814
      %v5969 = vpop.f32.mrf.mxu0
      %v5970 = vadd.f32 0.0, %v5969
      %v5971 = vpop.f32.mrf.mxu0
      %v5972 = vadd.f32 0.0, %v5971
      %5973 = vdwg.mxu0
      %5974 = vmatpush.bf16.msra.mxu0 %v5912
      %5975 = vmatpush.bf16.msra.mxu0 %v5911
      %5976 = vmatpush.bf16.msra.mxu0 %v5910
      %5977 = vmatpush.bf16.msra.mxu0 %v5909
      %5978 = vmatpush.bf16.msra.mxu0 %v5908
      %5979 = vmatpush.bf16.msra.mxu0 %v5907
      %5980 = vmatpush.bf16.msra.mxu0 %v5906
      %5981 = vmatpush.bf16.msra.mxu0 %v5905
      %5982 = vmatmul.bf16.gmra.mxu0 %v5806
      %v5983 = vpop.f32.mrf.mxu0
      %v5984 = vadd.f32 %v5955, %v5983
      %v5985 = vpop.f32.mrf.mxu0
      %v5986 = vadd.f32 %v5957, %v5985
      %5987 = vmatmul.bf16.gmra.mxu0 %v5809
      %v5988 = vpop.f32.mrf.mxu0
      %v5989 = vadd.f32 %v5960, %v5988
      %v5990 = vpop.f32.mrf.mxu0
      %v5991 = vadd.f32 %v5962, %v5990
      %5992 = vmatmul.bf16.gmra.mxu0 %v5812
      %v5993 = vpop.f32.mrf.mxu0
      %v5994 = vadd.f32 %v5965, %v5993
      %v5995 = vpop.f32.mrf.mxu0
      %v5996 = vadd.f32 %v5967, %v5995
      %5997 = vmatmul.bf16.gmra.mxu0 %v5815
      %v5998 = vpop.f32.mrf.mxu0
      %v5999 = vadd.f32 %v5970, %v5998
      %v6000 = vpop.f32.mrf.mxu0
      %v6001 = vadd.f32 %v5972, %v6000
      %6002 = vdwg.mxu0
      %6003 = vmatpush.bf16.msra.mxu0 0
      %6004 = vmatpush.bf16.msra.mxu0 0
      %6005 = vmatpush.bf16.msra.mxu0 0
      %6006 = vmatpush.bf16.msra.mxu0 0
      %6007 = vmatpush.bf16.msra.mxu0 0
      %6008 = vmatpush.bf16.msra.mxu0 0
      %6009 = vmatpush.bf16.msra.mxu0 %v5914
      %6010 = vmatpush.bf16.msra.mxu0 %v5913
      %6011 = vmatmul.bf16.gmra.mxu0 %v5934
      %v6012 = vpop.f32.mrf.mxu0
      %v6013 = vadd.f32 %v5984, %v6012
      %v6014 = vpop.f32.mrf.mxu0
      %v6015 = vadd.f32 %v5986, %v6014
      %6016 = vmatmul.bf16.gmra.mxu0 %v5937
      %v6017 = vpop.f32.mrf.mxu0
      %v6018 = vadd.f32 %v5989, %v6017
      %v6019 = vpop.f32.mrf.mxu0
      %v6020 = vadd.f32 %v5991, %v6019
      %6021 = vmatmul.bf16.gmra.mxu0 %v5940
      %v6022 = vpop.f32.mrf.mxu0
      %v6023 = vadd.f32 %v5994, %v6022
      %v6024 = vpop.f32.mrf.mxu0
      %v6025 = vadd.f32 %v5996, %v6024
      %6026 = vmatmul.bf16.gmra.mxu0 %v5943
      %v6027 = vpop.f32.mrf.mxu0
      %v6028 = vadd.f32 %v5999, %v6027
      %v6029 = vpop.f32.mrf.mxu0
      %v6030 = vadd.f32 %v6001, %v6029
      %6031 = vdwg.mxu0
      %v6032 = vperm.slane %v586, 0
      %v6033 = vmul.f32 %v6013, %v6032
      %v6034 = vmul.f32 %v6015, %v6032
      %v6035 = vmul.f32 %v6018, %v6032
      %v6036 = vmul.f32 %v6020, %v6032
      %v6037 = vmul.f32 %v6023, %v6032
      %v6038 = vmul.f32 %v6025, %v6032
      %v6039 = vmul.f32 %v6028, %v6032
      %v6040 = vmul.f32 %v6030, %v6032
      %v6041 = vld [vmem:[%s11] sm:$0x1]
      %v6043 = vperm.slane %v6041, 0
      %v6045 = vadd.f32 %v6033, %v6043
      %v6046 = vadd.f32 %v6034, %v6043
      %v6047 = vadd.f32 %v6035, %v6043
      %v6048 = vadd.f32 %v6036, %v6043
      %v6049 = vadd.f32 %v6037, %v6043
      %v6050 = vadd.f32 %v6038, %v6043
      %v6051 = vadd.f32 %v6039, %v6043
      %v6052 = vadd.f32 %v6040, %v6043
      %vm6053 = vcmp.ge.f32.partialorder %v6045, 0.0
      %vm6054 = vcmp.ge.f32.partialorder %v6046, 0.0
      %vm6055 = vcmp.ge.f32.partialorder %v6047, 0.0
      %vm6056 = vcmp.ge.f32.partialorder %v6048, 0.0
      %vm6057 = vcmp.ge.f32.partialorder %v6049, 0.0
      %vm6058 = vcmp.ge.f32.partialorder %v6050, 0.0
      %vm6059 = vcmp.ge.f32.partialorder %v6051, 0.0
      %vm6060 = vcmp.ge.f32.partialorder %v6052, 0.0
      %v6061 = vmul.f32 %v6045, 0.2
      %v6062 = vmul.f32 %v6046, 0.2
      %v6063 = vmul.f32 %v6047, 0.2
      %v6064 = vmul.f32 %v6048, 0.2
      %v6065 = vmul.f32 %v6049, 0.2
      %v6066 = vmul.f32 %v6050, 0.2
      %v6067 = vmul.f32 %v6051, 0.2
      %v6068 = vmul.f32 %v6052, 0.2
      %v6069 = vsel %vm6053, %v6045, %v6061
      %v6070 = vsel %vm6054, %v6046, %v6062
      %v6071 = vsel %vm6055, %v6047, %v6063
      %v6072 = vsel %vm6056, %v6048, %v6064
      %v6073 = vsel %vm6057, %v6049, %v6065
      %v6074 = vsel %vm6058, %v6050, %v6066
      %v6075 = vsel %vm6059, %v6051, %v6067
      %v6076 = vsel %vm6060, %v6052, %v6068
      %v6077 = vmul.f32 %v6069, 1.4142135
      %v6078 = vmul.f32 %v6070, 1.4142135
      %v6079 = vmul.f32 %v6071, 1.4142135
      %v6080 = vmul.f32 %v6072, 1.4142135
      %v6081 = vmul.f32 %v6073, 1.4142135
      %v6082 = vmul.f32 %v6074, 1.4142135
      %v6083 = vmul.f32 %v6075, 1.4142135
      %v6084 = vmul.f32 %v6076, 1.4142135
      %v6085 = vld [vmem:[#allocation2] ss:$2 sm:$0xff]
      %s6086 = scalar_lea.vmem [#allocation2], 48
      %v6087 = vld [vmem:[%s6086] ss:$2 sm:$0xff]
      %s6088 = scalar_lea.vmem [#allocation2], 96
      %v6089 = vld [vmem:[%s6088] ss:$2 sm:$0xff]
      %s6090 = scalar_lea.vmem [#allocation2], 144
      %v6091 = vld [vmem:[%s6090] ss:$2 sm:$0xff]
      %s6092 = scalar_lea.vmem [#allocation2], 192
      %v6093 = vld [vmem:[%s6092] ss:$2 sm:$0xff]
      %s6094 = scalar_lea.vmem [#allocation2], 240
      %v6095 = vld [vmem:[%s6094] ss:$2 sm:$0xff]
      %s6096 = scalar_lea.vmem [#allocation2], 288
      %v6097 = vld [vmem:[%s6096] ss:$2 sm:$0xff]
      %s6098 = scalar_lea.vmem [#allocation2], 336
      %v6099 = vld [vmem:[%s6098] ss:$2 sm:$0xff]
      %v6100 = vpack.c.bf16 %v6085, %v6085
      %v6101 = vpack.c.bf16 %v6087, %v6087
      %v6102 = vpack.c.bf16 %v6089, %v6089
      %v6103 = vpack.c.bf16 %v6091, %v6091
      %v6104 = vpack.c.bf16 %v6093, %v6093
      %v6105 = vpack.c.bf16 %v6095, %v6095
      %v6106 = vpack.c.bf16 %v6097, %v6097
      %v6107 = vpack.c.bf16 %v6099, %v6099
      %6108 = vst.msk [vmem:[#allocation6] sm:$0xf] %vm804, %v6100
      %6109 = vst.msk [vmem:[#allocation6 + $0x4] sm:$0xf] %vm804, %v6101
      %6110 = vst.msk [vmem:[#allocation6 + $0x8] sm:$0xf] %vm804, %v6102
      %6111 = vst.msk [vmem:[#allocation6 + $0xc] sm:$0xf] %vm804, %v6103
      %6112 = vst.msk [vmem:[#allocation6 + $0x10] sm:$0xf] %vm804, %v6104
      %6113 = vst.msk [vmem:[#allocation6 + $0x14] sm:$0xf] %vm804, %v6105
      %6114 = vst.msk [vmem:[#allocation6 + $0x18] sm:$0xf] %vm804, %v6106
      %6115 = vst.msk [vmem:[#allocation6 + $0x1c] sm:$0xf] %vm804, %v6107
      %s6116 = scalar_lea.vmem [#allocation2], 1
      %v6117 = vld [vmem:[%s6116] ss:$2 sm:$0xff]
      %s6118 = scalar_lea.vmem [#allocation2], 49
      %v6119 = vld [vmem:[%s6118] ss:$2 sm:$0xff]
      %s6120 = scalar_lea.vmem [#allocation2], 97
      %v6121 = vld [vmem:[%s6120] ss:$2 sm:$0xff]
      %s6122 = scalar_lea.vmem [#allocation2], 145
      %v6123 = vld [vmem:[%s6122] ss:$2 sm:$0xff]
      %s6124 = scalar_lea.vmem [#allocation2], 193
      %v6125 = vld [vmem:[%s6124] ss:$2 sm:$0xff]
      %s6126 = scalar_lea.vmem [#allocation2], 241
      %v6127 = vld [vmem:[%s6126] ss:$2 sm:$0xff]
      %s6128 = scalar_lea.vmem [#allocation2], 289
      %v6129 = vld [vmem:[%s6128] ss:$2 sm:$0xff]
      %s6130 = scalar_lea.vmem [#allocation2], 337
      %v6131 = vld [vmem:[%s6130] ss:$2 sm:$0xff]
      %v6132 = vpack.c.bf16 %v6117, %v6117
      %v6133 = vpack.c.bf16 %v6119, %v6119
      %v6134 = vpack.c.bf16 %v6121, %v6121
      %v6135 = vpack.c.bf16 %v6123, %v6123
      %v6136 = vpack.c.bf16 %v6125, %v6125
      %v6137 = vpack.c.bf16 %v6127, %v6127
      %v6138 = vpack.c.bf16 %v6129, %v6129
      %v6139 = vpack.c.bf16 %v6131, %v6131
      %6148 = vrot.lane.b32.xlu0 %v6132, 4
      %v6149 = vpop.permute.xlu0 %6148
      %6150 = vrot.lane.b32.xlu0 %v6133, 4
      %v6151 = vpop.permute.xlu0 %6150
      %6152 = vrot.lane.b32.xlu0 %v6134, 4
      %v6153 = vpop.permute.xlu0 %6152
      %6154 = vrot.lane.b32.xlu0 %v6135, 4
      %v6155 = vpop.permute.xlu0 %6154
      %6156 = vrot.lane.b32.xlu0 %v6136, 4
      %v6157 = vpop.permute.xlu0 %6156
      %6158 = vrot.lane.b32.xlu0 %v6137, 4
      %v6159 = vpop.permute.xlu0 %6158
      %6160 = vrot.lane.b32.xlu0 %v6138, 4
      %v6161 = vpop.permute.xlu0 %6160
      %6162 = vrot.lane.b32.xlu0 %v6139, 4
      %v6163 = vpop.permute.xlu0 %6162
      %6172 = vst.msk [vmem:[#allocation6] sm:$0xf] %vm1061, %v6149
      %6173 = vst.msk [vmem:[#allocation6 + $0x4] sm:$0xf] %vm1061, %v6151
      %6174 = vst.msk [vmem:[#allocation6 + $0x8] sm:$0xf] %vm1061, %v6153
      %6175 = vst.msk [vmem:[#allocation6 + $0xc] sm:$0xf] %vm1061, %v6155
      %6176 = vst.msk [vmem:[#allocation6 + $0x10] sm:$0xf] %vm1061, %v6157
      %6177 = vst.msk [vmem:[#allocation6 + $0x14] sm:$0xf] %vm1061, %v6159
      %6178 = vst.msk [vmem:[#allocation6 + $0x18] sm:$0xf] %vm1061, %v6161
      %6179 = vst.msk [vmem:[#allocation6 + $0x1c] sm:$0xf] %vm1061, %v6163
      %s6180 = scalar_lea.vmem [#allocation2], 2
      %v6181 = vld [vmem:[%s6180] ss:$2 sm:$0xff]
      %s6182 = scalar_lea.vmem [#allocation2], 50
      %v6183 = vld [vmem:[%s6182] ss:$2 sm:$0xff]
      %s6184 = scalar_lea.vmem [#allocation2], 98
      %v6185 = vld [vmem:[%s6184] ss:$2 sm:$0xff]
      %s6186 = scalar_lea.vmem [#allocation2], 146
      %v6187 = vld [vmem:[%s6186] ss:$2 sm:$0xff]
      %s6188 = scalar_lea.vmem [#allocation2], 194
      %v6189 = vld [vmem:[%s6188] ss:$2 sm:$0xff]
      %s6190 = scalar_lea.vmem [#allocation2], 242
      %v6191 = vld [vmem:[%s6190] ss:$2 sm:$0xff]
      %s6192 = scalar_lea.vmem [#allocation2], 290
      %v6193 = vld [vmem:[%s6192] ss:$2 sm:$0xff]
      %s6194 = scalar_lea.vmem [#allocation2], 338
      %v6195 = vld [vmem:[%s6194] ss:$2 sm:$0xff]
      %v6196 = vpack.c.bf16 %v6181, %v6181
      %v6197 = vpack.c.bf16 %v6183, %v6183
      %v6198 = vpack.c.bf16 %v6185, %v6185
      %v6199 = vpack.c.bf16 %v6187, %v6187
      %v6200 = vpack.c.bf16 %v6189, %v6189
      %v6201 = vpack.c.bf16 %v6191, %v6191
      %v6202 = vpack.c.bf16 %v6193, %v6193
      %v6203 = vpack.c.bf16 %v6195, %v6195
      %6212 = vrot.lane.b32.xlu0 %v6196, 8
      %v6213 = vpop.permute.xlu0 %6212
      %6214 = vrot.lane.b32.xlu0 %v6197, 8
      %v6215 = vpop.permute.xlu0 %6214
      %6216 = vrot.lane.b32.xlu0 %v6198, 8
      %v6217 = vpop.permute.xlu0 %6216
      %6218 = vrot.lane.b32.xlu0 %v6199, 8
      %v6219 = vpop.permute.xlu0 %6218
      %6220 = vrot.lane.b32.xlu0 %v6200, 8
      %v6221 = vpop.permute.xlu0 %6220
      %6222 = vrot.lane.b32.xlu0 %v6201, 8
      %v6223 = vpop.permute.xlu0 %6222
      %6224 = vrot.lane.b32.xlu0 %v6202, 8
      %v6225 = vpop.permute.xlu0 %6224
      %6226 = vrot.lane.b32.xlu0 %v6203, 8
      %v6227 = vpop.permute.xlu0 %6226
      %6236 = vst.msk [vmem:[#allocation6] sm:$0xf] %vm1318, %v6213
      %6237 = vst.msk [vmem:[#allocation6 + $0x4] sm:$0xf] %vm1318, %v6215
      %6238 = vst.msk [vmem:[#allocation6 + $0x8] sm:$0xf] %vm1318, %v6217
      %6239 = vst.msk [vmem:[#allocation6 + $0xc] sm:$0xf] %vm1318, %v6219
      %6240 = vst.msk [vmem:[#allocation6 + $0x10] sm:$0xf] %vm1318, %v6221
      %6241 = vst.msk [vmem:[#allocation6 + $0x14] sm:$0xf] %vm1318, %v6223
      %6242 = vst.msk [vmem:[#allocation6 + $0x18] sm:$0xf] %vm1318, %v6225
      %6243 = vst.msk [vmem:[#allocation6 + $0x1c] sm:$0xf] %vm1318, %v6227
      %s6244 = scalar_lea.vmem [#allocation2], 3
      %v6245 = vld [vmem:[%s6244] ss:$2 sm:$0xff]
      %s6246 = scalar_lea.vmem [#allocation2], 51
      %v6247 = vld [vmem:[%s6246] ss:$2 sm:$0xff]
      %s6248 = scalar_lea.vmem [#allocation2], 99
      %v6249 = vld [vmem:[%s6248] ss:$2 sm:$0xff]
      %s6250 = scalar_lea.vmem [#allocation2], 147
      %v6251 = vld [vmem:[%s6250] ss:$2 sm:$0xff]
      %s6252 = scalar_lea.vmem [#allocation2], 195
      %v6253 = vld [vmem:[%s6252] ss:$2 sm:$0xff]
      %s6254 = scalar_lea.vmem [#allocation2], 243
      %v6255 = vld [vmem:[%s6254] ss:$2 sm:$0xff]
      %s6256 = scalar_lea.vmem [#allocation2], 291
      %v6257 = vld [vmem:[%s6256] ss:$2 sm:$0xff]
      %s6258 = scalar_lea.vmem [#allocation2], 339
      %v6259 = vld [vmem:[%s6258] ss:$2 sm:$0xff]
      %v6260 = vpack.c.bf16 %v6245, %v6245
      %v6261 = vpack.c.bf16 %v6247, %v6247
      %v6262 = vpack.c.bf16 %v6249, %v6249
      %v6263 = vpack.c.bf16 %v6251, %v6251
      %v6264 = vpack.c.bf16 %v6253, %v6253
      %v6265 = vpack.c.bf16 %v6255, %v6255
      %v6266 = vpack.c.bf16 %v6257, %v6257
      %v6267 = vpack.c.bf16 %v6259, %v6259
      %6276 = vrot.lane.b32.xlu0 %v6260, 12
      %v6277 = vpop.permute.xlu0 %6276
      %6278 = vrot.lane.b32.xlu0 %v6261, 12
      %v6279 = vpop.permute.xlu0 %6278
      %6280 = vrot.lane.b32.xlu0 %v6262, 12
      %v6281 = vpop.permute.xlu0 %6280
      %6282 = vrot.lane.b32.xlu0 %v6263, 12
      %v6283 = vpop.permute.xlu0 %6282
      %6284 = vrot.lane.b32.xlu0 %v6264, 12
      %v6285 = vpop.permute.xlu0 %6284
      %6286 = vrot.lane.b32.xlu0 %v6265, 12
      %v6287 = vpop.permute.xlu0 %6286
      %6288 = vrot.lane.b32.xlu0 %v6266, 12
      %v6289 = vpop.permute.xlu0 %6288
      %6290 = vrot.lane.b32.xlu0 %v6267, 12
      %v6291 = vpop.permute.xlu0 %6290
      %6300 = vst.msk [vmem:[#allocation6] sm:$0xf] %vm1575, %v6277
      %6301 = vst.msk [vmem:[#allocation6 + $0x4] sm:$0xf] %vm1575, %v6279
      %6302 = vst.msk [vmem:[#allocation6 + $0x8] sm:$0xf] %vm1575, %v6281
      %6303 = vst.msk [vmem:[#allocation6 + $0xc] sm:$0xf] %vm1575, %v6283
      %6304 = vst.msk [vmem:[#allocation6 + $0x10] sm:$0xf] %vm1575, %v6285
      %6305 = vst.msk [vmem:[#allocation6 + $0x14] sm:$0xf] %vm1575, %v6287
      %6306 = vst.msk [vmem:[#allocation6 + $0x18] sm:$0xf] %vm1575, %v6289
      %6307 = vst.msk [vmem:[#allocation6 + $0x1c] sm:$0xf] %vm1575, %v6291
      %v6308 = vld [vmem:[%s674] ss:$2 sm:$0xff]
      %s6309 = scalar_lea.vmem %s674, 48 [#allocation2]
      %v6310 = vld [vmem:[%s6309] ss:$2 sm:$0xff]
      %s6311 = scalar_lea.vmem %s674, 96 [#allocation2]
      %v6312 = vld [vmem:[%s6311] ss:$2 sm:$0xff]
      %s6313 = scalar_lea.vmem %s674, 144 [#allocation2]
      %v6314 = vld [vmem:[%s6313] ss:$2 sm:$0xff]
      %s6315 = scalar_lea.vmem %s674, 192 [#allocation2]
      %v6316 = vld [vmem:[%s6315] ss:$2 sm:$0xff]
      %s6317 = scalar_lea.vmem %s674, 240 [#allocation2]
      %v6318 = vld [vmem:[%s6317] ss:$2 sm:$0xff]
      %s6319 = scalar_lea.vmem %s674, 288 [#allocation2]
      %v6320 = vld [vmem:[%s6319] ss:$2 sm:$0xff]
      %s6321 = scalar_lea.vmem %s674, 336 [#allocation2]
      %v6322 = vld [vmem:[%s6321] ss:$2 sm:$0xff]
      %v6323 = vpack.c.bf16 %v6308, %v6308
      %v6324 = vpack.c.bf16 %v6310, %v6310
      %v6325 = vpack.c.bf16 %v6312, %v6312
      %v6326 = vpack.c.bf16 %v6314, %v6314
      %v6327 = vpack.c.bf16 %v6316, %v6316
      %v6328 = vpack.c.bf16 %v6318, %v6318
      %v6329 = vpack.c.bf16 %v6320, %v6320
      %v6330 = vpack.c.bf16 %v6322, %v6322
      %6339 = vrot.lane.b32.xlu0 %v6323, 16
      %v6340 = vpop.permute.xlu0 %6339
      %6341 = vrot.lane.b32.xlu0 %v6324, 16
      %v6342 = vpop.permute.xlu0 %6341
      %6343 = vrot.lane.b32.xlu0 %v6325, 16
      %v6344 = vpop.permute.xlu0 %6343
      %6345 = vrot.lane.b32.xlu0 %v6326, 16
      %v6346 = vpop.permute.xlu0 %6345
      %6347 = vrot.lane.b32.xlu0 %v6327, 16
      %v6348 = vpop.permute.xlu0 %6347
      %6349 = vrot.lane.b32.xlu0 %v6328, 16
      %v6350 = vpop.permute.xlu0 %6349
      %6351 = vrot.lane.b32.xlu0 %v6329, 16
      %v6352 = vpop.permute.xlu0 %6351
      %6353 = vrot.lane.b32.xlu0 %v6330, 16
      %v6354 = vpop.permute.xlu0 %6353
      %6363 = vst.msk [vmem:[#allocation6] sm:$0xf] %vm1832, %v6340
      %6364 = vst.msk [vmem:[#allocation6 + $0x4] sm:$0xf] %vm1832, %v6342
      %6365 = vst.msk [vmem:[#allocation6 + $0x8] sm:$0xf] %vm1832, %v6344
      %6366 = vst.msk [vmem:[#allocation6 + $0xc] sm:$0xf] %vm1832, %v6346
      %6367 = vst.msk [vmem:[#allocation6 + $0x10] sm:$0xf] %vm1832, %v6348
      %6368 = vst.msk [vmem:[#allocation6 + $0x14] sm:$0xf] %vm1832, %v6350
      %6369 = vst.msk [vmem:[#allocation6 + $0x18] sm:$0xf] %vm1832, %v6352
      %6370 = vst.msk [vmem:[#allocation6 + $0x1c] sm:$0xf] %vm1832, %v6354
      %s6371 = scalar_lea.vmem %s674, 1 [#allocation2]
      %v6372 = vld [vmem:[%s6371] ss:$2 sm:$0xff]
      %s6373 = scalar_lea.vmem %s674, 49 [#allocation2]
      %v6374 = vld [vmem:[%s6373] ss:$2 sm:$0xff]
      %s6375 = scalar_lea.vmem %s674, 97 [#allocation2]
      %v6376 = vld [vmem:[%s6375] ss:$2 sm:$0xff]
      %s6377 = scalar_lea.vmem %s674, 145 [#allocation2]
      %v6378 = vld [vmem:[%s6377] ss:$2 sm:$0xff]
      %s6379 = scalar_lea.vmem %s674, 193 [#allocation2]
      %v6380 = vld [vmem:[%s6379] ss:$2 sm:$0xff]
      %s6381 = scalar_lea.vmem %s674, 241 [#allocation2]
      %v6382 = vld [vmem:[%s6381] ss:$2 sm:$0xff]
      %s6383 = scalar_lea.vmem %s674, 289 [#allocation2]
      %v6384 = vld [vmem:[%s6383] ss:$2 sm:$0xff]
      %s6385 = scalar_lea.vmem %s674, 337 [#allocation2]
      %v6386 = vld [vmem:[%s6385] ss:$2 sm:$0xff]
      %v6387 = vpack.c.bf16 %v6372, %v6372
      %v6388 = vpack.c.bf16 %v6374, %v6374
      %v6389 = vpack.c.bf16 %v6376, %v6376
      %v6390 = vpack.c.bf16 %v6378, %v6378
      %v6391 = vpack.c.bf16 %v6380, %v6380
      %v6392 = vpack.c.bf16 %v6382, %v6382
      %v6393 = vpack.c.bf16 %v6384, %v6384
      %v6394 = vpack.c.bf16 %v6386, %v6386
      %6403 = vrot.lane.b32.xlu0 %v6387, 20
      %v6404 = vpop.permute.xlu0 %6403
      %6405 = vrot.lane.b32.xlu0 %v6388, 20
      %v6406 = vpop.permute.xlu0 %6405
      %6407 = vrot.lane.b32.xlu0 %v6389, 20
      %v6408 = vpop.permute.xlu0 %6407
      %6409 = vrot.lane.b32.xlu0 %v6390, 20
      %v6410 = vpop.permute.xlu0 %6409
      %6411 = vrot.lane.b32.xlu0 %v6391, 20
      %v6412 = vpop.permute.xlu0 %6411
      %6413 = vrot.lane.b32.xlu0 %v6392, 20
      %v6414 = vpop.permute.xlu0 %6413
      %6415 = vrot.lane.b32.xlu0 %v6393, 20
      %v6416 = vpop.permute.xlu0 %6415
      %6417 = vrot.lane.b32.xlu0 %v6394, 20
      %v6418 = vpop.permute.xlu0 %6417
      %6427 = vst.msk [vmem:[#allocation6] sm:$0xf] %vm2089, %v6404
      %6428 = vst.msk [vmem:[#allocation6 + $0x4] sm:$0xf] %vm2089, %v6406
      %6429 = vst.msk [vmem:[#allocation6 + $0x8] sm:$0xf] %vm2089, %v6408
      %6430 = vst.msk [vmem:[#allocation6 + $0xc] sm:$0xf] %vm2089, %v6410
      %6431 = vst.msk [vmem:[#allocation6 + $0x10] sm:$0xf] %vm2089, %v6412
      %6432 = vst.msk [vmem:[#allocation6 + $0x14] sm:$0xf] %vm2089, %v6414
      %6433 = vst.msk [vmem:[#allocation6 + $0x18] sm:$0xf] %vm2089, %v6416
      %6434 = vst.msk [vmem:[#allocation6 + $0x1c] sm:$0xf] %vm2089, %v6418
      %s6435 = scalar_lea.vmem %s674, 2 [#allocation2]
      %v6436 = vld [vmem:[%s6435] ss:$2 sm:$0xff]
      %s6437 = scalar_lea.vmem %s674, 50 [#allocation2]
      %v6438 = vld [vmem:[%s6437] ss:$2 sm:$0xff]
      %s6439 = scalar_lea.vmem %s674, 98 [#allocation2]
      %v6440 = vld [vmem:[%s6439] ss:$2 sm:$0xff]
      %s6441 = scalar_lea.vmem %s674, 146 [#allocation2]
      %v6442 = vld [vmem:[%s6441] ss:$2 sm:$0xff]
      %s6443 = scalar_lea.vmem %s674, 194 [#allocation2]
      %v6444 = vld [vmem:[%s6443] ss:$2 sm:$0xff]
      %s6445 = scalar_lea.vmem %s674, 242 [#allocation2]
      %v6446 = vld [vmem:[%s6445] ss:$2 sm:$0xff]
      %s6447 = scalar_lea.vmem %s674, 290 [#allocation2]
      %v6448 = vld [vmem:[%s6447] ss:$2 sm:$0xff]
      %s6449 = scalar_lea.vmem %s674, 338 [#allocation2]
      %v6450 = vld [vmem:[%s6449] ss:$2 sm:$0xff]
      %v6451 = vpack.c.bf16 %v6436, %v6436
      %v6452 = vpack.c.bf16 %v6438, %v6438
      %v6453 = vpack.c.bf16 %v6440, %v6440
      %v6454 = vpack.c.bf16 %v6442, %v6442
      %v6455 = vpack.c.bf16 %v6444, %v6444
      %v6456 = vpack.c.bf16 %v6446, %v6446
      %v6457 = vpack.c.bf16 %v6448, %v6448
      %v6458 = vpack.c.bf16 %v6450, %v6450
      %6467 = vrot.lane.b32.xlu0 %v6451, 24
      %v6468 = vpop.permute.xlu0 %6467
      %6469 = vrot.lane.b32.xlu0 %v6452, 24
      %v6470 = vpop.permute.xlu0 %6469
      %6471 = vrot.lane.b32.xlu0 %v6453, 24
      %v6472 = vpop.permute.xlu0 %6471
      %6473 = vrot.lane.b32.xlu0 %v6454, 24
      %v6474 = vpop.permute.xlu0 %6473
      %6475 = vrot.lane.b32.xlu0 %v6455, 24
      %v6476 = vpop.permute.xlu0 %6475
      %6477 = vrot.lane.b32.xlu0 %v6456, 24
      %v6478 = vpop.permute.xlu0 %6477
      %6479 = vrot.lane.b32.xlu0 %v6457, 24
      %v6480 = vpop.permute.xlu0 %6479
      %6481 = vrot.lane.b32.xlu0 %v6458, 24
      %v6482 = vpop.permute.xlu0 %6481
      %6491 = vst.msk [vmem:[#allocation6] sm:$0xf] %vm2347, %v6468
      %6492 = vst.msk [vmem:[#allocation6 + $0x4] sm:$0xf] %vm2347, %v6470
      %6493 = vst.msk [vmem:[#allocation6 + $0x8] sm:$0xf] %vm2347, %v6472
      %6494 = vst.msk [vmem:[#allocation6 + $0xc] sm:$0xf] %vm2347, %v6474
      %6495 = vst.msk [vmem:[#allocation6 + $0x10] sm:$0xf] %vm2347, %v6476
      %6496 = vst.msk [vmem:[#allocation6 + $0x14] sm:$0xf] %vm2347, %v6478
      %6497 = vst.msk [vmem:[#allocation6 + $0x18] sm:$0xf] %vm2347, %v6480
      %6498 = vst.msk [vmem:[#allocation6 + $0x1c] sm:$0xf] %vm2347, %v6482
      %s6499 = scalar_lea.vmem %s674, 3 [#allocation2]
      %v6500 = vld [vmem:[%s6499] ss:$2 sm:$0xff]
      %s6501 = scalar_lea.vmem %s674, 51 [#allocation2]
      %v6502 = vld [vmem:[%s6501] ss:$2 sm:$0xff]
      %s6503 = scalar_lea.vmem %s674, 99 [#allocation2]
      %v6504 = vld [vmem:[%s6503] ss:$2 sm:$0xff]
      %s6505 = scalar_lea.vmem %s674, 147 [#allocation2]
      %v6506 = vld [vmem:[%s6505] ss:$2 sm:$0xff]
      %s6507 = scalar_lea.vmem %s674, 195 [#allocation2]
      %v6508 = vld [vmem:[%s6507] ss:$2 sm:$0xff]
      %s6509 = scalar_lea.vmem %s674, 243 [#allocation2]
      %v6510 = vld [vmem:[%s6509] ss:$2 sm:$0xff]
      %s6511 = scalar_lea.vmem %s674, 291 [#allocation2]
      %v6512 = vld [vmem:[%s6511] ss:$2 sm:$0xff]
      %s6513 = scalar_lea.vmem %s674, 339 [#allocation2]
      %v6514 = vld [vmem:[%s6513] ss:$2 sm:$0xff]
      %v6515 = vpack.c.bf16 %v6500, %v6500
      %v6516 = vpack.c.bf16 %v6502, %v6502
      %v6517 = vpack.c.bf16 %v6504, %v6504
      %v6518 = vpack.c.bf16 %v6506, %v6506
      %v6519 = vpack.c.bf16 %v6508, %v6508
      %v6520 = vpack.c.bf16 %v6510, %v6510
      %v6521 = vpack.c.bf16 %v6512, %v6512
      %v6522 = vpack.c.bf16 %v6514, %v6514
      %6531 = vrot.lane.b32.xlu0 %v6515, 28
      %v6532 = vpop.permute.xlu0 %6531
      %6533 = vrot.lane.b32.xlu0 %v6516, 28
      %v6534 = vpop.permute.xlu0 %6533
      %6535 = vrot.lane.b32.xlu0 %v6517, 28
      %v6536 = vpop.permute.xlu0 %6535
      %6537 = vrot.lane.b32.xlu0 %v6518, 28
      %v6538 = vpop.permute.xlu0 %6537
      %6539 = vrot.lane.b32.xlu0 %v6519, 28
      %v6540 = vpop.permute.xlu0 %6539
      %6541 = vrot.lane.b32.xlu0 %v6520, 28
      %v6542 = vpop.permute.xlu0 %6541
      %6543 = vrot.lane.b32.xlu0 %v6521, 28
      %v6544 = vpop.permute.xlu0 %6543
      %6545 = vrot.lane.b32.xlu0 %v6522, 28
      %v6546 = vpop.permute.xlu0 %6545
      %6555 = vst.msk [vmem:[#allocation6] sm:$0xf] %vm2604, %v6532
      %6556 = vst.msk [vmem:[#allocation6 + $0x4] sm:$0xf] %vm2604, %v6534
      %6557 = vst.msk [vmem:[#allocation6 + $0x8] sm:$0xf] %vm2604, %v6536
      %6558 = vst.msk [vmem:[#allocation6 + $0xc] sm:$0xf] %vm2604, %v6538
      %6559 = vst.msk [vmem:[#allocation6 + $0x10] sm:$0xf] %vm2604, %v6540
      %6560 = vst.msk [vmem:[#allocation6 + $0x14] sm:$0xf] %vm2604, %v6542
      %6561 = vst.msk [vmem:[#allocation6 + $0x18] sm:$0xf] %vm2604, %v6544
      %6562 = vst.msk [vmem:[#allocation6 + $0x1c] sm:$0xf] %vm2604, %v6546
      %v6563 = vld [vmem:[%s2122] ss:$2 sm:$0xff]
      %s6564 = scalar_lea.vmem %s2122, 48 [#allocation2]
      %v6565 = vld [vmem:[%s6564] ss:$2 sm:$0xff]
      %s6566 = scalar_lea.vmem %s2122, 96 [#allocation2]
      %v6567 = vld [vmem:[%s6566] ss:$2 sm:$0xff]
      %s6568 = scalar_lea.vmem %s2122, 144 [#allocation2]
      %v6569 = vld [vmem:[%s6568] ss:$2 sm:$0xff]
      %s6570 = scalar_lea.vmem %s2122, 192 [#allocation2]
      %v6571 = vld [vmem:[%s6570] ss:$2 sm:$0xff]
      %s6572 = scalar_lea.vmem %s2122, 240 [#allocation2]
      %v6573 = vld [vmem:[%s6572] ss:$2 sm:$0xff]
      %s6574 = scalar_lea.vmem %s2122, 288 [#allocation2]
      %v6575 = vld [vmem:[%s6574] ss:$2 sm:$0xff]
      %s6576 = scalar_lea.vmem %s2122, 336 [#allocation2]
      %v6577 = vld [vmem:[%s6576] ss:$2 sm:$0xff]
      %v6578 = vpack.c.bf16 %v6563, %v6563
      %v6579 = vpack.c.bf16 %v6565, %v6565
      %v6580 = vpack.c.bf16 %v6567, %v6567
      %v6581 = vpack.c.bf16 %v6569, %v6569
      %v6582 = vpack.c.bf16 %v6571, %v6571
      %v6583 = vpack.c.bf16 %v6573, %v6573
      %v6584 = vpack.c.bf16 %v6575, %v6575
      %v6585 = vpack.c.bf16 %v6577, %v6577
      %6594 = vrot.lane.b32.xlu0 %v6578, 32
      %v6595 = vpop.permute.xlu0 %6594
      %6596 = vrot.lane.b32.xlu0 %v6579, 32
      %v6597 = vpop.permute.xlu0 %6596
      %6598 = vrot.lane.b32.xlu0 %v6580, 32
      %v6599 = vpop.permute.xlu0 %6598
      %6600 = vrot.lane.b32.xlu0 %v6581, 32
      %v6601 = vpop.permute.xlu0 %6600
      %6602 = vrot.lane.b32.xlu0 %v6582, 32
      %v6603 = vpop.permute.xlu0 %6602
      %6604 = vrot.lane.b32.xlu0 %v6583, 32
      %v6605 = vpop.permute.xlu0 %6604
      %6606 = vrot.lane.b32.xlu0 %v6584, 32
      %v6607 = vpop.permute.xlu0 %6606
      %6608 = vrot.lane.b32.xlu0 %v6585, 32
      %v6609 = vpop.permute.xlu0 %6608
      %6618 = vst.msk [vmem:[#allocation6] sm:$0xf] %vm2861, %v6595
      %6619 = vst.msk [vmem:[#allocation6 + $0x4] sm:$0xf] %vm2861, %v6597
      %6620 = vst.msk [vmem:[#allocation6 + $0x8] sm:$0xf] %vm2861, %v6599
      %6621 = vst.msk [vmem:[#allocation6 + $0xc] sm:$0xf] %vm2861, %v6601
      %6622 = vst.msk [vmem:[#allocation6 + $0x10] sm:$0xf] %vm2861, %v6603
      %6623 = vst.msk [vmem:[#allocation6 + $0x14] sm:$0xf] %vm2861, %v6605
      %6624 = vst.msk [vmem:[#allocation6 + $0x18] sm:$0xf] %vm2861, %v6607
      %6625 = vst.msk [vmem:[#allocation6 + $0x1c] sm:$0xf] %vm2861, %v6609
      %s6626 = scalar_lea.vmem %s2122, 1 [#allocation2]
      %v6627 = vld [vmem:[%s6626] ss:$2 sm:$0xff]
      %s6628 = scalar_lea.vmem %s2122, 49 [#allocation2]
      %v6629 = vld [vmem:[%s6628] ss:$2 sm:$0xff]
      %s6630 = scalar_lea.vmem %s2122, 97 [#allocation2]
      %v6631 = vld [vmem:[%s6630] ss:$2 sm:$0xff]
      %s6632 = scalar_lea.vmem %s2122, 145 [#allocation2]
      %v6633 = vld [vmem:[%s6632] ss:$2 sm:$0xff]
      %s6634 = scalar_lea.vmem %s2122, 193 [#allocation2]
      %v6635 = vld [vmem:[%s6634] ss:$2 sm:$0xff]
      %s6636 = scalar_lea.vmem %s2122, 241 [#allocation2]
      %v6637 = vld [vmem:[%s6636] ss:$2 sm:$0xff]
      %s6638 = scalar_lea.vmem %s2122, 289 [#allocation2]
      %v6639 = vld [vmem:[%s6638] ss:$2 sm:$0xff]
      %s6640 = scalar_lea.vmem %s2122, 337 [#allocation2]
      %v6641 = vld [vmem:[%s6640] ss:$2 sm:$0xff]
      %v6642 = vpack.c.bf16 %v6627, %v6627
      %v6643 = vpack.c.bf16 %v6629, %v6629
      %v6644 = vpack.c.bf16 %v6631, %v6631
      %v6645 = vpack.c.bf16 %v6633, %v6633
      %v6646 = vpack.c.bf16 %v6635, %v6635
      %v6647 = vpack.c.bf16 %v6637, %v6637
      %v6648 = vpack.c.bf16 %v6639, %v6639
      %v6649 = vpack.c.bf16 %v6641, %v6641
      %6658 = vrot.lane.b32.xlu0 %v6642, 36
      %v6659 = vpop.permute.xlu0 %6658
      %6660 = vrot.lane.b32.xlu0 %v6643, 36
      %v6661 = vpop.permute.xlu0 %6660
      %6662 = vrot.lane.b32.xlu0 %v6644, 36
      %v6663 = vpop.permute.xlu0 %6662
      %6664 = vrot.lane.b32.xlu0 %v6645, 36
      %v6665 = vpop.permute.xlu0 %6664
      %6666 = vrot.lane.b32.xlu0 %v6646, 36
      %v6667 = vpop.permute.xlu0 %6666
      %6668 = vrot.lane.b32.xlu0 %v6647, 36
      %v6669 = vpop.permute.xlu0 %6668
      %6670 = vrot.lane.b32.xlu0 %v6648, 36
      %v6671 = vpop.permute.xlu0 %6670
      %6672 = vrot.lane.b32.xlu0 %v6649, 36
      %v6673 = vpop.permute.xlu0 %6672
      %vm6682 = vcmask 322848
      %6683 = vst.msk [vmem:[#allocation6] sm:$0xf] %vm6682, %v6659
      %6684 = vst.msk [vmem:[#allocation6 + $0x4] sm:$0xf] %vm6682, %v6661
      %6685 = vst.msk [vmem:[#allocation6 + $0x8] sm:$0xf] %vm6682, %v6663
      %6686 = vst.msk [vmem:[#allocation6 + $0xc] sm:$0xf] %vm6682, %v6665
      %6687 = vst.msk [vmem:[#allocation6 + $0x10] sm:$0xf] %vm6682, %v6667
      %6688 = vst.msk [vmem:[#allocation6 + $0x14] sm:$0xf] %vm6682, %v6669
      %6689 = vst.msk [vmem:[#allocation6 + $0x18] sm:$0xf] %vm6682, %v6671
      %6690 = vst.msk [vmem:[#allocation6 + $0x1c] sm:$0xf] %vm6682, %v6673
      %s6691 = scalar_lea.vmem %s2122, 2 [#allocation2]
      %v6692 = vld [vmem:[%s6691] ss:$2 sm:$0xff]
      %s6693 = scalar_lea.vmem %s2122, 50 [#allocation2]
      %v6694 = vld [vmem:[%s6693] ss:$2 sm:$0xff]
      %s6695 = scalar_lea.vmem %s2122, 98 [#allocation2]
      %v6696 = vld [vmem:[%s6695] ss:$2 sm:$0xff]
      %s6697 = scalar_lea.vmem %s2122, 146 [#allocation2]
      %v6698 = vld [vmem:[%s6697] ss:$2 sm:$0xff]
      %s6699 = scalar_lea.vmem %s2122, 194 [#allocation2]
      %v6700 = vld [vmem:[%s6699] ss:$2 sm:$0xff]
      %s6701 = scalar_lea.vmem %s2122, 242 [#allocation2]
      %v6702 = vld [vmem:[%s6701] ss:$2 sm:$0xff]
      %s6703 = scalar_lea.vmem %s2122, 290 [#allocation2]
      %v6704 = vld [vmem:[%s6703] ss:$2 sm:$0xff]
      %s6705 = scalar_lea.vmem %s2122, 338 [#allocation2]
      %v6706 = vld [vmem:[%s6705] ss:$2 sm:$0xff]
      %v6707 = vpack.c.bf16 %v6692, %v6692
      %v6708 = vpack.c.bf16 %v6694, %v6694
      %v6709 = vpack.c.bf16 %v6696, %v6696
      %v6710 = vpack.c.bf16 %v6698, %v6698
      %v6711 = vpack.c.bf16 %v6700, %v6700
      %v6712 = vpack.c.bf16 %v6702, %v6702
      %v6713 = vpack.c.bf16 %v6704, %v6704
      %v6714 = vpack.c.bf16 %v6706, %v6706
      %6723 = vrot.lane.b32.xlu0 %v6707, 40
      %v6724 = vpop.permute.xlu0 %6723
      %6725 = vrot.lane.b32.xlu0 %v6708, 40
      %v6726 = vpop.permute.xlu0 %6725
      %6727 = vrot.lane.b32.xlu0 %v6709, 40
      %v6728 = vpop.permute.xlu0 %6727
      %6729 = vrot.lane.b32.xlu0 %v6710, 40
      %v6730 = vpop.permute.xlu0 %6729
      %6731 = vrot.lane.b32.xlu0 %v6711, 40
      %v6732 = vpop.permute.xlu0 %6731
      %6733 = vrot.lane.b32.xlu0 %v6712, 40
      %v6734 = vpop.permute.xlu0 %6733
      %6735 = vrot.lane.b32.xlu0 %v6713, 40
      %v6736 = vpop.permute.xlu0 %6735
      %6737 = vrot.lane.b32.xlu0 %v6714, 40
      %v6738 = vpop.permute.xlu0 %6737
      %vm6747 = vcmask 355648
      %6748 = vst.msk [vmem:[#allocation6] sm:$0xf] %vm6747, %v6724
      %6749 = vst.msk [vmem:[#allocation6 + $0x4] sm:$0xf] %vm6747, %v6726
      %6750 = vst.msk [vmem:[#allocation6 + $0x8] sm:$0xf] %vm6747, %v6728
      %6751 = vst.msk [vmem:[#allocation6 + $0xc] sm:$0xf] %vm6747, %v6730
      %6752 = vst.msk [vmem:[#allocation6 + $0x10] sm:$0xf] %vm6747, %v6732
      %6753 = vst.msk [vmem:[#allocation6 + $0x14] sm:$0xf] %vm6747, %v6734
      %6754 = vst.msk [vmem:[#allocation6 + $0x18] sm:$0xf] %vm6747, %v6736
      %6755 = vst.msk [vmem:[#allocation6 + $0x1c] sm:$0xf] %vm6747, %v6738
      %s6756 = scalar_lea.vmem %s2122, 3 [#allocation2]
      %v6757 = vld [vmem:[%s6756] ss:$2 sm:$0xff]
      %s6758 = scalar_lea.vmem %s2122, 51 [#allocation2]
      %v6759 = vld [vmem:[%s6758] ss:$2 sm:$0xff]
      %s6760 = scalar_lea.vmem %s2122, 99 [#allocation2]
      %v6761 = vld [vmem:[%s6760] ss:$2 sm:$0xff]
      %s6762 = scalar_lea.vmem %s2122, 147 [#allocation2]
      %v6763 = vld [vmem:[%s6762] ss:$2 sm:$0xff]
      %s6764 = scalar_lea.vmem %s2122, 195 [#allocation2]
      %v6765 = vld [vmem:[%s6764] ss:$2 sm:$0xff]
      %s6766 = scalar_lea.vmem %s2122, 243 [#allocation2]
      %v6767 = vld [vmem:[%s6766] ss:$2 sm:$0xff]
      %s6768 = scalar_lea.vmem %s2122, 291 [#allocation2]
      %v6769 = vld [vmem:[%s6768] ss:$2 sm:$0xff]
      %s6770 = scalar_lea.vmem %s2122, 339 [#allocation2]
      %v6771 = vld [vmem:[%s6770] ss:$2 sm:$0xff]
      %v6772 = vpack.c.bf16 %v6757, %v6757
      %v6773 = vpack.c.bf16 %v6759, %v6759
      %v6774 = vpack.c.bf16 %v6761, %v6761
      %v6775 = vpack.c.bf16 %v6763, %v6763
      %v6776 = vpack.c.bf16 %v6765, %v6765
      %v6777 = vpack.c.bf16 %v6767, %v6767
      %v6778 = vpack.c.bf16 %v6769, %v6769
      %v6779 = vpack.c.bf16 %v6771, %v6771
      %6788 = vrot.lane.b32.xlu0 %v6772, 44
      %v6789 = vpop.permute.xlu0 %6788
      %6790 = vrot.lane.b32.xlu0 %v6773, 44
      %v6791 = vpop.permute.xlu0 %6790
      %6792 = vrot.lane.b32.xlu0 %v6774, 44
      %v6793 = vpop.permute.xlu0 %6792
      %6794 = vrot.lane.b32.xlu0 %v6775, 44
      %v6795 = vpop.permute.xlu0 %6794
      %6796 = vrot.lane.b32.xlu0 %v6776, 44
      %v6797 = vpop.permute.xlu0 %6796
      %6798 = vrot.lane.b32.xlu0 %v6777, 44
      %v6799 = vpop.permute.xlu0 %6798
      %6800 = vrot.lane.b32.xlu0 %v6778, 44
      %v6801 = vpop.permute.xlu0 %6800
      %6802 = vrot.lane.b32.xlu0 %v6779, 44
      %v6803 = vpop.permute.xlu0 %6802
      %vm6812 = vcmask 388448
      %6813 = vst.msk [vmem:[#allocation6] sm:$0xf] %vm6812, %v6789
      %6814 = vst.msk [vmem:[#allocation6 + $0x4] sm:$0xf] %vm6812, %v6791
      %6815 = vst.msk [vmem:[#allocation6 + $0x8] sm:$0xf] %vm6812, %v6793
      %6816 = vst.msk [vmem:[#allocation6 + $0xc] sm:$0xf] %vm6812, %v6795
      %6817 = vst.msk [vmem:[#allocation6 + $0x10] sm:$0xf] %vm6812, %v6797
      %6818 = vst.msk [vmem:[#allocation6 + $0x14] sm:$0xf] %vm6812, %v6799
      %6819 = vst.msk [vmem:[#allocation6 + $0x18] sm:$0xf] %vm6812, %v6801
      %6820 = vst.msk [vmem:[#allocation6 + $0x1c] sm:$0xf] %vm6812, %v6803
      %s6821 = scalar_lea.vmem [#allocation2], 72
      %v6822 = vld [vmem:[%s6821] ss:$2 sm:$0xff]
      %s6823 = scalar_lea.vmem %s6821, 48 [#allocation2]
      %v6824 = vld [vmem:[%s6823] ss:$2 sm:$0xff]
      %s6825 = scalar_lea.vmem %s6821, 96 [#allocation2]
      %v6826 = vld [vmem:[%s6825] ss:$2 sm:$0xff]
      %s6827 = scalar_lea.vmem %s6821, 144 [#allocation2]
      %v6828 = vld [vmem:[%s6827] ss:$2 sm:$0xff]
      %s6829 = scalar_lea.vmem %s6821, 192 [#allocation2]
      %v6830 = vld [vmem:[%s6829] ss:$2 sm:$0xff]
      %s6831 = scalar_lea.vmem %s6821, 240 [#allocation2]
      %v6832 = vld [vmem:[%s6831] ss:$2 sm:$0xff]
      %s6833 = scalar_lea.vmem %s6821, 288 [#allocation2]
      %v6834 = vld [vmem:[%s6833] ss:$2 sm:$0xff]
      %s6835 = scalar_lea.vmem %s6821, 336 [#allocation2]
      %v6836 = vld [vmem:[%s6835] ss:$2 sm:$0xff]
      %v6837 = vpack.c.bf16 %v6822, %v6822
      %v6838 = vpack.c.bf16 %v6824, %v6824
      %v6839 = vpack.c.bf16 %v6826, %v6826
      %v6840 = vpack.c.bf16 %v6828, %v6828
      %v6841 = vpack.c.bf16 %v6830, %v6830
      %v6842 = vpack.c.bf16 %v6832, %v6832
      %v6843 = vpack.c.bf16 %v6834, %v6834
      %v6844 = vpack.c.bf16 %v6836, %v6836
      %6853 = vrot.lane.b32.xlu0 %v6837, 48
      %v6854 = vpop.permute.xlu0 %6853
      %6855 = vrot.lane.b32.xlu0 %v6838, 48
      %v6856 = vpop.permute.xlu0 %6855
      %6857 = vrot.lane.b32.xlu0 %v6839, 48
      %v6858 = vpop.permute.xlu0 %6857
      %6859 = vrot.lane.b32.xlu0 %v6840, 48
      %v6860 = vpop.permute.xlu0 %6859
      %6861 = vrot.lane.b32.xlu0 %v6841, 48
      %v6862 = vpop.permute.xlu0 %6861
      %6863 = vrot.lane.b32.xlu0 %v6842, 48
      %v6864 = vpop.permute.xlu0 %6863
      %6865 = vrot.lane.b32.xlu0 %v6843, 48
      %v6866 = vpop.permute.xlu0 %6865
      %6867 = vrot.lane.b32.xlu0 %v6844, 48
      %v6868 = vpop.permute.xlu0 %6867
      %vm6877 = vcmask 421248
      %6878 = vst.msk [vmem:[#allocation6] sm:$0xf] %vm6877, %v6854
      %6879 = vst.msk [vmem:[#allocation6 + $0x4] sm:$0xf] %vm6877, %v6856
      %6880 = vst.msk [vmem:[#allocation6 + $0x8] sm:$0xf] %vm6877, %v6858
      %6881 = vst.msk [vmem:[#allocation6 + $0xc] sm:$0xf] %vm6877, %v6860
      %6882 = vst.msk [vmem:[#allocation6 + $0x10] sm:$0xf] %vm6877, %v6862
      %6883 = vst.msk [vmem:[#allocation6 + $0x14] sm:$0xf] %vm6877, %v6864
      %6884 = vst.msk [vmem:[#allocation6 + $0x18] sm:$0xf] %vm6877, %v6866
      %6885 = vst.msk [vmem:[#allocation6 + $0x1c] sm:$0xf] %vm6877, %v6868
      %s6886 = scalar_lea.vmem %s6821, 1 [#allocation2]
      %v6887 = vld [vmem:[%s6886] ss:$2 sm:$0xff]
      %s6888 = scalar_lea.vmem %s6821, 49 [#allocation2]
      %v6889 = vld [vmem:[%s6888] ss:$2 sm:$0xff]
      %s6890 = scalar_lea.vmem %s6821, 97 [#allocation2]
      %v6891 = vld [vmem:[%s6890] ss:$2 sm:$0xff]
      %s6892 = scalar_lea.vmem %s6821, 145 [#allocation2]
      %v6893 = vld [vmem:[%s6892] ss:$2 sm:$0xff]
      %s6894 = scalar_lea.vmem %s6821, 193 [#allocation2]
      %v6895 = vld [vmem:[%s6894] ss:$2 sm:$0xff]
      %s6896 = scalar_lea.vmem %s6821, 241 [#allocation2]
      %v6897 = vld [vmem:[%s6896] ss:$2 sm:$0xff]
      %s6898 = scalar_lea.vmem %s6821, 289 [#allocation2]
      %v6899 = vld [vmem:[%s6898] ss:$2 sm:$0xff]
      %s6900 = scalar_lea.vmem %s6821, 337 [#allocation2]
      %v6901 = vld [vmem:[%s6900] ss:$2 sm:$0xff]
      %v6902 = vpack.c.bf16 %v6887, %v6887
      %v6903 = vpack.c.bf16 %v6889, %v6889
      %v6904 = vpack.c.bf16 %v6891, %v6891
      %v6905 = vpack.c.bf16 %v6893, %v6893
      %v6906 = vpack.c.bf16 %v6895, %v6895
      %v6907 = vpack.c.bf16 %v6897, %v6897
      %v6908 = vpack.c.bf16 %v6899, %v6899
      %v6909 = vpack.c.bf16 %v6901, %v6901
      %6918 = vrot.lane.b32.xlu0 %v6902, 52
      %v6919 = vpop.permute.xlu0 %6918
      %6920 = vrot.lane.b32.xlu0 %v6903, 52
      %v6921 = vpop.permute.xlu0 %6920
      %6922 = vrot.lane.b32.xlu0 %v6904, 52
      %v6923 = vpop.permute.xlu0 %6922
      %6924 = vrot.lane.b32.xlu0 %v6905, 52
      %v6925 = vpop.permute.xlu0 %6924
      %6926 = vrot.lane.b32.xlu0 %v6906, 52
      %v6927 = vpop.permute.xlu0 %6926
      %6928 = vrot.lane.b32.xlu0 %v6907, 52
      %v6929 = vpop.permute.xlu0 %6928
      %6930 = vrot.lane.b32.xlu0 %v6908, 52
      %v6931 = vpop.permute.xlu0 %6930
      %6932 = vrot.lane.b32.xlu0 %v6909, 52
      %v6933 = vpop.permute.xlu0 %6932
      %vm6942 = vcmask 454048
      %6943 = vst.msk [vmem:[#allocation6] sm:$0xf] %vm6942, %v6919
      %6944 = vst.msk [vmem:[#allocation6 + $0x4] sm:$0xf] %vm6942, %v6921
      %6945 = vst.msk [vmem:[#allocation6 + $0x8] sm:$0xf] %vm6942, %v6923
      %6946 = vst.msk [vmem:[#allocation6 + $0xc] sm:$0xf] %vm6942, %v6925
      %6947 = vst.msk [vmem:[#allocation6 + $0x10] sm:$0xf] %vm6942, %v6927
      %6948 = vst.msk [vmem:[#allocation6 + $0x14] sm:$0xf] %vm6942, %v6929
      %6949 = vst.msk [vmem:[#allocation6 + $0x18] sm:$0xf] %vm6942, %v6931
      %6950 = vst.msk [vmem:[#allocation6 + $0x1c] sm:$0xf] %vm6942, %v6933
      %s6951 = scalar_lea.vmem %s6821, 2 [#allocation2]
      %v6952 = vld [vmem:[%s6951] ss:$2 sm:$0xff]
      %s6953 = scalar_lea.vmem %s6821, 50 [#allocation2]
      %v6954 = vld [vmem:[%s6953] ss:$2 sm:$0xff]
      %s6955 = scalar_lea.vmem %s6821, 98 [#allocation2]
      %v6956 = vld [vmem:[%s6955] ss:$2 sm:$0xff]
      %s6957 = scalar_lea.vmem %s6821, 146 [#allocation2]
      %v6958 = vld [vmem:[%s6957] ss:$2 sm:$0xff]
      %s6959 = scalar_lea.vmem %s6821, 194 [#allocation2]
      %v6960 = vld [vmem:[%s6959] ss:$2 sm:$0xff]
      %s6961 = scalar_lea.vmem %s6821, 242 [#allocation2]
      %v6962 = vld [vmem:[%s6961] ss:$2 sm:$0xff]
      %s6963 = scalar_lea.vmem %s6821, 290 [#allocation2]
      %v6964 = vld [vmem:[%s6963] ss:$2 sm:$0xff]
      %s6965 = scalar_lea.vmem %s6821, 338 [#allocation2]
      %v6966 = vld [vmem:[%s6965] ss:$2 sm:$0xff]
      %v6967 = vpack.c.bf16 %v6952, %v6952
      %v6968 = vpack.c.bf16 %v6954, %v6954
      %v6969 = vpack.c.bf16 %v6956, %v6956
      %v6970 = vpack.c.bf16 %v6958, %v6958
      %v6971 = vpack.c.bf16 %v6960, %v6960
      %v6972 = vpack.c.bf16 %v6962, %v6962
      %v6973 = vpack.c.bf16 %v6964, %v6964
      %v6974 = vpack.c.bf16 %v6966, %v6966
      %6983 = vrot.lane.b32.xlu0 %v6967, 56
      %v6984 = vpop.permute.xlu0 %6983
      %6985 = vrot.lane.b32.xlu0 %v6968, 56
      %v6986 = vpop.permute.xlu0 %6985
      %6987 = vrot.lane.b32.xlu0 %v6969, 56
      %v6988 = vpop.permute.xlu0 %6987
      %6989 = vrot.lane.b32.xlu0 %v6970, 56
      %v6990 = vpop.permute.xlu0 %6989
      %6991 = vrot.lane.b32.xlu0 %v6971, 56
      %v6992 = vpop.permute.xlu0 %6991
      %6993 = vrot.lane.b32.xlu0 %v6972, 56
      %v6994 = vpop.permute.xlu0 %6993
      %6995 = vrot.lane.b32.xlu0 %v6973, 56
      %v6996 = vpop.permute.xlu0 %6995
      %6997 = vrot.lane.b32.xlu0 %v6974, 56
      %v6998 = vpop.permute.xlu0 %6997
      %vm7007 = vcmask 486848
      %7008 = vst.msk [vmem:[#allocation6] sm:$0xf] %vm7007, %v6984
      %7009 = vst.msk [vmem:[#allocation6 + $0x4] sm:$0xf] %vm7007, %v6986
      %7010 = vst.msk [vmem:[#allocation6 + $0x8] sm:$0xf] %vm7007, %v6988
      %7011 = vst.msk [vmem:[#allocation6 + $0xc] sm:$0xf] %vm7007, %v6990
      %7012 = vst.msk [vmem:[#allocation6 + $0x10] sm:$0xf] %vm7007, %v6992
      %7013 = vst.msk [vmem:[#allocation6 + $0x14] sm:$0xf] %vm7007, %v6994
      %7014 = vst.msk [vmem:[#allocation6 + $0x18] sm:$0xf] %vm7007, %v6996
      %7015 = vst.msk [vmem:[#allocation6 + $0x1c] sm:$0xf] %vm7007, %v6998
      %s7016 = scalar_lea.vmem %s6821, 3 [#allocation2]
      %v7017 = vld [vmem:[%s7016] ss:$2 sm:$0xff]
      %s7018 = scalar_lea.vmem %s6821, 51 [#allocation2]
      %v7019 = vld [vmem:[%s7018] ss:$2 sm:$0xff]
      %s7020 = scalar_lea.vmem %s6821, 99 [#allocation2]
      %v7021 = vld [vmem:[%s7020] ss:$2 sm:$0xff]
      %s7022 = scalar_lea.vmem %s6821, 147 [#allocation2]
      %v7023 = vld [vmem:[%s7022] ss:$2 sm:$0xff]
      %s7024 = scalar_lea.vmem %s6821, 195 [#allocation2]
      %v7025 = vld [vmem:[%s7024] ss:$2 sm:$0xff]
      %s7026 = scalar_lea.vmem %s6821, 243 [#allocation2]
      %v7027 = vld [vmem:[%s7026] ss:$2 sm:$0xff]
      %s7028 = scalar_lea.vmem %s6821, 291 [#allocation2]
      %v7029 = vld [vmem:[%s7028] ss:$2 sm:$0xff]
      %s7030 = scalar_lea.vmem %s6821, 339 [#allocation2]
      %v7031 = vld [vmem:[%s7030] ss:$2 sm:$0xff]
      %v7032 = vpack.c.bf16 %v7017, %v7017
      %v7033 = vpack.c.bf16 %v7019, %v7019
      %v7034 = vpack.c.bf16 %v7021, %v7021
      %v7035 = vpack.c.bf16 %v7023, %v7023
      %v7036 = vpack.c.bf16 %v7025, %v7025
      %v7037 = vpack.c.bf16 %v7027, %v7027
      %v7038 = vpack.c.bf16 %v7029, %v7029
      %v7039 = vpack.c.bf16 %v7031, %v7031
      %7048 = vrot.lane.b32.xlu0 %v7032, 60
      %v7049 = vpop.permute.xlu0 %7048
      %7050 = vrot.lane.b32.xlu0 %v7033, 60
      %v7051 = vpop.permute.xlu0 %7050
      %7052 = vrot.lane.b32.xlu0 %v7034, 60
      %v7053 = vpop.permute.xlu0 %7052
      %7054 = vrot.lane.b32.xlu0 %v7035, 60
      %v7055 = vpop.permute.xlu0 %7054
      %7056 = vrot.lane.b32.xlu0 %v7036, 60
      %v7057 = vpop.permute.xlu0 %7056
      %7058 = vrot.lane.b32.xlu0 %v7037, 60
      %v7059 = vpop.permute.xlu0 %7058
      %7060 = vrot.lane.b32.xlu0 %v7038, 60
      %v7061 = vpop.permute.xlu0 %7060
      %7062 = vrot.lane.b32.xlu0 %v7039, 60
      %v7063 = vpop.permute.xlu0 %7062
      %vm7072 = vcmask 519648
      %7073 = vst.msk [vmem:[#allocation6] sm:$0xf] %vm7072, %v7049
      %7074 = vst.msk [vmem:[#allocation6 + $0x4] sm:$0xf] %vm7072, %v7051
      %7075 = vst.msk [vmem:[#allocation6 + $0x8] sm:$0xf] %vm7072, %v7053
      %7076 = vst.msk [vmem:[#allocation6 + $0xc] sm:$0xf] %vm7072, %v7055
      %7077 = vst.msk [vmem:[#allocation6 + $0x10] sm:$0xf] %vm7072, %v7057
      %7078 = vst.msk [vmem:[#allocation6 + $0x14] sm:$0xf] %vm7072, %v7059
      %7079 = vst.msk [vmem:[#allocation6 + $0x18] sm:$0xf] %vm7072, %v7061
      %7080 = vst.msk [vmem:[#allocation6 + $0x1c] sm:$0xf] %vm7072, %v7063
      %v7081 = vld [vmem:[#allocation6] sm:$0xf]
      %v7082 = vld [vmem:[#allocation6 + $0x4] sm:$0xf]
      %v7083 = vld [vmem:[#allocation6 + $0x8] sm:$0xf]
      %v7084 = vld [vmem:[#allocation6 + $0xc] sm:$0xf]
      %v7085 = vld [vmem:[#allocation6 + $0x10] sm:$0xf]
      %v7086 = vld [vmem:[#allocation6 + $0x14] sm:$0xf]
      %v7087 = vld [vmem:[#allocation6 + $0x18] sm:$0xf]
      %v7088 = vld [vmem:[#allocation6 + $0x1c] sm:$0xf]
      %v7089 = vld [vmem:[%s12] sm:$0xf]
      %v7090 = vld [vmem:[%s12 + $0x4] sm:$0xf]
      %v7091 = vld [vmem:[%s12 + $0x8] sm:$0xf]
      %v7092 = vld [vmem:[%s12 + $0xc] sm:$0xf]
      %v7093 = vld [vmem:[%s12 + $0x10] sm:$0xf]
      %v7094 = vld [vmem:[%s12 + $0x14] sm:$0xf]
      %v7095 = vld [vmem:[%s12 + $0x18] sm:$0xf]
      %v7096 = vld [vmem:[%s12 + $0x1c] sm:$0xf]
      %v7105 = vunpack.c.l.b16 %v7081
      %v7106 = vunpack.c.l.b16 %v7082
      %v7107 = vunpack.c.l.b16 %v7083
      %v7108 = vunpack.c.l.b16 %v7084
      %v7109 = vunpack.c.l.b16 %v7085
      %v7110 = vunpack.c.l.b16 %v7086
      %v7111 = vunpack.c.l.b16 %v7087
      %v7112 = vunpack.c.l.b16 %v7088
      %v7113 = vpack.c.b16 %v7106, %v7105
      %v7114 = vpack.c.b16 %v7108, %v7107
      %v7115 = vpack.c.b16 %v7110, %v7109
      %v7116 = vpack.c.b16 %v7112, %v7111
      %v7125 = vunpack.c.l.b16 %v7089
      %v7126 = vunpack.c.l.b16 %v7090
      %v7127 = vunpack.c.l.b16 %v7091
      %v7128 = vunpack.c.l.b16 %v7092
      %v7129 = vunpack.c.l.b16 %v7093
      %v7130 = vunpack.c.l.b16 %v7094
      %v7131 = vunpack.c.l.b16 %v7095
      %v7132 = vunpack.c.l.b16 %v7096
      %v7133 = vpack.c.b16 %v7126, %v7125
      %v7134 = vpack.c.b16 %v7128, %v7127
      %v7135 = vpack.c.b16 %v7130, %v7129
      %v7136 = vpack.c.b16 %v7132, %v7131
      %vm7141 = vcmask 523264
      %v7143 = vsel %vm7141, %v7113, 0
      %v7146 = vsel %vm7141, %v7114, 0
      %v7149 = vsel %vm7141, %v7115, 0
      %v7152 = vsel %vm7141, %v7116, 0
      %7154 = vmatpush.bf16.msra.mxu0 0
      %7155 = vmatpush.bf16.msra.mxu0 0
      %7156 = vmatpush.bf16.msra.mxu0 0
      %7157 = vmatpush.bf16.msra.mxu0 0
      %7158 = vmatpush.bf16.msra.mxu0 %v7136
      %7159 = vmatpush.bf16.msra.mxu0 %v7135
      %7160 = vmatpush.bf16.msra.mxu0 %v7134
      %7161 = vmatpush.bf16.msra.mxu0 %v7133
      %7162 = vmatmul.bf16.gmra.mxu0 %v7143
      %v7163 = vpop.f32.mrf.mxu0
      %v7164 = vadd.f32 0.0, %v7163
      %v7165 = vpop.f32.mrf.mxu0
      %v7166 = vadd.f32 0.0, %v7165
      %7167 = vmatmul.bf16.gmra.mxu0 %v7146
      %v7168 = vpop.f32.mrf.mxu0
      %v7169 = vadd.f32 0.0, %v7168
      %v7170 = vpop.f32.mrf.mxu0
      %v7171 = vadd.f32 0.0, %v7170
      %7172 = vmatmul.bf16.gmra.mxu0 %v7149
      %v7173 = vpop.f32.mrf.mxu0
      %v7174 = vadd.f32 0.0, %v7173
      %v7175 = vpop.f32.mrf.mxu0
      %v7176 = vadd.f32 0.0, %v7175
      %7177 = vmatmul.bf16.gmra.mxu0 %v7152
      %v7178 = vpop.f32.mrf.mxu0
      %v7179 = vadd.f32 0.0, %v7178
      %v7180 = vpop.f32.mrf.mxu0
      %v7181 = vadd.f32 0.0, %v7180
      %7182 = vdwg.mxu0
      %v7183 = vadd.f32 %v6077, %v7164
      %v7184 = vadd.f32 %v6078, %v7166
      %v7185 = vadd.f32 %v6079, %v7169
      %v7186 = vadd.f32 %v6080, %v7171
      %v7187 = vadd.f32 %v6081, %v7174
      %v7188 = vadd.f32 %v6082, %v7176
      %v7189 = vadd.f32 %v6083, %v7179
      %v7190 = vadd.f32 %v6084, %v7181
      %v7191 = vmul.f32 %v7183, 0.70710677
      %v7192 = vmul.f32 %v7184, 0.70710677
      %v7193 = vmul.f32 %v7185, 0.70710677
      %v7194 = vmul.f32 %v7186, 0.70710677
      %v7195 = vmul.f32 %v7187, 0.70710677
      %v7196 = vmul.f32 %v7188, 0.70710677
      %v7197 = vmul.f32 %v7189, 0.70710677
      %v7198 = vmul.f32 %v7190, 0.70710677
      %7199 = vst.msk [vmem:[%s454] sm:$0xff] %vm553, %v7191
      %7200 = vst.msk [vmem:[%s454 + $0x8] sm:$0xff] %vm553, %v7192
      %7201 = vst.msk [vmem:[%s454 + $0x10] sm:$0xff] %vm553, %v7193
      %7202 = vst.msk [vmem:[%s454 + $0x18] sm:$0xff] %vm553, %v7194
      %7203 = vst.msk [vmem:[%s454 + $0x20] sm:$0xff] %vm553, %v7195
      %7204 = vst.msk [vmem:[%s454 + $0x28] sm:$0xff] %vm553, %v7196
      %7205 = vst.msk [vmem:[%s454 + $0x30] sm:$0xff] %vm553, %v7197
      %7206 = vst.msk [vmem:[%s454 + $0x38] sm:$0xff] %vm553, %v7198
      %p7207 = scmp.lt.s32.totalorder %s24, 1
      %s7208 = scalar_select %p7207, %s24, 1
      %s7209 = smul.addr %s7208, 8
      %s7210 = smul.addr %s7209, 8
      %s7211 = scalar_lea.vmem %s13, %s7210
      // Predicated region
      $region73: #{styled_resblock2_forward.1} parent=71 // pred_check
        %p7212 = pneg %p325
      $region74: #{styled_resblock2_forward.1} parent=71 // pred_check_branch
        %7214 = sbr.rel (%p7212) target = $region76
      $region75: #{styled_resblock2_forward.1} parent=71 // pred_region
        _
      $region76: #{styled_resblock2_forward.1} parent=71 // pred_fallthru
        _
    $region72: #{styled_resblock2_forward.1} parent=5 // pred_fallthru
      _
    %p7215 = scmp.le.s32.totalorder 2, %s19
    // Predicated region
    $region77: #{styled_resblock2_forward.1} parent=5 // pred_check
      %p7216 = pneg %p7215
    $region78: #{styled_resblock2_forward.1} parent=5 // pred_check_branch
      %7218 = sbr.rel (%p7216) target = $region80
    $region79: #{styled_resblock2_forward.1} parent=5 // pred_region
      %s7219 = ssub.s32 %s19, 2
      // Predicated region
      $region81: #{styled_resblock2_forward.1} parent=79 // pred_check
        %p7220 = pneg %p331
      $region82: #{styled_resblock2_forward.1} parent=79 // pred_check_branch
        %7222 = sbr.rel (%p7220) target = $region84
      $region83: #{styled_resblock2_forward.1} parent=79 // pred_region
        %p7223 = scmp.lt.s32.totalorder %s25, 1
        %s7224 = scalar_select %p7223, %s25, 1
        %s7225 = smul.addr %s7224, 8
        %s7226 = smul.addr %s7225, 8
        %s7227 = scalar_lea.vmem %s13, %s7226
      $region84: #{styled_resblock2_forward.1} parent=79 // pred_fallthru
        _
    $region80: #{styled_resblock2_forward.1} parent=5 // pred_fallthru
      _
  $region6: #{styled_resblock2_forward.1} parent=0 // loop_footer
    %s23 = sadd.s32 1, %s19
  $region7: #{styled_resblock2_forward.1} parent=0 // loop_footer_branch
    %18 = sbr.rel target = $region3
  $region8: #{styled_resblock2_forward.1} parent=0 // loop_exit
    _

</llo_original>
